<compile_context>
chip_gen: v7x
topology: tpu7x:2x2x1
jax: 0.10.0
libtpu: 0.0.40
codegen_flags: <defaults>
</compile_context>

<pallas_src>
import jax
import jax.numpy as jnp
from jax.experimental import pallas as pl
from jax.experimental.pallas import tpu as pltpu

NEG_BIG = -1e30  # finite "-inf" for padded logit columns


def _cparams():
    return pltpu.CompilerParams(
        dimension_semantics=("parallel",),
        vmem_limit_bytes=32 * 1024 * 1024,
    )


# ------------------ stage 1: conv1 + ReLU + pool1 + conv2 + ReLU ------------------ #
# Patch layout (built by the wrapper):
#   p[b, g*200 + (ph*14+pw), i*5+j] = x_pad2[b, 2*ph+di+i, 2*pw+dj+j]
# with g enumerating the 4 pool offsets (di,dj); each group padded 196->200 rows
# (8-aligned), 25 taps padded to 32 columns. Pool1 = elementwise max of the four
# aligned row groups; conv2 (1x1) = second matmul on the pooled tile.

def _stage1_kernel(p_ref, w1_ref, b1_ref, w2_ref, b2_ref, o_ref):
    p = p_ref[0]                                                    # (800, 32) bf16
    h = jnp.dot(p, w1_ref[...], preferred_element_type=jnp.float32)
    h = jnp.maximum(h + b1_ref[...], 0.0)                           # conv1 + ReLU (f32)
    pooled = jnp.maximum(jnp.maximum(h[0:200], h[200:400]),
                         jnp.maximum(h[400:600], h[600:800]))       # (200, 32) pool1
    h2 = jnp.dot(pooled.astype(jnp.bfloat16), w2_ref[...],
                 preferred_element_type=jnp.float32)
    h2 = jnp.maximum(h2 + b2_ref[...], 0.0)                         # conv2 + ReLU
    o_ref[0] = h2[0:196, :].astype(o_ref.dtype)                     # drop pad rows


def _stage1(p, w1, b1, w2, b2):
    B = p.shape[0]
    return pl.pallas_call(
        _stage1_kernel,
        out_shape=jax.ShapeDtypeStruct((B, 196, 64), jnp.bfloat16),
        grid=(B,),
        in_specs=[
            pl.BlockSpec((1, 800, 32), lambda b: (b, 0, 0)),
            pl.BlockSpec((32, 32), lambda b: (0, 0)),
            pl.BlockSpec((1, 32), lambda b: (0, 0)),
            pl.BlockSpec((32, 64), lambda b: (0, 0)),
            pl.BlockSpec((1, 64), lambda b: (0, 0)),
        ],
        out_specs=pl.BlockSpec((1, 196, 64), lambda b: (b, 0, 0)),
        compiler_params=_cparams(),
    )(p, w1, b1, w2, b2)


def _conv1_pool_patches(x):
    """x: (B, 28, 28) f32 -> (B, 800, 32) bf16 pool-group-major conv1 patches."""
    B = x.shape[0]
    xp = jnp.pad(x, ((0, 0), (2, 2), (2, 2)))                       # (B, 32, 32)
    groups = []
    for di in range(2):
        for dj in range(2):
            taps = [
                xp[:, di + i: di + i + 28: 2, dj + j: dj + j + 28: 2].reshape(B, 196)
                for i in range(5) for j in range(5)
            ]
            g = jnp.stack(taps, axis=-1)                            # (B, 196, 25)
            groups.append(jnp.pad(g, ((0, 0), (0, 4), (0, 7))))     # (B, 200, 32)
    return jnp.concatenate(groups, axis=1).astype(jnp.bfloat16)     # (B, 800, 32)


# ------------------------ stage 2: conv3 + ReLU + pool2 --------------------------- #
# The wrapper pads the (14,14,64) map to 18x18 (pad (1,3)) and splits it into the
# even / odd padded columns, so every tap read in-kernel is a contiguous slice.
# Two accumulators (even / odd output columns) make the W-pool an elementwise max;
# the H-pool is a max over an 8-aligned reshape. Bias/ReLU commute with the max.

def _stage2_kernel(xe_ref, xo_ref, w3_ref, b3_ref, o_ref):
    xe = xe_ref[0]                                                  # (18, 9, 64) bf16
    xo = xo_ref[0]
    xe0, xe1 = xe[:, 0:8, :], xe[:, 1:9, :]
    xo0, xo1 = xo[:, 0:8, :], xo[:, 1:9, :]
    even_srcs = (xe0, xo0, xe1)     # tap j = 0, 1, 2 for even output columns
    odd_srcs = (xo0, xe1, xo1)      # tap j = 0, 1, 2 for odd  output columns
    acc_e = jnp.zeros((128, 64), jnp.float32)
    acc_o = jnp.zeros((128, 64), jnp.float32)
    for i in range(3):
        for j in range(3):
            w_tap = w3_ref[i * 3 + j]                               # (64, 64) bf16
            lhs_e = even_srcs[j][i:i + 16].reshape(128, 64)
            lhs_o = odd_srcs[j][i:i + 16].reshape(128, 64)
            acc_e = acc_e + jnp.dot(lhs_e, w_tap, preferred_element_type=jnp.float32)
            acc_o = acc_o + jnp.dot(lhs_o, w_tap, preferred_element_type=jnp.float32)
    h = jnp.maximum(acc_e, acc_o) + b3_ref[...]                     # W-pool, rows = oh*8+t
    h = h.reshape(8, 2, 8, 64)                                      # oh = 2g + d
    h = jnp.maximum(h[:, 0], h[:, 1])                               # H-pool -> (8, 8, 64)
    h = jnp.maximum(h, 0.0)                                         # ReLU
    o_ref[0] = h.reshape(64, 64).astype(o_ref.dtype)                # row = g*8 + t


def _stage2(xe, xo, w3, b3):
    B = xe.shape[0]
    return pl.pallas_call(
        _stage2_kernel,
        out_shape=jax.ShapeDtypeStruct((B, 64, 64), jnp.bfloat16),
        grid=(B,),
        in_specs=[
            pl.BlockSpec((1, 18, 9, 64), lambda b: (b, 0, 0, 0)),
            pl.BlockSpec((1, 18, 9, 64), lambda b: (b, 0, 0, 0)),
            pl.BlockSpec((9, 64, 64), lambda b: (0, 0, 0)),
            pl.BlockSpec((1, 64), lambda b: (0, 0)),
        ],
        out_specs=pl.BlockSpec((1, 64, 64), lambda b: (b, 0, 0)),
        compiler_params=_cparams(),
    )(xe, xo, w3, b3)


# -------------------- stage 3: fc1 + ReLU + fc2 + log_softmax --------------------- #

def _stage3_kernel(x_ref, w1_ref, b1_ref, w2_ref, b2_ref, o_ref):
    x = x_ref[...]                                                  # (TB, 4096) bf16
    h = jnp.dot(x, w1_ref[...], preferred_element_type=jnp.float32) + b1_ref[...]
    h = jnp.maximum(h, 0.0)
    logits = jnp.dot(h.astype(jnp.bfloat16), w2_ref[...],
                     preferred_element_type=jnp.float32) + b2_ref[...]
    m = jnp.max(logits, axis=-1, keepdims=True)
    lse = m + jnp.log(jnp.sum(jnp.exp(logits - m), axis=-1, keepdims=True))
    o_ref[...] = (logits - lse).astype(o_ref.dtype)


def _stage3(f, w1, b1, w2, b2):
    B = f.shape[0]
    tb = B if B <= 512 else 512
    return pl.pallas_call(
        _stage3_kernel,
        out_shape=jax.ShapeDtypeStruct((B, 128), jnp.float32),
        grid=(pl.cdiv(B, tb),),
        in_specs=[
            pl.BlockSpec((tb, 4096), lambda i: (i, 0)),
            pl.BlockSpec((4096, 128), lambda i: (0, 0)),
            pl.BlockSpec((1, 128), lambda i: (0, 0)),
            pl.BlockSpec((128, 128), lambda i: (0, 0)),
            pl.BlockSpec((1, 128), lambda i: (0, 0)),
        ],
        out_specs=pl.BlockSpec((tb, 128), lambda i: (i, 0)),
        compiler_params=_cparams(),
    )(f, w1, b1, w2, b2)


# ----------------------------------- params --------------------------------------- #

def init_params(key):
    """Deterministic synthetic parameters (PyTorch-default-style uniform init)."""
    def uniform(k, shape, fan_in):
        bound = 1.0 / jnp.sqrt(jnp.float32(fan_in))
        return jax.random.uniform(k, shape, jnp.float32, -bound, bound)

    ks = jax.random.split(key, 10)
    return {
        "w1": uniform(ks[0], (25, 32), 25),        # conv1 5x5x1->32, row = i*5+j
        "b1": uniform(ks[1], (32,), 25),
        "w2": uniform(ks[2], (32, 64), 32),        # conv2 1x1, 32->64
        "b2": uniform(ks[3], (64,), 32),
        "w3": uniform(ks[4], (576, 64), 576),      # conv3 3x3x64->64, row = (i*3+j)*64+ci
        "b3": uniform(ks[5], (64,), 576),
        "wfc1": uniform(ks[6], (3136, 128), 3136),  # torch flatten: row = c*49 + h*7 + w
        "bfc1": uniform(ks[7], (128,), 3136),
        "wfc2": uniform(ks[8], (128, 10), 128),
        "bfc2": uniform(ks[9], (10,), 128),
    }


def _permute_pad_fc1(wfc1):
    """Map torch-flatten rows (c*49+h*7+w) onto kernel feature rows (h*512+w*64+c)."""
    g = jnp.arange(7)[:, None, None]
    t = jnp.arange(7)[None, :, None]
    c = jnp.arange(64)[None, None, :]
    src = (c * 49 + g * 7 + t).reshape(-1)
    dst = (g * 512 + t * 64 + c).reshape(-1)
    out = jnp.zeros((4096, wfc1.shape[1]), wfc1.dtype)
    return out.at[dst].set(wfc1[src])          # rows for padded h==7 / w==7 stay zero


def prepare_params(params):
    return {
        "w1": jnp.pad(params["w1"], ((0, 7), (0, 0))).astype(jnp.bfloat16),   # (32, 32)
        "b1": params["b1"].reshape(1, 32),
        "w2": params["w2"].astype(jnp.bfloat16),                              # (32, 64)
        "b2": params["b2"].reshape(1, 64),
        "w3": params["w3"].reshape(9, 64, 64).astype(jnp.bfloat16),
        "b3": params["b3"].reshape(1, 64),
        "wfc1": _permute_pad_fc1(params["wfc1"]).astype(jnp.bfloat16),        # (4096, 128)
        "bfc1": params["bfc1"].reshape(1, 128),
        "wfc2": jnp.pad(params["wfc2"], ((0, 0), (0, 118))).astype(jnp.bfloat16),  # (128,128)
        "bfc2": jnp.concatenate(
            [params["bfc2"], jnp.full((118,), NEG_BIG, jnp.float32)]).reshape(1, 128),
    }


# ----------------------------------- forward -------------------------------------- #

def forward(x_nchw, kp):
    """DifferentKernelCNN forward. x_nchw: (B, 1, 28, 28) f32 -> (B, 10) f32."""
    B = x_nchw.shape[0]
    x = x_nchw[:, 0, :, :]                                          # Cin = 1

    # stage 1: conv1 + ReLU + pool1 + conv2 + ReLU
    p1 = _conv1_pool_patches(x)                                     # (B, 800, 32) bf16
    h1 = _stage1(p1, kp["w1"], kp["b1"], kp["w2"], kp["b2"])        # (B, 196, 64) bf16
    h1 = h1.reshape(B, 14, 14, 64)

    # stage 2: conv3 input padded to 18x18 (pad (1,3)) and split into even / odd
    # padded columns so the fused conv3+pool kernel only needs contiguous slices.
    xe = jnp.pad(h1[:, :, 1::2, :], ((0, 0), (1, 3), (1, 1), (0, 0)))   # (B, 18, 9, 64)
    xo = jnp.pad(h1[:, :, 0::2, :], ((0, 0), (1, 3), (0, 2), (0, 0)))   # (B, 18, 9, 64)
    f = _stage2(xe, xo, kp["w3"], kp["b3"])                         # (B, 64, 64) bf16
    f = f.reshape(B, 4096)

    # stage 3: fc1 + ReLU + (dropout=identity in eval) + fc2 + log_softmax
    out = _stage3(f, kp["wfc1"], kp["bfc1"], kp["wfc2"], kp["bfc2"])    # (B, 128) f32
    return out[:, :10]


# ------------------------------------- main ---------------------------------------- #

if __name__ == "__main__":
    key = jax.random.PRNGKey(0)
    kx, kparams = jax.random.split(key)

    # MNIST-like input implied by fc1 = Linear(64*7*7, 128) and two 2x2 pools.
    x = jax.random.normal(kx, (2, 1, 28, 28), dtype=jnp.float32)
    params = prepare_params(init_params(kparams))

    out = jax.jit(forward)(x, params)
    out = jax.block_until_ready(out)

    assert out.shape == (2, 10), out.shape
    assert out.dtype == jnp.float32
    # log_softmax sanity: each row's exp() sums to 1
    row_sums = jnp.exp(out).sum(axis=-1)
    assert bool(jnp.all(jnp.abs(row_sums - 1.0) < 1e-3)), row_sums

    print("KERNEL_OK")
</pallas_src>

<mosaic_0001>
module attributes {stable_mosaic.version = 11 : i64} {
  func.func @_stage1_kernel(%arg0: i32, %arg1: memref<1x800x32xbf16, #tpu.memory_space<vmem>>, %arg2: memref<32x32xbf16, #tpu.memory_space<vmem>>, %arg3: memref<1x32xf32, #tpu.memory_space<vmem>>, %arg4: memref<32x64xbf16, #tpu.memory_space<vmem>>, %arg5: memref<1x64xf32, #tpu.memory_space<vmem>>, %arg6: memref<1x196x64xbf16, #tpu.memory_space<vmem>>) attributes {dimension_semantics = [#tpu.dimension_semantics<parallel>], iteration_bounds = array<i64: 2>, scalar_prefetch = 0 : i64, scratch_operands = 0 : i64, tpu.core_type = #tpu.core_type<tc>, window_params = [{transform_indices = @transform_0, window_bounds = array<i64: 1, 800, 32>}, {pipeline_mode = #tpu.pipeline_mode<synchronous>, transform_indices = @transform_1, window_bounds = array<i64: 32, 32>}, {pipeline_mode = #tpu.pipeline_mode<synchronous>, transform_indices = @transform_2, window_bounds = array<i64: 1, 32>}, {pipeline_mode = #tpu.pipeline_mode<synchronous>, transform_indices = @transform_3, window_bounds = array<i64: 32, 64>}, {pipeline_mode = #tpu.pipeline_mode<synchronous>, transform_indices = @transform_4, window_bounds = array<i64: 1, 64>}, {transform_indices = @transform_5, window_bounds = array<i64: 1, 196, 64>}]} {
    %c0 = arith.constant 0 : index
    %c0_0 = arith.constant 0 : index
    %c0_1 = arith.constant 0 : index
    %0 = vector.load %arg1[%c0, %c0_0, %c0_1] : memref<1x800x32xbf16, #tpu.memory_space<vmem>>, vector<1x800x32xbf16>
    %1 = vector.shape_cast %0 : vector<1x800x32xbf16> to vector<800x32xbf16>
    %c0_2 = arith.constant 0 : index
    %c0_3 = arith.constant 0 : index
    %2 = vector.load %arg2[%c0_2, %c0_3] : memref<32x32xbf16, #tpu.memory_space<vmem>>, vector<32x32xbf16>
    %cst = arith.constant dense<0.000000e+00> : vector<800x32xf32>
    %3 = tpu.matmul %1, %2, %cst {dimension_numbers = #tpu.dot_dimension_numbers<[1], [0], [0], [1], [0, 0, 1, 1], [], []>} : vector<800x32xbf16>, vector<32x32xbf16>, vector<800x32xf32> -> vector<800x32xf32>
    %c0_4 = arith.constant 0 : index
    %c0_5 = arith.constant 0 : index
    %4 = vector.load %arg3[%c0_4, %c0_5] : memref<1x32xf32, #tpu.memory_space<vmem>>, vector<1x32xf32>
    %5 = vector.broadcast %4 : vector<1x32xf32> to vector<800x32xf32>
    %6 = arith.addf %3, %5 : vector<800x32xf32>
    %cst_6 = arith.constant 0.000000e+00 : f32
    %7 = vector.broadcast %cst_6 : f32 to vector<800x32xf32>
    %8 = arith.maximumf %6, %7 : vector<800x32xf32>
    %9 = vector.extract_strided_slice %8 {offsets = [0, 0], sizes = [200, 32], strides = [1, 1]} : vector<800x32xf32> to vector<200x32xf32>
    %10 = vector.extract_strided_slice %8 {offsets = [200, 0], sizes = [200, 32], strides = [1, 1]} : vector<800x32xf32> to vector<200x32xf32>
    %11 = arith.maximumf %9, %10 : vector<200x32xf32>
    %12 = vector.extract_strided_slice %8 {offsets = [400, 0], sizes = [200, 32], strides = [1, 1]} : vector<800x32xf32> to vector<200x32xf32>
    %13 = vector.extract_strided_slice %8 {offsets = [600, 0], sizes = [200, 32], strides = [1, 1]} : vector<800x32xf32> to vector<200x32xf32>
    %14 = arith.maximumf %12, %13 : vector<200x32xf32>
    %15 = arith.maximumf %11, %14 : vector<200x32xf32>
    %16 = arith.truncf %15 : vector<200x32xf32> to vector<200x32xbf16>
    %c0_7 = arith.constant 0 : index
    %c0_8 = arith.constant 0 : index
    %17 = vector.load %arg4[%c0_7, %c0_8] : memref<32x64xbf16, #tpu.memory_space<vmem>>, vector<32x64xbf16>
    %cst_9 = arith.constant dense<0.000000e+00> : vector<200x64xf32>
    %18 = tpu.matmul %16, %17, %cst_9 {dimension_numbers = #tpu.dot_dimension_numbers<[1], [0], [0], [1], [0, 0, 1, 1], [], []>} : vector<200x32xbf16>, vector<32x64xbf16>, vector<200x64xf32> -> vector<200x64xf32>
    %c0_10 = arith.constant 0 : index
    %c0_11 = arith.constant 0 : index
    %19 = vector.load %arg5[%c0_10, %c0_11] : memref<1x64xf32, #tpu.memory_space<vmem>>, vector<1x64xf32>
    %20 = vector.broadcast %19 : vector<1x64xf32> to vector<200x64xf32>
    %21 = arith.addf %18, %20 : vector<200x64xf32>
    %cst_12 = arith.constant 0.000000e+00 : f32
    %22 = vector.broadcast %cst_12 : f32 to vector<200x64xf32>
    %23 = arith.maximumf %21, %22 : vector<200x64xf32>
    %24 = vector.extract_strided_slice %23 {offsets = [0, 0], sizes = [196, 64], strides = [1, 1]} : vector<200x64xf32> to vector<196x64xf32>
    %25 = arith.truncf %24 : vector<196x64xf32> to vector<196x64xbf16>
    %c0_13 = arith.constant 0 : index
    %c0_14 = arith.constant 0 : index
    %c0_15 = arith.constant 0 : index
    %26 = vector.load %arg6[%c0_13, %c0_14, %c0_15] : memref<1x196x64xbf16, #tpu.memory_space<vmem>>, vector<1x196x64xbf16>
    %27 = vector.shape_cast %26 : vector<1x196x64xbf16> to vector<196x64xbf16>
    %28 = vector.shape_cast %25 : vector<196x64xbf16> to vector<1x196x64xbf16>
    tpu.vector_store %arg6[%c0_13, %c0_14, %c0_15], %28 {strides = array<i32>} : memref<1x196x64xbf16, #tpu.memory_space<vmem>>, vector<1x196x64xbf16>,
    return
  }
  func.func @transform_0(%arg0: i32) -> (i32, i32, i32) {
    %c0_i32 = arith.constant 0 : i32
    %c0_i32_0 = arith.constant 0 : i32
    %c0_i32_1 = arith.constant 0 : i32
    return %arg0, %c0_i32, %c0_i32_0 : i32, i32, i32
  }
  func.func @transform_1(%arg0: i32) -> (i32, i32) {
    %c0_i32 = arith.constant 0 : i32
    %c0_i32_0 = arith.constant 0 : i32
    %c0_i32_1 = arith.constant 0 : i32
    return %c0_i32, %c0_i32_0 : i32, i32
  }
  func.func @transform_2(%arg0: i32) -> (i32, i32) {
    %c0_i32 = arith.constant 0 : i32
    %c0_i32_0 = arith.constant 0 : i32
    %c0_i32_1 = arith.constant 0 : i32
    return %c0_i32, %c0_i32_0 : i32, i32
  }
  func.func @transform_3(%arg0: i32) -> (i32, i32) {
    %c0_i32 = arith.constant 0 : i32
    %c0_i32_0 = arith.constant 0 : i32
    %c0_i32_1 = arith.constant 0 : i32
    return %c0_i32, %c0_i32_0 : i32, i32
  }
  func.func @transform_4(%arg0: i32) -> (i32, i32) {
    %c0_i32 = arith.constant 0 : i32
    %c0_i32_0 = arith.constant 0 : i32
    %c0_i32_1 = arith.constant 0 : i32
    return %c0_i32, %c0_i32_0 : i32, i32
  }
  func.func @transform_5(%arg0: i32) -> (i32, i32, i32) {
    %c0_i32 = arith.constant 0 : i32
    %c0_i32_0 = arith.constant 0 : i32
    %c0_i32_1 = arith.constant 0 : i32
    return %arg0, %c0_i32, %c0_i32_0 : i32, i32, i32
  }
}

module attributes {stable_mosaic.version = 11 : i64} {
  func.func @_stage2_kernel(%arg0: i32, %arg1: memref<1x18x9x64xbf16, #tpu.memory_space<vmem>>, %arg2: memref<1x18x9x64xbf16, #tpu.memory_space<vmem>>, %arg3: memref<9x64x64xbf16, #tpu.memory_space<vmem>>, %arg4: memref<1x64xf32, #tpu.memory_space<vmem>>, %arg5: memref<1x64x64xbf16, #tpu.memory_space<vmem>>) attributes {dimension_semantics = [#tpu.dimension_semantics<parallel>], iteration_bounds = array<i64: 2>, scalar_prefetch = 0 : i64, scratch_operands = 0 : i64, tpu.core_type = #tpu.core_type<tc>, window_params = [{transform_indices = @transform_0, window_bounds = array<i64: 1, 18, 9, 64>}, {transform_indices = @transform_1, window_bounds = array<i64: 1, 18, 9, 64>}, {pipeline_mode = #tpu.pipeline_mode<synchronous>, transform_indices = @transform_2, window_bounds = array<i64: 9, 64, 64>}, {pipeline_mode = #tpu.pipeline_mode<synchronous>, transform_indices = @transform_3, window_bounds = array<i64: 1, 64>}, {transform_indices = @transform_4, window_bounds = array<i64: 1, 64, 64>}]} {
    %c0 = arith.constant 0 : index
    %c0_0 = arith.constant 0 : index
    %c0_1 = arith.constant 0 : index
    %c0_2 = arith.constant 0 : index
    %0 = vector.load %arg1[%c0, %c0_0, %c0_1, %c0_2] : memref<1x18x9x64xbf16, #tpu.memory_space<vmem>>, vector<1x18x9x64xbf16>
    %1 = vector.shape_cast %0 : vector<1x18x9x64xbf16> to vector<18x9x64xbf16>
    %c0_3 = arith.constant 0 : index
    %c0_4 = arith.constant 0 : index
    %c0_5 = arith.constant 0 : index
    %c0_6 = arith.constant 0 : index
    %2 = vector.load %arg2[%c0_3, %c0_4, %c0_5, %c0_6] : memref<1x18x9x64xbf16, #tpu.memory_space<vmem>>, vector<1x18x9x64xbf16>
    %3 = vector.shape_cast %2 : vector<1x18x9x64xbf16> to vector<18x9x64xbf16>
    %4 = vector.extract_strided_slice %1 {offsets = [0, 0, 0], sizes = [18, 8, 64], strides = [1, 1, 1]} : vector<18x9x64xbf16> to vector<18x8x64xbf16>
    %5 = vector.extract_strided_slice %1 {offsets = [0, 1, 0], sizes = [18, 8, 64], strides = [1, 1, 1]} : vector<18x9x64xbf16> to vector<18x8x64xbf16>
    %6 = vector.extract_strided_slice %3 {offsets = [0, 0, 0], sizes = [18, 8, 64], strides = [1, 1, 1]} : vector<18x9x64xbf16> to vector<18x8x64xbf16>
    %7 = vector.extract_strided_slice %3 {offsets = [0, 1, 0], sizes = [18, 8, 64], strides = [1, 1, 1]} : vector<18x9x64xbf16> to vector<18x8x64xbf16>
    %cst = arith.constant 0.000000e+00 : f32
    %8 = vector.broadcast %cst : f32 to vector<128x64xf32>
    %cst_7 = arith.constant 0.000000e+00 : f32
    %9 = vector.broadcast %cst_7 : f32 to vector<128x64xf32>
    %c0_8 = arith.constant 0 : index
    %c0_9 = arith.constant 0 : index
    %c0_10 = arith.constant 0 : index
    %10 = vector.load %arg3[%c0_8, %c0_9, %c0_10] : memref<9x64x64xbf16, #tpu.memory_space<vmem>>, vector<1x64x64xbf16>
    %11 = vector.shape_cast %10 : vector<1x64x64xbf16> to vector<64x64xbf16>
    %12 = vector.extract_strided_slice %4 {offsets = [0, 0, 0], sizes = [16, 8, 64], strides = [1, 1, 1]} : vector<18x8x64xbf16> to vector<16x8x64xbf16>
    %13 = vector.shape_cast %12 : vector<16x8x64xbf16> to vector<128x64xbf16>
    %14 = vector.extract_strided_slice %6 {offsets = [0, 0, 0], sizes = [16, 8, 64], strides = [1, 1, 1]} : vector<18x8x64xbf16> to vector<16x8x64xbf16>
    %15 = vector.shape_cast %14 : vector<16x8x64xbf16> to vector<128x64xbf16>
    %cst_11 = arith.constant dense<0.000000e+00> : vector<128x64xf32>
    %16 = tpu.matmul %13, %11, %cst_11 {dimension_numbers = #tpu.dot_dimension_numbers<[1], [0], [0], [1], [0, 0, 1, 1], [], []>} : vector<128x64xbf16>, vector<64x64xbf16>, vector<128x64xf32> -> vector<128x64xf32>
    %17 = arith.addf %8, %16 : vector<128x64xf32>
    %cst_12 = arith.constant dense<0.000000e+00> : vector<128x64xf32>
    %18 = tpu.matmul %15, %11, %cst_12 {dimension_numbers = #tpu.dot_dimension_numbers<[1], [0], [0], [1], [0, 0, 1, 1], [], []>} : vector<128x64xbf16>, vector<64x64xbf16>, vector<128x64xf32> -> vector<128x64xf32>
    %19 = arith.addf %9, %18 : vector<128x64xf32>
    %c1 = arith.constant 1 : index
    %c0_13 = arith.constant 0 : index
    %c0_14 = arith.constant 0 : index
    %20 = vector.load %arg3[%c1, %c0_13, %c0_14] : memref<9x64x64xbf16, #tpu.memory_space<vmem>>, vector<1x64x64xbf16>
    %21 = vector.shape_cast %20 : vector<1x64x64xbf16> to vector<64x64xbf16>
    %22 = vector.extract_strided_slice %6 {offsets = [0, 0, 0], sizes = [16, 8, 64], strides = [1, 1, 1]} : vector<18x8x64xbf16> to vector<16x8x64xbf16>
    %23 = vector.shape_cast %22 : vector<16x8x64xbf16> to vector<128x64xbf16>
    %24 = vector.extract_strided_slice %5 {offsets = [0, 0, 0], sizes = [16, 8, 64], strides = [1, 1, 1]} : vector<18x8x64xbf16> to vector<16x8x64xbf16>
    %25 = vector.shape_cast %24 : vector<16x8x64xbf16> to vector<128x64xbf16>
    %cst_15 = arith.constant dense<0.000000e+00> : vector<128x64xf32>
    %26 = tpu.matmul %23, %21, %cst_15 {dimension_numbers = #tpu.dot_dimension_numbers<[1], [0], [0], [1], [0, 0, 1, 1], [], []>} : vector<128x64xbf16>, vector<64x64xbf16>, vector<128x64xf32> -> vector<128x64xf32>
    %27 = arith.addf %17, %26 : vector<128x64xf32>
    %cst_16 = arith.constant dense<0.000000e+00> : vector<128x64xf32>
    %28 = tpu.matmul %25, %21, %cst_16 {dimension_numbers = #tpu.dot_dimension_numbers<[1], [0], [0], [1], [0, 0, 1, 1], [], []>} : vector<128x64xbf16>, vector<64x64xbf16>, vector<128x64xf32> -> vector<128x64xf32>
    %29 = arith.addf %19, %28 : vector<128x64xf32>
    %c2 = arith.constant 2 : index
    %c0_17 = arith.constant 0 : index
    %c0_18 = arith.constant 0 : index
    %30 = vector.load %arg3[%c2, %c0_17, %c0_18] : memref<9x64x64xbf16, #tpu.memory_space<vmem>>, vector<1x64x64xbf16>
    %31 = vector.shape_cast %30 : vector<1x64x64xbf16> to vector<64x64xbf16>
    %32 = vector.extract_strided_slice %5 {offsets = [0, 0, 0], sizes = [16, 8, 64], strides = [1, 1, 1]} : vector<18x8x64xbf16> to vector<16x8x64xbf16>
    %33 = vector.shape_cast %32 : vector<16x8x64xbf16> to vector<128x64xbf16>
    %34 = vector.extract_strided_slice %7 {offsets = [0, 0, 0], sizes = [16, 8, 64], strides = [1, 1, 1]} : vector<18x8x64xbf16> to vector<16x8x64xbf16>
    %35 = vector.shape_cast %34 : vector<16x8x64xbf16> to vector<128x64xbf16>
    %cst_19 = arith.constant dense<0.000000e+00> : vector<128x64xf32>
    %36 = tpu.matmul %33, %31, %cst_19 {dimension_numbers = #tpu.dot_dimension_numbers<[1], [0], [0], [1], [0, 0, 1, 1], [], []>} : vector<128x64xbf16>, vector<64x64xbf16>, vector<128x64xf32> -> vector<128x64xf32>
    %37 = arith.addf %27, %36 : vector<128x64xf32>
    %cst_20 = arith.constant dense<0.000000e+00> : vector<128x64xf32>
    %38 = tpu.matmul %35, %31, %cst_20 {dimension_numbers = #tpu.dot_dimension_numbers<[1], [0], [0], [1], [0, 0, 1, 1], [], []>} : vector<128x64xbf16>, vector<64x64xbf16>, vector<128x64xf32> -> vector<128x64xf32>
    %39 = arith.addf %29, %38 : vector<128x64xf32>
    %c3 = arith.constant 3 : index
    %c0_21 = arith.constant 0 : index
    %c0_22 = arith.constant 0 : index
    %40 = vector.load %arg3[%c3, %c0_21, %c0_22] : memref<9x64x64xbf16, #tpu.memory_space<vmem>>, vector<1x64x64xbf16>
    %41 = vector.shape_cast %40 : vector<1x64x64xbf16> to vector<64x64xbf16>
    %42 = vector.extract_strided_slice %4 {offsets = [1, 0, 0], sizes = [16, 8, 64], strides = [1, 1, 1]} : vector<18x8x64xbf16> to vector<16x8x64xbf16>
    %43 = vector.shape_cast %42 : vector<16x8x64xbf16> to vector<128x64xbf16>
    %44 = vector.extract_strided_slice %6 {offsets = [1, 0, 0], sizes = [16, 8, 64], strides = [1, 1, 1]} : vector<18x8x64xbf16> to vector<16x8x64xbf16>
    %45 = vector.shape_cast %44 : vector<16x8x64xbf16> to vector<128x64xbf16>
    %cst_23 = arith.constant dense<0.000000e+00> : vector<128x64xf32>
    %46 = tpu.matmul %43, %41, %cst_23 {dimension_numbers = #tpu.dot_dimension_numbers<[1], [0], [0], [1], [0, 0, 1, 1], [], []>} : vector<128x64xbf16>, vector<64x64xbf16>, vector<128x64xf32> -> vector<128x64xf32>
    %47 = arith.addf %37, %46 : vector<128x64xf32>
    %cst_24 = arith.constant dense<0.000000e+00> : vector<128x64xf32>
    %48 = tpu.matmul %45, %41, %cst_24 {dimension_numbers = #tpu.dot_dimension_numbers<[1], [0], [0], [1], [0, 0, 1, 1], [], []>} : vector<128x64xbf16>, vector<64x64xbf16>, vector<128x64xf32> -> vector<128x64xf32>
    %49 = arith.addf %39, %48 : vector<128x64xf32>
    %c4 = arith.constant 4 : index
    %c0_25 = arith.constant 0 : index
    %c0_26 = arith.constant 0 : index
    %50 = vector.load %arg3[%c4, %c0_25, %c0_26] : memref<9x64x64xbf16, #tpu.memory_space<vmem>>, vector<1x64x64xbf16>
    %51 = vector.shape_cast %50 : vector<1x64x64xbf16> to vector<64x64xbf16>
    %52 = vector.extract_strided_slice %6 {offsets = [1, 0, 0], sizes = [16, 8, 64], strides = [1, 1, 1]} : vector<18x8x64xbf16> to vector<16x8x64xbf16>
    %53 = vector.shape_cast %52 : vector<16x8x64xbf16> to vector<128x64xbf16>
    %54 = vector.extract_strided_slice %5 {offsets = [1, 0, 0], sizes = [16, 8, 64], strides = [1, 1, 1]} : vector<18x8x64xbf16> to vector<16x8x64xbf16>
    %55 = vector.shape_cast %54 : vector<16x8x64xbf16> to vector<128x64xbf16>
    %cst_27 = arith.constant dense<0.000000e+00> : vector<128x64xf32>
    %56 = tpu.matmul %53, %51, %cst_27 {dimension_numbers = #tpu.dot_dimension_numbers<[1], [0], [0], [1], [0, 0, 1, 1], [], []>} : vector<128x64xbf16>, vector<64x64xbf16>, vector<128x64xf32> -> vector<128x64xf32>
    %57 = arith.addf %47, %56 : vector<128x64xf32>
    %cst_28 = arith.constant dense<0.000000e+00> : vector<128x64xf32>
    %58 = tpu.matmul %55, %51, %cst_28 {dimension_numbers = #tpu.dot_dimension_numbers<[1], [0], [0], [1], [0, 0, 1, 1], [], []>} : vector<128x64xbf16>, vector<64x64xbf16>, vector<128x64xf32> -> vector<128x64xf32>
    %59 = arith.addf %49, %58 : vector<128x64xf32>
    %c5 = arith.constant 5 : index
    %c0_29 = arith.constant 0 : index
    %c0_30 = arith.constant 0 : index
    %60 = vector.load %arg3[%c5, %c0_29, %c0_30] : memref<9x64x64xbf16, #tpu.memory_space<vmem>>, vector<1x64x64xbf16>
    %61 = vector.shape_cast %60 : vector<1x64x64xbf16> to vector<64x64xbf16>
    %62 = vector.extract_strided_slice %5 {offsets = [1, 0, 0], sizes = [16, 8, 64], strides = [1, 1, 1]} : vector<18x8x64xbf16> to vector<16x8x64xbf16>
    %63 = vector.shape_cast %62 : vector<16x8x64xbf16> to vector<128x64xbf16>
    %64 = vector.extract_strided_slice %7 {offsets = [1, 0, 0], sizes = [16, 8, 64], strides = [1, 1, 1]} : vector<18x8x64xbf16> to vector<16x8x64xbf16>
    %65 = vector.shape_cast %64 : vector<16x8x64xbf16> to vector<128x64xbf16>
    %cst_31 = arith.constant dense<0.000000e+00> : vector<128x64xf32>
    %66 = tpu.matmul %63, %61, %cst_31 {dimension_numbers = #tpu.dot_dimension_numbers<[1], [0], [0], [1], [0, 0, 1, 1], [], []>} : vector<128x64xbf16>, vector<64x64xbf16>, vector<128x64xf32> -> vector<128x64xf32>
    %67 = arith.addf %57, %66 : vector<128x64xf32>
    %cst_32 = arith.constant dense<0.000000e+00> : vector<128x64xf32>
    %68 = tpu.matmul %65, %61, %cst_32 {dimension_numbers = #tpu.dot_dimension_numbers<[1], [0], [0], [1], [0, 0, 1, 1], [], []>} : vector<128x64xbf16>, vector<64x64xbf16>, vector<128x64xf32> -> vector<128x64xf32>
    %69 = arith.addf %59, %68 : vector<128x64xf32>
    %c6 = arith.constant 6 : index
    %c0_33 = arith.constant 0 : index
    %c0_34 = arith.constant 0 : index
    %70 = vector.load %arg3[%c6, %c0_33, %c0_34] : memref<9x64x64xbf16, #tpu.memory_space<vmem>>, vector<1x64x64xbf16>
    %71 = vector.shape_cast %70 : vector<1x64x64xbf16> to vector<64x64xbf16>
    %72 = vector.extract_strided_slice %4 {offsets = [2, 0, 0], sizes = [16, 8, 64], strides = [1, 1, 1]} : vector<18x8x64xbf16> to vector<16x8x64xbf16>
    %73 = vector.shape_cast %72 : vector<16x8x64xbf16> to vector<128x64xbf16>
    %74 = vector.extract_strided_slice %6 {offsets = [2, 0, 0], sizes = [16, 8, 64], strides = [1, 1, 1]} : vector<18x8x64xbf16> to vector<16x8x64xbf16>
    %75 = vector.shape_cast %74 : vector<16x8x64xbf16> to vector<128x64xbf16>
    %cst_35 = arith.constant dense<0.000000e+00> : vector<128x64xf32>
    %76 = tpu.matmul %73, %71, %cst_35 {dimension_numbers = #tpu.dot_dimension_numbers<[1], [0], [0], [1], [0, 0, 1, 1], [], []>} : vector<128x64xbf16>, vector<64x64xbf16>, vector<128x64xf32> -> vector<128x64xf32>
    %77 = arith.addf %67, %76 : vector<128x64xf32>
    %cst_36 = arith.constant dense<0.000000e+00> : vector<128x64xf32>
    %78 = tpu.matmul %75, %71, %cst_36 {dimension_numbers = #tpu.dot_dimension_numbers<[1], [0], [0], [1], [0, 0, 1, 1], [], []>} : vector<128x64xbf16>, vector<64x64xbf16>, vector<128x64xf32> -> vector<128x64xf32>
    %79 = arith.addf %69, %78 : vector<128x64xf32>
    %c7 = arith.constant 7 : index
    %c0_37 = arith.constant 0 : index
    %c0_38 = arith.constant 0 : index
    %80 = vector.load %arg3[%c7, %c0_37, %c0_38] : memref<9x64x64xbf16, #tpu.memory_space<vmem>>, vector<1x64x64xbf16>
    %81 = vector.shape_cast %80 : vector<1x64x64xbf16> to vector<64x64xbf16>
    %82 = vector.extract_strided_slice %6 {offsets = [2, 0, 0], sizes = [16, 8, 64], strides = [1, 1, 1]} : vector<18x8x64xbf16> to vector<16x8x64xbf16>
    %83 = vector.shape_cast %82 : vector<16x8x64xbf16> to vector<128x64xbf16>
    %84 = vector.extract_strided_slice %5 {offsets = [2, 0, 0], sizes = [16, 8, 64], strides = [1, 1, 1]} : vector<18x8x64xbf16> to vector<16x8x64xbf16>
    %85 = vector.shape_cast %84 : vector<16x8x64xbf16> to vector<128x64xbf16>
    %cst_39 = arith.constant dense<0.000000e+00> : vector<128x64xf32>
    %86 = tpu.matmul %83, %81, %cst_39 {dimension_numbers = #tpu.dot_dimension_numbers<[1], [0], [0], [1], [0, 0, 1, 1], [], []>} : vector<128x64xbf16>, vector<64x64xbf16>, vector<128x64xf32> -> vector<128x64xf32>
    %87 = arith.addf %77, %86 : vector<128x64xf32>
    %cst_40 = arith.constant dense<0.000000e+00> : vector<128x64xf32>
    %88 = tpu.matmul %85, %81, %cst_40 {dimension_numbers = #tpu.dot_dimension_numbers<[1], [0], [0], [1], [0, 0, 1, 1], [], []>} : vector<128x64xbf16>, vector<64x64xbf16>, vector<128x64xf32> -> vector<128x64xf32>
    %89 = arith.addf %79, %88 : vector<128x64xf32>
    %c8 = arith.constant 8 : index
    %c0_41 = arith.constant 0 : index
    %c0_42 = arith.constant 0 : index
    %90 = vector.load %arg3[%c8, %c0_41, %c0_42] : memref<9x64x64xbf16, #tpu.memory_space<vmem>>, vector<1x64x64xbf16>
    %91 = vector.shape_cast %90 : vector<1x64x64xbf16> to vector<64x64xbf16>
    %92 = vector.extract_strided_slice %5 {offsets = [2, 0, 0], sizes = [16, 8, 64], strides = [1, 1, 1]} : vector<18x8x64xbf16> to vector<16x8x64xbf16>
    %93 = vector.shape_cast %92 : vector<16x8x64xbf16> to vector<128x64xbf16>
    %94 = vector.extract_strided_slice %7 {offsets = [2, 0, 0], sizes = [16, 8, 64], strides = [1, 1, 1]} : vector<18x8x64xbf16> to vector<16x8x64xbf16>
    %95 = vector.shape_cast %94 : vector<16x8x64xbf16> to vector<128x64xbf16>
    %cst_43 = arith.constant dense<0.000000e+00> : vector<128x64xf32>
    %96 = tpu.matmul %93, %91, %cst_43 {dimension_numbers = #tpu.dot_dimension_numbers<[1], [0], [0], [1], [0, 0, 1, 1], [], []>} : vector<128x64xbf16>, vector<64x64xbf16>, vector<128x64xf32> -> vector<128x64xf32>
    %97 = arith.addf %87, %96 : vector<128x64xf32>
    %cst_44 = arith.constant dense<0.000000e+00> : vector<128x64xf32>
    %98 = tpu.matmul %95, %91, %cst_44 {dimension_numbers = #tpu.dot_dimension_numbers<[1], [0], [0], [1], [0, 0, 1, 1], [], []>} : vector<128x64xbf16>, vector<64x64xbf16>, vector<128x64xf32> -> vector<128x64xf32>
    %99 = arith.addf %89, %98 : vector<128x64xf32>
    %100 = arith.maximumf %97, %99 : vector<128x64xf32>
    %c0_45 = arith.constant 0 : index
    %c0_46 = arith.constant 0 : index
    %101 = vector.load %arg4[%c0_45, %c0_46] : memref<1x64xf32, #tpu.memory_space<vmem>>, vector<1x64xf32>
    %102 = vector.broadcast %101 : vector<1x64xf32> to vector<128x64xf32>
    %103 = arith.addf %100, %102 : vector<128x64xf32>
    %104 = vector.shape_cast %103 : vector<128x64xf32> to vector<8x2x8x64xf32>
    %105 = vector.extract_strided_slice %104 {offsets = [0, 0, 0, 0], sizes = [8, 1, 8, 64], strides = [1, 1, 1, 1]} : vector<8x2x8x64xf32> to vector<8x1x8x64xf32>
    %106 = vector.shape_cast %105 : vector<8x1x8x64xf32> to vector<8x8x64xf32>
    %107 = vector.extract_strided_slice %104 {offsets = [0, 1, 0, 0], sizes = [8, 1, 8, 64], strides = [1, 1, 1, 1]} : vector<8x2x8x64xf32> to vector<8x1x8x64xf32>
    %108 = vector.shape_cast %107 : vector<8x1x8x64xf32> to vector<8x8x64xf32>
    %109 = arith.maximumf %106, %108 : vector<8x8x64xf32>
    %cst_47 = arith.constant 0.000000e+00 : f32
    %110 = vector.broadcast %cst_47 : f32 to vector<8x8x64xf32>
    %111 = arith.maximumf %109, %110 : vector<8x8x64xf32>
    %112 = vector.shape_cast %111 : vector<8x8x64xf32> to vector<64x64xf32>
    %113 = arith.truncf %112 : vector<64x64xf32> to vector<64x64xbf16>
    %c0_48 = arith.constant 0 : index
    %c0_49 = arith.constant 0 : index
    %c0_50 = arith.constant 0 : index
    %114 = vector.load %arg5[%c0_48, %c0_49, %c0_50] : memref<1x64x64xbf16, #tpu.memory_space<vmem>>, vector<1x64x64xbf16>
    %115 = vector.shape_cast %114 : vector<1x64x64xbf16> to vector<64x64xbf16>
    %116 = vector.shape_cast %113 : vector<64x64xbf16> to vector<1x64x64xbf16>
    tpu.vector_store %arg5[%c0_48, %c0_49, %c0_50], %116 {strides = array<i32>} : memref<1x64x64xbf16, #tpu.memory_space<vmem>>, vector<1x64x64xbf16>,
    return
  }
  func.func @transform_0(%arg0: i32) -> (i32, i32, i32, i32) {
    %c0_i32 = arith.constant 0 : i32
    %c0_i32_0 = arith.constant 0 : i32
    %c0_i32_1 = arith.constant 0 : i32
    %c0_i32_2 = arith.constant 0 : i32
    return %arg0, %c0_i32, %c0_i32_0, %c0_i32_1 : i32, i32, i32, i32
  }
  func.func @transform_1(%arg0: i32) -> (i32, i32, i32, i32) {
    %c0_i32 = arith.constant 0 : i32
    %c0_i32_0 = arith.constant 0 : i32
    %c0_i32_1 = arith.constant 0 : i32
    %c0_i32_2 = arith.constant 0 : i32
    return %arg0, %c0_i32, %c0_i32_0, %c0_i32_1 : i32, i32, i32, i32
  }
  func.func @transform_2(%arg0: i32) -> (i32, i32, i32) {
    %c0_i32 = arith.constant 0 : i32
    %c0_i32_0 = arith.constant 0 : i32
    %c0_i32_1 = arith.constant 0 : i32
    %c0_i32_2 = arith.constant 0 : i32
    return %c0_i32, %c0_i32_0, %c0_i32_1 : i32, i32, i32
  }
  func.func @transform_3(%arg0: i32) -> (i32, i32) {
    %c0_i32 = arith.constant 0 : i32
    %c0_i32_0 = arith.constant 0 : i32
    %c0_i32_1 = arith.constant 0 : i32
    return %c0_i32, %c0_i32_0 : i32, i32
  }
  func.func @transform_4(%arg0: i32) -> (i32, i32, i32) {
    %c0_i32 = arith.constant 0 : i32
    %c0_i32_0 = arith.constant 0 : i32
    %c0_i32_1 = arith.constant 0 : i32
    return %arg0, %c0_i32, %c0_i32_0 : i32, i32, i32
  }
}

module attributes {stable_mosaic.version = 11 : i64} {
  func.func @_stage3_kernel(%arg0: i32, %arg1: memref<2x4096xbf16, #tpu.memory_space<vmem>>, %arg2: memref<4096x128xbf16, #tpu.memory_space<vmem>>, %arg3: memref<1x128xf32, #tpu.memory_space<vmem>>, %arg4: memref<128x128xbf16, #tpu.memory_space<vmem>>, %arg5: memref<1x128xf32, #tpu.memory_space<vmem>>, %arg6: memref<2x128xf32, #tpu.memory_space<vmem>>) attributes {dimension_semantics = [#tpu.dimension_semantics<parallel>], iteration_bounds = array<i64: 1>, scalar_prefetch = 0 : i64, scratch_operands = 0 : i64, tpu.core_type = #tpu.core_type<tc>, window_params = [{transform_indices = @transform_0, window_bounds = array<i64: 2, 4096>}, {pipeline_mode = #tpu.pipeline_mode<synchronous>, transform_indices = @transform_1, window_bounds = array<i64: 4096, 128>}, {pipeline_mode = #tpu.pipeline_mode<synchronous>, transform_indices = @transform_2, window_bounds = array<i64: 1, 128>}, {pipeline_mode = #tpu.pipeline_mode<synchronous>, transform_indices = @transform_3, window_bounds = array<i64: 128, 128>}, {pipeline_mode = #tpu.pipeline_mode<synchronous>, transform_indices = @transform_4, window_bounds = array<i64: 1, 128>}, {transform_indices = @transform_5, window_bounds = array<i64: 2, 128>}]} {
    %c0 = arith.constant 0 : index
    %c0_0 = arith.constant 0 : index
    %0 = vector.load %arg1[%c0, %c0_0] : memref<2x4096xbf16, #tpu.memory_space<vmem>>, vector<2x4096xbf16>
    %c0_1 = arith.constant 0 : index
    %c0_2 = arith.constant 0 : index
    %1 = vector.load %arg2[%c0_1, %c0_2] : memref<4096x128xbf16, #tpu.memory_space<vmem>>, vector<4096x128xbf16>
    %cst = arith.constant dense<0.000000e+00> : vector<2x128xf32>
    %2 = tpu.matmul %0, %1, %cst {dimension_numbers = #tpu.dot_dimension_numbers<[1], [0], [0], [1], [0, 0, 1, 1], [], []>} : vector<2x4096xbf16>, vector<4096x128xbf16>, vector<2x128xf32> -> vector<2x128xf32>
    %c0_3 = arith.constant 0 : index
    %c0_4 = arith.constant 0 : index
    %3 = vector.load %arg3[%c0_3, %c0_4] : memref<1x128xf32, #tpu.memory_space<vmem>>, vector<1x128xf32>
    %4 = vector.broadcast %3 : vector<1x128xf32> to vector<2x128xf32>
    %5 = arith.addf %2, %4 : vector<2x128xf32>
    %cst_5 = arith.constant 0.000000e+00 : f32
    %6 = vector.broadcast %cst_5 : f32 to vector<2x128xf32>
    %7 = arith.maximumf %5, %6 : vector<2x128xf32>
    %8 = arith.truncf %7 : vector<2x128xf32> to vector<2x128xbf16>
    %c0_6 = arith.constant 0 : index
    %c0_7 = arith.constant 0 : index
    %9 = vector.load %arg4[%c0_6, %c0_7] : memref<128x128xbf16, #tpu.memory_space<vmem>>, vector<128x128xbf16>
    %cst_8 = arith.constant dense<0.000000e+00> : vector<2x128xf32>
    %10 = tpu.matmul %8, %9, %cst_8 {dimension_numbers = #tpu.dot_dimension_numbers<[1], [0], [0], [1], [0, 0, 1, 1], [], []>} : vector<2x128xbf16>, vector<128x128xbf16>, vector<2x128xf32> -> vector<2x128xf32>
    %c0_9 = arith.constant 0 : index
    %c0_10 = arith.constant 0 : index
    %11 = vector.load %arg5[%c0_9, %c0_10] : memref<1x128xf32, #tpu.memory_space<vmem>>, vector<1x128xf32>
    %12 = vector.broadcast %11 : vector<1x128xf32> to vector<2x128xf32>
    %13 = arith.addf %10, %12 : vector<2x128xf32>
    %cst_11 = arith.constant dense<0xFF800000> : vector<2xf32>
    %14 = vector.multi_reduction <maximumf>, %13, %cst_11 [1] : vector<2x128xf32> to vector<2xf32>
    %15 = vector.shape_cast %14 : vector<2xf32> to vector<2x1xf32>
    %16 = vector.broadcast %15 : vector<2x1xf32> to vector<2x128xf32>
    %17 = arith.subf %13, %16 : vector<2x128xf32>
    %18 = math.exp %17 : vector<2x128xf32>
    %cst_12 = arith.constant dense<0.000000e+00> : vector<2xf32>
    %19 = vector.multi_reduction <add>, %18, %cst_12 [1] : vector<2x128xf32> to vector<2xf32>
    %20 = vector.shape_cast %19 : vector<2xf32> to vector<2x1xf32>
    %21 = math.log %20 : vector<2x1xf32>
    %22 = arith.addf %15, %21 : vector<2x1xf32>
    %23 = vector.broadcast %22 : vector<2x1xf32> to vector<2x128xf32>
    %24 = arith.subf %13, %23 : vector<2x128xf32>
    %c0_13 = arith.constant 0 : index
    %c0_14 = arith.constant 0 : index
    %25 = vector.load %arg6[%c0_13, %c0_14] : memref<2x128xf32, #tpu.memory_space<vmem>>, vector<2x128xf32>
    tpu.vector_store %arg6[%c0_13, %c0_14], %24 {strides = array<i32>} : memref<2x128xf32, #tpu.memory_space<vmem>>, vector<2x128xf32>,
    return
  }
  func.func @transform_0(%arg0: i32) -> (i32, i32) {
    %c0_i32 = arith.constant 0 : i32
    %c0_i32_0 = arith.constant 0 : i32
    return %arg0, %c0_i32 : i32, i32
  }
  func.func @transform_1(%arg0: i32) -> (i32, i32) {
    %c0_i32 = arith.constant 0 : i32
    %c0_i32_0 = arith.constant 0 : i32
    %c0_i32_1 = arith.constant 0 : i32
    return %c0_i32, %c0_i32_0 : i32, i32
  }
  func.func @transform_2(%arg0: i32) -> (i32, i32) {
    %c0_i32 = arith.constant 0 : i32
    %c0_i32_0 = arith.constant 0 : i32
    %c0_i32_1 = arith.constant 0 : i32
    return %c0_i32, %c0_i32_0 : i32, i32
  }
  func.func @transform_3(%arg0: i32) -> (i32, i32) {
    %c0_i32 = arith.constant 0 : i32
    %c0_i32_0 = arith.constant 0 : i32
    %c0_i32_1 = arith.constant 0 : i32
    return %c0_i32, %c0_i32_0 : i32, i32
  }
  func.func @transform_4(%arg0: i32) -> (i32, i32) {
    %c0_i32 = arith.constant 0 : i32
    %c0_i32_0 = arith.constant 0 : i32
    %c0_i32_1 = arith.constant 0 : i32
    return %c0_i32, %c0_i32_0 : i32, i32
  }
  func.func @transform_5(%arg0: i32) -> (i32, i32) {
    %c0_i32 = arith.constant 0 : i32
    %c0_i32_0 = arith.constant 0 : i32
    return %arg0, %c0_i32 : i32, i32
  }
}

</mosaic_0001>

<llo_original>
// kernel: forward.3
$region0: #{forward.3}
  #allocation0 [shape = 'u32[]', space=smem, size = 0x4, offset = 0x4, fixed_abs, tag = 'smem constant byte address 0x4 - core index']
  #allocation1 [shape = 'u32[144,128]{1,0:T(1,128)}', space=vmem, size = 0x12000, scoped, tag = 'internal scratch']
  %s0 = inlined_call_operand.vmem [shape: bf16[2,800,32], index: 0, kind: input, shape index: {}]
  %s1 = inlined_call_operand.vmem [shape: bf16[32,32], index: 1, kind: input, shape index: {}]
  %s2 = inlined_call_operand.vmem [shape: f32[1,32], index: 2, kind: input, shape index: {}]
  %s3 = inlined_call_operand.vmem [shape: bf16[32,64], index: 3, kind: input, shape index: {}]
  %s4 = inlined_call_operand.vmem [shape: f32[1,64], index: 4, kind: input, shape index: {}]
  %s5 = inlined_call_operand.vmem [shape: bf16[2,196,64], index: 5, kind: output, shape index: {}]
  %s6 = sld [smem:[#allocation0]]
  $region53: #{forward.3} parent=0
    _
  %s8 = ssub.s32 1, %s6
  %s9 = scalar_select 0, %s8, %s6
  loop: start=0, step=1, limit=4
  $region2: #{forward.3} parent=0 // loop_pre_header
    _
  $region3: #{forward.3} parent=0 // loop_header
    %s11 = sphi 0, %s15
    %p12 = scmp.ge.s32.totalorder %s11, 4
    %s21 = sphi 0, %s23
    %s24 = sphi 0, %s21
    %s25 = sphi 0, %s24
    %s41 = sphi 0, %s25
    %s45 = sphi 0, %s45
    %s47 = sphi 0, %s45
    %s48 = sphi 0, %s47
    %s62 = sphi 0, %s48
    %s66 = sphi 0, %s66
    %s68 = sphi 0, %s66
    %s69 = sphi 0, %s68
    %s83 = sphi 0, %s69
    %s87 = sphi 0, %s87
    %s89 = sphi 0, %s87
    %s90 = sphi 0, %s89
    %s104 = sphi 0, %s90
    %s108 = sphi 0, %s108
    %s110 = sphi 0, %s108
    %s111 = sphi 0, %s110
    %s125 = sphi 0, %s111
    %s131 = sphi 0, %s133
    %s134 = sphi 0, %s131
    %s135 = sphi 0, %s134
    %s151 = sphi 0, %s135
  $region4: #{forward.3} parent=0 // loop_header_branch
    %14 = sbr.rel (%p12) target = $region8
  $region5: #{forward.3} parent=0 // loop_body
    %s16 = ssub.s32 %s11, 1
    %s17 = ssub.s32 %s11, 2
    %s18 = sadd.s32 %s11, 1
    %s19 = ssub.s32 %s11, %s18
    %p20 = scmp.eq.s32.totalorder %s19, 0
    %s22 = sadd.s32 %s21, 1
    %s23 = scalar_select %p20, %s21, %s22
    %p26 = pneg %p20
    %p27 = scmp.eq.s32.totalorder %s11, 1
    %p28 = por %p26, %p27
    %p29 = scmp.ne.s32.totalorder %s21, %s24
    %p30 = scmp.eq.s32.totalorder %s11, 0
    %p31 = por %p29, %p30
    %p32 = scmp.ne.s32.totalorder %s21, %s24
    %p33 = scmp.eq.s32.totalorder %s16, 1
    %p34 = por %p32, %p33
    %p35 = scmp.ne.s32.totalorder %s24, %s25
    %p36 = scmp.eq.s32.totalorder %s16, 0
    %p37 = por %p35, %p36
    %p38 = scmp.ne.s32.totalorder %s24, %s25
    %p39 = scmp.eq.s32.totalorder %s17, 1
    %p40 = por %p38, %p39
    %p42 = scmp.ne.s32.totalorder %s25, %s41
    %p43 = scmp.eq.s32.totalorder %s17, 0
    %p44 = por %p42, %p43
    %s46 = sadd.s32 %s45, 1
    %p49 = scmp.eq.s32.totalorder %s11, 1
    %p50 = scmp.ne.s32.totalorder %s45, %s47
    %p51 = scmp.eq.s32.totalorder %s11, 0
    %p52 = por %p50, %p51
    %p53 = scmp.ne.s32.totalorder %s45, %s47
    %p54 = scmp.eq.s32.totalorder %s16, 1
    %p55 = por %p53, %p54
    %p56 = scmp.ne.s32.totalorder %s47, %s48
    %p57 = scmp.eq.s32.totalorder %s16, 0
    %p58 = por %p56, %p57
    %p59 = scmp.ne.s32.totalorder %s47, %s48
    %p60 = scmp.eq.s32.totalorder %s17, 1
    %p61 = por %p59, %p60
    %p63 = scmp.ne.s32.totalorder %s48, %s62
    %p64 = scmp.eq.s32.totalorder %s17, 0
    %p65 = por %p63, %p64
    %s67 = sadd.s32 %s66, 1
    %p70 = scmp.eq.s32.totalorder %s11, 1
    %p71 = scmp.ne.s32.totalorder %s66, %s68
    %p72 = scmp.eq.s32.totalorder %s11, 0
    %p73 = por %p71, %p72
    %p74 = scmp.ne.s32.totalorder %s66, %s68
    %p75 = scmp.eq.s32.totalorder %s16, 1
    %p76 = por %p74, %p75
    %p77 = scmp.ne.s32.totalorder %s68, %s69
    %p78 = scmp.eq.s32.totalorder %s16, 0
    %p79 = por %p77, %p78
    %p80 = scmp.ne.s32.totalorder %s68, %s69
    %p81 = scmp.eq.s32.totalorder %s17, 1
    %p82 = por %p80, %p81
    %p84 = scmp.ne.s32.totalorder %s69, %s83
    %p85 = scmp.eq.s32.totalorder %s17, 0
    %p86 = por %p84, %p85
    %s88 = sadd.s32 %s87, 1
    %p91 = scmp.eq.s32.totalorder %s11, 1
    %p92 = scmp.ne.s32.totalorder %s87, %s89
    %p93 = scmp.eq.s32.totalorder %s11, 0
    %p94 = por %p92, %p93
    %p95 = scmp.ne.s32.totalorder %s87, %s89
    %p96 = scmp.eq.s32.totalorder %s16, 1
    %p97 = por %p95, %p96
    %p98 = scmp.ne.s32.totalorder %s89, %s90
    %p99 = scmp.eq.s32.totalorder %s16, 0
    %p100 = por %p98, %p99
    %p101 = scmp.ne.s32.totalorder %s89, %s90
    %p102 = scmp.eq.s32.totalorder %s17, 1
    %p103 = por %p101, %p102
    %p105 = scmp.ne.s32.totalorder %s90, %s104
    %p106 = scmp.eq.s32.totalorder %s17, 0
    %p107 = por %p105, %p106
    %s109 = sadd.s32 %s108, 1
    %p112 = scmp.eq.s32.totalorder %s11, 1
    %p113 = scmp.ne.s32.totalorder %s108, %s110
    %p114 = scmp.eq.s32.totalorder %s11, 0
    %p115 = por %p113, %p114
    %p116 = scmp.ne.s32.totalorder %s108, %s110
    %p117 = scmp.eq.s32.totalorder %s16, 1
    %p118 = por %p116, %p117
    %p119 = scmp.ne.s32.totalorder %s110, %s111
    %p120 = scmp.eq.s32.totalorder %s16, 0
    %p121 = por %p119, %p120
    %p122 = scmp.ne.s32.totalorder %s110, %s111
    %p123 = scmp.eq.s32.totalorder %s17, 1
    %p124 = por %p122, %p123
    %p126 = scmp.ne.s32.totalorder %s111, %s125
    %p127 = scmp.eq.s32.totalorder %s17, 0
    %p128 = por %p126, %p127
    %s129 = ssub.s32 %s11, %s18
    %p130 = scmp.eq.s32.totalorder %s129, 0
    %s132 = sadd.s32 %s131, 1
    %s133 = scalar_select %p130, %s131, %s132
    %p136 = pneg %p130
    %p137 = scmp.eq.s32.totalorder %s11, 1
    %p138 = por %p136, %p137
    %p139 = scmp.ne.s32.totalorder %s131, %s134
    %p140 = scmp.eq.s32.totalorder %s11, 0
    %p141 = por %p139, %p140
    %p142 = scmp.ne.s32.totalorder %s131, %s134
    %p143 = scmp.eq.s32.totalorder %s16, 1
    %p144 = por %p142, %p143
    %p145 = scmp.ne.s32.totalorder %s134, %s135
    %p146 = scmp.eq.s32.totalorder %s16, 0
    %p147 = por %p145, %p146
    %p148 = scmp.ne.s32.totalorder %s134, %s135
    %p149 = scmp.eq.s32.totalorder %s17, 1
    %p150 = por %p148, %p149
    %p152 = scmp.ne.s32.totalorder %s135, %s151
    %p153 = scmp.eq.s32.totalorder %s17, 0
    %p154 = por %p152, %p153
    %p155 = scmp.le.s32.totalorder 1, %s11
    %p156 = scmp.lt.s32.totalorder %s11, 3
    %p157 = pnand %p155, %p156
    %p158 = pneg %p157
    // Predicated region
    $region9: #{forward.3} parent=5 // pred_check
      _
    $region10: #{forward.3} parent=5 // pred_check_branch
      %160 = sbr.rel (%p157) target = $region12
    $region11: #{forward.3} parent=5 // pred_region
      %s161 = ssub.s32 %s11, 1
      // Predicated region
      $region13: #{forward.3} parent=11 // pred_check
        %p162 = pneg %p58
      $region14: #{forward.3} parent=11 // pred_check_branch
        %164 = sbr.rel (%p162) target = $region16
      $region15: #{forward.3} parent=11 // pred_region
        _
      $region16: #{forward.3} parent=11 // pred_fallthru
        _
      // Predicated region
      $region17: #{forward.3} parent=11 // pred_check
        %p165 = pneg %p79
      $region18: #{forward.3} parent=11 // pred_check_branch
        %167 = sbr.rel (%p165) target = $region20
      $region19: #{forward.3} parent=11 // pred_region
        _
      $region20: #{forward.3} parent=11 // pred_fallthru
        _
      // Predicated region
      $region21: #{forward.3} parent=11 // pred_check
        %p168 = pneg %p100
      $region22: #{forward.3} parent=11 // pred_check_branch
        %170 = sbr.rel (%p168) target = $region24
      $region23: #{forward.3} parent=11 // pred_region
        _
      $region24: #{forward.3} parent=11 // pred_fallthru
        _
      // Predicated region
      $region25: #{forward.3} parent=11 // pred_check
        %p171 = pneg %p121
      $region26: #{forward.3} parent=11 // pred_check_branch
        %173 = sbr.rel (%p171) target = $region28
      $region27: #{forward.3} parent=11 // pred_region
        _
      $region28: #{forward.3} parent=11 // pred_fallthru
        _
    $region12: #{forward.3} parent=5 // pred_fallthru
      _
    %p174 = scmp.lt.s32.totalorder %s11, 2
    // Predicated region
    $region29: #{forward.3} parent=5 // pred_check
      %p175 = pneg %p174
    $region30: #{forward.3} parent=5 // pred_check_branch
      %177 = sbr.rel (%p175) target = $region32
    $region31: #{forward.3} parent=5 // pred_region
      // Predicated region
      $region33: #{forward.3} parent=31 // pred_check
        %p178 = pneg %p31
      $region34: #{forward.3} parent=31 // pred_check_branch
        %180 = sbr.rel (%p178) target = $region36
      $region35: #{forward.3} parent=31 // pred_region
        %p181 = scmp.lt.s32.totalorder %s11, 1
        %s182 = scalar_select %p181, %s11, 1
        %s183 = smul.addr %s182, 100
        %s184 = smul.addr %s183, 4
        %s185 = scalar_lea.vmem %s0, %s184
      $region36: #{forward.3} parent=31 // pred_fallthru
        _
    $region32: #{forward.3} parent=5 // pred_fallthru
      _
    %p186 = scmp.le.s32.totalorder 1, %s11
    %p187 = scmp.lt.s32.totalorder %s11, 3
    %p188 = pnand %p186, %p187
    %p189 = pneg %p188
    // Predicated region
    $region37: #{forward.3} parent=5 // pred_check
      _
    $region38: #{forward.3} parent=5 // pred_check_branch
      %191 = sbr.rel (%p188) target = $region40
    $region39: #{forward.3} parent=5 // pred_region
      %s192 = ssub.s32 %s11, 1
      %p193 = scmp.lt.s32.totalorder %s16, 1
      %s194 = scalar_select %p193, %s16, 1
      %s195 = smul.addr %s194, 100
      %s196 = smul.addr %s195, 4
      %s197 = scalar_lea.vmem %s0, %s196
      %p198 = pneg %p37
      %p199 = pneg %p34
      %p200 = pneg %p58
      %p201 = pneg %p55
      %p202 = pneg %p79
      %p203 = pneg %p76
      %p204 = pneg %p100
      %p205 = pneg %p97
      %p206 = pneg %p121
      %p207 = pneg %p118
      %p208 = pneg %p147
      %p209 = pneg %p144
      %p210 = scmp.lt.s32.totalorder %s16, 1
      %s211 = scalar_select %p210, %s16, 1
      %s212 = smul.addr %s211, 25
      %s213 = smul.addr %s212, 4
      %s214 = scalar_lea.vmem %s5, %s213
      %p215 = scmp.lt.s32.totalorder %s16, 1
      %s216 = scalar_select %p215, %s16, 1
      %s217 = smul.addr %s216, 100
      %s218 = smul.addr %s217, 4
      %s219 = scalar_lea.vmem %s0, %s218
      %p220 = scmp.lt.s32.totalorder %s16, 1
      %s221 = scalar_select %p220, %s16, 1
      %s222 = smul.addr %s221, 25
      %s223 = smul.addr %s222, 4
      %s224 = scalar_lea.vmem %s5, %s223
      %v226 = vld [vmem:[%s219] sm:$0xf]
      %v227 = vld [vmem:[%s219 + $0x4] sm:$0xf]
      %v228 = vld [vmem:[%s219 + $0x8] sm:$0xf]
      %v229 = vld [vmem:[%s219 + $0xc] sm:$0xf]
      %v230 = vld [vmem:[%s219 + $0x10] sm:$0xf]
      %v231 = vld [vmem:[%s219 + $0x14] sm:$0xf]
      %v232 = vld [vmem:[%s219 + $0x18] sm:$0xf]
      %v233 = vld [vmem:[%s219 + $0x1c] sm:$0xf]
      %v234 = vld [vmem:[%s219 + $0x20] sm:$0xf]
      %v235 = vld [vmem:[%s219 + $0x24] sm:$0xf]
      %v236 = vld [vmem:[%s219 + $0x28] sm:$0xf]
      %v237 = vld [vmem:[%s219 + $0x2c] sm:$0xf]
      %v238 = vld [vmem:[%s219 + $0x30] sm:$0xf]
      %v239 = vld [vmem:[%s219 + $0x34] sm:$0xf]
      %v240 = vld [vmem:[%s219 + $0x38] sm:$0xf]
      %v241 = vld [vmem:[%s219 + $0x3c] sm:$0xf]
      %v242 = vld [vmem:[%s219 + $0x40] sm:$0xf]
      %v243 = vld [vmem:[%s219 + $0x44] sm:$0xf]
      %v244 = vld [vmem:[%s219 + $0x48] sm:$0xf]
      %v245 = vld [vmem:[%s219 + $0x4c] sm:$0xf]
      %v246 = vld [vmem:[%s219 + $0x50] sm:$0xf]
      %v247 = vld [vmem:[%s219 + $0x54] sm:$0xf]
      %v248 = vld [vmem:[%s219 + $0x58] sm:$0xf]
      %v249 = vld [vmem:[%s219 + $0x5c] sm:$0xf]
      %v250 = vld [vmem:[%s219 + $0x60] sm:$0xf]
      %v251 = vld [vmem:[%s219 + $0x64] sm:$0xf]
      %v252 = vld [vmem:[%s219 + $0x68] sm:$0xf]
      %v253 = vld [vmem:[%s219 + $0x6c] sm:$0xf]
      %v254 = vld [vmem:[%s219 + $0x70] sm:$0xf]
      %v255 = vld [vmem:[%s219 + $0x74] sm:$0xf]
      %v256 = vld [vmem:[%s219 + $0x78] sm:$0xf]
      %v257 = vld [vmem:[%s219 + $0x7c] sm:$0xf]
      %v258 = vld [vmem:[%s219 + $0x80] sm:$0xf]
      %v259 = vld [vmem:[%s219 + $0x84] sm:$0xf]
      %v260 = vld [vmem:[%s219 + $0x88] sm:$0xf]
      %v261 = vld [vmem:[%s219 + $0x8c] sm:$0xf]
      %v262 = vld [vmem:[%s219 + $0x90] sm:$0xf]
      %v263 = vld [vmem:[%s219 + $0x94] sm:$0xf]
      %v264 = vld [vmem:[%s219 + $0x98] sm:$0xf]
      %v265 = vld [vmem:[%s219 + $0x9c] sm:$0xf]
      %v266 = vld [vmem:[%s219 + $0xa0] sm:$0xf]
      %v267 = vld [vmem:[%s219 + $0xa4] sm:$0xf]
      %v268 = vld [vmem:[%s219 + $0xa8] sm:$0xf]
      %v269 = vld [vmem:[%s219 + $0xac] sm:$0xf]
      %v270 = vld [vmem:[%s219 + $0xb0] sm:$0xf]
      %v271 = vld [vmem:[%s219 + $0xb4] sm:$0xf]
      %v272 = vld [vmem:[%s219 + $0xb8] sm:$0xf]
      %v273 = vld [vmem:[%s219 + $0xbc] sm:$0xf]
      %v274 = vld [vmem:[%s219 + $0xc0] sm:$0xf]
      %v275 = vld [vmem:[%s219 + $0xc4] sm:$0xf]
      %v276 = vld [vmem:[%s219 + $0xc8] sm:$0xf]
      %v277 = vld [vmem:[%s219 + $0xcc] sm:$0xf]
      %v278 = vld [vmem:[%s219 + $0xd0] sm:$0xf]
      %v279 = vld [vmem:[%s219 + $0xd4] sm:$0xf]
      %v280 = vld [vmem:[%s219 + $0xd8] sm:$0xf]
      %v281 = vld [vmem:[%s219 + $0xdc] sm:$0xf]
      %v282 = vld [vmem:[%s219 + $0xe0] sm:$0xf]
      %v283 = vld [vmem:[%s219 + $0xe4] sm:$0xf]
      %v284 = vld [vmem:[%s219 + $0xe8] sm:$0xf]
      %v285 = vld [vmem:[%s219 + $0xec] sm:$0xf]
      %v286 = vld [vmem:[%s219 + $0xf0] sm:$0xf]
      %v287 = vld [vmem:[%s219 + $0xf4] sm:$0xf]
      %v288 = vld [vmem:[%s219 + $0xf8] sm:$0xf]
      %v289 = vld [vmem:[%s219 + $0xfc] sm:$0xf]
      %v290 = vld [vmem:[%s219 + $0x100] sm:$0xf]
      %v291 = vld [vmem:[%s219 + $0x104] sm:$0xf]
      %v292 = vld [vmem:[%s219 + $0x108] sm:$0xf]
      %v293 = vld [vmem:[%s219 + $0x10c] sm:$0xf]
      %v294 = vld [vmem:[%s219 + $0x110] sm:$0xf]
      %v295 = vld [vmem:[%s219 + $0x114] sm:$0xf]
      %v296 = vld [vmem:[%s219 + $0x118] sm:$0xf]
      %v297 = vld [vmem:[%s219 + $0x11c] sm:$0xf]
      %v298 = vld [vmem:[%s219 + $0x120] sm:$0xf]
      %v299 = vld [vmem:[%s219 + $0x124] sm:$0xf]
      %v300 = vld [vmem:[%s219 + $0x128] sm:$0xf]
      %v301 = vld [vmem:[%s219 + $0x12c] sm:$0xf]
      %v302 = vld [vmem:[%s219 + $0x130] sm:$0xf]
      %v303 = vld [vmem:[%s219 + $0x134] sm:$0xf]
      %v304 = vld [vmem:[%s219 + $0x138] sm:$0xf]
      %v305 = vld [vmem:[%s219 + $0x13c] sm:$0xf]
      %v306 = vld [vmem:[%s219 + $0x140] sm:$0xf]
      %v307 = vld [vmem:[%s219 + $0x144] sm:$0xf]
      %v308 = vld [vmem:[%s219 + $0x148] sm:$0xf]
      %v309 = vld [vmem:[%s219 + $0x14c] sm:$0xf]
      %v310 = vld [vmem:[%s219 + $0x150] sm:$0xf]
      %v311 = vld [vmem:[%s219 + $0x154] sm:$0xf]
      %v312 = vld [vmem:[%s219 + $0x158] sm:$0xf]
      %v313 = vld [vmem:[%s219 + $0x15c] sm:$0xf]
      %v314 = vld [vmem:[%s219 + $0x160] sm:$0xf]
      %v315 = vld [vmem:[%s219 + $0x164] sm:$0xf]
      %v316 = vld [vmem:[%s219 + $0x168] sm:$0xf]
      %v317 = vld [vmem:[%s219 + $0x16c] sm:$0xf]
      %v318 = vld [vmem:[%s219 + $0x170] sm:$0xf]
      %v319 = vld [vmem:[%s219 + $0x174] sm:$0xf]
      %v320 = vld [vmem:[%s219 + $0x178] sm:$0xf]
      %v321 = vld [vmem:[%s219 + $0x17c] sm:$0xf]
      %v322 = vld [vmem:[%s219 + $0x180] sm:$0xf]
      %v323 = vld [vmem:[%s219 + $0x184] sm:$0xf]
      %v324 = vld [vmem:[%s219 + $0x188] sm:$0xf]
      %v325 = vld [vmem:[%s219 + $0x18c] sm:$0xf]
      %v326 = vld [vmem:[%s1] sm:$0xf]
      %v327 = vld [vmem:[%s1 + $0x4] sm:$0xf]
      %v328 = vld [vmem:[%s1 + $0x8] sm:$0xf]
      %v329 = vld [vmem:[%s1 + $0xc] sm:$0xf]
      %v330 = vld [vmem:[%s2] sm:$0x1]
      %v332 = vlaneseq
      %v333 = vshrl.u32 %v332, 7
      %v334 = vsub.s32 0, %v333
      %v335 = vrot.slane %v330, %v334
      %v437 = vunpack.c.l.b16 %v226
      %v438 = vunpack.c.l.b16 %v227
      %v439 = vunpack.c.l.b16 %v228
      %v440 = vunpack.c.l.b16 %v229
      %v441 = vunpack.c.l.b16 %v230
      %v442 = vunpack.c.l.b16 %v231
      %v443 = vunpack.c.l.b16 %v232
      %v444 = vunpack.c.l.b16 %v233
      %v445 = vunpack.c.l.b16 %v234
      %v446 = vunpack.c.l.b16 %v235
      %v447 = vunpack.c.l.b16 %v236
      %v448 = vunpack.c.l.b16 %v237
      %v449 = vunpack.c.l.b16 %v238
      %v450 = vunpack.c.l.b16 %v239
      %v451 = vunpack.c.l.b16 %v240
      %v452 = vunpack.c.l.b16 %v241
      %v453 = vunpack.c.l.b16 %v242
      %v454 = vunpack.c.l.b16 %v243
      %v455 = vunpack.c.l.b16 %v244
      %v456 = vunpack.c.l.b16 %v245
      %v457 = vunpack.c.l.b16 %v246
      %v458 = vunpack.c.l.b16 %v247
      %v459 = vunpack.c.l.b16 %v248
      %v460 = vunpack.c.l.b16 %v249
      %v461 = vunpack.c.l.b16 %v250
      %v462 = vunpack.c.l.b16 %v251
      %v463 = vunpack.c.l.b16 %v252
      %v464 = vunpack.c.l.b16 %v253
      %v465 = vunpack.c.l.b16 %v254
      %v466 = vunpack.c.l.b16 %v255
      %v467 = vunpack.c.l.b16 %v256
      %v468 = vunpack.c.l.b16 %v257
      %v469 = vunpack.c.l.b16 %v258
      %v470 = vunpack.c.l.b16 %v259
      %v471 = vunpack.c.l.b16 %v260
      %v472 = vunpack.c.l.b16 %v261
      %v473 = vunpack.c.l.b16 %v262
      %v474 = vunpack.c.l.b16 %v263
      %v475 = vunpack.c.l.b16 %v264
      %v476 = vunpack.c.l.b16 %v265
      %v477 = vunpack.c.l.b16 %v266
      %v478 = vunpack.c.l.b16 %v267
      %v479 = vunpack.c.l.b16 %v268
      %v480 = vunpack.c.l.b16 %v269
      %v481 = vunpack.c.l.b16 %v270
      %v482 = vunpack.c.l.b16 %v271
      %v483 = vunpack.c.l.b16 %v272
      %v484 = vunpack.c.l.b16 %v273
      %v485 = vunpack.c.l.b16 %v274
      %v486 = vunpack.c.l.b16 %v275
      %v487 = vunpack.c.l.b16 %v276
      %v488 = vunpack.c.l.b16 %v277
      %v489 = vunpack.c.l.b16 %v278
      %v490 = vunpack.c.l.b16 %v279
      %v491 = vunpack.c.l.b16 %v280
      %v492 = vunpack.c.l.b16 %v281
      %v493 = vunpack.c.l.b16 %v282
      %v494 = vunpack.c.l.b16 %v283
      %v495 = vunpack.c.l.b16 %v284
      %v496 = vunpack.c.l.b16 %v285
      %v497 = vunpack.c.l.b16 %v286
      %v498 = vunpack.c.l.b16 %v287
      %v499 = vunpack.c.l.b16 %v288
      %v500 = vunpack.c.l.b16 %v289
      %v501 = vunpack.c.l.b16 %v290
      %v502 = vunpack.c.l.b16 %v291
      %v503 = vunpack.c.l.b16 %v292
      %v504 = vunpack.c.l.b16 %v293
      %v505 = vunpack.c.l.b16 %v294
      %v506 = vunpack.c.l.b16 %v295
      %v507 = vunpack.c.l.b16 %v296
      %v508 = vunpack.c.l.b16 %v297
      %v509 = vunpack.c.l.b16 %v298
      %v510 = vunpack.c.l.b16 %v299
      %v511 = vunpack.c.l.b16 %v300
      %v512 = vunpack.c.l.b16 %v301
      %v513 = vunpack.c.l.b16 %v302
      %v514 = vunpack.c.l.b16 %v303
      %v515 = vunpack.c.l.b16 %v304
      %v516 = vunpack.c.l.b16 %v305
      %v517 = vunpack.c.l.b16 %v306
      %v518 = vunpack.c.l.b16 %v307
      %v519 = vunpack.c.l.b16 %v308
      %v520 = vunpack.c.l.b16 %v309
      %v521 = vunpack.c.l.b16 %v310
      %v522 = vunpack.c.l.b16 %v311
      %v523 = vunpack.c.l.b16 %v312
      %v524 = vunpack.c.l.b16 %v313
      %v525 = vunpack.c.l.b16 %v314
      %v526 = vunpack.c.l.b16 %v315
      %v527 = vunpack.c.l.b16 %v316
      %v528 = vunpack.c.l.b16 %v317
      %v529 = vunpack.c.l.b16 %v318
      %v530 = vunpack.c.l.b16 %v319
      %v531 = vunpack.c.l.b16 %v320
      %v532 = vunpack.c.l.b16 %v321
      %v533 = vunpack.c.l.b16 %v322
      %v534 = vunpack.c.l.b16 %v323
      %v535 = vunpack.c.l.b16 %v324
      %v536 = vunpack.c.l.b16 %v325
      %v537 = vpack.c.b16 %v438, %v437
      %v538 = vpack.c.b16 %v440, %v439
      %v539 = vpack.c.b16 %v442, %v441
      %v540 = vpack.c.b16 %v444, %v443
      %v541 = vpack.c.b16 %v446, %v445
      %v542 = vpack.c.b16 %v448, %v447
      %v543 = vpack.c.b16 %v450, %v449
      %v544 = vpack.c.b16 %v452, %v451
      %v545 = vpack.c.b16 %v454, %v453
      %v546 = vpack.c.b16 %v456, %v455
      %v547 = vpack.c.b16 %v458, %v457
      %v548 = vpack.c.b16 %v460, %v459
      %v549 = vpack.c.b16 %v462, %v461
      %v550 = vpack.c.b16 %v464, %v463
      %v551 = vpack.c.b16 %v466, %v465
      %v552 = vpack.c.b16 %v468, %v467
      %v553 = vpack.c.b16 %v470, %v469
      %v554 = vpack.c.b16 %v472, %v471
      %v555 = vpack.c.b16 %v474, %v473
      %v556 = vpack.c.b16 %v476, %v475
      %v557 = vpack.c.b16 %v478, %v477
      %v558 = vpack.c.b16 %v480, %v479
      %v559 = vpack.c.b16 %v482, %v481
      %v560 = vpack.c.b16 %v484, %v483
      %v561 = vpack.c.b16 %v486, %v485
      %v562 = vpack.c.b16 %v488, %v487
      %v563 = vpack.c.b16 %v490, %v489
      %v564 = vpack.c.b16 %v492, %v491
      %v565 = vpack.c.b16 %v494, %v493
      %v566 = vpack.c.b16 %v496, %v495
      %v567 = vpack.c.b16 %v498, %v497
      %v568 = vpack.c.b16 %v500, %v499
      %v569 = vpack.c.b16 %v502, %v501
      %v570 = vpack.c.b16 %v504, %v503
      %v571 = vpack.c.b16 %v506, %v505
      %v572 = vpack.c.b16 %v508, %v507
      %v573 = vpack.c.b16 %v510, %v509
      %v574 = vpack.c.b16 %v512, %v511
      %v575 = vpack.c.b16 %v514, %v513
      %v576 = vpack.c.b16 %v516, %v515
      %v577 = vpack.c.b16 %v518, %v517
      %v578 = vpack.c.b16 %v520, %v519
      %v579 = vpack.c.b16 %v522, %v521
      %v580 = vpack.c.b16 %v524, %v523
      %v581 = vpack.c.b16 %v526, %v525
      %v582 = vpack.c.b16 %v528, %v527
      %v583 = vpack.c.b16 %v530, %v529
      %v584 = vpack.c.b16 %v532, %v531
      %v585 = vpack.c.b16 %v534, %v533
      %v586 = vpack.c.b16 %v536, %v535
      %v591 = vunpack.c.l.b16 %v326
      %v592 = vunpack.c.l.b16 %v327
      %v593 = vunpack.c.l.b16 %v328
      %v594 = vunpack.c.l.b16 %v329
      %v595 = vpack.c.b16 %v592, %v591
      %v596 = vpack.c.b16 %v594, %v593
      %vm599 = vcmask 261120
      %v601 = vsel %vm599, %v537, 0
      %v604 = vsel %vm599, %v538, 0
      %v607 = vsel %vm599, %v539, 0
      %v610 = vsel %vm599, %v540, 0
      %v613 = vsel %vm599, %v541, 0
      %v616 = vsel %vm599, %v542, 0
      %v619 = vsel %vm599, %v543, 0
      %v622 = vsel %vm599, %v544, 0
      %v625 = vsel %vm599, %v545, 0
      %v628 = vsel %vm599, %v546, 0
      %v631 = vsel %vm599, %v547, 0
      %v634 = vsel %vm599, %v548, 0
      %v637 = vsel %vm599, %v549, 0
      %v640 = vsel %vm599, %v550, 0
      %v643 = vsel %vm599, %v551, 0
      %v646 = vsel %vm599, %v552, 0
      %v649 = vsel %vm599, %v553, 0
      %v652 = vsel %vm599, %v554, 0
      %v655 = vsel %vm599, %v555, 0
      %v658 = vsel %vm599, %v556, 0
      %v661 = vsel %vm599, %v557, 0
      %v664 = vsel %vm599, %v558, 0
      %v667 = vsel %vm599, %v559, 0
      %v670 = vsel %vm599, %v560, 0
      %v673 = vsel %vm599, %v561, 0
      %v676 = vsel %vm599, %v562, 0
      %v679 = vsel %vm599, %v563, 0
      %v682 = vsel %vm599, %v564, 0
      %v685 = vsel %vm599, %v565, 0
      %v688 = vsel %vm599, %v566, 0
      %v691 = vsel %vm599, %v567, 0
      %v694 = vsel %vm599, %v568, 0
      %v697 = vsel %vm599, %v569, 0
      %v700 = vsel %vm599, %v570, 0
      %v703 = vsel %vm599, %v571, 0
      %v706 = vsel %vm599, %v572, 0
      %v709 = vsel %vm599, %v573, 0
      %v712 = vsel %vm599, %v574, 0
      %v715 = vsel %vm599, %v575, 0
      %v718 = vsel %vm599, %v576, 0
      %v721 = vsel %vm599, %v577, 0
      %v724 = vsel %vm599, %v578, 0
      %v727 = vsel %vm599, %v579, 0
      %v730 = vsel %vm599, %v580, 0
      %v733 = vsel %vm599, %v581, 0
      %v736 = vsel %vm599, %v582, 0
      %v739 = vsel %vm599, %v583, 0
      %v742 = vsel %vm599, %v584, 0
      %v745 = vsel %vm599, %v585, 0
      %v748 = vsel %vm599, %v586, 0
      %750 = vmatprep.subr.bf16.mxu0 0
      %751 = vmatpush1.bf16.msra.mxu0 %v595
      %752 = vmatprep.subr.bf16.mxu0 0
      %753 = vmatpush1.bf16.msra.mxu0 %v596
      %754 = vmatprep.subr.bf16.mxu0 0
      %755 = vmatpush1.bf16.msra.mxu0 0
      %756 = vmatprep.subr.bf16.mxu0 0
      %757 = vmatpush1.bf16.msra.mxu0 0
      %758 = vmatprep.subr.bf16.mxu0 0
      %759 = vmatpush1.bf16.msra.mxu0 0
      %760 = vmatprep.subr.bf16.mxu0 0
      %761 = vmatpush1.bf16.msra.mxu0 0
      %762 = vmatprep.subr.bf16.mxu0 0
      %763 = vmatpush1.bf16.msra.mxu0 0
      %764 = vmatprep.subr.bf16.mxu0 0
      %765 = vmatpush1.bf16.msra.mxu0 0
      %766 = vmatprep.subr.bf16.mxu0 0
      %767 = vmatpush1.bf16.msra.mxu0 0
      %768 = vmatprep.subr.bf16.mxu0 0
      %769 = vmatpush1.bf16.msra.mxu0 0
      %770 = vmatprep.subr.bf16.mxu0 0
      %771 = vmatpush1.bf16.msra.mxu0 0
      %772 = vmatprep.subr.bf16.mxu0 0
      %773 = vmatpush1.bf16.msra.mxu0 0
      %774 = vmatprep.subr.bf16.mxu0 0
      %775 = vmatpush1.bf16.msra.mxu0 0
      %776 = vmatprep.subr.bf16.mxu0 0
      %777 = vmatpush1.bf16.msra.mxu0 0
      %778 = vmatprep.subr.bf16.mxu0 0
      %779 = vmatpush1.bf16.msra.mxu0 0
      %780 = vmatprep.subr.bf16.mxu0 0
      %781 = vmatpush1.bf16.msra.mxu0 0
      %782 = vmatprep.mubr.bf16.mxu0 0
      %783 = vmatmul.mubr.bf16.gmra.mrb[0].mxu0 %v601
      %v784 = vpop.f32.mrb[0].mxu0
      %v785 = vadd.f32 %v335, %v784
      %v786 = vpop.f32.mrb[0].mxu0
      %v787 = vpop.f32.mrb[0].mxu0
      %v788 = vadd.f32 %v335, %v787
      %v789 = vpop.f32.mrb[0].mxu0
      %790 = vmatprep.mubr.bf16.mxu0 0
      %791 = vmatmul.mubr.bf16.gmra.mrb[0].mxu0 %v604
      %v792 = vpop.f32.mrb[0].mxu0
      %v793 = vadd.f32 %v335, %v792
      %v794 = vpop.f32.mrb[0].mxu0
      %v795 = vpop.f32.mrb[0].mxu0
      %v796 = vadd.f32 %v335, %v795
      %v797 = vpop.f32.mrb[0].mxu0
      %798 = vmatprep.mubr.bf16.mxu0 0
      %799 = vmatmul.mubr.bf16.gmra.mrb[0].mxu0 %v607
      %v800 = vpop.f32.mrb[0].mxu0
      %v801 = vadd.f32 %v335, %v800
      %v802 = vpop.f32.mrb[0].mxu0
      %v803 = vpop.f32.mrb[0].mxu0
      %v804 = vadd.f32 %v335, %v803
      %v805 = vpop.f32.mrb[0].mxu0
      %806 = vmatprep.mubr.bf16.mxu0 0
      %807 = vmatmul.mubr.bf16.gmra.mrb[0].mxu0 %v610
      %v808 = vpop.f32.mrb[0].mxu0
      %v809 = vadd.f32 %v335, %v808
      %v810 = vpop.f32.mrb[0].mxu0
      %v811 = vpop.f32.mrb[0].mxu0
      %v812 = vadd.f32 %v335, %v811
      %v813 = vpop.f32.mrb[0].mxu0
      %814 = vmatprep.mubr.bf16.mxu0 0
      %815 = vmatmul.mubr.bf16.gmra.mrb[0].mxu0 %v613
      %v816 = vpop.f32.mrb[0].mxu0
      %v817 = vadd.f32 %v335, %v816
      %v818 = vpop.f32.mrb[0].mxu0
      %v819 = vpop.f32.mrb[0].mxu0
      %v820 = vadd.f32 %v335, %v819
      %v821 = vpop.f32.mrb[0].mxu0
      %822 = vmatprep.mubr.bf16.mxu0 0
      %823 = vmatmul.mubr.bf16.gmra.mrb[0].mxu0 %v616
      %v824 = vpop.f32.mrb[0].mxu0
      %v825 = vadd.f32 %v335, %v824
      %v826 = vpop.f32.mrb[0].mxu0
      %v827 = vpop.f32.mrb[0].mxu0
      %v828 = vadd.f32 %v335, %v827
      %v829 = vpop.f32.mrb[0].mxu0
      %830 = vmatprep.mubr.bf16.mxu0 0
      %831 = vmatmul.mubr.bf16.gmra.mrb[0].mxu0 %v619
      %v832 = vpop.f32.mrb[0].mxu0
      %v833 = vadd.f32 %v335, %v832
      %v834 = vpop.f32.mrb[0].mxu0
      %v835 = vpop.f32.mrb[0].mxu0
      %v836 = vadd.f32 %v335, %v835
      %v837 = vpop.f32.mrb[0].mxu0
      %838 = vmatprep.mubr.bf16.mxu0 0
      %839 = vmatmul.mubr.bf16.gmra.mrb[0].mxu0 %v622
      %v840 = vpop.f32.mrb[0].mxu0
      %v841 = vadd.f32 %v335, %v840
      %v842 = vpop.f32.mrb[0].mxu0
      %v843 = vpop.f32.mrb[0].mxu0
      %v844 = vadd.f32 %v335, %v843
      %v845 = vpop.f32.mrb[0].mxu0
      %846 = vmatprep.mubr.bf16.mxu0 0
      %847 = vmatmul.mubr.bf16.gmra.mrb[0].mxu0 %v625
      %v848 = vpop.f32.mrb[0].mxu0
      %v849 = vadd.f32 %v335, %v848
      %v850 = vpop.f32.mrb[0].mxu0
      %v851 = vpop.f32.mrb[0].mxu0
      %v852 = vadd.f32 %v335, %v851
      %v853 = vpop.f32.mrb[0].mxu0
      %854 = vmatprep.mubr.bf16.mxu0 0
      %855 = vmatmul.mubr.bf16.gmra.mrb[0].mxu0 %v628
      %v856 = vpop.f32.mrb[0].mxu0
      %v857 = vadd.f32 %v335, %v856
      %v858 = vpop.f32.mrb[0].mxu0
      %v859 = vpop.f32.mrb[0].mxu0
      %v860 = vadd.f32 %v335, %v859
      %v861 = vpop.f32.mrb[0].mxu0
      %862 = vmatprep.mubr.bf16.mxu0 0
      %863 = vmatmul.mubr.bf16.gmra.mrb[0].mxu0 %v631
      %v864 = vpop.f32.mrb[0].mxu0
      %v865 = vadd.f32 %v335, %v864
      %v866 = vpop.f32.mrb[0].mxu0
      %v867 = vpop.f32.mrb[0].mxu0
      %v868 = vadd.f32 %v335, %v867
      %v869 = vpop.f32.mrb[0].mxu0
      %870 = vmatprep.mubr.bf16.mxu0 0
      %871 = vmatmul.mubr.bf16.gmra.mrb[0].mxu0 %v634
      %v872 = vpop.f32.mrb[0].mxu0
      %v873 = vadd.f32 %v335, %v872
      %v874 = vpop.f32.mrb[0].mxu0
      %v875 = vpop.f32.mrb[0].mxu0
      %v876 = vadd.f32 %v335, %v875
      %v877 = vpop.f32.mrb[0].mxu0
      %878 = vmatprep.mubr.bf16.mxu0 0
      %879 = vmatmul.mubr.bf16.gmra.mrb[0].mxu0 %v637
      %v880 = vpop.f32.mrb[0].mxu0
      %v881 = vadd.f32 %v335, %v880
      %v882 = vpop.f32.mrb[0].mxu0
      %v883 = vpop.f32.mrb[0].mxu0
      %v884 = vadd.f32 %v335, %v883
      %v885 = vpop.f32.mrb[0].mxu0
      %886 = vmatprep.mubr.bf16.mxu0 0
      %887 = vmatmul.mubr.bf16.gmra.mrb[0].mxu0 %v640
      %v888 = vpop.f32.mrb[0].mxu0
      %v889 = vadd.f32 %v335, %v888
      %v890 = vpop.f32.mrb[0].mxu0
      %v891 = vpop.f32.mrb[0].mxu0
      %v892 = vadd.f32 %v335, %v891
      %v893 = vpop.f32.mrb[0].mxu0
      %894 = vmatprep.mubr.bf16.mxu0 0
      %895 = vmatmul.mubr.bf16.gmra.mrb[0].mxu0 %v643
      %v896 = vpop.f32.mrb[0].mxu0
      %v897 = vadd.f32 %v335, %v896
      %v898 = vpop.f32.mrb[0].mxu0
      %v899 = vpop.f32.mrb[0].mxu0
      %v900 = vadd.f32 %v335, %v899
      %v901 = vpop.f32.mrb[0].mxu0
      %902 = vmatprep.mubr.bf16.mxu0 0
      %903 = vmatmul.mubr.bf16.gmra.mrb[0].mxu0 %v646
      %v904 = vpop.f32.mrb[0].mxu0
      %v905 = vadd.f32 %v335, %v904
      %v906 = vpop.f32.mrb[0].mxu0
      %v907 = vpop.f32.mrb[0].mxu0
      %v908 = vadd.f32 %v335, %v907
      %v909 = vpop.f32.mrb[0].mxu0
      %910 = vmatprep.mubr.bf16.mxu0 0
      %911 = vmatmul.mubr.bf16.gmra.mrb[0].mxu0 %v649
      %v912 = vpop.f32.mrb[0].mxu0
      %v913 = vadd.f32 %v335, %v912
      %v914 = vpop.f32.mrb[0].mxu0
      %v915 = vpop.f32.mrb[0].mxu0
      %v916 = vadd.f32 %v335, %v915
      %v917 = vpop.f32.mrb[0].mxu0
      %918 = vmatprep.mubr.bf16.mxu0 0
      %919 = vmatmul.mubr.bf16.gmra.mrb[0].mxu0 %v652
      %v920 = vpop.f32.mrb[0].mxu0
      %v921 = vadd.f32 %v335, %v920
      %v922 = vpop.f32.mrb[0].mxu0
      %v923 = vpop.f32.mrb[0].mxu0
      %v924 = vadd.f32 %v335, %v923
      %v925 = vpop.f32.mrb[0].mxu0
      %926 = vmatprep.mubr.bf16.mxu0 0
      %927 = vmatmul.mubr.bf16.gmra.mrb[0].mxu0 %v655
      %v928 = vpop.f32.mrb[0].mxu0
      %v929 = vadd.f32 %v335, %v928
      %v930 = vpop.f32.mrb[0].mxu0
      %v931 = vpop.f32.mrb[0].mxu0
      %v932 = vadd.f32 %v335, %v931
      %v933 = vpop.f32.mrb[0].mxu0
      %934 = vmatprep.mubr.bf16.mxu0 0
      %935 = vmatmul.mubr.bf16.gmra.mrb[0].mxu0 %v658
      %v936 = vpop.f32.mrb[0].mxu0
      %v937 = vadd.f32 %v335, %v936
      %v938 = vpop.f32.mrb[0].mxu0
      %v939 = vpop.f32.mrb[0].mxu0
      %v940 = vadd.f32 %v335, %v939
      %v941 = vpop.f32.mrb[0].mxu0
      %942 = vmatprep.mubr.bf16.mxu0 0
      %943 = vmatmul.mubr.bf16.gmra.mrb[0].mxu0 %v661
      %v944 = vpop.f32.mrb[0].mxu0
      %v945 = vadd.f32 %v335, %v944
      %v946 = vpop.f32.mrb[0].mxu0
      %v947 = vpop.f32.mrb[0].mxu0
      %v948 = vadd.f32 %v335, %v947
      %v949 = vpop.f32.mrb[0].mxu0
      %950 = vmatprep.mubr.bf16.mxu0 0
      %951 = vmatmul.mubr.bf16.gmra.mrb[0].mxu0 %v664
      %v952 = vpop.f32.mrb[0].mxu0
      %v953 = vadd.f32 %v335, %v952
      %v954 = vpop.f32.mrb[0].mxu0
      %v955 = vpop.f32.mrb[0].mxu0
      %v956 = vadd.f32 %v335, %v955
      %v957 = vpop.f32.mrb[0].mxu0
      %958 = vmatprep.mubr.bf16.mxu0 0
      %959 = vmatmul.mubr.bf16.gmra.mrb[0].mxu0 %v667
      %v960 = vpop.f32.mrb[0].mxu0
      %v961 = vadd.f32 %v335, %v960
      %v962 = vpop.f32.mrb[0].mxu0
      %v963 = vpop.f32.mrb[0].mxu0
      %v964 = vadd.f32 %v335, %v963
      %v965 = vpop.f32.mrb[0].mxu0
      %966 = vmatprep.mubr.bf16.mxu0 0
      %967 = vmatmul.mubr.bf16.gmra.mrb[0].mxu0 %v670
      %v968 = vpop.f32.mrb[0].mxu0
      %v969 = vadd.f32 %v335, %v968
      %v970 = vpop.f32.mrb[0].mxu0
      %v971 = vpop.f32.mrb[0].mxu0
      %v972 = vadd.f32 %v335, %v971
      %v973 = vpop.f32.mrb[0].mxu0
      %974 = vmatprep.mubr.bf16.mxu0 0
      %975 = vmatmul.mubr.bf16.gmra.mrb[0].mxu0 %v673
      %v976 = vpop.f32.mrb[0].mxu0
      %v977 = vadd.f32 %v335, %v976
      %v978 = vpop.f32.mrb[0].mxu0
      %v979 = vpop.f32.mrb[0].mxu0
      %v980 = vadd.f32 %v335, %v979
      %v981 = vpop.f32.mrb[0].mxu0
      %982 = vmatprep.mubr.bf16.mxu0 0
      %983 = vmatmul.mubr.bf16.gmra.mrb[0].mxu0 %v676
      %v984 = vpop.f32.mrb[0].mxu0
      %v985 = vadd.f32 %v335, %v984
      %v986 = vpop.f32.mrb[0].mxu0
      %v987 = vpop.f32.mrb[0].mxu0
      %v988 = vadd.f32 %v335, %v987
      %v989 = vpop.f32.mrb[0].mxu0
      %990 = vmatprep.mubr.bf16.mxu0 0
      %991 = vmatmul.mubr.bf16.gmra.mrb[0].mxu0 %v679
      %v992 = vpop.f32.mrb[0].mxu0
      %v993 = vadd.f32 %v335, %v992
      %v994 = vpop.f32.mrb[0].mxu0
      %v995 = vpop.f32.mrb[0].mxu0
      %v996 = vadd.f32 %v335, %v995
      %v997 = vpop.f32.mrb[0].mxu0
      %998 = vmatprep.mubr.bf16.mxu0 0
      %999 = vmatmul.mubr.bf16.gmra.mrb[0].mxu0 %v682
      %v1000 = vpop.f32.mrb[0].mxu0
      %v1001 = vadd.f32 %v335, %v1000
      %v1002 = vpop.f32.mrb[0].mxu0
      %v1003 = vpop.f32.mrb[0].mxu0
      %v1004 = vadd.f32 %v335, %v1003
      %v1005 = vpop.f32.mrb[0].mxu0
      %1006 = vmatprep.mubr.bf16.mxu0 0
      %1007 = vmatmul.mubr.bf16.gmra.mrb[0].mxu0 %v685
      %v1008 = vpop.f32.mrb[0].mxu0
      %v1009 = vadd.f32 %v335, %v1008
      %v1010 = vpop.f32.mrb[0].mxu0
      %v1011 = vpop.f32.mrb[0].mxu0
      %v1012 = vadd.f32 %v335, %v1011
      %v1013 = vpop.f32.mrb[0].mxu0
      %1014 = vmatprep.mubr.bf16.mxu0 0
      %1015 = vmatmul.mubr.bf16.gmra.mrb[0].mxu0 %v688
      %v1016 = vpop.f32.mrb[0].mxu0
      %v1017 = vadd.f32 %v335, %v1016
      %v1018 = vpop.f32.mrb[0].mxu0
      %v1019 = vpop.f32.mrb[0].mxu0
      %v1020 = vadd.f32 %v335, %v1019
      %v1021 = vpop.f32.mrb[0].mxu0
      %1022 = vmatprep.mubr.bf16.mxu0 0
      %1023 = vmatmul.mubr.bf16.gmra.mrb[0].mxu0 %v691
      %v1024 = vpop.f32.mrb[0].mxu0
      %v1025 = vadd.f32 %v335, %v1024
      %v1026 = vpop.f32.mrb[0].mxu0
      %v1027 = vpop.f32.mrb[0].mxu0
      %v1028 = vadd.f32 %v335, %v1027
      %v1029 = vpop.f32.mrb[0].mxu0
      %1030 = vmatprep.mubr.bf16.mxu0 0
      %1031 = vmatmul.mubr.bf16.gmra.mrb[0].mxu0 %v694
      %v1032 = vpop.f32.mrb[0].mxu0
      %v1033 = vadd.f32 %v335, %v1032
      %v1034 = vpop.f32.mrb[0].mxu0
      %v1035 = vpop.f32.mrb[0].mxu0
      %v1036 = vadd.f32 %v335, %v1035
      %v1037 = vpop.f32.mrb[0].mxu0
      %1038 = vmatprep.mubr.bf16.mxu0 0
      %1039 = vmatmul.mubr.bf16.gmra.mrb[0].mxu0 %v697
      %v1040 = vpop.f32.mrb[0].mxu0
      %v1041 = vadd.f32 %v335, %v1040
      %v1042 = vpop.f32.mrb[0].mxu0
      %v1043 = vpop.f32.mrb[0].mxu0
      %v1044 = vadd.f32 %v335, %v1043
      %v1045 = vpop.f32.mrb[0].mxu0
      %1046 = vmatprep.mubr.bf16.mxu0 0
      %1047 = vmatmul.mubr.bf16.gmra.mrb[0].mxu0 %v700
      %v1048 = vpop.f32.mrb[0].mxu0
      %v1049 = vadd.f32 %v335, %v1048
      %v1050 = vpop.f32.mrb[0].mxu0
      %v1051 = vpop.f32.mrb[0].mxu0
      %v1052 = vadd.f32 %v335, %v1051
      %v1053 = vpop.f32.mrb[0].mxu0
      %1054 = vmatprep.mubr.bf16.mxu0 0
      %1055 = vmatmul.mubr.bf16.gmra.mrb[0].mxu0 %v703
      %v1056 = vpop.f32.mrb[0].mxu0
      %v1057 = vadd.f32 %v335, %v1056
      %v1058 = vpop.f32.mrb[0].mxu0
      %v1059 = vpop.f32.mrb[0].mxu0
      %v1060 = vadd.f32 %v335, %v1059
      %v1061 = vpop.f32.mrb[0].mxu0
      %1062 = vmatprep.mubr.bf16.mxu0 0
      %1063 = vmatmul.mubr.bf16.gmra.mrb[0].mxu0 %v706
      %v1064 = vpop.f32.mrb[0].mxu0
      %v1065 = vadd.f32 %v335, %v1064
      %v1066 = vpop.f32.mrb[0].mxu0
      %v1067 = vpop.f32.mrb[0].mxu0
      %v1068 = vadd.f32 %v335, %v1067
      %v1069 = vpop.f32.mrb[0].mxu0
      %1070 = vmatprep.mubr.bf16.mxu0 0
      %1071 = vmatmul.mubr.bf16.gmra.mrb[0].mxu0 %v709
      %v1072 = vpop.f32.mrb[0].mxu0
      %v1073 = vadd.f32 %v335, %v1072
      %v1074 = vpop.f32.mrb[0].mxu0
      %v1075 = vpop.f32.mrb[0].mxu0
      %v1076 = vadd.f32 %v335, %v1075
      %v1077 = vpop.f32.mrb[0].mxu0
      %1078 = vmatprep.mubr.bf16.mxu0 0
      %1079 = vmatmul.mubr.bf16.gmra.mrb[0].mxu0 %v712
      %v1080 = vpop.f32.mrb[0].mxu0
      %v1081 = vadd.f32 %v335, %v1080
      %v1082 = vpop.f32.mrb[0].mxu0
      %v1083 = vpop.f32.mrb[0].mxu0
      %v1084 = vadd.f32 %v335, %v1083
      %v1085 = vpop.f32.mrb[0].mxu0
      %1086 = vmatprep.mubr.bf16.mxu0 0
      %1087 = vmatmul.mubr.bf16.gmra.mrb[0].mxu0 %v715
      %v1088 = vpop.f32.mrb[0].mxu0
      %v1089 = vadd.f32 %v335, %v1088
      %v1090 = vpop.f32.mrb[0].mxu0
      %v1091 = vpop.f32.mrb[0].mxu0
      %v1092 = vadd.f32 %v335, %v1091
      %v1093 = vpop.f32.mrb[0].mxu0
      %1094 = vmatprep.mubr.bf16.mxu0 0
      %1095 = vmatmul.mubr.bf16.gmra.mrb[0].mxu0 %v718
      %v1096 = vpop.f32.mrb[0].mxu0
      %v1097 = vadd.f32 %v335, %v1096
      %v1098 = vpop.f32.mrb[0].mxu0
      %v1099 = vpop.f32.mrb[0].mxu0
      %v1100 = vadd.f32 %v335, %v1099
      %v1101 = vpop.f32.mrb[0].mxu0
      %1102 = vmatprep.mubr.bf16.mxu0 0
      %1103 = vmatmul.mubr.bf16.gmra.mrb[0].mxu0 %v721
      %v1104 = vpop.f32.mrb[0].mxu0
      %v1105 = vadd.f32 %v335, %v1104
      %v1106 = vpop.f32.mrb[0].mxu0
      %v1107 = vpop.f32.mrb[0].mxu0
      %v1108 = vadd.f32 %v335, %v1107
      %v1109 = vpop.f32.mrb[0].mxu0
      %1110 = vmatprep.mubr.bf16.mxu0 0
      %1111 = vmatmul.mubr.bf16.gmra.mrb[0].mxu0 %v724
      %v1112 = vpop.f32.mrb[0].mxu0
      %v1113 = vadd.f32 %v335, %v1112
      %v1114 = vpop.f32.mrb[0].mxu0
      %v1115 = vpop.f32.mrb[0].mxu0
      %v1116 = vadd.f32 %v335, %v1115
      %v1117 = vpop.f32.mrb[0].mxu0
      %1118 = vmatprep.mubr.bf16.mxu0 0
      %1119 = vmatmul.mubr.bf16.gmra.mrb[0].mxu0 %v727
      %v1120 = vpop.f32.mrb[0].mxu0
      %v1121 = vadd.f32 %v335, %v1120
      %v1122 = vpop.f32.mrb[0].mxu0
      %v1123 = vpop.f32.mrb[0].mxu0
      %v1124 = vadd.f32 %v335, %v1123
      %v1125 = vpop.f32.mrb[0].mxu0
      %1126 = vmatprep.mubr.bf16.mxu0 0
      %1127 = vmatmul.mubr.bf16.gmra.mrb[0].mxu0 %v730
      %v1128 = vpop.f32.mrb[0].mxu0
      %v1129 = vadd.f32 %v335, %v1128
      %v1130 = vpop.f32.mrb[0].mxu0
      %v1131 = vpop.f32.mrb[0].mxu0
      %v1132 = vadd.f32 %v335, %v1131
      %v1133 = vpop.f32.mrb[0].mxu0
      %1134 = vmatprep.mubr.bf16.mxu0 0
      %1135 = vmatmul.mubr.bf16.gmra.mrb[0].mxu0 %v733
      %v1136 = vpop.f32.mrb[0].mxu0
      %v1137 = vadd.f32 %v335, %v1136
      %v1138 = vpop.f32.mrb[0].mxu0
      %v1139 = vpop.f32.mrb[0].mxu0
      %v1140 = vadd.f32 %v335, %v1139
      %v1141 = vpop.f32.mrb[0].mxu0
      %1142 = vmatprep.mubr.bf16.mxu0 0
      %1143 = vmatmul.mubr.bf16.gmra.mrb[0].mxu0 %v736
      %v1144 = vpop.f32.mrb[0].mxu0
      %v1145 = vadd.f32 %v335, %v1144
      %v1146 = vpop.f32.mrb[0].mxu0
      %v1147 = vpop.f32.mrb[0].mxu0
      %v1148 = vadd.f32 %v335, %v1147
      %v1149 = vpop.f32.mrb[0].mxu0
      %1150 = vmatprep.mubr.bf16.mxu0 0
      %1151 = vmatmul.mubr.bf16.gmra.mrb[0].mxu0 %v739
      %v1152 = vpop.f32.mrb[0].mxu0
      %v1153 = vadd.f32 %v335, %v1152
      %v1154 = vpop.f32.mrb[0].mxu0
      %v1155 = vpop.f32.mrb[0].mxu0
      %v1156 = vadd.f32 %v335, %v1155
      %v1157 = vpop.f32.mrb[0].mxu0
      %1158 = vmatprep.mubr.bf16.mxu0 0
      %1159 = vmatmul.mubr.bf16.gmra.mrb[0].mxu0 %v742
      %v1160 = vpop.f32.mrb[0].mxu0
      %v1161 = vadd.f32 %v335, %v1160
      %v1162 = vpop.f32.mrb[0].mxu0
      %v1163 = vpop.f32.mrb[0].mxu0
      %v1164 = vadd.f32 %v335, %v1163
      %v1165 = vpop.f32.mrb[0].mxu0
      %1166 = vmatprep.mubr.bf16.mxu0 0
      %1167 = vmatmul.mubr.bf16.gmra.mrb[0].mxu0 %v745
      %v1168 = vpop.f32.mrb[0].mxu0
      %v1169 = vadd.f32 %v335, %v1168
      %v1170 = vpop.f32.mrb[0].mxu0
      %v1171 = vpop.f32.mrb[0].mxu0
      %v1172 = vadd.f32 %v335, %v1171
      %v1173 = vpop.f32.mrb[0].mxu0
      %1174 = vmatprep.mubr.bf16.mxu0 0
      %1175 = vmatmul.mubr.bf16.gmra.mrb[0].mxu0 %v748
      %v1176 = vpop.f32.mrb[0].mxu0
      %v1177 = vadd.f32 %v335, %v1176
      %v1178 = vpop.f32.mrb[0].mxu0
      %v1179 = vpop.f32.mrb[0].mxu0
      %v1180 = vadd.f32 %v335, %v1179
      %v1181 = vpop.f32.mrb[0].mxu0
      %1182 = vdwg.mxu0
      %v1183 = vmax.f32 %v785, 0.0
      %v1184 = vmax.f32 %v788, 0.0
      %v1185 = vmax.f32 %v793, 0.0
      %v1186 = vmax.f32 %v796, 0.0
      %v1187 = vmax.f32 %v801, 0.0
      %v1188 = vmax.f32 %v804, 0.0
      %v1189 = vmax.f32 %v809, 0.0
      %v1190 = vmax.f32 %v812, 0.0
      %v1191 = vmax.f32 %v817, 0.0
      %v1192 = vmax.f32 %v820, 0.0
      %v1193 = vmax.f32 %v825, 0.0
      %v1194 = vmax.f32 %v828, 0.0
      %v1195 = vmax.f32 %v833, 0.0
      %v1196 = vmax.f32 %v836, 0.0
      %v1197 = vmax.f32 %v841, 0.0
      %v1198 = vmax.f32 %v844, 0.0
      %v1199 = vmax.f32 %v849, 0.0
      %v1200 = vmax.f32 %v852, 0.0
      %v1201 = vmax.f32 %v857, 0.0
      %v1202 = vmax.f32 %v860, 0.0
      %v1203 = vmax.f32 %v865, 0.0
      %v1204 = vmax.f32 %v868, 0.0
      %v1205 = vmax.f32 %v873, 0.0
      %v1206 = vmax.f32 %v876, 0.0
      %v1207 = vmax.f32 %v881, 0.0
      %v1208 = vmax.f32 %v884, 0.0
      %v1209 = vmax.f32 %v889, 0.0
      %v1210 = vmax.f32 %v892, 0.0
      %v1211 = vmax.f32 %v897, 0.0
      %v1212 = vmax.f32 %v900, 0.0
      %v1213 = vmax.f32 %v905, 0.0
      %v1214 = vmax.f32 %v908, 0.0
      %v1215 = vmax.f32 %v913, 0.0
      %v1216 = vmax.f32 %v916, 0.0
      %v1217 = vmax.f32 %v921, 0.0
      %v1218 = vmax.f32 %v924, 0.0
      %v1219 = vmax.f32 %v929, 0.0
      %v1220 = vmax.f32 %v932, 0.0
      %v1221 = vmax.f32 %v937, 0.0
      %v1222 = vmax.f32 %v940, 0.0
      %v1223 = vmax.f32 %v945, 0.0
      %v1224 = vmax.f32 %v948, 0.0
      %v1225 = vmax.f32 %v953, 0.0
      %v1226 = vmax.f32 %v956, 0.0
      %v1227 = vmax.f32 %v961, 0.0
      %v1228 = vmax.f32 %v964, 0.0
      %v1229 = vmax.f32 %v969, 0.0
      %v1230 = vmax.f32 %v972, 0.0
      %v1231 = vmax.f32 %v977, 0.0
      %v1232 = vmax.f32 %v980, 0.0
      %v1233 = vmax.f32 %v985, 0.0
      %v1234 = vmax.f32 %v988, 0.0
      %v1235 = vmax.f32 %v993, 0.0
      %v1236 = vmax.f32 %v996, 0.0
      %v1237 = vmax.f32 %v1001, 0.0
      %v1238 = vmax.f32 %v1004, 0.0
      %v1239 = vmax.f32 %v1009, 0.0
      %v1240 = vmax.f32 %v1012, 0.0
      %v1241 = vmax.f32 %v1017, 0.0
      %v1242 = vmax.f32 %v1020, 0.0
      %v1243 = vmax.f32 %v1025, 0.0
      %v1244 = vmax.f32 %v1028, 0.0
      %v1245 = vmax.f32 %v1033, 0.0
      %v1246 = vmax.f32 %v1036, 0.0
      %v1247 = vmax.f32 %v1041, 0.0
      %v1248 = vmax.f32 %v1044, 0.0
      %v1249 = vmax.f32 %v1049, 0.0
      %v1250 = vmax.f32 %v1052, 0.0
      %v1251 = vmax.f32 %v1057, 0.0
      %v1252 = vmax.f32 %v1060, 0.0
      %v1253 = vmax.f32 %v1065, 0.0
      %v1254 = vmax.f32 %v1068, 0.0
      %v1255 = vmax.f32 %v1073, 0.0
      %v1256 = vmax.f32 %v1076, 0.0
      %v1257 = vmax.f32 %v1081, 0.0
      %v1258 = vmax.f32 %v1084, 0.0
      %v1259 = vmax.f32 %v1089, 0.0
      %v1260 = vmax.f32 %v1092, 0.0
      %v1261 = vmax.f32 %v1097, 0.0
      %v1262 = vmax.f32 %v1100, 0.0
      %v1263 = vmax.f32 %v1105, 0.0
      %v1264 = vmax.f32 %v1108, 0.0
      %v1265 = vmax.f32 %v1113, 0.0
      %v1266 = vmax.f32 %v1116, 0.0
      %v1267 = vmax.f32 %v1121, 0.0
      %v1268 = vmax.f32 %v1124, 0.0
      %v1269 = vmax.f32 %v1129, 0.0
      %v1270 = vmax.f32 %v1132, 0.0
      %v1271 = vmax.f32 %v1137, 0.0
      %v1272 = vmax.f32 %v1140, 0.0
      %v1273 = vmax.f32 %v1145, 0.0
      %v1274 = vmax.f32 %v1148, 0.0
      %v1275 = vmax.f32 %v1153, 0.0
      %v1276 = vmax.f32 %v1156, 0.0
      %v1277 = vmax.f32 %v1161, 0.0
      %v1278 = vmax.f32 %v1164, 0.0
      %v1279 = vmax.f32 %v1169, 0.0
      %v1280 = vmax.f32 %v1172, 0.0
      %v1281 = vmax.f32 %v1177, 0.0
      %v1282 = vmax.f32 %v1180, 0.0
      %v1283 = vmax.f32 %v1183, %v1208
      %v1284 = vmax.f32 %v1184, %v1209
      %v1285 = vmax.f32 %v1185, %v1210
      %v1286 = vmax.f32 %v1186, %v1211
      %v1287 = vmax.f32 %v1187, %v1212
      %v1288 = vmax.f32 %v1188, %v1213
      %v1289 = vmax.f32 %v1189, %v1214
      %v1290 = vmax.f32 %v1190, %v1215
      %v1291 = vmax.f32 %v1191, %v1216
      %v1292 = vmax.f32 %v1192, %v1217
      %v1293 = vmax.f32 %v1193, %v1218
      %v1294 = vmax.f32 %v1194, %v1219
      %v1295 = vmax.f32 %v1195, %v1220
      %v1296 = vmax.f32 %v1196, %v1221
      %v1297 = vmax.f32 %v1197, %v1222
      %v1298 = vmax.f32 %v1198, %v1223
      %v1299 = vmax.f32 %v1199, %v1224
      %v1300 = vmax.f32 %v1200, %v1225
      %v1301 = vmax.f32 %v1201, %v1226
      %v1302 = vmax.f32 %v1202, %v1227
      %v1303 = vmax.f32 %v1203, %v1228
      %v1304 = vmax.f32 %v1204, %v1229
      %v1305 = vmax.f32 %v1205, %v1230
      %v1306 = vmax.f32 %v1206, %v1231
      %v1307 = vmax.f32 %v1207, %v1232
      %v1308 = vmax.f32 %v1233, %v1258
      %v1309 = vmax.f32 %v1234, %v1259
      %v1310 = vmax.f32 %v1235, %v1260
      %v1311 = vmax.f32 %v1236, %v1261
      %v1312 = vmax.f32 %v1237, %v1262
      %v1313 = vmax.f32 %v1238, %v1263
      %v1314 = vmax.f32 %v1239, %v1264
      %v1315 = vmax.f32 %v1240, %v1265
      %v1316 = vmax.f32 %v1241, %v1266
      %v1317 = vmax.f32 %v1242, %v1267
      %v1318 = vmax.f32 %v1243, %v1268
      %v1319 = vmax.f32 %v1244, %v1269
      %v1320 = vmax.f32 %v1245, %v1270
      %v1321 = vmax.f32 %v1246, %v1271
      %v1322 = vmax.f32 %v1247, %v1272
      %v1323 = vmax.f32 %v1248, %v1273
      %v1324 = vmax.f32 %v1249, %v1274
      %v1325 = vmax.f32 %v1250, %v1275
      %v1326 = vmax.f32 %v1251, %v1276
      %v1327 = vmax.f32 %v1252, %v1277
      %v1328 = vmax.f32 %v1253, %v1278
      %v1329 = vmax.f32 %v1254, %v1279
      %v1330 = vmax.f32 %v1255, %v1280
      %v1331 = vmax.f32 %v1256, %v1281
      %v1332 = vmax.f32 %v1257, %v1282
      %v1333 = vmax.f32 %v1283, %v1308
      %v1334 = vmax.f32 %v1284, %v1309
      %v1335 = vmax.f32 %v1285, %v1310
      %v1336 = vmax.f32 %v1286, %v1311
      %v1337 = vmax.f32 %v1287, %v1312
      %v1338 = vmax.f32 %v1288, %v1313
      %v1339 = vmax.f32 %v1289, %v1314
      %v1340 = vmax.f32 %v1290, %v1315
      %v1341 = vmax.f32 %v1291, %v1316
      %v1342 = vmax.f32 %v1292, %v1317
      %v1343 = vmax.f32 %v1293, %v1318
      %v1344 = vmax.f32 %v1294, %v1319
      %v1345 = vmax.f32 %v1295, %v1320
      %v1346 = vmax.f32 %v1296, %v1321
      %v1347 = vmax.f32 %v1297, %v1322
      %v1348 = vmax.f32 %v1298, %v1323
      %v1349 = vmax.f32 %v1299, %v1324
      %v1350 = vmax.f32 %v1300, %v1325
      %v1351 = vmax.f32 %v1301, %v1326
      %v1352 = vmax.f32 %v1302, %v1327
      %v1353 = vmax.f32 %v1303, %v1328
      %v1354 = vmax.f32 %v1304, %v1329
      %v1355 = vmax.f32 %v1305, %v1330
      %v1356 = vmax.f32 %v1306, %v1331
      %v1357 = vmax.f32 %v1307, %v1332
      %v1358 = vpack.c.bf16 %v1334, %v1333
      %v1359 = vpack.c.bf16 %v1336, %v1335
      %v1360 = vpack.c.bf16 %v1338, %v1337
      %v1361 = vpack.c.bf16 %v1340, %v1339
      %v1362 = vpack.c.bf16 %v1342, %v1341
      %v1363 = vpack.c.bf16 %v1344, %v1343
      %v1364 = vpack.c.bf16 %v1346, %v1345
      %v1365 = vpack.c.bf16 %v1348, %v1347
      %v1366 = vpack.c.bf16 %v1350, %v1349
      %v1367 = vpack.c.bf16 %v1352, %v1351
      %v1368 = vpack.c.bf16 %v1354, %v1353
      %v1369 = vpack.c.bf16 %v1356, %v1355
      %v1370 = vpack.c.bf16 %v1357, %v1357
      %v1371 = vld [vmem:[%s3] sm:$0xf]
      %v1372 = vld [vmem:[%s3 + $0x4] sm:$0xf]
      %v1373 = vld [vmem:[%s3 + $0x8] sm:$0xf]
      %v1374 = vld [vmem:[%s3 + $0xc] sm:$0xf]
      %v1375 = vld [vmem:[%s4] sm:$0x1]
      %v1377 = vlaneseq
      %v1378 = vshrl.u32 %v1377, 7
      %v1379 = vsub.s32 0, %v1378
      %v1380 = vrot.slane %v1375, %v1379
      %v1386 = vunpack.c.l.b16 %v1371
      %v1387 = vunpack.c.l.b16 %v1372
      %v1388 = vunpack.c.l.b16 %v1373
      %v1389 = vunpack.c.l.b16 %v1374
      %v1390 = vpack.c.b16 %v1387, %v1386
      %v1391 = vpack.c.b16 %v1389, %v1388
      %v1395 = vsel %vm599, %v1358, 0
      %v1398 = vsel %vm599, %v1359, 0
      %v1401 = vsel %vm599, %v1360, 0
      %v1404 = vsel %vm599, %v1361, 0
      %v1407 = vsel %vm599, %v1362, 0
      %v1410 = vsel %vm599, %v1363, 0
      %v1413 = vsel %vm599, %v1364, 0
      %v1416 = vsel %vm599, %v1365, 0
      %v1419 = vsel %vm599, %v1366, 0
      %v1422 = vsel %vm599, %v1367, 0
      %v1425 = vsel %vm599, %v1368, 0
      %v1428 = vsel %vm599, %v1369, 0
      %v1431 = vsel %vm599, %v1370, 0
      %1433 = vmatprep.subr.bf16.mxu0 0
      %1434 = vmatpush1.bf16.msra.mxu0 %v1390
      %1435 = vmatprep.subr.bf16.mxu0 0
      %1436 = vmatpush1.bf16.msra.mxu0 %v1391
      %1437 = vmatprep.subr.bf16.mxu0 0
      %1438 = vmatpush1.bf16.msra.mxu0 0
      %1439 = vmatprep.subr.bf16.mxu0 0
      %1440 = vmatpush1.bf16.msra.mxu0 0
      %1441 = vmatprep.subr.bf16.mxu0 0
      %1442 = vmatpush1.bf16.msra.mxu0 0
      %1443 = vmatprep.subr.bf16.mxu0 0
      %1444 = vmatpush1.bf16.msra.mxu0 0
      %1445 = vmatprep.subr.bf16.mxu0 0
      %1446 = vmatpush1.bf16.msra.mxu0 0
      %1447 = vmatprep.subr.bf16.mxu0 0
      %1448 = vmatpush1.bf16.msra.mxu0 0
      %1449 = vmatprep.subr.bf16.mxu0 0
      %1450 = vmatpush1.bf16.msra.mxu0 0
      %1451 = vmatprep.subr.bf16.mxu0 0
      %1452 = vmatpush1.bf16.msra.mxu0 0
      %1453 = vmatprep.subr.bf16.mxu0 0
      %1454 = vmatpush1.bf16.msra.mxu0 0
      %1455 = vmatprep.subr.bf16.mxu0 0
      %1456 = vmatpush1.bf16.msra.mxu0 0
      %1457 = vmatprep.subr.bf16.mxu0 0
      %1458 = vmatpush1.bf16.msra.mxu0 0
      %1459 = vmatprep.subr.bf16.mxu0 0
      %1460 = vmatpush1.bf16.msra.mxu0 0
      %1461 = vmatprep.subr.bf16.mxu0 0
      %1462 = vmatpush1.bf16.msra.mxu0 0
      %1463 = vmatprep.subr.bf16.mxu0 0
      %1464 = vmatpush1.bf16.msra.mxu0 0
      %1465 = vmatprep.mubr.bf16.mxu0 0
      %1466 = vmatmul.mubr.bf16.gmra.mrb[0].mxu0 %v1395
      %v1467 = vpop.f32.mrb[0].mxu0
      %v1468 = vadd.f32 %v1380, %v1467
      %v1469 = vpop.f32.mrb[0].mxu0
      %v1470 = vpop.f32.mrb[0].mxu0
      %v1471 = vadd.f32 %v1380, %v1470
      %v1472 = vpop.f32.mrb[0].mxu0
      %1473 = vmatprep.mubr.bf16.mxu0 0
      %1474 = vmatmul.mubr.bf16.gmra.mrb[0].mxu0 %v1398
      %v1475 = vpop.f32.mrb[0].mxu0
      %v1476 = vadd.f32 %v1380, %v1475
      %v1477 = vpop.f32.mrb[0].mxu0
      %v1478 = vpop.f32.mrb[0].mxu0
      %v1479 = vadd.f32 %v1380, %v1478
      %v1480 = vpop.f32.mrb[0].mxu0
      %1481 = vmatprep.mubr.bf16.mxu0 0
      %1482 = vmatmul.mubr.bf16.gmra.mrb[0].mxu0 %v1401
      %v1483 = vpop.f32.mrb[0].mxu0
      %v1484 = vadd.f32 %v1380, %v1483
      %v1485 = vpop.f32.mrb[0].mxu0
      %v1486 = vpop.f32.mrb[0].mxu0
      %v1487 = vadd.f32 %v1380, %v1486
      %v1488 = vpop.f32.mrb[0].mxu0
      %1489 = vmatprep.mubr.bf16.mxu0 0
      %1490 = vmatmul.mubr.bf16.gmra.mrb[0].mxu0 %v1404
      %v1491 = vpop.f32.mrb[0].mxu0
      %v1492 = vadd.f32 %v1380, %v1491
      %v1493 = vpop.f32.mrb[0].mxu0
      %v1494 = vpop.f32.mrb[0].mxu0
      %v1495 = vadd.f32 %v1380, %v1494
      %v1496 = vpop.f32.mrb[0].mxu0
      %1497 = vmatprep.mubr.bf16.mxu0 0
      %1498 = vmatmul.mubr.bf16.gmra.mrb[0].mxu0 %v1407
      %v1499 = vpop.f32.mrb[0].mxu0
      %v1500 = vadd.f32 %v1380, %v1499
      %v1501 = vpop.f32.mrb[0].mxu0
      %v1502 = vpop.f32.mrb[0].mxu0
      %v1503 = vadd.f32 %v1380, %v1502
      %v1504 = vpop.f32.mrb[0].mxu0
      %1505 = vmatprep.mubr.bf16.mxu0 0
      %1506 = vmatmul.mubr.bf16.gmra.mrb[0].mxu0 %v1410
      %v1507 = vpop.f32.mrb[0].mxu0
      %v1508 = vadd.f32 %v1380, %v1507
      %v1509 = vpop.f32.mrb[0].mxu0
      %v1510 = vpop.f32.mrb[0].mxu0
      %v1511 = vadd.f32 %v1380, %v1510
      %v1512 = vpop.f32.mrb[0].mxu0
      %1513 = vmatprep.mubr.bf16.mxu0 0
      %1514 = vmatmul.mubr.bf16.gmra.mrb[0].mxu0 %v1413
      %v1515 = vpop.f32.mrb[0].mxu0
      %v1516 = vadd.f32 %v1380, %v1515
      %v1517 = vpop.f32.mrb[0].mxu0
      %v1518 = vpop.f32.mrb[0].mxu0
      %v1519 = vadd.f32 %v1380, %v1518
      %v1520 = vpop.f32.mrb[0].mxu0
      %1521 = vmatprep.mubr.bf16.mxu0 0
      %1522 = vmatmul.mubr.bf16.gmra.mrb[0].mxu0 %v1416
      %v1523 = vpop.f32.mrb[0].mxu0
      %v1524 = vadd.f32 %v1380, %v1523
      %v1525 = vpop.f32.mrb[0].mxu0
      %v1526 = vpop.f32.mrb[0].mxu0
      %v1527 = vadd.f32 %v1380, %v1526
      %v1528 = vpop.f32.mrb[0].mxu0
      %1529 = vmatprep.mubr.bf16.mxu0 0
      %1530 = vmatmul.mubr.bf16.gmra.mrb[0].mxu0 %v1419
      %v1531 = vpop.f32.mrb[0].mxu0
      %v1532 = vadd.f32 %v1380, %v1531
      %v1533 = vpop.f32.mrb[0].mxu0
      %v1534 = vpop.f32.mrb[0].mxu0
      %v1535 = vadd.f32 %v1380, %v1534
      %v1536 = vpop.f32.mrb[0].mxu0
      %1537 = vmatprep.mubr.bf16.mxu0 0
      %1538 = vmatmul.mubr.bf16.gmra.mrb[0].mxu0 %v1422
      %v1539 = vpop.f32.mrb[0].mxu0
      %v1540 = vadd.f32 %v1380, %v1539
      %v1541 = vpop.f32.mrb[0].mxu0
      %v1542 = vpop.f32.mrb[0].mxu0
      %v1543 = vadd.f32 %v1380, %v1542
      %v1544 = vpop.f32.mrb[0].mxu0
      %1545 = vmatprep.mubr.bf16.mxu0 0
      %1546 = vmatmul.mubr.bf16.gmra.mrb[0].mxu0 %v1425
      %v1547 = vpop.f32.mrb[0].mxu0
      %v1548 = vadd.f32 %v1380, %v1547
      %v1549 = vpop.f32.mrb[0].mxu0
      %v1550 = vpop.f32.mrb[0].mxu0
      %v1551 = vadd.f32 %v1380, %v1550
      %v1552 = vpop.f32.mrb[0].mxu0
      %1553 = vmatprep.mubr.bf16.mxu0 0
      %1554 = vmatmul.mubr.bf16.gmra.mrb[0].mxu0 %v1428
      %v1555 = vpop.f32.mrb[0].mxu0
      %v1556 = vadd.f32 %v1380, %v1555
      %v1557 = vpop.f32.mrb[0].mxu0
      %v1558 = vpop.f32.mrb[0].mxu0
      %v1559 = vadd.f32 %v1380, %v1558
      %v1560 = vpop.f32.mrb[0].mxu0
      %1561 = vmatprep.mubr.bf16.mxu0 0
      %1562 = vmatmul.mubr.bf16.gmra.mrb[0].mxu0 %v1431
      %v1563 = vpop.f32.mrb[0].mxu0
      %v1564 = vadd.f32 %v1380, %v1563
      %v1565 = vpop.f32.mrb[0].mxu0
      %v1566 = vpop.f32.mrb[0].mxu0
      %v1567 = vpop.f32.mrb[0].mxu0
      %1568 = vdwg.mxu0
      %v1569 = vmax.f32 %v1468, 0.0
      %v1570 = vmax.f32 %v1471, 0.0
      %v1571 = vmax.f32 %v1476, 0.0
      %v1572 = vmax.f32 %v1479, 0.0
      %v1573 = vmax.f32 %v1484, 0.0
      %v1574 = vmax.f32 %v1487, 0.0
      %v1575 = vmax.f32 %v1492, 0.0
      %v1576 = vmax.f32 %v1495, 0.0
      %v1577 = vmax.f32 %v1500, 0.0
      %v1578 = vmax.f32 %v1503, 0.0
      %v1579 = vmax.f32 %v1508, 0.0
      %v1580 = vmax.f32 %v1511, 0.0
      %v1581 = vmax.f32 %v1516, 0.0
      %v1582 = vmax.f32 %v1519, 0.0
      %v1583 = vmax.f32 %v1524, 0.0
      %v1584 = vmax.f32 %v1527, 0.0
      %v1585 = vmax.f32 %v1532, 0.0
      %v1586 = vmax.f32 %v1535, 0.0
      %v1587 = vmax.f32 %v1540, 0.0
      %v1588 = vmax.f32 %v1543, 0.0
      %v1589 = vmax.f32 %v1548, 0.0
      %v1590 = vmax.f32 %v1551, 0.0
      %v1591 = vmax.f32 %v1556, 0.0
      %v1592 = vmax.f32 %v1559, 0.0
      %v1593 = vmax.f32 %v1564, 0.0
      %v1594 = vpack.c.bf16 %v1570, %v1569
      %v1595 = vpack.c.bf16 %v1572, %v1571
      %v1596 = vpack.c.bf16 %v1574, %v1573
      %v1597 = vpack.c.bf16 %v1576, %v1575
      %v1598 = vpack.c.bf16 %v1578, %v1577
      %v1599 = vpack.c.bf16 %v1580, %v1579
      %v1600 = vpack.c.bf16 %v1582, %v1581
      %v1601 = vpack.c.bf16 %v1584, %v1583
      %v1602 = vpack.c.bf16 %v1586, %v1585
      %v1603 = vpack.c.bf16 %v1588, %v1587
      %v1604 = vpack.c.bf16 %v1590, %v1589
      %v1605 = vpack.c.bf16 %v1592, %v1591
      %v1606 = vpack.c.bf16 %v1593, %v1593
      %v1620 = vunpack.c.l.b16 %v1594
      %v1621 = vunpack.c.h.b16 %v1594
      %v1622 = vunpack.c.l.b16 %v1595
      %v1623 = vunpack.c.h.b16 %v1595
      %v1624 = vunpack.c.l.b16 %v1596
      %v1625 = vunpack.c.h.b16 %v1596
      %v1626 = vunpack.c.l.b16 %v1597
      %v1627 = vunpack.c.h.b16 %v1597
      %v1628 = vunpack.c.l.b16 %v1598
      %v1629 = vunpack.c.h.b16 %v1598
      %v1630 = vunpack.c.l.b16 %v1599
      %v1631 = vunpack.c.h.b16 %v1599
      %v1632 = vunpack.c.l.b16 %v1600
      %v1633 = vunpack.c.h.b16 %v1600
      %v1634 = vunpack.c.l.b16 %v1601
      %v1635 = vunpack.c.h.b16 %v1601
      %v1636 = vunpack.c.l.b16 %v1602
      %v1637 = vunpack.c.h.b16 %v1602
      %v1638 = vunpack.c.l.b16 %v1603
      %v1639 = vunpack.c.h.b16 %v1603
      %v1640 = vunpack.c.l.b16 %v1604
      %v1641 = vunpack.c.h.b16 %v1604
      %v1642 = vunpack.c.l.b16 %v1605
      %v1643 = vunpack.c.h.b16 %v1605
      %v1644 = vunpack.c.l.b16 %v1606
      %v1645 = vpack.c.b16 %v1620, %v1620
      %v1646 = vpack.c.b16 %v1621, %v1621
      %v1647 = vpack.c.b16 %v1622, %v1622
      %v1648 = vpack.c.b16 %v1623, %v1623
      %v1649 = vpack.c.b16 %v1624, %v1624
      %v1650 = vpack.c.b16 %v1625, %v1625
      %v1651 = vpack.c.b16 %v1626, %v1626
      %v1652 = vpack.c.b16 %v1627, %v1627
      %v1653 = vpack.c.b16 %v1628, %v1628
      %v1654 = vpack.c.b16 %v1629, %v1629
      %v1655 = vpack.c.b16 %v1630, %v1630
      %v1656 = vpack.c.b16 %v1631, %v1631
      %v1657 = vpack.c.b16 %v1632, %v1632
      %v1658 = vpack.c.b16 %v1633, %v1633
      %v1659 = vpack.c.b16 %v1634, %v1634
      %v1660 = vpack.c.b16 %v1635, %v1635
      %v1661 = vpack.c.b16 %v1636, %v1636
      %v1662 = vpack.c.b16 %v1637, %v1637
      %v1663 = vpack.c.b16 %v1638, %v1638
      %v1664 = vpack.c.b16 %v1639, %v1639
      %v1665 = vpack.c.b16 %v1640, %v1640
      %v1666 = vpack.c.b16 %v1641, %v1641
      %v1667 = vpack.c.b16 %v1642, %v1642
      %v1668 = vpack.c.b16 %v1643, %v1643
      %v1669 = vpack.c.b16 %v1644, %v1644
      %vm1695 = vcmask 519168
      %1696 = vst.msk [vmem:[%s224] sm:$0xf] %vm1695, %v1645
      %1697 = vst.msk [vmem:[%s224 + $0x4] sm:$0xf] %vm1695, %v1646
      %1698 = vst.msk [vmem:[%s224 + $0x8] sm:$0xf] %vm1695, %v1647
      %1699 = vst.msk [vmem:[%s224 + $0xc] sm:$0xf] %vm1695, %v1648
      %1700 = vst.msk [vmem:[%s224 + $0x10] sm:$0xf] %vm1695, %v1649
      %1701 = vst.msk [vmem:[%s224 + $0x14] sm:$0xf] %vm1695, %v1650
      %1702 = vst.msk [vmem:[%s224 + $0x18] sm:$0xf] %vm1695, %v1651
      %1703 = vst.msk [vmem:[%s224 + $0x1c] sm:$0xf] %vm1695, %v1652
      %1704 = vst.msk [vmem:[%s224 + $0x20] sm:$0xf] %vm1695, %v1653
      %1705 = vst.msk [vmem:[%s224 + $0x24] sm:$0xf] %vm1695, %v1654
      %1706 = vst.msk [vmem:[%s224 + $0x28] sm:$0xf] %vm1695, %v1655
      %1707 = vst.msk [vmem:[%s224 + $0x2c] sm:$0xf] %vm1695, %v1656
      %1708 = vst.msk [vmem:[%s224 + $0x30] sm:$0xf] %vm1695, %v1657
      %1709 = vst.msk [vmem:[%s224 + $0x34] sm:$0xf] %vm1695, %v1658
      %1710 = vst.msk [vmem:[%s224 + $0x38] sm:$0xf] %vm1695, %v1659
      %1711 = vst.msk [vmem:[%s224 + $0x3c] sm:$0xf] %vm1695, %v1660
      %1712 = vst.msk [vmem:[%s224 + $0x40] sm:$0xf] %vm1695, %v1661
      %1713 = vst.msk [vmem:[%s224 + $0x44] sm:$0xf] %vm1695, %v1662
      %1714 = vst.msk [vmem:[%s224 + $0x48] sm:$0xf] %vm1695, %v1663
      %1715 = vst.msk [vmem:[%s224 + $0x4c] sm:$0xf] %vm1695, %v1664
      %1716 = vst.msk [vmem:[%s224 + $0x50] sm:$0xf] %vm1695, %v1665
      %1717 = vst.msk [vmem:[%s224 + $0x54] sm:$0xf] %vm1695, %v1666
      %1718 = vst.msk [vmem:[%s224 + $0x58] sm:$0xf] %vm1695, %v1667
      %1719 = vst.msk [vmem:[%s224 + $0x5c] sm:$0xf] %vm1695, %v1668
      %vm1720 = vcmask 517120
      %1721 = vst.msk [vmem:[%s224 + $0x60] sm:$0x3] %vm1720, %v1669
      %p1722 = scmp.lt.s32.totalorder %s16, 1
      %s1723 = scalar_select %p1722, %s16, 1
      %s1724 = smul.addr %s1723, 25
      %s1725 = smul.addr %s1724, 4
      %s1726 = scalar_lea.vmem %s5, %s1725
      // Predicated region
      $region41: #{forward.3} parent=39 // pred_check
        %p1727 = pneg %p144
      $region42: #{forward.3} parent=39 // pred_check_branch
        %1729 = sbr.rel (%p1727) target = $region44
      $region43: #{forward.3} parent=39 // pred_region
        _
      $region44: #{forward.3} parent=39 // pred_fallthru
        _
    $region40: #{forward.3} parent=5 // pred_fallthru
      _
    %p1730 = scmp.le.s32.totalorder 2, %s11
    // Predicated region
    $region45: #{forward.3} parent=5 // pred_check
      %p1731 = pneg %p1730
    $region46: #{forward.3} parent=5 // pred_check_branch
      %1733 = sbr.rel (%p1731) target = $region48
    $region47: #{forward.3} parent=5 // pred_region
      %s1734 = ssub.s32 %s11, 2
      // Predicated region
      $region49: #{forward.3} parent=47 // pred_check
        %p1735 = pneg %p150
      $region50: #{forward.3} parent=47 // pred_check_branch
        %1737 = sbr.rel (%p1735) target = $region52
      $region51: #{forward.3} parent=47 // pred_region
        %p1738 = scmp.lt.s32.totalorder %s17, 1
        %s1739 = scalar_select %p1738, %s17, 1
        %s1740 = smul.addr %s1739, 25
        %s1741 = smul.addr %s1740, 4
        %s1742 = scalar_lea.vmem %s5, %s1741
      $region52: #{forward.3} parent=47 // pred_fallthru
        _
    $region48: #{forward.3} parent=5 // pred_fallthru
      _
  $region6: #{forward.3} parent=0 // loop_footer
    %s15 = sadd.s32 1, %s11
  $region7: #{forward.3} parent=0 // loop_footer_branch
    %10 = sbr.rel target = $region3
  $region8: #{forward.3} parent=0 // loop_exit
    _

// kernel: forward.4
$region0: #{forward.4}
  #allocation0 [shape = 'u32[]', space=smem, size = 0x4, offset = 0x4, fixed_abs, tag = 'smem constant byte address 0x4 - core index']
  #allocation1 [shape = 'u32[144,128]{1,0:T(1,128)}', space=vmem, size = 0x12000, scoped, tag = 'internal scratch']
  %s0 = inlined_call_operand.vmem [shape: bf16[2,18,9,64], index: 0, kind: input, shape index: {}]
  %s1 = inlined_call_operand.vmem [shape: bf16[2,18,9,64], index: 1, kind: input, shape index: {}]
  %s2 = inlined_call_operand.vmem [shape: bf16[9,64,64], index: 2, kind: input, shape index: {}]
  %s3 = inlined_call_operand.vmem [shape: f32[1,64], index: 3, kind: input, shape index: {}]
  %s4 = inlined_call_operand.vmem [shape: bf16[2,64,64], index: 4, kind: output, shape index: {}]
  %s5 = sld [smem:[#allocation0]]
  $region49: #{forward.4} parent=0
    _
  %s7 = ssub.s32 1, %s5
  %s8 = scalar_select 0, %s7, %s5
  loop: start=0, step=1, limit=4
  $region2: #{forward.4} parent=0 // loop_pre_header
    _
  $region3: #{forward.4} parent=0 // loop_header
    %s10 = sphi 0, %s14
    %p11 = scmp.ge.s32.totalorder %s10, 4
    %s20 = sphi 0, %s22
    %s23 = sphi 0, %s20
    %s24 = sphi 0, %s23
    %s40 = sphi 0, %s24
    %s46 = sphi 0, %s48
    %s49 = sphi 0, %s46
    %s50 = sphi 0, %s49
    %s66 = sphi 0, %s50
    %s70 = sphi 0, %s70
    %s72 = sphi 0, %s70
    %s73 = sphi 0, %s72
    %s87 = sphi 0, %s73
    %s91 = sphi 0, %s91
    %s93 = sphi 0, %s91
    %s94 = sphi 0, %s93
    %s108 = sphi 0, %s94
    %s114 = sphi 0, %s116
    %s117 = sphi 0, %s114
    %s118 = sphi 0, %s117
    %s134 = sphi 0, %s118
  $region4: #{forward.4} parent=0 // loop_header_branch
    %13 = sbr.rel (%p11) target = $region8
  $region5: #{forward.4} parent=0 // loop_body
    %s15 = ssub.s32 %s10, 1
    %s16 = ssub.s32 %s10, 2
    %s17 = sadd.s32 %s10, 1
    %s18 = ssub.s32 %s10, %s17
    %p19 = scmp.eq.s32.totalorder %s18, 0
    %s21 = sadd.s32 %s20, 1
    %s22 = scalar_select %p19, %s20, %s21
    %p25 = pneg %p19
    %p26 = scmp.eq.s32.totalorder %s10, 1
    %p27 = por %p25, %p26
    %p28 = scmp.ne.s32.totalorder %s20, %s23
    %p29 = scmp.eq.s32.totalorder %s10, 0
    %p30 = por %p28, %p29
    %p31 = scmp.ne.s32.totalorder %s20, %s23
    %p32 = scmp.eq.s32.totalorder %s15, 1
    %p33 = por %p31, %p32
    %p34 = scmp.ne.s32.totalorder %s23, %s24
    %p35 = scmp.eq.s32.totalorder %s15, 0
    %p36 = por %p34, %p35
    %p37 = scmp.ne.s32.totalorder %s23, %s24
    %p38 = scmp.eq.s32.totalorder %s16, 1
    %p39 = por %p37, %p38
    %p41 = scmp.ne.s32.totalorder %s24, %s40
    %p42 = scmp.eq.s32.totalorder %s16, 0
    %p43 = por %p41, %p42
    %s44 = ssub.s32 %s10, %s17
    %p45 = scmp.eq.s32.totalorder %s44, 0
    %s47 = sadd.s32 %s46, 1
    %s48 = scalar_select %p45, %s46, %s47
    %p51 = pneg %p45
    %p52 = scmp.eq.s32.totalorder %s10, 1
    %p53 = por %p51, %p52
    %p54 = scmp.ne.s32.totalorder %s46, %s49
    %p55 = scmp.eq.s32.totalorder %s10, 0
    %p56 = por %p54, %p55
    %p57 = scmp.ne.s32.totalorder %s46, %s49
    %p58 = scmp.eq.s32.totalorder %s15, 1
    %p59 = por %p57, %p58
    %p60 = scmp.ne.s32.totalorder %s49, %s50
    %p61 = scmp.eq.s32.totalorder %s15, 0
    %p62 = por %p60, %p61
    %p63 = scmp.ne.s32.totalorder %s49, %s50
    %p64 = scmp.eq.s32.totalorder %s16, 1
    %p65 = por %p63, %p64
    %p67 = scmp.ne.s32.totalorder %s50, %s66
    %p68 = scmp.eq.s32.totalorder %s16, 0
    %p69 = por %p67, %p68
    %s71 = sadd.s32 %s70, 1
    %p74 = scmp.eq.s32.totalorder %s10, 1
    %p75 = scmp.ne.s32.totalorder %s70, %s72
    %p76 = scmp.eq.s32.totalorder %s10, 0
    %p77 = por %p75, %p76
    %p78 = scmp.ne.s32.totalorder %s70, %s72
    %p79 = scmp.eq.s32.totalorder %s15, 1
    %p80 = por %p78, %p79
    %p81 = scmp.ne.s32.totalorder %s72, %s73
    %p82 = scmp.eq.s32.totalorder %s15, 0
    %p83 = por %p81, %p82
    %p84 = scmp.ne.s32.totalorder %s72, %s73
    %p85 = scmp.eq.s32.totalorder %s16, 1
    %p86 = por %p84, %p85
    %p88 = scmp.ne.s32.totalorder %s73, %s87
    %p89 = scmp.eq.s32.totalorder %s16, 0
    %p90 = por %p88, %p89
    %s92 = sadd.s32 %s91, 1
    %p95 = scmp.eq.s32.totalorder %s10, 1
    %p96 = scmp.ne.s32.totalorder %s91, %s93
    %p97 = scmp.eq.s32.totalorder %s10, 0
    %p98 = por %p96, %p97
    %p99 = scmp.ne.s32.totalorder %s91, %s93
    %p100 = scmp.eq.s32.totalorder %s15, 1
    %p101 = por %p99, %p100
    %p102 = scmp.ne.s32.totalorder %s93, %s94
    %p103 = scmp.eq.s32.totalorder %s15, 0
    %p104 = por %p102, %p103
    %p105 = scmp.ne.s32.totalorder %s93, %s94
    %p106 = scmp.eq.s32.totalorder %s16, 1
    %p107 = por %p105, %p106
    %p109 = scmp.ne.s32.totalorder %s94, %s108
    %p110 = scmp.eq.s32.totalorder %s16, 0
    %p111 = por %p109, %p110
    %s112 = ssub.s32 %s10, %s17
    %p113 = scmp.eq.s32.totalorder %s112, 0
    %s115 = sadd.s32 %s114, 1
    %s116 = scalar_select %p113, %s114, %s115
    %p119 = pneg %p113
    %p120 = scmp.eq.s32.totalorder %s10, 1
    %p121 = por %p119, %p120
    %p122 = scmp.ne.s32.totalorder %s114, %s117
    %p123 = scmp.eq.s32.totalorder %s10, 0
    %p124 = por %p122, %p123
    %p125 = scmp.ne.s32.totalorder %s114, %s117
    %p126 = scmp.eq.s32.totalorder %s15, 1
    %p127 = por %p125, %p126
    %p128 = scmp.ne.s32.totalorder %s117, %s118
    %p129 = scmp.eq.s32.totalorder %s15, 0
    %p130 = por %p128, %p129
    %p131 = scmp.ne.s32.totalorder %s117, %s118
    %p132 = scmp.eq.s32.totalorder %s16, 1
    %p133 = por %p131, %p132
    %p135 = scmp.ne.s32.totalorder %s118, %s134
    %p136 = scmp.eq.s32.totalorder %s16, 0
    %p137 = por %p135, %p136
    %p138 = scmp.le.s32.totalorder 1, %s10
    %p139 = scmp.lt.s32.totalorder %s10, 3
    %p140 = pnand %p138, %p139
    %p141 = pneg %p140
    // Predicated region
    $region9: #{forward.4} parent=5 // pred_check
      _
    $region10: #{forward.4} parent=5 // pred_check_branch
      %143 = sbr.rel (%p140) target = $region12
    $region11: #{forward.4} parent=5 // pred_region
      %s144 = ssub.s32 %s10, 1
      // Predicated region
      $region13: #{forward.4} parent=11 // pred_check
        %p145 = pneg %p83
      $region14: #{forward.4} parent=11 // pred_check_branch
        %147 = sbr.rel (%p145) target = $region16
      $region15: #{forward.4} parent=11 // pred_region
        _
      $region16: #{forward.4} parent=11 // pred_fallthru
        _
      // Predicated region
      $region17: #{forward.4} parent=11 // pred_check
        %p148 = pneg %p104
      $region18: #{forward.4} parent=11 // pred_check_branch
        %150 = sbr.rel (%p148) target = $region20
      $region19: #{forward.4} parent=11 // pred_region
        _
      $region20: #{forward.4} parent=11 // pred_fallthru
        _
    $region12: #{forward.4} parent=5 // pred_fallthru
      _
    %p151 = scmp.lt.s32.totalorder %s10, 2
    // Predicated region
    $region21: #{forward.4} parent=5 // pred_check
      %p152 = pneg %p151
    $region22: #{forward.4} parent=5 // pred_check_branch
      %154 = sbr.rel (%p152) target = $region24
    $region23: #{forward.4} parent=5 // pred_region
      // Predicated region
      $region25: #{forward.4} parent=23 // pred_check
        %p155 = pneg %p30
      $region26: #{forward.4} parent=23 // pred_check_branch
        %157 = sbr.rel (%p155) target = $region28
      $region27: #{forward.4} parent=23 // pred_region
        %p158 = scmp.lt.s32.totalorder %s10, 1
        %s159 = scalar_select %p158, %s10, 1
        %s160 = smul.addr %s159, 36
        %s161 = smul.addr %s160, 4
        %s162 = scalar_lea.vmem %s0, %s161
      $region28: #{forward.4} parent=23 // pred_fallthru
        _
      // Predicated region
      $region29: #{forward.4} parent=23 // pred_check
        %p163 = pneg %p56
      $region30: #{forward.4} parent=23 // pred_check_branch
        %165 = sbr.rel (%p163) target = $region32
      $region31: #{forward.4} parent=23 // pred_region
        %p166 = scmp.lt.s32.totalorder %s10, 1
        %s167 = scalar_select %p166, %s10, 1
        %s168 = smul.addr %s167, 36
        %s169 = smul.addr %s168, 4
        %s170 = scalar_lea.vmem %s1, %s169
      $region32: #{forward.4} parent=23 // pred_fallthru
        _
    $region24: #{forward.4} parent=5 // pred_fallthru
      _
    %p171 = scmp.le.s32.totalorder 1, %s10
    %p172 = scmp.lt.s32.totalorder %s10, 3
    %p173 = pnand %p171, %p172
    %p174 = pneg %p173
    // Predicated region
    $region33: #{forward.4} parent=5 // pred_check
      _
    $region34: #{forward.4} parent=5 // pred_check_branch
      %176 = sbr.rel (%p173) target = $region36
    $region35: #{forward.4} parent=5 // pred_region
      %s177 = ssub.s32 %s10, 1
      %p178 = scmp.lt.s32.totalorder %s15, 1
      %s179 = scalar_select %p178, %s15, 1
      %s180 = smul.addr %s179, 36
      %s181 = smul.addr %s180, 4
      %s182 = scalar_lea.vmem %s0, %s181
      %p183 = pneg %p36
      %p184 = pneg %p33
      %p185 = scmp.lt.s32.totalorder %s15, 1
      %s186 = scalar_select %p185, %s15, 1
      %s187 = smul.addr %s186, 36
      %s188 = smul.addr %s187, 4
      %s189 = scalar_lea.vmem %s1, %s188
      %p190 = pneg %p62
      %p191 = pneg %p59
      %p192 = pneg %p83
      %p193 = pneg %p80
      %p194 = pneg %p104
      %p195 = pneg %p101
      %p196 = pneg %p130
      %p197 = pneg %p127
      %p198 = scmp.lt.s32.totalorder %s15, 1
      %s199 = scalar_select %p198, %s15, 1
      %s200 = smul.addr %s199, 8
      %s201 = smul.addr %s200, 4
      %s202 = scalar_lea.vmem %s4, %s201
      %p203 = scmp.lt.s32.totalorder %s15, 1
      %s204 = scalar_select %p203, %s15, 1
      %s205 = smul.addr %s204, 36
      %s206 = smul.addr %s205, 4
      %s207 = scalar_lea.vmem %s0, %s206
      %p208 = scmp.lt.s32.totalorder %s15, 1
      %s209 = scalar_select %p208, %s15, 1
      %s210 = smul.addr %s209, 36
      %s211 = smul.addr %s210, 4
      %s212 = scalar_lea.vmem %s1, %s211
      %p213 = scmp.lt.s32.totalorder %s15, 1
      %s214 = scalar_select %p213, %s15, 1
      %s215 = smul.addr %s214, 8
      %s216 = smul.addr %s215, 4
      %s217 = scalar_lea.vmem %s4, %s216
      %v219 = vld [vmem:[%s207] sm:$0xf]
      %v220 = vld [vmem:[%s207 + $0x4] sm:$0x1]
      %v221 = vld [vmem:[%s207 + $0x8] sm:$0xf]
      %v222 = vld [vmem:[%s207 + $0xc] sm:$0x1]
      %v223 = vld [vmem:[%s207 + $0x10] sm:$0xf]
      %v224 = vld [vmem:[%s207 + $0x14] sm:$0x1]
      %v225 = vld [vmem:[%s207 + $0x18] sm:$0xf]
      %v226 = vld [vmem:[%s207 + $0x1c] sm:$0x1]
      %v227 = vld [vmem:[%s207 + $0x20] sm:$0xf]
      %v228 = vld [vmem:[%s207 + $0x24] sm:$0x1]
      %v229 = vld [vmem:[%s207 + $0x28] sm:$0xf]
      %v230 = vld [vmem:[%s207 + $0x2c] sm:$0x1]
      %v231 = vld [vmem:[%s207 + $0x30] sm:$0xf]
      %v232 = vld [vmem:[%s207 + $0x34] sm:$0x1]
      %v233 = vld [vmem:[%s207 + $0x38] sm:$0xf]
      %v234 = vld [vmem:[%s207 + $0x3c] sm:$0x1]
      %v235 = vld [vmem:[%s207 + $0x40] sm:$0xf]
      %v236 = vld [vmem:[%s207 + $0x44] sm:$0x1]
      %v237 = vld [vmem:[%s207 + $0x48] sm:$0xf]
      %v238 = vld [vmem:[%s207 + $0x4c] sm:$0x1]
      %v239 = vld [vmem:[%s207 + $0x50] sm:$0xf]
      %v240 = vld [vmem:[%s207 + $0x54] sm:$0x1]
      %v241 = vld [vmem:[%s207 + $0x58] sm:$0xf]
      %v242 = vld [vmem:[%s207 + $0x5c] sm:$0x1]
      %v243 = vld [vmem:[%s207 + $0x60] sm:$0xf]
      %v244 = vld [vmem:[%s207 + $0x64] sm:$0x1]
      %v245 = vld [vmem:[%s207 + $0x68] sm:$0xf]
      %v246 = vld [vmem:[%s207 + $0x6c] sm:$0x1]
      %v247 = vld [vmem:[%s207 + $0x70] sm:$0xf]
      %v248 = vld [vmem:[%s207 + $0x74] sm:$0x1]
      %v249 = vld [vmem:[%s207 + $0x78] sm:$0xf]
      %v250 = vld [vmem:[%s207 + $0x7c] sm:$0x1]
      %v251 = vld [vmem:[%s207 + $0x80] sm:$0xf]
      %v252 = vld [vmem:[%s207 + $0x84] sm:$0x1]
      %v253 = vld [vmem:[%s207 + $0x88] sm:$0xf]
      %v254 = vld [vmem:[%s207 + $0x8c] sm:$0x1]
      %v255 = vld [vmem:[%s212] sm:$0xf]
      %v256 = vld [vmem:[%s212 + $0x4] sm:$0x1]
      %v257 = vld [vmem:[%s212 + $0x8] sm:$0xf]
      %v258 = vld [vmem:[%s212 + $0xc] sm:$0x1]
      %v259 = vld [vmem:[%s212 + $0x10] sm:$0xf]
      %v260 = vld [vmem:[%s212 + $0x14] sm:$0x1]
      %v261 = vld [vmem:[%s212 + $0x18] sm:$0xf]
      %v262 = vld [vmem:[%s212 + $0x1c] sm:$0x1]
      %v263 = vld [vmem:[%s212 + $0x20] sm:$0xf]
      %v264 = vld [vmem:[%s212 + $0x24] sm:$0x1]
      %v265 = vld [vmem:[%s212 + $0x28] sm:$0xf]
      %v266 = vld [vmem:[%s212 + $0x2c] sm:$0x1]
      %v267 = vld [vmem:[%s212 + $0x30] sm:$0xf]
      %v268 = vld [vmem:[%s212 + $0x34] sm:$0x1]
      %v269 = vld [vmem:[%s212 + $0x38] sm:$0xf]
      %v270 = vld [vmem:[%s212 + $0x3c] sm:$0x1]
      %v271 = vld [vmem:[%s212 + $0x40] sm:$0xf]
      %v272 = vld [vmem:[%s212 + $0x44] sm:$0x1]
      %v273 = vld [vmem:[%s212 + $0x48] sm:$0xf]
      %v274 = vld [vmem:[%s212 + $0x4c] sm:$0x1]
      %v275 = vld [vmem:[%s212 + $0x50] sm:$0xf]
      %v276 = vld [vmem:[%s212 + $0x54] sm:$0x1]
      %v277 = vld [vmem:[%s212 + $0x58] sm:$0xf]
      %v278 = vld [vmem:[%s212 + $0x5c] sm:$0x1]
      %v279 = vld [vmem:[%s212 + $0x60] sm:$0xf]
      %v280 = vld [vmem:[%s212 + $0x64] sm:$0x1]
      %v281 = vld [vmem:[%s212 + $0x68] sm:$0xf]
      %v282 = vld [vmem:[%s212 + $0x6c] sm:$0x1]
      %v283 = vld [vmem:[%s212 + $0x70] sm:$0xf]
      %v284 = vld [vmem:[%s212 + $0x74] sm:$0x1]
      %v285 = vld [vmem:[%s212 + $0x78] sm:$0xf]
      %v286 = vld [vmem:[%s212 + $0x7c] sm:$0x1]
      %v287 = vld [vmem:[%s212 + $0x80] sm:$0xf]
      %v288 = vld [vmem:[%s212 + $0x84] sm:$0x1]
      %v289 = vld [vmem:[%s212 + $0x88] sm:$0xf]
      %v290 = vld [vmem:[%s212 + $0x8c] sm:$0x1]
      %v291 = vld [vmem:[%s2] sm:$0xf]
      %v292 = vld [vmem:[%s2 + $0x4] sm:$0xf]
      %v293 = vld [vmem:[%s2 + $0x8] sm:$0xf]
      %v294 = vld [vmem:[%s2 + $0xc] sm:$0xf]
      %v295 = vld [vmem:[%s2 + $0x10] sm:$0xf]
      %v296 = vld [vmem:[%s2 + $0x14] sm:$0xf]
      %v297 = vld [vmem:[%s2 + $0x18] sm:$0xf]
      %v298 = vld [vmem:[%s2 + $0x1c] sm:$0xf]
      %s299 = scalar_lea.vmem %s2, 32
      %v300 = vld [vmem:[%s299] sm:$0xf]
      %v301 = vld [vmem:[%s299 + $0x4] sm:$0xf]
      %v302 = vld [vmem:[%s299 + $0x8] sm:$0xf]
      %v303 = vld [vmem:[%s299 + $0xc] sm:$0xf]
      %v304 = vld [vmem:[%s299 + $0x10] sm:$0xf]
      %v305 = vld [vmem:[%s299 + $0x14] sm:$0xf]
      %v306 = vld [vmem:[%s299 + $0x18] sm:$0xf]
      %v307 = vld [vmem:[%s299 + $0x1c] sm:$0xf]
      %vm308 = vsmask.f32 3328
      %vm309 = vsmask.f32 7440
      %vm310 = vmor %vm308, %vm309
      %v312 = vshrl.u32 %v219, 16
      %v314 = vrot.slane %v312, 4
      %v315 = vshll.u32 %v219, 16
      %v317 = vrot.slane %v315, 5
      %v318 = vor.u32 %v314, %v317
      %v319 = vrot.slane %v318, 4
      %v321 = vshll.u32 %v220, 16
      %v323 = vrot.slane %v321, 5
      %v324 = vsel %vm310, %v319, %v323
      %v326 = vshrl.u32 %v221, 16
      %v328 = vrot.slane %v326, 4
      %v329 = vshll.u32 %v221, 16
      %v331 = vrot.slane %v329, 5
      %v332 = vor.u32 %v328, %v331
      %v333 = vrot.slane %v332, 4
      %v335 = vshll.u32 %v222, 16
      %v337 = vrot.slane %v335, 5
      %v338 = vsel %vm310, %v333, %v337
      %v340 = vshrl.u32 %v223, 16
      %v342 = vrot.slane %v340, 4
      %v343 = vshll.u32 %v223, 16
      %v345 = vrot.slane %v343, 5
      %v346 = vor.u32 %v342, %v345
      %v347 = vrot.slane %v346, 4
      %v349 = vshll.u32 %v224, 16
      %v351 = vrot.slane %v349, 5
      %v352 = vsel %vm310, %v347, %v351
      %v354 = vshrl.u32 %v225, 16
      %v356 = vrot.slane %v354, 4
      %v357 = vshll.u32 %v225, 16
      %v359 = vrot.slane %v357, 5
      %v360 = vor.u32 %v356, %v359
      %v361 = vrot.slane %v360, 4
      %v363 = vshll.u32 %v226, 16
      %v365 = vrot.slane %v363, 5
      %v366 = vsel %vm310, %v361, %v365
      %v368 = vshrl.u32 %v227, 16
      %v370 = vrot.slane %v368, 4
      %v371 = vshll.u32 %v227, 16
      %v373 = vrot.slane %v371, 5
      %v374 = vor.u32 %v370, %v373
      %v375 = vrot.slane %v374, 4
      %v377 = vshll.u32 %v228, 16
      %v379 = vrot.slane %v377, 5
      %v380 = vsel %vm310, %v375, %v379
      %v382 = vshrl.u32 %v229, 16
      %v384 = vrot.slane %v382, 4
      %v385 = vshll.u32 %v229, 16
      %v387 = vrot.slane %v385, 5
      %v388 = vor.u32 %v384, %v387
      %v389 = vrot.slane %v388, 4
      %v391 = vshll.u32 %v230, 16
      %v393 = vrot.slane %v391, 5
      %v394 = vsel %vm310, %v389, %v393
      %v396 = vshrl.u32 %v231, 16
      %v398 = vrot.slane %v396, 4
      %v399 = vshll.u32 %v231, 16
      %v401 = vrot.slane %v399, 5
      %v402 = vor.u32 %v398, %v401
      %v403 = vrot.slane %v402, 4
      %v405 = vshll.u32 %v232, 16
      %v407 = vrot.slane %v405, 5
      %v408 = vsel %vm310, %v403, %v407
      %v410 = vshrl.u32 %v233, 16
      %v412 = vrot.slane %v410, 4
      %v413 = vshll.u32 %v233, 16
      %v415 = vrot.slane %v413, 5
      %v416 = vor.u32 %v412, %v415
      %v417 = vrot.slane %v416, 4
      %v419 = vshll.u32 %v234, 16
      %v421 = vrot.slane %v419, 5
      %v422 = vsel %vm310, %v417, %v421
      %v424 = vshrl.u32 %v235, 16
      %v426 = vrot.slane %v424, 4
      %v427 = vshll.u32 %v235, 16
      %v429 = vrot.slane %v427, 5
      %v430 = vor.u32 %v426, %v429
      %v431 = vrot.slane %v430, 4
      %v433 = vshll.u32 %v236, 16
      %v435 = vrot.slane %v433, 5
      %v436 = vsel %vm310, %v431, %v435
      %v438 = vshrl.u32 %v237, 16
      %v440 = vrot.slane %v438, 4
      %v441 = vshll.u32 %v237, 16
      %v443 = vrot.slane %v441, 5
      %v444 = vor.u32 %v440, %v443
      %v445 = vrot.slane %v444, 4
      %v447 = vshll.u32 %v238, 16
      %v449 = vrot.slane %v447, 5
      %v450 = vsel %vm310, %v445, %v449
      %v452 = vshrl.u32 %v239, 16
      %v454 = vrot.slane %v452, 4
      %v455 = vshll.u32 %v239, 16
      %v457 = vrot.slane %v455, 5
      %v458 = vor.u32 %v454, %v457
      %v459 = vrot.slane %v458, 4
      %v461 = vshll.u32 %v240, 16
      %v463 = vrot.slane %v461, 5
      %v464 = vsel %vm310, %v459, %v463
      %v466 = vshrl.u32 %v241, 16
      %v468 = vrot.slane %v466, 4
      %v469 = vshll.u32 %v241, 16
      %v471 = vrot.slane %v469, 5
      %v472 = vor.u32 %v468, %v471
      %v473 = vrot.slane %v472, 4
      %v475 = vshll.u32 %v242, 16
      %v477 = vrot.slane %v475, 5
      %v478 = vsel %vm310, %v473, %v477
      %v480 = vshrl.u32 %v243, 16
      %v482 = vrot.slane %v480, 4
      %v483 = vshll.u32 %v243, 16
      %v485 = vrot.slane %v483, 5
      %v486 = vor.u32 %v482, %v485
      %v487 = vrot.slane %v486, 4
      %v489 = vshll.u32 %v244, 16
      %v491 = vrot.slane %v489, 5
      %v492 = vsel %vm310, %v487, %v491
      %v494 = vshrl.u32 %v245, 16
      %v496 = vrot.slane %v494, 4
      %v497 = vshll.u32 %v245, 16
      %v499 = vrot.slane %v497, 5
      %v500 = vor.u32 %v496, %v499
      %v501 = vrot.slane %v500, 4
      %v503 = vshll.u32 %v246, 16
      %v505 = vrot.slane %v503, 5
      %v506 = vsel %vm310, %v501, %v505
      %v508 = vshrl.u32 %v247, 16
      %v510 = vrot.slane %v508, 4
      %v511 = vshll.u32 %v247, 16
      %v513 = vrot.slane %v511, 5
      %v514 = vor.u32 %v510, %v513
      %v515 = vrot.slane %v514, 4
      %v517 = vshll.u32 %v248, 16
      %v519 = vrot.slane %v517, 5
      %v520 = vsel %vm310, %v515, %v519
      %v522 = vshrl.u32 %v249, 16
      %v524 = vrot.slane %v522, 4
      %v525 = vshll.u32 %v249, 16
      %v527 = vrot.slane %v525, 5
      %v528 = vor.u32 %v524, %v527
      %v529 = vrot.slane %v528, 4
      %v531 = vshll.u32 %v250, 16
      %v533 = vrot.slane %v531, 5
      %v534 = vsel %vm310, %v529, %v533
      %v551 = vunpack.c.l.b16 %v255
      %v552 = vunpack.c.l.b16 %v257
      %v553 = vunpack.c.l.b16 %v259
      %v554 = vunpack.c.l.b16 %v261
      %v555 = vunpack.c.l.b16 %v263
      %v556 = vunpack.c.l.b16 %v265
      %v557 = vunpack.c.l.b16 %v267
      %v558 = vunpack.c.l.b16 %v269
      %v559 = vunpack.c.l.b16 %v271
      %v560 = vunpack.c.l.b16 %v273
      %v561 = vunpack.c.l.b16 %v275
      %v562 = vunpack.c.l.b16 %v277
      %v563 = vunpack.c.l.b16 %v279
      %v564 = vunpack.c.l.b16 %v281
      %v565 = vunpack.c.l.b16 %v283
      %v566 = vunpack.c.l.b16 %v285
      %v567 = vpack.c.b16 %v552, %v551
      %v568 = vpack.c.b16 %v554, %v553
      %v569 = vpack.c.b16 %v556, %v555
      %v570 = vpack.c.b16 %v558, %v557
      %v571 = vpack.c.b16 %v560, %v559
      %v572 = vpack.c.b16 %v562, %v561
      %v573 = vpack.c.b16 %v564, %v563
      %v574 = vpack.c.b16 %v566, %v565
      %v583 = vunpack.c.l.b16 %v300
      %v584 = vunpack.c.l.b16 %v301
      %v585 = vunpack.c.l.b16 %v302
      %v586 = vunpack.c.l.b16 %v303
      %v587 = vunpack.c.l.b16 %v304
      %v588 = vunpack.c.l.b16 %v305
      %v589 = vunpack.c.l.b16 %v306
      %v590 = vunpack.c.l.b16 %v307
      %v591 = vpack.c.b16 %v584, %v583
      %v592 = vpack.c.b16 %v586, %v585
      %v593 = vpack.c.b16 %v588, %v587
      %v594 = vpack.c.b16 %v590, %v589
      %vm599 = vcmask 523264
      %v601 = vsel %vm599, %v567, 0
      %v604 = vsel %vm599, %v568, 0
      %v607 = vsel %vm599, %v569, 0
      %v610 = vsel %vm599, %v570, 0
      %v613 = vsel %vm599, %v571, 0
      %v616 = vsel %vm599, %v572, 0
      %v619 = vsel %vm599, %v573, 0
      %v622 = vsel %vm599, %v574, 0
      %624 = vmatprep.subr.bf16.mxu0 0
      %625 = vmatpush1.bf16.msra.mxu0 %v591
      %626 = vmatprep.subr.bf16.mxu0 0
      %627 = vmatpush1.bf16.msra.mxu0 %v592
      %628 = vmatprep.subr.bf16.mxu0 0
      %629 = vmatpush1.bf16.msra.mxu0 %v593
      %630 = vmatprep.subr.bf16.mxu0 0
      %631 = vmatpush1.bf16.msra.mxu0 %v594
      %632 = vmatprep.subr.bf16.mxu0 0
      %633 = vmatpush1.bf16.msra.mxu0 0
      %634 = vmatprep.subr.bf16.mxu0 0
      %635 = vmatpush1.bf16.msra.mxu0 0
      %636 = vmatprep.subr.bf16.mxu0 0
      %637 = vmatpush1.bf16.msra.mxu0 0
      %638 = vmatprep.subr.bf16.mxu0 0
      %639 = vmatpush1.bf16.msra.mxu0 0
      %640 = vmatprep.subr.bf16.mxu0 0
      %641 = vmatpush1.bf16.msra.mxu0 0
      %642 = vmatprep.subr.bf16.mxu0 0
      %643 = vmatpush1.bf16.msra.mxu0 0
      %644 = vmatprep.subr.bf16.mxu0 0
      %645 = vmatpush1.bf16.msra.mxu0 0
      %646 = vmatprep.subr.bf16.mxu0 0
      %647 = vmatpush1.bf16.msra.mxu0 0
      %648 = vmatprep.subr.bf16.mxu0 0
      %649 = vmatpush1.bf16.msra.mxu0 0
      %650 = vmatprep.subr.bf16.mxu0 0
      %651 = vmatpush1.bf16.msra.mxu0 0
      %652 = vmatprep.subr.bf16.mxu0 0
      %653 = vmatpush1.bf16.msra.mxu0 0
      %654 = vmatprep.subr.bf16.mxu0 0
      %655 = vmatpush1.bf16.msra.mxu0 0
      %656 = vmatprep.mubr.bf16.mxu0 0
      %657 = vmatmul.mubr.bf16.gmra.mrb[0].mxu0 %v601
      %v658 = vpop.f32.mrb[0].mxu0
      %v659 = vadd.f32 0.0, %v658
      %v660 = vpop.f32.mrb[0].mxu0
      %v661 = vpop.f32.mrb[0].mxu0
      %v662 = vadd.f32 0.0, %v661
      %v663 = vpop.f32.mrb[0].mxu0
      %664 = vmatprep.mubr.bf16.mxu0 0
      %665 = vmatmul.mubr.bf16.gmra.mrb[0].mxu0 %v604
      %v666 = vpop.f32.mrb[0].mxu0
      %v667 = vadd.f32 0.0, %v666
      %v668 = vpop.f32.mrb[0].mxu0
      %v669 = vpop.f32.mrb[0].mxu0
      %v670 = vadd.f32 0.0, %v669
      %v671 = vpop.f32.mrb[0].mxu0
      %672 = vmatprep.mubr.bf16.mxu0 0
      %673 = vmatmul.mubr.bf16.gmra.mrb[0].mxu0 %v607
      %v674 = vpop.f32.mrb[0].mxu0
      %v675 = vadd.f32 0.0, %v674
      %v676 = vpop.f32.mrb[0].mxu0
      %v677 = vpop.f32.mrb[0].mxu0
      %v678 = vadd.f32 0.0, %v677
      %v679 = vpop.f32.mrb[0].mxu0
      %680 = vmatprep.mubr.bf16.mxu0 0
      %681 = vmatmul.mubr.bf16.gmra.mrb[0].mxu0 %v610
      %v682 = vpop.f32.mrb[0].mxu0
      %v683 = vadd.f32 0.0, %v682
      %v684 = vpop.f32.mrb[0].mxu0
      %v685 = vpop.f32.mrb[0].mxu0
      %v686 = vadd.f32 0.0, %v685
      %v687 = vpop.f32.mrb[0].mxu0
      %688 = vmatprep.mubr.bf16.mxu0 0
      %689 = vmatmul.mubr.bf16.gmra.mrb[0].mxu0 %v613
      %v690 = vpop.f32.mrb[0].mxu0
      %v691 = vadd.f32 0.0, %v690
      %v692 = vpop.f32.mrb[0].mxu0
      %v693 = vpop.f32.mrb[0].mxu0
      %v694 = vadd.f32 0.0, %v693
      %v695 = vpop.f32.mrb[0].mxu0
      %696 = vmatprep.mubr.bf16.mxu0 0
      %697 = vmatmul.mubr.bf16.gmra.mrb[0].mxu0 %v616
      %v698 = vpop.f32.mrb[0].mxu0
      %v699 = vadd.f32 0.0, %v698
      %v700 = vpop.f32.mrb[0].mxu0
      %v701 = vpop.f32.mrb[0].mxu0
      %v702 = vadd.f32 0.0, %v701
      %v703 = vpop.f32.mrb[0].mxu0
      %704 = vmatprep.mubr.bf16.mxu0 0
      %705 = vmatmul.mubr.bf16.gmra.mrb[0].mxu0 %v619
      %v706 = vpop.f32.mrb[0].mxu0
      %v707 = vadd.f32 0.0, %v706
      %v708 = vpop.f32.mrb[0].mxu0
      %v709 = vpop.f32.mrb[0].mxu0
      %v710 = vadd.f32 0.0, %v709
      %v711 = vpop.f32.mrb[0].mxu0
      %712 = vmatprep.mubr.bf16.mxu0 0
      %713 = vmatmul.mubr.bf16.gmra.mrb[0].mxu0 %v622
      %v714 = vpop.f32.mrb[0].mxu0
      %v715 = vadd.f32 0.0, %v714
      %v716 = vpop.f32.mrb[0].mxu0
      %v717 = vpop.f32.mrb[0].mxu0
      %v718 = vadd.f32 0.0, %v717
      %v719 = vpop.f32.mrb[0].mxu0
      %720 = vdwg.mxu0
      %v737 = vunpack.c.l.b16 %v219
      %v738 = vunpack.c.l.b16 %v221
      %v739 = vunpack.c.l.b16 %v223
      %v740 = vunpack.c.l.b16 %v225
      %v741 = vunpack.c.l.b16 %v227
      %v742 = vunpack.c.l.b16 %v229
      %v743 = vunpack.c.l.b16 %v231
      %v744 = vunpack.c.l.b16 %v233
      %v745 = vunpack.c.l.b16 %v235
      %v746 = vunpack.c.l.b16 %v237
      %v747 = vunpack.c.l.b16 %v239
      %v748 = vunpack.c.l.b16 %v241
      %v749 = vunpack.c.l.b16 %v243
      %v750 = vunpack.c.l.b16 %v245
      %v751 = vunpack.c.l.b16 %v247
      %v752 = vunpack.c.l.b16 %v249
      %v753 = vpack.c.b16 %v738, %v737
      %v754 = vpack.c.b16 %v740, %v739
      %v755 = vpack.c.b16 %v742, %v741
      %v756 = vpack.c.b16 %v744, %v743
      %v757 = vpack.c.b16 %v746, %v745
      %v758 = vpack.c.b16 %v748, %v747
      %v759 = vpack.c.b16 %v750, %v749
      %v760 = vpack.c.b16 %v752, %v751
      %v769 = vunpack.c.l.b16 %v291
      %v770 = vunpack.c.l.b16 %v292
      %v771 = vunpack.c.l.b16 %v293
      %v772 = vunpack.c.l.b16 %v294
      %v773 = vunpack.c.l.b16 %v295
      %v774 = vunpack.c.l.b16 %v296
      %v775 = vunpack.c.l.b16 %v297
      %v776 = vunpack.c.l.b16 %v298
      %v777 = vpack.c.b16 %v770, %v769
      %v778 = vpack.c.b16 %v772, %v771
      %v779 = vpack.c.b16 %v774, %v773
      %v780 = vpack.c.b16 %v776, %v775
      %v786 = vsel %vm599, %v753, 0
      %v789 = vsel %vm599, %v754, 0
      %v792 = vsel %vm599, %v755, 0
      %v795 = vsel %vm599, %v756, 0
      %v798 = vsel %vm599, %v757, 0
      %v801 = vsel %vm599, %v758, 0
      %v804 = vsel %vm599, %v759, 0
      %v807 = vsel %vm599, %v760, 0
      %809 = vmatprep.subr.bf16.mxu0 0
      %810 = vmatpush1.bf16.msra.mxu0 %v777
      %811 = vmatprep.subr.bf16.mxu0 0
      %812 = vmatpush1.bf16.msra.mxu0 %v778
      %813 = vmatprep.subr.bf16.mxu0 0
      %814 = vmatpush1.bf16.msra.mxu0 %v779
      %815 = vmatprep.subr.bf16.mxu0 0
      %816 = vmatpush1.bf16.msra.mxu0 %v780
      %817 = vmatprep.subr.bf16.mxu0 0
      %818 = vmatpush1.bf16.msra.mxu0 0
      %819 = vmatprep.subr.bf16.mxu0 0
      %820 = vmatpush1.bf16.msra.mxu0 0
      %821 = vmatprep.subr.bf16.mxu0 0
      %822 = vmatpush1.bf16.msra.mxu0 0
      %823 = vmatprep.subr.bf16.mxu0 0
      %824 = vmatpush1.bf16.msra.mxu0 0
      %825 = vmatprep.subr.bf16.mxu0 0
      %826 = vmatpush1.bf16.msra.mxu0 0
      %827 = vmatprep.subr.bf16.mxu0 0
      %828 = vmatpush1.bf16.msra.mxu0 0
      %829 = vmatprep.subr.bf16.mxu0 0
      %830 = vmatpush1.bf16.msra.mxu0 0
      %831 = vmatprep.subr.bf16.mxu0 0
      %832 = vmatpush1.bf16.msra.mxu0 0
      %833 = vmatprep.subr.bf16.mxu0 0
      %834 = vmatpush1.bf16.msra.mxu0 0
      %835 = vmatprep.subr.bf16.mxu0 0
      %836 = vmatpush1.bf16.msra.mxu0 0
      %837 = vmatprep.subr.bf16.mxu0 0
      %838 = vmatpush1.bf16.msra.mxu0 0
      %839 = vmatprep.subr.bf16.mxu0 0
      %840 = vmatpush1.bf16.msra.mxu0 0
      %841 = vmatprep.mubr.bf16.mxu0 0
      %842 = vmatmul.mubr.bf16.gmra.mrb[0].mxu0 %v786
      %v843 = vpop.f32.mrb[0].mxu0
      %v844 = vadd.f32 %v659, %v843
      %v845 = vpop.f32.mrb[0].mxu0
      %v846 = vpop.f32.mrb[0].mxu0
      %v847 = vadd.f32 %v662, %v846
      %v848 = vpop.f32.mrb[0].mxu0
      %849 = vmatprep.mubr.bf16.mxu0 0
      %850 = vmatmul.mubr.bf16.gmra.mrb[0].mxu0 %v789
      %v851 = vpop.f32.mrb[0].mxu0
      %v852 = vadd.f32 %v667, %v851
      %v853 = vpop.f32.mrb[0].mxu0
      %v854 = vpop.f32.mrb[0].mxu0
      %v855 = vadd.f32 %v670, %v854
      %v856 = vpop.f32.mrb[0].mxu0
      %857 = vmatprep.mubr.bf16.mxu0 0
      %858 = vmatmul.mubr.bf16.gmra.mrb[0].mxu0 %v792
      %v859 = vpop.f32.mrb[0].mxu0
      %v860 = vadd.f32 %v675, %v859
      %v861 = vpop.f32.mrb[0].mxu0
      %v862 = vpop.f32.mrb[0].mxu0
      %v863 = vadd.f32 %v678, %v862
      %v864 = vpop.f32.mrb[0].mxu0
      %865 = vmatprep.mubr.bf16.mxu0 0
      %866 = vmatmul.mubr.bf16.gmra.mrb[0].mxu0 %v795
      %v867 = vpop.f32.mrb[0].mxu0
      %v868 = vadd.f32 %v683, %v867
      %v869 = vpop.f32.mrb[0].mxu0
      %v870 = vpop.f32.mrb[0].mxu0
      %v871 = vadd.f32 %v686, %v870
      %v872 = vpop.f32.mrb[0].mxu0
      %873 = vmatprep.mubr.bf16.mxu0 0
      %874 = vmatmul.mubr.bf16.gmra.mrb[0].mxu0 %v798
      %v875 = vpop.f32.mrb[0].mxu0
      %v876 = vadd.f32 %v691, %v875
      %v877 = vpop.f32.mrb[0].mxu0
      %v878 = vpop.f32.mrb[0].mxu0
      %v879 = vadd.f32 %v694, %v878
      %v880 = vpop.f32.mrb[0].mxu0
      %881 = vmatprep.mubr.bf16.mxu0 0
      %882 = vmatmul.mubr.bf16.gmra.mrb[0].mxu0 %v801
      %v883 = vpop.f32.mrb[0].mxu0
      %v884 = vadd.f32 %v699, %v883
      %v885 = vpop.f32.mrb[0].mxu0
      %v886 = vpop.f32.mrb[0].mxu0
      %v887 = vadd.f32 %v702, %v886
      %v888 = vpop.f32.mrb[0].mxu0
      %889 = vmatprep.mubr.bf16.mxu0 0
      %890 = vmatmul.mubr.bf16.gmra.mrb[0].mxu0 %v804
      %v891 = vpop.f32.mrb[0].mxu0
      %v892 = vadd.f32 %v707, %v891
      %v893 = vpop.f32.mrb[0].mxu0
      %v894 = vpop.f32.mrb[0].mxu0
      %v895 = vadd.f32 %v710, %v894
      %v896 = vpop.f32.mrb[0].mxu0
      %897 = vmatprep.mubr.bf16.mxu0 0
      %898 = vmatmul.mubr.bf16.gmra.mrb[0].mxu0 %v807
      %v899 = vpop.f32.mrb[0].mxu0
      %v900 = vadd.f32 %v715, %v899
      %v901 = vpop.f32.mrb[0].mxu0
      %v902 = vpop.f32.mrb[0].mxu0
      %v903 = vadd.f32 %v718, %v902
      %v904 = vpop.f32.mrb[0].mxu0
      %905 = vdwg.mxu0
      %v906 = vunpack.c.l.b16 %v324
      %v907 = vunpack.c.l.b16 %v338
      %v908 = vunpack.c.l.b16 %v352
      %v909 = vunpack.c.l.b16 %v366
      %v910 = vunpack.c.l.b16 %v380
      %v911 = vunpack.c.l.b16 %v394
      %v912 = vunpack.c.l.b16 %v408
      %v913 = vunpack.c.l.b16 %v422
      %v914 = vunpack.c.l.b16 %v436
      %v915 = vunpack.c.l.b16 %v450
      %v916 = vunpack.c.l.b16 %v464
      %v917 = vunpack.c.l.b16 %v478
      %v918 = vunpack.c.l.b16 %v492
      %v919 = vunpack.c.l.b16 %v506
      %v920 = vunpack.c.l.b16 %v520
      %v921 = vunpack.c.l.b16 %v534
      %v922 = vpack.c.b16 %v907, %v906
      %v923 = vpack.c.b16 %v909, %v908
      %v924 = vpack.c.b16 %v911, %v910
      %v925 = vpack.c.b16 %v913, %v912
      %v926 = vpack.c.b16 %v915, %v914
      %v927 = vpack.c.b16 %v917, %v916
      %v928 = vpack.c.b16 %v919, %v918
      %v929 = vpack.c.b16 %v921, %v920
      %v931 = vsel %vm599, %v922, 0
      %v934 = vsel %vm599, %v923, 0
      %v937 = vsel %vm599, %v924, 0
      %v940 = vsel %vm599, %v925, 0
      %v943 = vsel %vm599, %v926, 0
      %v946 = vsel %vm599, %v927, 0
      %v949 = vsel %vm599, %v928, 0
      %v952 = vsel %vm599, %v929, 0
      %954 = vmatprep.subr.bf16.mxu0 0
      %955 = vmatpush1.bf16.msra.mxu0 %v591
      %956 = vmatprep.subr.bf16.mxu0 0
      %957 = vmatpush1.bf16.msra.mxu0 %v592
      %958 = vmatprep.subr.bf16.mxu0 0
      %959 = vmatpush1.bf16.msra.mxu0 %v593
      %960 = vmatprep.subr.bf16.mxu0 0
      %961 = vmatpush1.bf16.msra.mxu0 %v594
      %962 = vmatprep.subr.bf16.mxu0 0
      %963 = vmatpush1.bf16.msra.mxu0 0
      %964 = vmatprep.subr.bf16.mxu0 0
      %965 = vmatpush1.bf16.msra.mxu0 0
      %966 = vmatprep.subr.bf16.mxu0 0
      %967 = vmatpush1.bf16.msra.mxu0 0
      %968 = vmatprep.subr.bf16.mxu0 0
      %969 = vmatpush1.bf16.msra.mxu0 0
      %970 = vmatprep.subr.bf16.mxu0 0
      %971 = vmatpush1.bf16.msra.mxu0 0
      %972 = vmatprep.subr.bf16.mxu0 0
      %973 = vmatpush1.bf16.msra.mxu0 0
      %974 = vmatprep.subr.bf16.mxu0 0
      %975 = vmatpush1.bf16.msra.mxu0 0
      %976 = vmatprep.subr.bf16.mxu0 0
      %977 = vmatpush1.bf16.msra.mxu0 0
      %978 = vmatprep.subr.bf16.mxu0 0
      %979 = vmatpush1.bf16.msra.mxu0 0
      %980 = vmatprep.subr.bf16.mxu0 0
      %981 = vmatpush1.bf16.msra.mxu0 0
      %982 = vmatprep.subr.bf16.mxu0 0
      %983 = vmatpush1.bf16.msra.mxu0 0
      %984 = vmatprep.subr.bf16.mxu0 0
      %985 = vmatpush1.bf16.msra.mxu0 0
      %986 = vmatprep.mubr.bf16.mxu0 0
      %987 = vmatmul.mubr.bf16.gmra.mrb[0].mxu0 %v931
      %v988 = vpop.f32.mrb[0].mxu0
      %v989 = vadd.f32 0.0, %v988
      %v990 = vpop.f32.mrb[0].mxu0
      %v991 = vpop.f32.mrb[0].mxu0
      %v992 = vadd.f32 0.0, %v991
      %v993 = vpop.f32.mrb[0].mxu0
      %994 = vmatprep.mubr.bf16.mxu0 0
      %995 = vmatmul.mubr.bf16.gmra.mrb[0].mxu0 %v934
      %v996 = vpop.f32.mrb[0].mxu0
      %v997 = vadd.f32 0.0, %v996
      %v998 = vpop.f32.mrb[0].mxu0
      %v999 = vpop.f32.mrb[0].mxu0
      %v1000 = vadd.f32 0.0, %v999
      %v1001 = vpop.f32.mrb[0].mxu0
      %1002 = vmatprep.mubr.bf16.mxu0 0
      %1003 = vmatmul.mubr.bf16.gmra.mrb[0].mxu0 %v937
      %v1004 = vpop.f32.mrb[0].mxu0
      %v1005 = vadd.f32 0.0, %v1004
      %v1006 = vpop.f32.mrb[0].mxu0
      %v1007 = vpop.f32.mrb[0].mxu0
      %v1008 = vadd.f32 0.0, %v1007
      %v1009 = vpop.f32.mrb[0].mxu0
      %1010 = vmatprep.mubr.bf16.mxu0 0
      %1011 = vmatmul.mubr.bf16.gmra.mrb[0].mxu0 %v940
      %v1012 = vpop.f32.mrb[0].mxu0
      %v1013 = vadd.f32 0.0, %v1012
      %v1014 = vpop.f32.mrb[0].mxu0
      %v1015 = vpop.f32.mrb[0].mxu0
      %v1016 = vadd.f32 0.0, %v1015
      %v1017 = vpop.f32.mrb[0].mxu0
      %1018 = vmatprep.mubr.bf16.mxu0 0
      %1019 = vmatmul.mubr.bf16.gmra.mrb[0].mxu0 %v943
      %v1020 = vpop.f32.mrb[0].mxu0
      %v1021 = vadd.f32 0.0, %v1020
      %v1022 = vpop.f32.mrb[0].mxu0
      %v1023 = vpop.f32.mrb[0].mxu0
      %v1024 = vadd.f32 0.0, %v1023
      %v1025 = vpop.f32.mrb[0].mxu0
      %1026 = vmatprep.mubr.bf16.mxu0 0
      %1027 = vmatmul.mubr.bf16.gmra.mrb[0].mxu0 %v946
      %v1028 = vpop.f32.mrb[0].mxu0
      %v1029 = vadd.f32 0.0, %v1028
      %v1030 = vpop.f32.mrb[0].mxu0
      %v1031 = vpop.f32.mrb[0].mxu0
      %v1032 = vadd.f32 0.0, %v1031
      %v1033 = vpop.f32.mrb[0].mxu0
      %1034 = vmatprep.mubr.bf16.mxu0 0
      %1035 = vmatmul.mubr.bf16.gmra.mrb[0].mxu0 %v949
      %v1036 = vpop.f32.mrb[0].mxu0
      %v1037 = vadd.f32 0.0, %v1036
      %v1038 = vpop.f32.mrb[0].mxu0
      %v1039 = vpop.f32.mrb[0].mxu0
      %v1040 = vadd.f32 0.0, %v1039
      %v1041 = vpop.f32.mrb[0].mxu0
      %1042 = vmatprep.mubr.bf16.mxu0 0
      %1043 = vmatmul.mubr.bf16.gmra.mrb[0].mxu0 %v952
      %v1044 = vpop.f32.mrb[0].mxu0
      %v1045 = vadd.f32 0.0, %v1044
      %v1046 = vpop.f32.mrb[0].mxu0
      %v1047 = vpop.f32.mrb[0].mxu0
      %v1048 = vadd.f32 0.0, %v1047
      %v1049 = vpop.f32.mrb[0].mxu0
      %1050 = vdwg.mxu0
      %1051 = vmatprep.subr.bf16.mxu0 0
      %1052 = vmatpush1.bf16.msra.mxu0 %v777
      %1053 = vmatprep.subr.bf16.mxu0 0
      %1054 = vmatpush1.bf16.msra.mxu0 %v778
      %1055 = vmatprep.subr.bf16.mxu0 0
      %1056 = vmatpush1.bf16.msra.mxu0 %v779
      %1057 = vmatprep.subr.bf16.mxu0 0
      %1058 = vmatpush1.bf16.msra.mxu0 %v780
      %1059 = vmatprep.subr.bf16.mxu0 0
      %1060 = vmatpush1.bf16.msra.mxu0 0
      %1061 = vmatprep.subr.bf16.mxu0 0
      %1062 = vmatpush1.bf16.msra.mxu0 0
      %1063 = vmatprep.subr.bf16.mxu0 0
      %1064 = vmatpush1.bf16.msra.mxu0 0
      %1065 = vmatprep.subr.bf16.mxu0 0
      %1066 = vmatpush1.bf16.msra.mxu0 0
      %1067 = vmatprep.subr.bf16.mxu0 0
      %1068 = vmatpush1.bf16.msra.mxu0 0
      %1069 = vmatprep.subr.bf16.mxu0 0
      %1070 = vmatpush1.bf16.msra.mxu0 0
      %1071 = vmatprep.subr.bf16.mxu0 0
      %1072 = vmatpush1.bf16.msra.mxu0 0
      %1073 = vmatprep.subr.bf16.mxu0 0
      %1074 = vmatpush1.bf16.msra.mxu0 0
      %1075 = vmatprep.subr.bf16.mxu0 0
      %1076 = vmatpush1.bf16.msra.mxu0 0
      %1077 = vmatprep.subr.bf16.mxu0 0
      %1078 = vmatpush1.bf16.msra.mxu0 0
      %1079 = vmatprep.subr.bf16.mxu0 0
      %1080 = vmatpush1.bf16.msra.mxu0 0
      %1081 = vmatprep.subr.bf16.mxu0 0
      %1082 = vmatpush1.bf16.msra.mxu0 0
      %1083 = vmatprep.mubr.bf16.mxu0 0
      %1084 = vmatmul.mubr.bf16.gmra.mrb[0].mxu0 %v601
      %v1085 = vpop.f32.mrb[0].mxu0
      %v1086 = vadd.f32 %v989, %v1085
      %v1087 = vpop.f32.mrb[0].mxu0
      %v1088 = vpop.f32.mrb[0].mxu0
      %v1089 = vadd.f32 %v992, %v1088
      %v1090 = vpop.f32.mrb[0].mxu0
      %1091 = vmatprep.mubr.bf16.mxu0 0
      %1092 = vmatmul.mubr.bf16.gmra.mrb[0].mxu0 %v604
      %v1093 = vpop.f32.mrb[0].mxu0
      %v1094 = vadd.f32 %v997, %v1093
      %v1095 = vpop.f32.mrb[0].mxu0
      %v1096 = vpop.f32.mrb[0].mxu0
      %v1097 = vadd.f32 %v1000, %v1096
      %v1098 = vpop.f32.mrb[0].mxu0
      %1099 = vmatprep.mubr.bf16.mxu0 0
      %1100 = vmatmul.mubr.bf16.gmra.mrb[0].mxu0 %v607
      %v1101 = vpop.f32.mrb[0].mxu0
      %v1102 = vadd.f32 %v1005, %v1101
      %v1103 = vpop.f32.mrb[0].mxu0
      %v1104 = vpop.f32.mrb[0].mxu0
      %v1105 = vadd.f32 %v1008, %v1104
      %v1106 = vpop.f32.mrb[0].mxu0
      %1107 = vmatprep.mubr.bf16.mxu0 0
      %1108 = vmatmul.mubr.bf16.gmra.mrb[0].mxu0 %v610
      %v1109 = vpop.f32.mrb[0].mxu0
      %v1110 = vadd.f32 %v1013, %v1109
      %v1111 = vpop.f32.mrb[0].mxu0
      %v1112 = vpop.f32.mrb[0].mxu0
      %v1113 = vadd.f32 %v1016, %v1112
      %v1114 = vpop.f32.mrb[0].mxu0
      %1115 = vmatprep.mubr.bf16.mxu0 0
      %1116 = vmatmul.mubr.bf16.gmra.mrb[0].mxu0 %v613
      %v1117 = vpop.f32.mrb[0].mxu0
      %v1118 = vadd.f32 %v1021, %v1117
      %v1119 = vpop.f32.mrb[0].mxu0
      %v1120 = vpop.f32.mrb[0].mxu0
      %v1121 = vadd.f32 %v1024, %v1120
      %v1122 = vpop.f32.mrb[0].mxu0
      %1123 = vmatprep.mubr.bf16.mxu0 0
      %1124 = vmatmul.mubr.bf16.gmra.mrb[0].mxu0 %v616
      %v1125 = vpop.f32.mrb[0].mxu0
      %v1126 = vadd.f32 %v1029, %v1125
      %v1127 = vpop.f32.mrb[0].mxu0
      %v1128 = vpop.f32.mrb[0].mxu0
      %v1129 = vadd.f32 %v1032, %v1128
      %v1130 = vpop.f32.mrb[0].mxu0
      %1131 = vmatprep.mubr.bf16.mxu0 0
      %1132 = vmatmul.mubr.bf16.gmra.mrb[0].mxu0 %v619
      %v1133 = vpop.f32.mrb[0].mxu0
      %v1134 = vadd.f32 %v1037, %v1133
      %v1135 = vpop.f32.mrb[0].mxu0
      %v1136 = vpop.f32.mrb[0].mxu0
      %v1137 = vadd.f32 %v1040, %v1136
      %v1138 = vpop.f32.mrb[0].mxu0
      %1139 = vmatprep.mubr.bf16.mxu0 0
      %1140 = vmatmul.mubr.bf16.gmra.mrb[0].mxu0 %v622
      %v1141 = vpop.f32.mrb[0].mxu0
      %v1142 = vadd.f32 %v1045, %v1141
      %v1143 = vpop.f32.mrb[0].mxu0
      %v1144 = vpop.f32.mrb[0].mxu0
      %v1145 = vadd.f32 %v1048, %v1144
      %v1146 = vpop.f32.mrb[0].mxu0
      %1147 = vdwg.mxu0
      %s1148 = scalar_lea.vmem %s2, 64
      %v1149 = vld [vmem:[%s1148] sm:$0xf]
      %v1150 = vld [vmem:[%s1148 + $0x4] sm:$0xf]
      %v1151 = vld [vmem:[%s1148 + $0x8] sm:$0xf]
      %v1152 = vld [vmem:[%s1148 + $0xc] sm:$0xf]
      %v1153 = vld [vmem:[%s1148 + $0x10] sm:$0xf]
      %v1154 = vld [vmem:[%s1148 + $0x14] sm:$0xf]
      %v1155 = vld [vmem:[%s1148 + $0x18] sm:$0xf]
      %v1156 = vld [vmem:[%s1148 + $0x1c] sm:$0xf]
      %v1158 = vshrl.u32 %v255, 16
      %v1160 = vrot.slane %v1158, 4
      %v1161 = vshll.u32 %v255, 16
      %v1163 = vrot.slane %v1161, 5
      %v1164 = vor.u32 %v1160, %v1163
      %v1165 = vrot.slane %v1164, 4
      %v1167 = vshll.u32 %v256, 16
      %v1169 = vrot.slane %v1167, 5
      %v1170 = vsel %vm310, %v1165, %v1169
      %v1172 = vshrl.u32 %v257, 16
      %v1174 = vrot.slane %v1172, 4
      %v1175 = vshll.u32 %v257, 16
      %v1177 = vrot.slane %v1175, 5
      %v1178 = vor.u32 %v1174, %v1177
      %v1179 = vrot.slane %v1178, 4
      %v1181 = vshll.u32 %v258, 16
      %v1183 = vrot.slane %v1181, 5
      %v1184 = vsel %vm310, %v1179, %v1183
      %v1186 = vshrl.u32 %v259, 16
      %v1188 = vrot.slane %v1186, 4
      %v1189 = vshll.u32 %v259, 16
      %v1191 = vrot.slane %v1189, 5
      %v1192 = vor.u32 %v1188, %v1191
      %v1193 = vrot.slane %v1192, 4
      %v1195 = vshll.u32 %v260, 16
      %v1197 = vrot.slane %v1195, 5
      %v1198 = vsel %vm310, %v1193, %v1197
      %v1200 = vshrl.u32 %v261, 16
      %v1202 = vrot.slane %v1200, 4
      %v1203 = vshll.u32 %v261, 16
      %v1205 = vrot.slane %v1203, 5
      %v1206 = vor.u32 %v1202, %v1205
      %v1207 = vrot.slane %v1206, 4
      %v1209 = vshll.u32 %v262, 16
      %v1211 = vrot.slane %v1209, 5
      %v1212 = vsel %vm310, %v1207, %v1211
      %v1214 = vshrl.u32 %v263, 16
      %v1216 = vrot.slane %v1214, 4
      %v1217 = vshll.u32 %v263, 16
      %v1219 = vrot.slane %v1217, 5
      %v1220 = vor.u32 %v1216, %v1219
      %v1221 = vrot.slane %v1220, 4
      %v1223 = vshll.u32 %v264, 16
      %v1225 = vrot.slane %v1223, 5
      %v1226 = vsel %vm310, %v1221, %v1225
      %v1228 = vshrl.u32 %v265, 16
      %v1230 = vrot.slane %v1228, 4
      %v1231 = vshll.u32 %v265, 16
      %v1233 = vrot.slane %v1231, 5
      %v1234 = vor.u32 %v1230, %v1233
      %v1235 = vrot.slane %v1234, 4
      %v1237 = vshll.u32 %v266, 16
      %v1239 = vrot.slane %v1237, 5
      %v1240 = vsel %vm310, %v1235, %v1239
      %v1242 = vshrl.u32 %v267, 16
      %v1244 = vrot.slane %v1242, 4
      %v1245 = vshll.u32 %v267, 16
      %v1247 = vrot.slane %v1245, 5
      %v1248 = vor.u32 %v1244, %v1247
      %v1249 = vrot.slane %v1248, 4
      %v1251 = vshll.u32 %v268, 16
      %v1253 = vrot.slane %v1251, 5
      %v1254 = vsel %vm310, %v1249, %v1253
      %v1256 = vshrl.u32 %v269, 16
      %v1258 = vrot.slane %v1256, 4
      %v1259 = vshll.u32 %v269, 16
      %v1261 = vrot.slane %v1259, 5
      %v1262 = vor.u32 %v1258, %v1261
      %v1263 = vrot.slane %v1262, 4
      %v1265 = vshll.u32 %v270, 16
      %v1267 = vrot.slane %v1265, 5
      %v1268 = vsel %vm310, %v1263, %v1267
      %v1270 = vshrl.u32 %v271, 16
      %v1272 = vrot.slane %v1270, 4
      %v1273 = vshll.u32 %v271, 16
      %v1275 = vrot.slane %v1273, 5
      %v1276 = vor.u32 %v1272, %v1275
      %v1277 = vrot.slane %v1276, 4
      %v1279 = vshll.u32 %v272, 16
      %v1281 = vrot.slane %v1279, 5
      %v1282 = vsel %vm310, %v1277, %v1281
      %v1284 = vshrl.u32 %v273, 16
      %v1286 = vrot.slane %v1284, 4
      %v1287 = vshll.u32 %v273, 16
      %v1289 = vrot.slane %v1287, 5
      %v1290 = vor.u32 %v1286, %v1289
      %v1291 = vrot.slane %v1290, 4
      %v1293 = vshll.u32 %v274, 16
      %v1295 = vrot.slane %v1293, 5
      %v1296 = vsel %vm310, %v1291, %v1295
      %v1298 = vshrl.u32 %v275, 16
      %v1300 = vrot.slane %v1298, 4
      %v1301 = vshll.u32 %v275, 16
      %v1303 = vrot.slane %v1301, 5
      %v1304 = vor.u32 %v1300, %v1303
      %v1305 = vrot.slane %v1304, 4
      %v1307 = vshll.u32 %v276, 16
      %v1309 = vrot.slane %v1307, 5
      %v1310 = vsel %vm310, %v1305, %v1309
      %v1312 = vshrl.u32 %v277, 16
      %v1314 = vrot.slane %v1312, 4
      %v1315 = vshll.u32 %v277, 16
      %v1317 = vrot.slane %v1315, 5
      %v1318 = vor.u32 %v1314, %v1317
      %v1319 = vrot.slane %v1318, 4
      %v1321 = vshll.u32 %v278, 16
      %v1323 = vrot.slane %v1321, 5
      %v1324 = vsel %vm310, %v1319, %v1323
      %v1326 = vshrl.u32 %v279, 16
      %v1328 = vrot.slane %v1326, 4
      %v1329 = vshll.u32 %v279, 16
      %v1331 = vrot.slane %v1329, 5
      %v1332 = vor.u32 %v1328, %v1331
      %v1333 = vrot.slane %v1332, 4
      %v1335 = vshll.u32 %v280, 16
      %v1337 = vrot.slane %v1335, 5
      %v1338 = vsel %vm310, %v1333, %v1337
      %v1340 = vshrl.u32 %v281, 16
      %v1342 = vrot.slane %v1340, 4
      %v1343 = vshll.u32 %v281, 16
      %v1345 = vrot.slane %v1343, 5
      %v1346 = vor.u32 %v1342, %v1345
      %v1347 = vrot.slane %v1346, 4
      %v1349 = vshll.u32 %v282, 16
      %v1351 = vrot.slane %v1349, 5
      %v1352 = vsel %vm310, %v1347, %v1351
      %v1354 = vshrl.u32 %v283, 16
      %v1356 = vrot.slane %v1354, 4
      %v1357 = vshll.u32 %v283, 16
      %v1359 = vrot.slane %v1357, 5
      %v1360 = vor.u32 %v1356, %v1359
      %v1361 = vrot.slane %v1360, 4
      %v1363 = vshll.u32 %v284, 16
      %v1365 = vrot.slane %v1363, 5
      %v1366 = vsel %vm310, %v1361, %v1365
      %v1368 = vshrl.u32 %v285, 16
      %v1370 = vrot.slane %v1368, 4
      %v1371 = vshll.u32 %v285, 16
      %v1373 = vrot.slane %v1371, 5
      %v1374 = vor.u32 %v1370, %v1373
      %v1375 = vrot.slane %v1374, 4
      %v1377 = vshll.u32 %v286, 16
      %v1379 = vrot.slane %v1377, 5
      %v1380 = vsel %vm310, %v1375, %v1379
      %v1389 = vunpack.c.l.b16 %v1149
      %v1390 = vunpack.c.l.b16 %v1150
      %v1391 = vunpack.c.l.b16 %v1151
      %v1392 = vunpack.c.l.b16 %v1152
      %v1393 = vunpack.c.l.b16 %v1153
      %v1394 = vunpack.c.l.b16 %v1154
      %v1395 = vunpack.c.l.b16 %v1155
      %v1396 = vunpack.c.l.b16 %v1156
      %v1397 = vpack.c.b16 %v1390, %v1389
      %v1398 = vpack.c.b16 %v1392, %v1391
      %v1399 = vpack.c.b16 %v1394, %v1393
      %v1400 = vpack.c.b16 %v1396, %v1395
      %1405 = vmatprep.subr.bf16.mxu0 0
      %1406 = vmatpush1.bf16.msra.mxu0 %v1397
      %1407 = vmatprep.subr.bf16.mxu0 0
      %1408 = vmatpush1.bf16.msra.mxu0 %v1398
      %1409 = vmatprep.subr.bf16.mxu0 0
      %1410 = vmatpush1.bf16.msra.mxu0 %v1399
      %1411 = vmatprep.subr.bf16.mxu0 0
      %1412 = vmatpush1.bf16.msra.mxu0 %v1400
      %1413 = vmatprep.subr.bf16.mxu0 0
      %1414 = vmatpush1.bf16.msra.mxu0 0
      %1415 = vmatprep.subr.bf16.mxu0 0
      %1416 = vmatpush1.bf16.msra.mxu0 0
      %1417 = vmatprep.subr.bf16.mxu0 0
      %1418 = vmatpush1.bf16.msra.mxu0 0
      %1419 = vmatprep.subr.bf16.mxu0 0
      %1420 = vmatpush1.bf16.msra.mxu0 0
      %1421 = vmatprep.subr.bf16.mxu0 0
      %1422 = vmatpush1.bf16.msra.mxu0 0
      %1423 = vmatprep.subr.bf16.mxu0 0
      %1424 = vmatpush1.bf16.msra.mxu0 0
      %1425 = vmatprep.subr.bf16.mxu0 0
      %1426 = vmatpush1.bf16.msra.mxu0 0
      %1427 = vmatprep.subr.bf16.mxu0 0
      %1428 = vmatpush1.bf16.msra.mxu0 0
      %1429 = vmatprep.subr.bf16.mxu0 0
      %1430 = vmatpush1.bf16.msra.mxu0 0
      %1431 = vmatprep.subr.bf16.mxu0 0
      %1432 = vmatpush1.bf16.msra.mxu0 0
      %1433 = vmatprep.subr.bf16.mxu0 0
      %1434 = vmatpush1.bf16.msra.mxu0 0
      %1435 = vmatprep.subr.bf16.mxu0 0
      %1436 = vmatpush1.bf16.msra.mxu0 0
      %1437 = vmatprep.mubr.bf16.mxu0 0
      %1438 = vmatmul.mubr.bf16.gmra.mrb[0].mxu0 %v931
      %v1439 = vpop.f32.mrb[0].mxu0
      %v1440 = vadd.f32 0.0, %v1439
      %v1441 = vpop.f32.mrb[0].mxu0
      %v1442 = vpop.f32.mrb[0].mxu0
      %v1443 = vadd.f32 0.0, %v1442
      %v1444 = vpop.f32.mrb[0].mxu0
      %1445 = vmatprep.mubr.bf16.mxu0 0
      %1446 = vmatmul.mubr.bf16.gmra.mrb[0].mxu0 %v934
      %v1447 = vpop.f32.mrb[0].mxu0
      %v1448 = vadd.f32 0.0, %v1447
      %v1449 = vpop.f32.mrb[0].mxu0
      %v1450 = vpop.f32.mrb[0].mxu0
      %v1451 = vadd.f32 0.0, %v1450
      %v1452 = vpop.f32.mrb[0].mxu0
      %1453 = vmatprep.mubr.bf16.mxu0 0
      %1454 = vmatmul.mubr.bf16.gmra.mrb[0].mxu0 %v937
      %v1455 = vpop.f32.mrb[0].mxu0
      %v1456 = vadd.f32 0.0, %v1455
      %v1457 = vpop.f32.mrb[0].mxu0
      %v1458 = vpop.f32.mrb[0].mxu0
      %v1459 = vadd.f32 0.0, %v1458
      %v1460 = vpop.f32.mrb[0].mxu0
      %1461 = vmatprep.mubr.bf16.mxu0 0
      %1462 = vmatmul.mubr.bf16.gmra.mrb[0].mxu0 %v940
      %v1463 = vpop.f32.mrb[0].mxu0
      %v1464 = vadd.f32 0.0, %v1463
      %v1465 = vpop.f32.mrb[0].mxu0
      %v1466 = vpop.f32.mrb[0].mxu0
      %v1467 = vadd.f32 0.0, %v1466
      %v1468 = vpop.f32.mrb[0].mxu0
      %1469 = vmatprep.mubr.bf16.mxu0 0
      %1470 = vmatmul.mubr.bf16.gmra.mrb[0].mxu0 %v943
      %v1471 = vpop.f32.mrb[0].mxu0
      %v1472 = vadd.f32 0.0, %v1471
      %v1473 = vpop.f32.mrb[0].mxu0
      %v1474 = vpop.f32.mrb[0].mxu0
      %v1475 = vadd.f32 0.0, %v1474
      %v1476 = vpop.f32.mrb[0].mxu0
      %1477 = vmatprep.mubr.bf16.mxu0 0
      %1478 = vmatmul.mubr.bf16.gmra.mrb[0].mxu0 %v946
      %v1479 = vpop.f32.mrb[0].mxu0
      %v1480 = vadd.f32 0.0, %v1479
      %v1481 = vpop.f32.mrb[0].mxu0
      %v1482 = vpop.f32.mrb[0].mxu0
      %v1483 = vadd.f32 0.0, %v1482
      %v1484 = vpop.f32.mrb[0].mxu0
      %1485 = vmatprep.mubr.bf16.mxu0 0
      %1486 = vmatmul.mubr.bf16.gmra.mrb[0].mxu0 %v949
      %v1487 = vpop.f32.mrb[0].mxu0
      %v1488 = vadd.f32 0.0, %v1487
      %v1489 = vpop.f32.mrb[0].mxu0
      %v1490 = vpop.f32.mrb[0].mxu0
      %v1491 = vadd.f32 0.0, %v1490
      %v1492 = vpop.f32.mrb[0].mxu0
      %1493 = vmatprep.mubr.bf16.mxu0 0
      %1494 = vmatmul.mubr.bf16.gmra.mrb[0].mxu0 %v952
      %v1495 = vpop.f32.mrb[0].mxu0
      %v1496 = vadd.f32 0.0, %v1495
      %v1497 = vpop.f32.mrb[0].mxu0
      %v1498 = vpop.f32.mrb[0].mxu0
      %v1499 = vadd.f32 0.0, %v1498
      %v1500 = vpop.f32.mrb[0].mxu0
      %1501 = vdwg.mxu0
      %v1502 = vadd.f32 %v844, %v1440
      %v1503 = vadd.f32 %v847, %v1443
      %v1504 = vadd.f32 %v852, %v1448
      %v1505 = vadd.f32 %v855, %v1451
      %v1506 = vadd.f32 %v860, %v1456
      %v1507 = vadd.f32 %v863, %v1459
      %v1508 = vadd.f32 %v868, %v1464
      %v1509 = vadd.f32 %v871, %v1467
      %v1510 = vadd.f32 %v876, %v1472
      %v1511 = vadd.f32 %v879, %v1475
      %v1512 = vadd.f32 %v884, %v1480
      %v1513 = vadd.f32 %v887, %v1483
      %v1514 = vadd.f32 %v892, %v1488
      %v1515 = vadd.f32 %v895, %v1491
      %v1516 = vadd.f32 %v900, %v1496
      %v1517 = vadd.f32 %v903, %v1499
      %v1518 = vunpack.c.l.b16 %v1170
      %v1519 = vunpack.c.l.b16 %v1184
      %v1520 = vunpack.c.l.b16 %v1198
      %v1521 = vunpack.c.l.b16 %v1212
      %v1522 = vunpack.c.l.b16 %v1226
      %v1523 = vunpack.c.l.b16 %v1240
      %v1524 = vunpack.c.l.b16 %v1254
      %v1525 = vunpack.c.l.b16 %v1268
      %v1526 = vunpack.c.l.b16 %v1282
      %v1527 = vunpack.c.l.b16 %v1296
      %v1528 = vunpack.c.l.b16 %v1310
      %v1529 = vunpack.c.l.b16 %v1324
      %v1530 = vunpack.c.l.b16 %v1338
      %v1531 = vunpack.c.l.b16 %v1352
      %v1532 = vunpack.c.l.b16 %v1366
      %v1533 = vunpack.c.l.b16 %v1380
      %v1534 = vpack.c.b16 %v1519, %v1518
      %v1535 = vpack.c.b16 %v1521, %v1520
      %v1536 = vpack.c.b16 %v1523, %v1522
      %v1537 = vpack.c.b16 %v1525, %v1524
      %v1538 = vpack.c.b16 %v1527, %v1526
      %v1539 = vpack.c.b16 %v1529, %v1528
      %v1540 = vpack.c.b16 %v1531, %v1530
      %v1541 = vpack.c.b16 %v1533, %v1532
      %v1543 = vsel %vm599, %v1534, 0
      %v1546 = vsel %vm599, %v1535, 0
      %v1549 = vsel %vm599, %v1536, 0
      %v1552 = vsel %vm599, %v1537, 0
      %v1555 = vsel %vm599, %v1538, 0
      %v1558 = vsel %vm599, %v1539, 0
      %v1561 = vsel %vm599, %v1540, 0
      %v1564 = vsel %vm599, %v1541, 0
      %1566 = vmatprep.subr.bf16.mxu0 0
      %1567 = vmatpush1.bf16.msra.mxu0 %v1397
      %1568 = vmatprep.subr.bf16.mxu0 0
      %1569 = vmatpush1.bf16.msra.mxu0 %v1398
      %1570 = vmatprep.subr.bf16.mxu0 0
      %1571 = vmatpush1.bf16.msra.mxu0 %v1399
      %1572 = vmatprep.subr.bf16.mxu0 0
      %1573 = vmatpush1.bf16.msra.mxu0 %v1400
      %1574 = vmatprep.subr.bf16.mxu0 0
      %1575 = vmatpush1.bf16.msra.mxu0 0
      %1576 = vmatprep.subr.bf16.mxu0 0
      %1577 = vmatpush1.bf16.msra.mxu0 0
      %1578 = vmatprep.subr.bf16.mxu0 0
      %1579 = vmatpush1.bf16.msra.mxu0 0
      %1580 = vmatprep.subr.bf16.mxu0 0
      %1581 = vmatpush1.bf16.msra.mxu0 0
      %1582 = vmatprep.subr.bf16.mxu0 0
      %1583 = vmatpush1.bf16.msra.mxu0 0
      %1584 = vmatprep.subr.bf16.mxu0 0
      %1585 = vmatpush1.bf16.msra.mxu0 0
      %1586 = vmatprep.subr.bf16.mxu0 0
      %1587 = vmatpush1.bf16.msra.mxu0 0
      %1588 = vmatprep.subr.bf16.mxu0 0
      %1589 = vmatpush1.bf16.msra.mxu0 0
      %1590 = vmatprep.subr.bf16.mxu0 0
      %1591 = vmatpush1.bf16.msra.mxu0 0
      %1592 = vmatprep.subr.bf16.mxu0 0
      %1593 = vmatpush1.bf16.msra.mxu0 0
      %1594 = vmatprep.subr.bf16.mxu0 0
      %1595 = vmatpush1.bf16.msra.mxu0 0
      %1596 = vmatprep.subr.bf16.mxu0 0
      %1597 = vmatpush1.bf16.msra.mxu0 0
      %1598 = vmatprep.mubr.bf16.mxu0 0
      %1599 = vmatmul.mubr.bf16.gmra.mrb[0].mxu0 %v1543
      %v1600 = vpop.f32.mrb[0].mxu0
      %v1601 = vadd.f32 0.0, %v1600
      %v1602 = vpop.f32.mrb[0].mxu0
      %v1603 = vpop.f32.mrb[0].mxu0
      %v1604 = vadd.f32 0.0, %v1603
      %v1605 = vpop.f32.mrb[0].mxu0
      %1606 = vmatprep.mubr.bf16.mxu0 0
      %1607 = vmatmul.mubr.bf16.gmra.mrb[0].mxu0 %v1546
      %v1608 = vpop.f32.mrb[0].mxu0
      %v1609 = vadd.f32 0.0, %v1608
      %v1610 = vpop.f32.mrb[0].mxu0
      %v1611 = vpop.f32.mrb[0].mxu0
      %v1612 = vadd.f32 0.0, %v1611
      %v1613 = vpop.f32.mrb[0].mxu0
      %1614 = vmatprep.mubr.bf16.mxu0 0
      %1615 = vmatmul.mubr.bf16.gmra.mrb[0].mxu0 %v1549
      %v1616 = vpop.f32.mrb[0].mxu0
      %v1617 = vadd.f32 0.0, %v1616
      %v1618 = vpop.f32.mrb[0].mxu0
      %v1619 = vpop.f32.mrb[0].mxu0
      %v1620 = vadd.f32 0.0, %v1619
      %v1621 = vpop.f32.mrb[0].mxu0
      %1622 = vmatprep.mubr.bf16.mxu0 0
      %1623 = vmatmul.mubr.bf16.gmra.mrb[0].mxu0 %v1552
      %v1624 = vpop.f32.mrb[0].mxu0
      %v1625 = vadd.f32 0.0, %v1624
      %v1626 = vpop.f32.mrb[0].mxu0
      %v1627 = vpop.f32.mrb[0].mxu0
      %v1628 = vadd.f32 0.0, %v1627
      %v1629 = vpop.f32.mrb[0].mxu0
      %1630 = vmatprep.mubr.bf16.mxu0 0
      %1631 = vmatmul.mubr.bf16.gmra.mrb[0].mxu0 %v1555
      %v1632 = vpop.f32.mrb[0].mxu0
      %v1633 = vadd.f32 0.0, %v1632
      %v1634 = vpop.f32.mrb[0].mxu0
      %v1635 = vpop.f32.mrb[0].mxu0
      %v1636 = vadd.f32 0.0, %v1635
      %v1637 = vpop.f32.mrb[0].mxu0
      %1638 = vmatprep.mubr.bf16.mxu0 0
      %1639 = vmatmul.mubr.bf16.gmra.mrb[0].mxu0 %v1558
      %v1640 = vpop.f32.mrb[0].mxu0
      %v1641 = vadd.f32 0.0, %v1640
      %v1642 = vpop.f32.mrb[0].mxu0
      %v1643 = vpop.f32.mrb[0].mxu0
      %v1644 = vadd.f32 0.0, %v1643
      %v1645 = vpop.f32.mrb[0].mxu0
      %1646 = vmatprep.mubr.bf16.mxu0 0
      %1647 = vmatmul.mubr.bf16.gmra.mrb[0].mxu0 %v1561
      %v1648 = vpop.f32.mrb[0].mxu0
      %v1649 = vadd.f32 0.0, %v1648
      %v1650 = vpop.f32.mrb[0].mxu0
      %v1651 = vpop.f32.mrb[0].mxu0
      %v1652 = vadd.f32 0.0, %v1651
      %v1653 = vpop.f32.mrb[0].mxu0
      %1654 = vmatprep.mubr.bf16.mxu0 0
      %1655 = vmatmul.mubr.bf16.gmra.mrb[0].mxu0 %v1564
      %v1656 = vpop.f32.mrb[0].mxu0
      %v1657 = vadd.f32 0.0, %v1656
      %v1658 = vpop.f32.mrb[0].mxu0
      %v1659 = vpop.f32.mrb[0].mxu0
      %v1660 = vadd.f32 0.0, %v1659
      %v1661 = vpop.f32.mrb[0].mxu0
      %1662 = vdwg.mxu0
      %v1663 = vadd.f32 %v1086, %v1601
      %v1664 = vadd.f32 %v1089, %v1604
      %v1665 = vadd.f32 %v1094, %v1609
      %v1666 = vadd.f32 %v1097, %v1612
      %v1667 = vadd.f32 %v1102, %v1617
      %v1668 = vadd.f32 %v1105, %v1620
      %v1669 = vadd.f32 %v1110, %v1625
      %v1670 = vadd.f32 %v1113, %v1628
      %v1671 = vadd.f32 %v1118, %v1633
      %v1672 = vadd.f32 %v1121, %v1636
      %v1673 = vadd.f32 %v1126, %v1641
      %v1674 = vadd.f32 %v1129, %v1644
      %v1675 = vadd.f32 %v1134, %v1649
      %v1676 = vadd.f32 %v1137, %v1652
      %v1677 = vadd.f32 %v1142, %v1657
      %v1678 = vadd.f32 %v1145, %v1660
      %s1679 = scalar_lea.vmem %s2, 96
      %v1680 = vld [vmem:[%s1679] sm:$0xf]
      %v1681 = vld [vmem:[%s1679 + $0x4] sm:$0xf]
      %v1682 = vld [vmem:[%s1679 + $0x8] sm:$0xf]
      %v1683 = vld [vmem:[%s1679 + $0xc] sm:$0xf]
      %v1684 = vld [vmem:[%s1679 + $0x10] sm:$0xf]
      %v1685 = vld [vmem:[%s1679 + $0x14] sm:$0xf]
      %v1686 = vld [vmem:[%s1679 + $0x18] sm:$0xf]
      %v1687 = vld [vmem:[%s1679 + $0x1c] sm:$0xf]
      %v1689 = vunpack.c.l.b16 %v251
      %v1690 = vpack.c.b16 %v739, %v738
      %v1691 = vpack.c.b16 %v741, %v740
      %v1692 = vpack.c.b16 %v743, %v742
      %v1693 = vpack.c.b16 %v745, %v744
      %v1694 = vpack.c.b16 %v747, %v746
      %v1695 = vpack.c.b16 %v749, %v748
      %v1696 = vpack.c.b16 %v751, %v750
      %v1697 = vpack.c.b16 %v1689, %v752
      %v1706 = vunpack.c.l.b16 %v1680
      %v1707 = vunpack.c.l.b16 %v1681
      %v1708 = vunpack.c.l.b16 %v1682
      %v1709 = vunpack.c.l.b16 %v1683
      %v1710 = vunpack.c.l.b16 %v1684
      %v1711 = vunpack.c.l.b16 %v1685
      %v1712 = vunpack.c.l.b16 %v1686
      %v1713 = vunpack.c.l.b16 %v1687
      %v1714 = vpack.c.b16 %v1707, %v1706
      %v1715 = vpack.c.b16 %v1709, %v1708
      %v1716 = vpack.c.b16 %v1711, %v1710
      %v1717 = vpack.c.b16 %v1713, %v1712
      %v1723 = vsel %vm599, %v1690, 0
      %v1726 = vsel %vm599, %v1691, 0
      %v1729 = vsel %vm599, %v1692, 0
      %v1732 = vsel %vm599, %v1693, 0
      %v1735 = vsel %vm599, %v1694, 0
      %v1738 = vsel %vm599, %v1695, 0
      %v1741 = vsel %vm599, %v1696, 0
      %v1744 = vsel %vm599, %v1697, 0
      %1746 = vmatprep.subr.bf16.mxu0 0
      %1747 = vmatpush1.bf16.msra.mxu0 %v1714
      %1748 = vmatprep.subr.bf16.mxu0 0
      %1749 = vmatpush1.bf16.msra.mxu0 %v1715
      %1750 = vmatprep.subr.bf16.mxu0 0
      %1751 = vmatpush1.bf16.msra.mxu0 %v1716
      %1752 = vmatprep.subr.bf16.mxu0 0
      %1753 = vmatpush1.bf16.msra.mxu0 %v1717
      %1754 = vmatprep.subr.bf16.mxu0 0
      %1755 = vmatpush1.bf16.msra.mxu0 0
      %1756 = vmatprep.subr.bf16.mxu0 0
      %1757 = vmatpush1.bf16.msra.mxu0 0
      %1758 = vmatprep.subr.bf16.mxu0 0
      %1759 = vmatpush1.bf16.msra.mxu0 0
      %1760 = vmatprep.subr.bf16.mxu0 0
      %1761 = vmatpush1.bf16.msra.mxu0 0
      %1762 = vmatprep.subr.bf16.mxu0 0
      %1763 = vmatpush1.bf16.msra.mxu0 0
      %1764 = vmatprep.subr.bf16.mxu0 0
      %1765 = vmatpush1.bf16.msra.mxu0 0
      %1766 = vmatprep.subr.bf16.mxu0 0
      %1767 = vmatpush1.bf16.msra.mxu0 0
      %1768 = vmatprep.subr.bf16.mxu0 0
      %1769 = vmatpush1.bf16.msra.mxu0 0
      %1770 = vmatprep.subr.bf16.mxu0 0
      %1771 = vmatpush1.bf16.msra.mxu0 0
      %1772 = vmatprep.subr.bf16.mxu0 0
      %1773 = vmatpush1.bf16.msra.mxu0 0
      %1774 = vmatprep.subr.bf16.mxu0 0
      %1775 = vmatpush1.bf16.msra.mxu0 0
      %1776 = vmatprep.subr.bf16.mxu0 0
      %1777 = vmatpush1.bf16.msra.mxu0 0
      %1778 = vmatprep.mubr.bf16.mxu0 0
      %1779 = vmatmul.mubr.bf16.gmra.mrb[0].mxu0 %v1723
      %v1780 = vpop.f32.mrb[0].mxu0
      %v1781 = vadd.f32 0.0, %v1780
      %v1782 = vpop.f32.mrb[0].mxu0
      %v1783 = vpop.f32.mrb[0].mxu0
      %v1784 = vadd.f32 0.0, %v1783
      %v1785 = vpop.f32.mrb[0].mxu0
      %1786 = vmatprep.mubr.bf16.mxu0 0
      %1787 = vmatmul.mubr.bf16.gmra.mrb[0].mxu0 %v1726
      %v1788 = vpop.f32.mrb[0].mxu0
      %v1789 = vadd.f32 0.0, %v1788
      %v1790 = vpop.f32.mrb[0].mxu0
      %v1791 = vpop.f32.mrb[0].mxu0
      %v1792 = vadd.f32 0.0, %v1791
      %v1793 = vpop.f32.mrb[0].mxu0
      %1794 = vmatprep.mubr.bf16.mxu0 0
      %1795 = vmatmul.mubr.bf16.gmra.mrb[0].mxu0 %v1729
      %v1796 = vpop.f32.mrb[0].mxu0
      %v1797 = vadd.f32 0.0, %v1796
      %v1798 = vpop.f32.mrb[0].mxu0
      %v1799 = vpop.f32.mrb[0].mxu0
      %v1800 = vadd.f32 0.0, %v1799
      %v1801 = vpop.f32.mrb[0].mxu0
      %1802 = vmatprep.mubr.bf16.mxu0 0
      %1803 = vmatmul.mubr.bf16.gmra.mrb[0].mxu0 %v1732
      %v1804 = vpop.f32.mrb[0].mxu0
      %v1805 = vadd.f32 0.0, %v1804
      %v1806 = vpop.f32.mrb[0].mxu0
      %v1807 = vpop.f32.mrb[0].mxu0
      %v1808 = vadd.f32 0.0, %v1807
      %v1809 = vpop.f32.mrb[0].mxu0
      %1810 = vmatprep.mubr.bf16.mxu0 0
      %1811 = vmatmul.mubr.bf16.gmra.mrb[0].mxu0 %v1735
      %v1812 = vpop.f32.mrb[0].mxu0
      %v1813 = vadd.f32 0.0, %v1812
      %v1814 = vpop.f32.mrb[0].mxu0
      %v1815 = vpop.f32.mrb[0].mxu0
      %v1816 = vadd.f32 0.0, %v1815
      %v1817 = vpop.f32.mrb[0].mxu0
      %1818 = vmatprep.mubr.bf16.mxu0 0
      %1819 = vmatmul.mubr.bf16.gmra.mrb[0].mxu0 %v1738
      %v1820 = vpop.f32.mrb[0].mxu0
      %v1821 = vadd.f32 0.0, %v1820
      %v1822 = vpop.f32.mrb[0].mxu0
      %v1823 = vpop.f32.mrb[0].mxu0
      %v1824 = vadd.f32 0.0, %v1823
      %v1825 = vpop.f32.mrb[0].mxu0
      %1826 = vmatprep.mubr.bf16.mxu0 0
      %1827 = vmatmul.mubr.bf16.gmra.mrb[0].mxu0 %v1741
      %v1828 = vpop.f32.mrb[0].mxu0
      %v1829 = vadd.f32 0.0, %v1828
      %v1830 = vpop.f32.mrb[0].mxu0
      %v1831 = vpop.f32.mrb[0].mxu0
      %v1832 = vadd.f32 0.0, %v1831
      %v1833 = vpop.f32.mrb[0].mxu0
      %1834 = vmatprep.mubr.bf16.mxu0 0
      %1835 = vmatmul.mubr.bf16.gmra.mrb[0].mxu0 %v1744
      %v1836 = vpop.f32.mrb[0].mxu0
      %v1837 = vadd.f32 0.0, %v1836
      %v1838 = vpop.f32.mrb[0].mxu0
      %v1839 = vpop.f32.mrb[0].mxu0
      %v1840 = vadd.f32 0.0, %v1839
      %v1841 = vpop.f32.mrb[0].mxu0
      %1842 = vdwg.mxu0
      %v1843 = vadd.f32 %v1502, %v1781
      %v1844 = vadd.f32 %v1503, %v1784
      %v1845 = vadd.f32 %v1504, %v1789
      %v1846 = vadd.f32 %v1505, %v1792
      %v1847 = vadd.f32 %v1506, %v1797
      %v1848 = vadd.f32 %v1507, %v1800
      %v1849 = vadd.f32 %v1508, %v1805
      %v1850 = vadd.f32 %v1509, %v1808
      %v1851 = vadd.f32 %v1510, %v1813
      %v1852 = vadd.f32 %v1511, %v1816
      %v1853 = vadd.f32 %v1512, %v1821
      %v1854 = vadd.f32 %v1513, %v1824
      %v1855 = vadd.f32 %v1514, %v1829
      %v1856 = vadd.f32 %v1515, %v1832
      %v1857 = vadd.f32 %v1516, %v1837
      %v1858 = vadd.f32 %v1517, %v1840
      %v1860 = vunpack.c.l.b16 %v287
      %v1861 = vpack.c.b16 %v553, %v552
      %v1862 = vpack.c.b16 %v555, %v554
      %v1863 = vpack.c.b16 %v557, %v556
      %v1864 = vpack.c.b16 %v559, %v558
      %v1865 = vpack.c.b16 %v561, %v560
      %v1866 = vpack.c.b16 %v563, %v562
      %v1867 = vpack.c.b16 %v565, %v564
      %v1868 = vpack.c.b16 %v1860, %v566
      %v1870 = vsel %vm599, %v1861, 0
      %v1873 = vsel %vm599, %v1862, 0
      %v1876 = vsel %vm599, %v1863, 0
      %v1879 = vsel %vm599, %v1864, 0
      %v1882 = vsel %vm599, %v1865, 0
      %v1885 = vsel %vm599, %v1866, 0
      %v1888 = vsel %vm599, %v1867, 0
      %v1891 = vsel %vm599, %v1868, 0
      %1893 = vmatprep.subr.bf16.mxu0 0
      %1894 = vmatpush1.bf16.msra.mxu0 %v1714
      %1895 = vmatprep.subr.bf16.mxu0 0
      %1896 = vmatpush1.bf16.msra.mxu0 %v1715
      %1897 = vmatprep.subr.bf16.mxu0 0
      %1898 = vmatpush1.bf16.msra.mxu0 %v1716
      %1899 = vmatprep.subr.bf16.mxu0 0
      %1900 = vmatpush1.bf16.msra.mxu0 %v1717
      %1901 = vmatprep.subr.bf16.mxu0 0
      %1902 = vmatpush1.bf16.msra.mxu0 0
      %1903 = vmatprep.subr.bf16.mxu0 0
      %1904 = vmatpush1.bf16.msra.mxu0 0
      %1905 = vmatprep.subr.bf16.mxu0 0
      %1906 = vmatpush1.bf16.msra.mxu0 0
      %1907 = vmatprep.subr.bf16.mxu0 0
      %1908 = vmatpush1.bf16.msra.mxu0 0
      %1909 = vmatprep.subr.bf16.mxu0 0
      %1910 = vmatpush1.bf16.msra.mxu0 0
      %1911 = vmatprep.subr.bf16.mxu0 0
      %1912 = vmatpush1.bf16.msra.mxu0 0
      %1913 = vmatprep.subr.bf16.mxu0 0
      %1914 = vmatpush1.bf16.msra.mxu0 0
      %1915 = vmatprep.subr.bf16.mxu0 0
      %1916 = vmatpush1.bf16.msra.mxu0 0
      %1917 = vmatprep.subr.bf16.mxu0 0
      %1918 = vmatpush1.bf16.msra.mxu0 0
      %1919 = vmatprep.subr.bf16.mxu0 0
      %1920 = vmatpush1.bf16.msra.mxu0 0
      %1921 = vmatprep.subr.bf16.mxu0 0
      %1922 = vmatpush1.bf16.msra.mxu0 0
      %1923 = vmatprep.subr.bf16.mxu0 0
      %1924 = vmatpush1.bf16.msra.mxu0 0
      %1925 = vmatprep.mubr.bf16.mxu0 0
      %1926 = vmatmul.mubr.bf16.gmra.mrb[0].mxu0 %v1870
      %v1927 = vpop.f32.mrb[0].mxu0
      %v1928 = vadd.f32 0.0, %v1927
      %v1929 = vpop.f32.mrb[0].mxu0
      %v1930 = vpop.f32.mrb[0].mxu0
      %v1931 = vadd.f32 0.0, %v1930
      %v1932 = vpop.f32.mrb[0].mxu0
      %1933 = vmatprep.mubr.bf16.mxu0 0
      %1934 = vmatmul.mubr.bf16.gmra.mrb[0].mxu0 %v1873
      %v1935 = vpop.f32.mrb[0].mxu0
      %v1936 = vadd.f32 0.0, %v1935
      %v1937 = vpop.f32.mrb[0].mxu0
      %v1938 = vpop.f32.mrb[0].mxu0
      %v1939 = vadd.f32 0.0, %v1938
      %v1940 = vpop.f32.mrb[0].mxu0
      %1941 = vmatprep.mubr.bf16.mxu0 0
      %1942 = vmatmul.mubr.bf16.gmra.mrb[0].mxu0 %v1876
      %v1943 = vpop.f32.mrb[0].mxu0
      %v1944 = vadd.f32 0.0, %v1943
      %v1945 = vpop.f32.mrb[0].mxu0
      %v1946 = vpop.f32.mrb[0].mxu0
      %v1947 = vadd.f32 0.0, %v1946
      %v1948 = vpop.f32.mrb[0].mxu0
      %1949 = vmatprep.mubr.bf16.mxu0 0
      %1950 = vmatmul.mubr.bf16.gmra.mrb[0].mxu0 %v1879
      %v1951 = vpop.f32.mrb[0].mxu0
      %v1952 = vadd.f32 0.0, %v1951
      %v1953 = vpop.f32.mrb[0].mxu0
      %v1954 = vpop.f32.mrb[0].mxu0
      %v1955 = vadd.f32 0.0, %v1954
      %v1956 = vpop.f32.mrb[0].mxu0
      %1957 = vmatprep.mubr.bf16.mxu0 0
      %1958 = vmatmul.mubr.bf16.gmra.mrb[0].mxu0 %v1882
      %v1959 = vpop.f32.mrb[0].mxu0
      %v1960 = vadd.f32 0.0, %v1959
      %v1961 = vpop.f32.mrb[0].mxu0
      %v1962 = vpop.f32.mrb[0].mxu0
      %v1963 = vadd.f32 0.0, %v1962
      %v1964 = vpop.f32.mrb[0].mxu0
      %1965 = vmatprep.mubr.bf16.mxu0 0
      %1966 = vmatmul.mubr.bf16.gmra.mrb[0].mxu0 %v1885
      %v1967 = vpop.f32.mrb[0].mxu0
      %v1968 = vadd.f32 0.0, %v1967
      %v1969 = vpop.f32.mrb[0].mxu0
      %v1970 = vpop.f32.mrb[0].mxu0
      %v1971 = vadd.f32 0.0, %v1970
      %v1972 = vpop.f32.mrb[0].mxu0
      %1973 = vmatprep.mubr.bf16.mxu0 0
      %1974 = vmatmul.mubr.bf16.gmra.mrb[0].mxu0 %v1888
      %v1975 = vpop.f32.mrb[0].mxu0
      %v1976 = vadd.f32 0.0, %v1975
      %v1977 = vpop.f32.mrb[0].mxu0
      %v1978 = vpop.f32.mrb[0].mxu0
      %v1979 = vadd.f32 0.0, %v1978
      %v1980 = vpop.f32.mrb[0].mxu0
      %1981 = vmatprep.mubr.bf16.mxu0 0
      %1982 = vmatmul.mubr.bf16.gmra.mrb[0].mxu0 %v1891
      %v1983 = vpop.f32.mrb[0].mxu0
      %v1984 = vadd.f32 0.0, %v1983
      %v1985 = vpop.f32.mrb[0].mxu0
      %v1986 = vpop.f32.mrb[0].mxu0
      %v1987 = vadd.f32 0.0, %v1986
      %v1988 = vpop.f32.mrb[0].mxu0
      %1989 = vdwg.mxu0
      %v1990 = vadd.f32 %v1663, %v1928
      %v1991 = vadd.f32 %v1664, %v1931
      %v1992 = vadd.f32 %v1665, %v1936
      %v1993 = vadd.f32 %v1666, %v1939
      %v1994 = vadd.f32 %v1667, %v1944
      %v1995 = vadd.f32 %v1668, %v1947
      %v1996 = vadd.f32 %v1669, %v1952
      %v1997 = vadd.f32 %v1670, %v1955
      %v1998 = vadd.f32 %v1671, %v1960
      %v1999 = vadd.f32 %v1672, %v1963
      %v2000 = vadd.f32 %v1673, %v1968
      %v2001 = vadd.f32 %v1674, %v1971
      %v2002 = vadd.f32 %v1675, %v1976
      %v2003 = vadd.f32 %v1676, %v1979
      %v2004 = vadd.f32 %v1677, %v1984
      %v2005 = vadd.f32 %v1678, %v1987
      %s2006 = scalar_lea.vmem %s2, 128
      %v2007 = vld [vmem:[%s2006] sm:$0xf]
      %v2008 = vld [vmem:[%s2006 + $0x4] sm:$0xf]
      %v2009 = vld [vmem:[%s2006 + $0x8] sm:$0xf]
      %v2010 = vld [vmem:[%s2006 + $0xc] sm:$0xf]
      %v2011 = vld [vmem:[%s2006 + $0x10] sm:$0xf]
      %v2012 = vld [vmem:[%s2006 + $0x14] sm:$0xf]
      %v2013 = vld [vmem:[%s2006 + $0x18] sm:$0xf]
      %v2014 = vld [vmem:[%s2006 + $0x1c] sm:$0xf]
      %v2016 = vshrl.u32 %v251, 16
      %v2018 = vrot.slane %v2016, 4
      %v2019 = vshll.u32 %v251, 16
      %v2021 = vrot.slane %v2019, 5
      %v2022 = vor.u32 %v2018, %v2021
      %v2023 = vrot.slane %v2022, 4
      %v2025 = vshll.u32 %v252, 16
      %v2027 = vrot.slane %v2025, 5
      %v2028 = vsel %vm310, %v2023, %v2027
      %v2037 = vunpack.c.l.b16 %v2007
      %v2038 = vunpack.c.l.b16 %v2008
      %v2039 = vunpack.c.l.b16 %v2009
      %v2040 = vunpack.c.l.b16 %v2010
      %v2041 = vunpack.c.l.b16 %v2011
      %v2042 = vunpack.c.l.b16 %v2012
      %v2043 = vunpack.c.l.b16 %v2013
      %v2044 = vunpack.c.l.b16 %v2014
      %v2045 = vpack.c.b16 %v2038, %v2037
      %v2046 = vpack.c.b16 %v2040, %v2039
      %v2047 = vpack.c.b16 %v2042, %v2041
      %v2048 = vpack.c.b16 %v2044, %v2043
      %2053 = vmatprep.subr.bf16.mxu0 0
      %2054 = vmatpush1.bf16.msra.mxu0 %v2045
      %2055 = vmatprep.subr.bf16.mxu0 0
      %2056 = vmatpush1.bf16.msra.mxu0 %v2046
      %2057 = vmatprep.subr.bf16.mxu0 0
      %2058 = vmatpush1.bf16.msra.mxu0 %v2047
      %2059 = vmatprep.subr.bf16.mxu0 0
      %2060 = vmatpush1.bf16.msra.mxu0 %v2048
      %2061 = vmatprep.subr.bf16.mxu0 0
      %2062 = vmatpush1.bf16.msra.mxu0 0
      %2063 = vmatprep.subr.bf16.mxu0 0
      %2064 = vmatpush1.bf16.msra.mxu0 0
      %2065 = vmatprep.subr.bf16.mxu0 0
      %2066 = vmatpush1.bf16.msra.mxu0 0
      %2067 = vmatprep.subr.bf16.mxu0 0
      %2068 = vmatpush1.bf16.msra.mxu0 0
      %2069 = vmatprep.subr.bf16.mxu0 0
      %2070 = vmatpush1.bf16.msra.mxu0 0
      %2071 = vmatprep.subr.bf16.mxu0 0
      %2072 = vmatpush1.bf16.msra.mxu0 0
      %2073 = vmatprep.subr.bf16.mxu0 0
      %2074 = vmatpush1.bf16.msra.mxu0 0
      %2075 = vmatprep.subr.bf16.mxu0 0
      %2076 = vmatpush1.bf16.msra.mxu0 0
      %2077 = vmatprep.subr.bf16.mxu0 0
      %2078 = vmatpush1.bf16.msra.mxu0 0
      %2079 = vmatprep.subr.bf16.mxu0 0
      %2080 = vmatpush1.bf16.msra.mxu0 0
      %2081 = vmatprep.subr.bf16.mxu0 0
      %2082 = vmatpush1.bf16.msra.mxu0 0
      %2083 = vmatprep.subr.bf16.mxu0 0
      %2084 = vmatpush1.bf16.msra.mxu0 0
      %2085 = vmatprep.mubr.bf16.mxu0 0
      %2086 = vmatmul.mubr.bf16.gmra.mrb[0].mxu0 %v1870
      %v2087 = vpop.f32.mrb[0].mxu0
      %v2088 = vadd.f32 0.0, %v2087
      %v2089 = vpop.f32.mrb[0].mxu0
      %v2090 = vpop.f32.mrb[0].mxu0
      %v2091 = vadd.f32 0.0, %v2090
      %v2092 = vpop.f32.mrb[0].mxu0
      %2093 = vmatprep.mubr.bf16.mxu0 0
      %2094 = vmatmul.mubr.bf16.gmra.mrb[0].mxu0 %v1873
      %v2095 = vpop.f32.mrb[0].mxu0
      %v2096 = vadd.f32 0.0, %v2095
      %v2097 = vpop.f32.mrb[0].mxu0
      %v2098 = vpop.f32.mrb[0].mxu0
      %v2099 = vadd.f32 0.0, %v2098
      %v2100 = vpop.f32.mrb[0].mxu0
      %2101 = vmatprep.mubr.bf16.mxu0 0
      %2102 = vmatmul.mubr.bf16.gmra.mrb[0].mxu0 %v1876
      %v2103 = vpop.f32.mrb[0].mxu0
      %v2104 = vadd.f32 0.0, %v2103
      %v2105 = vpop.f32.mrb[0].mxu0
      %v2106 = vpop.f32.mrb[0].mxu0
      %v2107 = vadd.f32 0.0, %v2106
      %v2108 = vpop.f32.mrb[0].mxu0
      %2109 = vmatprep.mubr.bf16.mxu0 0
      %2110 = vmatmul.mubr.bf16.gmra.mrb[0].mxu0 %v1879
      %v2111 = vpop.f32.mrb[0].mxu0
      %v2112 = vadd.f32 0.0, %v2111
      %v2113 = vpop.f32.mrb[0].mxu0
      %v2114 = vpop.f32.mrb[0].mxu0
      %v2115 = vadd.f32 0.0, %v2114
      %v2116 = vpop.f32.mrb[0].mxu0
      %2117 = vmatprep.mubr.bf16.mxu0 0
      %2118 = vmatmul.mubr.bf16.gmra.mrb[0].mxu0 %v1882
      %v2119 = vpop.f32.mrb[0].mxu0
      %v2120 = vadd.f32 0.0, %v2119
      %v2121 = vpop.f32.mrb[0].mxu0
      %v2122 = vpop.f32.mrb[0].mxu0
      %v2123 = vadd.f32 0.0, %v2122
      %v2124 = vpop.f32.mrb[0].mxu0
      %2125 = vmatprep.mubr.bf16.mxu0 0
      %2126 = vmatmul.mubr.bf16.gmra.mrb[0].mxu0 %v1885
      %v2127 = vpop.f32.mrb[0].mxu0
      %v2128 = vadd.f32 0.0, %v2127
      %v2129 = vpop.f32.mrb[0].mxu0
      %v2130 = vpop.f32.mrb[0].mxu0
      %v2131 = vadd.f32 0.0, %v2130
      %v2132 = vpop.f32.mrb[0].mxu0
      %2133 = vmatprep.mubr.bf16.mxu0 0
      %2134 = vmatmul.mubr.bf16.gmra.mrb[0].mxu0 %v1888
      %v2135 = vpop.f32.mrb[0].mxu0
      %v2136 = vadd.f32 0.0, %v2135
      %v2137 = vpop.f32.mrb[0].mxu0
      %v2138 = vpop.f32.mrb[0].mxu0
      %v2139 = vadd.f32 0.0, %v2138
      %v2140 = vpop.f32.mrb[0].mxu0
      %2141 = vmatprep.mubr.bf16.mxu0 0
      %2142 = vmatmul.mubr.bf16.gmra.mrb[0].mxu0 %v1891
      %v2143 = vpop.f32.mrb[0].mxu0
      %v2144 = vadd.f32 0.0, %v2143
      %v2145 = vpop.f32.mrb[0].mxu0
      %v2146 = vpop.f32.mrb[0].mxu0
      %v2147 = vadd.f32 0.0, %v2146
      %v2148 = vpop.f32.mrb[0].mxu0
      %2149 = vdwg.mxu0
      %v2150 = vadd.f32 %v1843, %v2088
      %v2151 = vadd.f32 %v1844, %v2091
      %v2152 = vadd.f32 %v1845, %v2096
      %v2153 = vadd.f32 %v1846, %v2099
      %v2154 = vadd.f32 %v1847, %v2104
      %v2155 = vadd.f32 %v1848, %v2107
      %v2156 = vadd.f32 %v1849, %v2112
      %v2157 = vadd.f32 %v1850, %v2115
      %v2158 = vadd.f32 %v1851, %v2120
      %v2159 = vadd.f32 %v1852, %v2123
      %v2160 = vadd.f32 %v1853, %v2128
      %v2161 = vadd.f32 %v1854, %v2131
      %v2162 = vadd.f32 %v1855, %v2136
      %v2163 = vadd.f32 %v1856, %v2139
      %v2164 = vadd.f32 %v1857, %v2144
      %v2165 = vadd.f32 %v1858, %v2147
      %v2166 = vunpack.c.l.b16 %v2028
      %v2167 = vpack.c.b16 %v908, %v907
      %v2168 = vpack.c.b16 %v910, %v909
      %v2169 = vpack.c.b16 %v912, %v911
      %v2170 = vpack.c.b16 %v914, %v913
      %v2171 = vpack.c.b16 %v916, %v915
      %v2172 = vpack.c.b16 %v918, %v917
      %v2173 = vpack.c.b16 %v920, %v919
      %v2174 = vpack.c.b16 %v2166, %v921
      %v2176 = vsel %vm599, %v2167, 0
      %v2179 = vsel %vm599, %v2168, 0
      %v2182 = vsel %vm599, %v2169, 0
      %v2185 = vsel %vm599, %v2170, 0
      %v2188 = vsel %vm599, %v2171, 0
      %v2191 = vsel %vm599, %v2172, 0
      %v2194 = vsel %vm599, %v2173, 0
      %v2197 = vsel %vm599, %v2174, 0
      %2199 = vmatprep.subr.bf16.mxu0 0
      %2200 = vmatpush1.bf16.msra.mxu0 %v2045
      %2201 = vmatprep.subr.bf16.mxu0 0
      %2202 = vmatpush1.bf16.msra.mxu0 %v2046
      %2203 = vmatprep.subr.bf16.mxu0 0
      %2204 = vmatpush1.bf16.msra.mxu0 %v2047
      %2205 = vmatprep.subr.bf16.mxu0 0
      %2206 = vmatpush1.bf16.msra.mxu0 %v2048
      %2207 = vmatprep.subr.bf16.mxu0 0
      %2208 = vmatpush1.bf16.msra.mxu0 0
      %2209 = vmatprep.subr.bf16.mxu0 0
      %2210 = vmatpush1.bf16.msra.mxu0 0
      %2211 = vmatprep.subr.bf16.mxu0 0
      %2212 = vmatpush1.bf16.msra.mxu0 0
      %2213 = vmatprep.subr.bf16.mxu0 0
      %2214 = vmatpush1.bf16.msra.mxu0 0
      %2215 = vmatprep.subr.bf16.mxu0 0
      %2216 = vmatpush1.bf16.msra.mxu0 0
      %2217 = vmatprep.subr.bf16.mxu0 0
      %2218 = vmatpush1.bf16.msra.mxu0 0
      %2219 = vmatprep.subr.bf16.mxu0 0
      %2220 = vmatpush1.bf16.msra.mxu0 0
      %2221 = vmatprep.subr.bf16.mxu0 0
      %2222 = vmatpush1.bf16.msra.mxu0 0
      %2223 = vmatprep.subr.bf16.mxu0 0
      %2224 = vmatpush1.bf16.msra.mxu0 0
      %2225 = vmatprep.subr.bf16.mxu0 0
      %2226 = vmatpush1.bf16.msra.mxu0 0
      %2227 = vmatprep.subr.bf16.mxu0 0
      %2228 = vmatpush1.bf16.msra.mxu0 0
      %2229 = vmatprep.subr.bf16.mxu0 0
      %2230 = vmatpush1.bf16.msra.mxu0 0
      %2231 = vmatprep.mubr.bf16.mxu0 0
      %2232 = vmatmul.mubr.bf16.gmra.mrb[0].mxu0 %v2176
      %v2233 = vpop.f32.mrb[0].mxu0
      %v2234 = vadd.f32 0.0, %v2233
      %v2235 = vpop.f32.mrb[0].mxu0
      %v2236 = vpop.f32.mrb[0].mxu0
      %v2237 = vadd.f32 0.0, %v2236
      %v2238 = vpop.f32.mrb[0].mxu0
      %2239 = vmatprep.mubr.bf16.mxu0 0
      %2240 = vmatmul.mubr.bf16.gmra.mrb[0].mxu0 %v2179
      %v2241 = vpop.f32.mrb[0].mxu0
      %v2242 = vadd.f32 0.0, %v2241
      %v2243 = vpop.f32.mrb[0].mxu0
      %v2244 = vpop.f32.mrb[0].mxu0
      %v2245 = vadd.f32 0.0, %v2244
      %v2246 = vpop.f32.mrb[0].mxu0
      %2247 = vmatprep.mubr.bf16.mxu0 0
      %2248 = vmatmul.mubr.bf16.gmra.mrb[0].mxu0 %v2182
      %v2249 = vpop.f32.mrb[0].mxu0
      %v2250 = vadd.f32 0.0, %v2249
      %v2251 = vpop.f32.mrb[0].mxu0
      %v2252 = vpop.f32.mrb[0].mxu0
      %v2253 = vadd.f32 0.0, %v2252
      %v2254 = vpop.f32.mrb[0].mxu0
      %2255 = vmatprep.mubr.bf16.mxu0 0
      %2256 = vmatmul.mubr.bf16.gmra.mrb[0].mxu0 %v2185
      %v2257 = vpop.f32.mrb[0].mxu0
      %v2258 = vadd.f32 0.0, %v2257
      %v2259 = vpop.f32.mrb[0].mxu0
      %v2260 = vpop.f32.mrb[0].mxu0
      %v2261 = vadd.f32 0.0, %v2260
      %v2262 = vpop.f32.mrb[0].mxu0
      %2263 = vmatprep.mubr.bf16.mxu0 0
      %2264 = vmatmul.mubr.bf16.gmra.mrb[0].mxu0 %v2188
      %v2265 = vpop.f32.mrb[0].mxu0
      %v2266 = vadd.f32 0.0, %v2265
      %v2267 = vpop.f32.mrb[0].mxu0
      %v2268 = vpop.f32.mrb[0].mxu0
      %v2269 = vadd.f32 0.0, %v2268
      %v2270 = vpop.f32.mrb[0].mxu0
      %2271 = vmatprep.mubr.bf16.mxu0 0
      %2272 = vmatmul.mubr.bf16.gmra.mrb[0].mxu0 %v2191
      %v2273 = vpop.f32.mrb[0].mxu0
      %v2274 = vadd.f32 0.0, %v2273
      %v2275 = vpop.f32.mrb[0].mxu0
      %v2276 = vpop.f32.mrb[0].mxu0
      %v2277 = vadd.f32 0.0, %v2276
      %v2278 = vpop.f32.mrb[0].mxu0
      %2279 = vmatprep.mubr.bf16.mxu0 0
      %2280 = vmatmul.mubr.bf16.gmra.mrb[0].mxu0 %v2194
      %v2281 = vpop.f32.mrb[0].mxu0
      %v2282 = vadd.f32 0.0, %v2281
      %v2283 = vpop.f32.mrb[0].mxu0
      %v2284 = vpop.f32.mrb[0].mxu0
      %v2285 = vadd.f32 0.0, %v2284
      %v2286 = vpop.f32.mrb[0].mxu0
      %2287 = vmatprep.mubr.bf16.mxu0 0
      %2288 = vmatmul.mubr.bf16.gmra.mrb[0].mxu0 %v2197
      %v2289 = vpop.f32.mrb[0].mxu0
      %v2290 = vadd.f32 0.0, %v2289
      %v2291 = vpop.f32.mrb[0].mxu0
      %v2292 = vpop.f32.mrb[0].mxu0
      %v2293 = vadd.f32 0.0, %v2292
      %v2294 = vpop.f32.mrb[0].mxu0
      %2295 = vdwg.mxu0
      %v2296 = vadd.f32 %v1990, %v2234
      %v2297 = vadd.f32 %v1991, %v2237
      %v2298 = vadd.f32 %v1992, %v2242
      %v2299 = vadd.f32 %v1993, %v2245
      %v2300 = vadd.f32 %v1994, %v2250
      %v2301 = vadd.f32 %v1995, %v2253
      %v2302 = vadd.f32 %v1996, %v2258
      %v2303 = vadd.f32 %v1997, %v2261
      %v2304 = vadd.f32 %v1998, %v2266
      %v2305 = vadd.f32 %v1999, %v2269
      %v2306 = vadd.f32 %v2000, %v2274
      %v2307 = vadd.f32 %v2001, %v2277
      %v2308 = vadd.f32 %v2002, %v2282
      %v2309 = vadd.f32 %v2003, %v2285
      %v2310 = vadd.f32 %v2004, %v2290
      %v2311 = vadd.f32 %v2005, %v2293
      %s2312 = scalar_lea.vmem %s2, 160
      %v2313 = vld [vmem:[%s2312] sm:$0xf]
      %v2314 = vld [vmem:[%s2312 + $0x4] sm:$0xf]
      %v2315 = vld [vmem:[%s2312 + $0x8] sm:$0xf]
      %v2316 = vld [vmem:[%s2312 + $0xc] sm:$0xf]
      %v2317 = vld [vmem:[%s2312 + $0x10] sm:$0xf]
      %v2318 = vld [vmem:[%s2312 + $0x14] sm:$0xf]
      %v2319 = vld [vmem:[%s2312 + $0x18] sm:$0xf]
      %v2320 = vld [vmem:[%s2312 + $0x1c] sm:$0xf]
      %v2322 = vshrl.u32 %v287, 16
      %v2324 = vrot.slane %v2322, 4
      %v2325 = vshll.u32 %v287, 16
      %v2327 = vrot.slane %v2325, 5
      %v2328 = vor.u32 %v2324, %v2327
      %v2329 = vrot.slane %v2328, 4
      %v2331 = vshll.u32 %v288, 16
      %v2333 = vrot.slane %v2331, 5
      %v2334 = vsel %vm310, %v2329, %v2333
      %v2343 = vunpack.c.l.b16 %v2313
      %v2344 = vunpack.c.l.b16 %v2314
      %v2345 = vunpack.c.l.b16 %v2315
      %v2346 = vunpack.c.l.b16 %v2316
      %v2347 = vunpack.c.l.b16 %v2317
      %v2348 = vunpack.c.l.b16 %v2318
      %v2349 = vunpack.c.l.b16 %v2319
      %v2350 = vunpack.c.l.b16 %v2320
      %v2351 = vpack.c.b16 %v2344, %v2343
      %v2352 = vpack.c.b16 %v2346, %v2345
      %v2353 = vpack.c.b16 %v2348, %v2347
      %v2354 = vpack.c.b16 %v2350, %v2349
      %2359 = vmatprep.subr.bf16.mxu0 0
      %2360 = vmatpush1.bf16.msra.mxu0 %v2351
      %2361 = vmatprep.subr.bf16.mxu0 0
      %2362 = vmatpush1.bf16.msra.mxu0 %v2352
      %2363 = vmatprep.subr.bf16.mxu0 0
      %2364 = vmatpush1.bf16.msra.mxu0 %v2353
      %2365 = vmatprep.subr.bf16.mxu0 0
      %2366 = vmatpush1.bf16.msra.mxu0 %v2354
      %2367 = vmatprep.subr.bf16.mxu0 0
      %2368 = vmatpush1.bf16.msra.mxu0 0
      %2369 = vmatprep.subr.bf16.mxu0 0
      %2370 = vmatpush1.bf16.msra.mxu0 0
      %2371 = vmatprep.subr.bf16.mxu0 0
      %2372 = vmatpush1.bf16.msra.mxu0 0
      %2373 = vmatprep.subr.bf16.mxu0 0
      %2374 = vmatpush1.bf16.msra.mxu0 0
      %2375 = vmatprep.subr.bf16.mxu0 0
      %2376 = vmatpush1.bf16.msra.mxu0 0
      %2377 = vmatprep.subr.bf16.mxu0 0
      %2378 = vmatpush1.bf16.msra.mxu0 0
      %2379 = vmatprep.subr.bf16.mxu0 0
      %2380 = vmatpush1.bf16.msra.mxu0 0
      %2381 = vmatprep.subr.bf16.mxu0 0
      %2382 = vmatpush1.bf16.msra.mxu0 0
      %2383 = vmatprep.subr.bf16.mxu0 0
      %2384 = vmatpush1.bf16.msra.mxu0 0
      %2385 = vmatprep.subr.bf16.mxu0 0
      %2386 = vmatpush1.bf16.msra.mxu0 0
      %2387 = vmatprep.subr.bf16.mxu0 0
      %2388 = vmatpush1.bf16.msra.mxu0 0
      %2389 = vmatprep.subr.bf16.mxu0 0
      %2390 = vmatpush1.bf16.msra.mxu0 0
      %2391 = vmatprep.mubr.bf16.mxu0 0
      %2392 = vmatmul.mubr.bf16.gmra.mrb[0].mxu0 %v2176
      %v2393 = vpop.f32.mrb[0].mxu0
      %v2394 = vadd.f32 0.0, %v2393
      %v2395 = vpop.f32.mrb[0].mxu0
      %v2396 = vpop.f32.mrb[0].mxu0
      %v2397 = vadd.f32 0.0, %v2396
      %v2398 = vpop.f32.mrb[0].mxu0
      %2399 = vmatprep.mubr.bf16.mxu0 0
      %2400 = vmatmul.mubr.bf16.gmra.mrb[0].mxu0 %v2179
      %v2401 = vpop.f32.mrb[0].mxu0
      %v2402 = vadd.f32 0.0, %v2401
      %v2403 = vpop.f32.mrb[0].mxu0
      %v2404 = vpop.f32.mrb[0].mxu0
      %v2405 = vadd.f32 0.0, %v2404
      %v2406 = vpop.f32.mrb[0].mxu0
      %2407 = vmatprep.mubr.bf16.mxu0 0
      %2408 = vmatmul.mubr.bf16.gmra.mrb[0].mxu0 %v2182
      %v2409 = vpop.f32.mrb[0].mxu0
      %v2410 = vadd.f32 0.0, %v2409
      %v2411 = vpop.f32.mrb[0].mxu0
      %v2412 = vpop.f32.mrb[0].mxu0
      %v2413 = vadd.f32 0.0, %v2412
      %v2414 = vpop.f32.mrb[0].mxu0
      %2415 = vmatprep.mubr.bf16.mxu0 0
      %2416 = vmatmul.mubr.bf16.gmra.mrb[0].mxu0 %v2185
      %v2417 = vpop.f32.mrb[0].mxu0
      %v2418 = vadd.f32 0.0, %v2417
      %v2419 = vpop.f32.mrb[0].mxu0
      %v2420 = vpop.f32.mrb[0].mxu0
      %v2421 = vadd.f32 0.0, %v2420
      %v2422 = vpop.f32.mrb[0].mxu0
      %2423 = vmatprep.mubr.bf16.mxu0 0
      %2424 = vmatmul.mubr.bf16.gmra.mrb[0].mxu0 %v2188
      %v2425 = vpop.f32.mrb[0].mxu0
      %v2426 = vadd.f32 0.0, %v2425
      %v2427 = vpop.f32.mrb[0].mxu0
      %v2428 = vpop.f32.mrb[0].mxu0
      %v2429 = vadd.f32 0.0, %v2428
      %v2430 = vpop.f32.mrb[0].mxu0
      %2431 = vmatprep.mubr.bf16.mxu0 0
      %2432 = vmatmul.mubr.bf16.gmra.mrb[0].mxu0 %v2191
      %v2433 = vpop.f32.mrb[0].mxu0
      %v2434 = vadd.f32 0.0, %v2433
      %v2435 = vpop.f32.mrb[0].mxu0
      %v2436 = vpop.f32.mrb[0].mxu0
      %v2437 = vadd.f32 0.0, %v2436
      %v2438 = vpop.f32.mrb[0].mxu0
      %2439 = vmatprep.mubr.bf16.mxu0 0
      %2440 = vmatmul.mubr.bf16.gmra.mrb[0].mxu0 %v2194
      %v2441 = vpop.f32.mrb[0].mxu0
      %v2442 = vadd.f32 0.0, %v2441
      %v2443 = vpop.f32.mrb[0].mxu0
      %v2444 = vpop.f32.mrb[0].mxu0
      %v2445 = vadd.f32 0.0, %v2444
      %v2446 = vpop.f32.mrb[0].mxu0
      %2447 = vmatprep.mubr.bf16.mxu0 0
      %2448 = vmatmul.mubr.bf16.gmra.mrb[0].mxu0 %v2197
      %v2449 = vpop.f32.mrb[0].mxu0
      %v2450 = vadd.f32 0.0, %v2449
      %v2451 = vpop.f32.mrb[0].mxu0
      %v2452 = vpop.f32.mrb[0].mxu0
      %v2453 = vadd.f32 0.0, %v2452
      %v2454 = vpop.f32.mrb[0].mxu0
      %2455 = vdwg.mxu0
      %v2456 = vadd.f32 %v2150, %v2394
      %v2457 = vadd.f32 %v2151, %v2397
      %v2458 = vadd.f32 %v2152, %v2402
      %v2459 = vadd.f32 %v2153, %v2405
      %v2460 = vadd.f32 %v2154, %v2410
      %v2461 = vadd.f32 %v2155, %v2413
      %v2462 = vadd.f32 %v2156, %v2418
      %v2463 = vadd.f32 %v2157, %v2421
      %v2464 = vadd.f32 %v2158, %v2426
      %v2465 = vadd.f32 %v2159, %v2429
      %v2466 = vadd.f32 %v2160, %v2434
      %v2467 = vadd.f32 %v2161, %v2437
      %v2468 = vadd.f32 %v2162, %v2442
      %v2469 = vadd.f32 %v2163, %v2445
      %v2470 = vadd.f32 %v2164, %v2450
      %v2471 = vadd.f32 %v2165, %v2453
      %v2472 = vunpack.c.l.b16 %v2334
      %v2473 = vpack.c.b16 %v1520, %v1519
      %v2474 = vpack.c.b16 %v1522, %v1521
      %v2475 = vpack.c.b16 %v1524, %v1523
      %v2476 = vpack.c.b16 %v1526, %v1525
      %v2477 = vpack.c.b16 %v1528, %v1527
      %v2478 = vpack.c.b16 %v1530, %v1529
      %v2479 = vpack.c.b16 %v1532, %v1531
      %v2480 = vpack.c.b16 %v2472, %v1533
      %v2482 = vsel %vm599, %v2473, 0
      %v2485 = vsel %vm599, %v2474, 0
      %v2488 = vsel %vm599, %v2475, 0
      %v2491 = vsel %vm599, %v2476, 0
      %v2494 = vsel %vm599, %v2477, 0
      %v2497 = vsel %vm599, %v2478, 0
      %v2500 = vsel %vm599, %v2479, 0
      %v2503 = vsel %vm599, %v2480, 0
      %2505 = vmatprep.subr.bf16.mxu0 0
      %2506 = vmatpush1.bf16.msra.mxu0 %v2351
      %2507 = vmatprep.subr.bf16.mxu0 0
      %2508 = vmatpush1.bf16.msra.mxu0 %v2352
      %2509 = vmatprep.subr.bf16.mxu0 0
      %2510 = vmatpush1.bf16.msra.mxu0 %v2353
      %2511 = vmatprep.subr.bf16.mxu0 0
      %2512 = vmatpush1.bf16.msra.mxu0 %v2354
      %2513 = vmatprep.subr.bf16.mxu0 0
      %2514 = vmatpush1.bf16.msra.mxu0 0
      %2515 = vmatprep.subr.bf16.mxu0 0
      %2516 = vmatpush1.bf16.msra.mxu0 0
      %2517 = vmatprep.subr.bf16.mxu0 0
      %2518 = vmatpush1.bf16.msra.mxu0 0
      %2519 = vmatprep.subr.bf16.mxu0 0
      %2520 = vmatpush1.bf16.msra.mxu0 0
      %2521 = vmatprep.subr.bf16.mxu0 0
      %2522 = vmatpush1.bf16.msra.mxu0 0
      %2523 = vmatprep.subr.bf16.mxu0 0
      %2524 = vmatpush1.bf16.msra.mxu0 0
      %2525 = vmatprep.subr.bf16.mxu0 0
      %2526 = vmatpush1.bf16.msra.mxu0 0
      %2527 = vmatprep.subr.bf16.mxu0 0
      %2528 = vmatpush1.bf16.msra.mxu0 0
      %2529 = vmatprep.subr.bf16.mxu0 0
      %2530 = vmatpush1.bf16.msra.mxu0 0
      %2531 = vmatprep.subr.bf16.mxu0 0
      %2532 = vmatpush1.bf16.msra.mxu0 0
      %2533 = vmatprep.subr.bf16.mxu0 0
      %2534 = vmatpush1.bf16.msra.mxu0 0
      %2535 = vmatprep.subr.bf16.mxu0 0
      %2536 = vmatpush1.bf16.msra.mxu0 0
      %2537 = vmatprep.mubr.bf16.mxu0 0
      %2538 = vmatmul.mubr.bf16.gmra.mrb[0].mxu0 %v2482
      %v2539 = vpop.f32.mrb[0].mxu0
      %v2540 = vadd.f32 0.0, %v2539
      %v2541 = vpop.f32.mrb[0].mxu0
      %v2542 = vpop.f32.mrb[0].mxu0
      %v2543 = vadd.f32 0.0, %v2542
      %v2544 = vpop.f32.mrb[0].mxu0
      %2545 = vmatprep.mubr.bf16.mxu0 0
      %2546 = vmatmul.mubr.bf16.gmra.mrb[0].mxu0 %v2485
      %v2547 = vpop.f32.mrb[0].mxu0
      %v2548 = vadd.f32 0.0, %v2547
      %v2549 = vpop.f32.mrb[0].mxu0
      %v2550 = vpop.f32.mrb[0].mxu0
      %v2551 = vadd.f32 0.0, %v2550
      %v2552 = vpop.f32.mrb[0].mxu0
      %2553 = vmatprep.mubr.bf16.mxu0 0
      %2554 = vmatmul.mubr.bf16.gmra.mrb[0].mxu0 %v2488
      %v2555 = vpop.f32.mrb[0].mxu0
      %v2556 = vadd.f32 0.0, %v2555
      %v2557 = vpop.f32.mrb[0].mxu0
      %v2558 = vpop.f32.mrb[0].mxu0
      %v2559 = vadd.f32 0.0, %v2558
      %v2560 = vpop.f32.mrb[0].mxu0
      %2561 = vmatprep.mubr.bf16.mxu0 0
      %2562 = vmatmul.mubr.bf16.gmra.mrb[0].mxu0 %v2491
      %v2563 = vpop.f32.mrb[0].mxu0
      %v2564 = vadd.f32 0.0, %v2563
      %v2565 = vpop.f32.mrb[0].mxu0
      %v2566 = vpop.f32.mrb[0].mxu0
      %v2567 = vadd.f32 0.0, %v2566
      %v2568 = vpop.f32.mrb[0].mxu0
      %2569 = vmatprep.mubr.bf16.mxu0 0
      %2570 = vmatmul.mubr.bf16.gmra.mrb[0].mxu0 %v2494
      %v2571 = vpop.f32.mrb[0].mxu0
      %v2572 = vadd.f32 0.0, %v2571
      %v2573 = vpop.f32.mrb[0].mxu0
      %v2574 = vpop.f32.mrb[0].mxu0
      %v2575 = vadd.f32 0.0, %v2574
      %v2576 = vpop.f32.mrb[0].mxu0
      %2577 = vmatprep.mubr.bf16.mxu0 0
      %2578 = vmatmul.mubr.bf16.gmra.mrb[0].mxu0 %v2497
      %v2579 = vpop.f32.mrb[0].mxu0
      %v2580 = vadd.f32 0.0, %v2579
      %v2581 = vpop.f32.mrb[0].mxu0
      %v2582 = vpop.f32.mrb[0].mxu0
      %v2583 = vadd.f32 0.0, %v2582
      %v2584 = vpop.f32.mrb[0].mxu0
      %2585 = vmatprep.mubr.bf16.mxu0 0
      %2586 = vmatmul.mubr.bf16.gmra.mrb[0].mxu0 %v2500
      %v2587 = vpop.f32.mrb[0].mxu0
      %v2588 = vadd.f32 0.0, %v2587
      %v2589 = vpop.f32.mrb[0].mxu0
      %v2590 = vpop.f32.mrb[0].mxu0
      %v2591 = vadd.f32 0.0, %v2590
      %v2592 = vpop.f32.mrb[0].mxu0
      %2593 = vmatprep.mubr.bf16.mxu0 0
      %2594 = vmatmul.mubr.bf16.gmra.mrb[0].mxu0 %v2503
      %v2595 = vpop.f32.mrb[0].mxu0
      %v2596 = vadd.f32 0.0, %v2595
      %v2597 = vpop.f32.mrb[0].mxu0
      %v2598 = vpop.f32.mrb[0].mxu0
      %v2599 = vadd.f32 0.0, %v2598
      %v2600 = vpop.f32.mrb[0].mxu0
      %2601 = vdwg.mxu0
      %v2602 = vadd.f32 %v2296, %v2540
      %v2603 = vadd.f32 %v2297, %v2543
      %v2604 = vadd.f32 %v2298, %v2548
      %v2605 = vadd.f32 %v2299, %v2551
      %v2606 = vadd.f32 %v2300, %v2556
      %v2607 = vadd.f32 %v2301, %v2559
      %v2608 = vadd.f32 %v2302, %v2564
      %v2609 = vadd.f32 %v2303, %v2567
      %v2610 = vadd.f32 %v2304, %v2572
      %v2611 = vadd.f32 %v2305, %v2575
      %v2612 = vadd.f32 %v2306, %v2580
      %v2613 = vadd.f32 %v2307, %v2583
      %v2614 = vadd.f32 %v2308, %v2588
      %v2615 = vadd.f32 %v2309, %v2591
      %v2616 = vadd.f32 %v2310, %v2596
      %v2617 = vadd.f32 %v2311, %v2599
      %s2618 = scalar_lea.vmem %s2, 192
      %v2619 = vld [vmem:[%s2618] sm:$0xf]
      %v2620 = vld [vmem:[%s2618 + $0x4] sm:$0xf]
      %v2621 = vld [vmem:[%s2618 + $0x8] sm:$0xf]
      %v2622 = vld [vmem:[%s2618 + $0xc] sm:$0xf]
      %v2623 = vld [vmem:[%s2618 + $0x10] sm:$0xf]
      %v2624 = vld [vmem:[%s2618 + $0x14] sm:$0xf]
      %v2625 = vld [vmem:[%s2618 + $0x18] sm:$0xf]
      %v2626 = vld [vmem:[%s2618 + $0x1c] sm:$0xf]
      %v2628 = vunpack.c.l.b16 %v253
      %v2629 = vpack.c.b16 %v2628, %v1689
      %v2638 = vunpack.c.l.b16 %v2619
      %v2639 = vunpack.c.l.b16 %v2620
      %v2640 = vunpack.c.l.b16 %v2621
      %v2641 = vunpack.c.l.b16 %v2622
      %v2642 = vunpack.c.l.b16 %v2623
      %v2643 = vunpack.c.l.b16 %v2624
      %v2644 = vunpack.c.l.b16 %v2625
      %v2645 = vunpack.c.l.b16 %v2626
      %v2646 = vpack.c.b16 %v2639, %v2638
      %v2647 = vpack.c.b16 %v2641, %v2640
      %v2648 = vpack.c.b16 %v2643, %v2642
      %v2649 = vpack.c.b16 %v2645, %v2644
      %v2655 = vsel %vm599, %v2629, 0
      %2657 = vmatprep.subr.bf16.mxu0 0
      %2658 = vmatpush1.bf16.msra.mxu0 %v2646
      %2659 = vmatprep.subr.bf16.mxu0 0
      %2660 = vmatpush1.bf16.msra.mxu0 %v2647
      %2661 = vmatprep.subr.bf16.mxu0 0
      %2662 = vmatpush1.bf16.msra.mxu0 %v2648
      %2663 = vmatprep.subr.bf16.mxu0 0
      %2664 = vmatpush1.bf16.msra.mxu0 %v2649
      %2665 = vmatprep.subr.bf16.mxu0 0
      %2666 = vmatpush1.bf16.msra.mxu0 0
      %2667 = vmatprep.subr.bf16.mxu0 0
      %2668 = vmatpush1.bf16.msra.mxu0 0
      %2669 = vmatprep.subr.bf16.mxu0 0
      %2670 = vmatpush1.bf16.msra.mxu0 0
      %2671 = vmatprep.subr.bf16.mxu0 0
      %2672 = vmatpush1.bf16.msra.mxu0 0
      %2673 = vmatprep.subr.bf16.mxu0 0
      %2674 = vmatpush1.bf16.msra.mxu0 0
      %2675 = vmatprep.subr.bf16.mxu0 0
      %2676 = vmatpush1.bf16.msra.mxu0 0
      %2677 = vmatprep.subr.bf16.mxu0 0
      %2678 = vmatpush1.bf16.msra.mxu0 0
      %2679 = vmatprep.subr.bf16.mxu0 0
      %2680 = vmatpush1.bf16.msra.mxu0 0
      %2681 = vmatprep.subr.bf16.mxu0 0
      %2682 = vmatpush1.bf16.msra.mxu0 0
      %2683 = vmatprep.subr.bf16.mxu0 0
      %2684 = vmatpush1.bf16.msra.mxu0 0
      %2685 = vmatprep.subr.bf16.mxu0 0
      %2686 = vmatpush1.bf16.msra.mxu0 0
      %2687 = vmatprep.subr.bf16.mxu0 0
      %2688 = vmatpush1.bf16.msra.mxu0 0
      %2689 = vmatprep.mubr.bf16.mxu0 0
      %2690 = vmatmul.mubr.bf16.gmra.mrb[0].mxu0 %v789
      %v2691 = vpop.f32.mrb[0].mxu0
      %v2692 = vadd.f32 0.0, %v2691
      %v2693 = vpop.f32.mrb[0].mxu0
      %v2694 = vpop.f32.mrb[0].mxu0
      %v2695 = vadd.f32 0.0, %v2694
      %v2696 = vpop.f32.mrb[0].mxu0
      %2697 = vmatprep.mubr.bf16.mxu0 0
      %2698 = vmatmul.mubr.bf16.gmra.mrb[0].mxu0 %v792
      %v2699 = vpop.f32.mrb[0].mxu0
      %v2700 = vadd.f32 0.0, %v2699
      %v2701 = vpop.f32.mrb[0].mxu0
      %v2702 = vpop.f32.mrb[0].mxu0
      %v2703 = vadd.f32 0.0, %v2702
      %v2704 = vpop.f32.mrb[0].mxu0
      %2705 = vmatprep.mubr.bf16.mxu0 0
      %2706 = vmatmul.mubr.bf16.gmra.mrb[0].mxu0 %v795
      %v2707 = vpop.f32.mrb[0].mxu0
      %v2708 = vadd.f32 0.0, %v2707
      %v2709 = vpop.f32.mrb[0].mxu0
      %v2710 = vpop.f32.mrb[0].mxu0
      %v2711 = vadd.f32 0.0, %v2710
      %v2712 = vpop.f32.mrb[0].mxu0
      %2713 = vmatprep.mubr.bf16.mxu0 0
      %2714 = vmatmul.mubr.bf16.gmra.mrb[0].mxu0 %v798
      %v2715 = vpop.f32.mrb[0].mxu0
      %v2716 = vadd.f32 0.0, %v2715
      %v2717 = vpop.f32.mrb[0].mxu0
      %v2718 = vpop.f32.mrb[0].mxu0
      %v2719 = vadd.f32 0.0, %v2718
      %v2720 = vpop.f32.mrb[0].mxu0
      %2721 = vmatprep.mubr.bf16.mxu0 0
      %2722 = vmatmul.mubr.bf16.gmra.mrb[0].mxu0 %v801
      %v2723 = vpop.f32.mrb[0].mxu0
      %v2724 = vadd.f32 0.0, %v2723
      %v2725 = vpop.f32.mrb[0].mxu0
      %v2726 = vpop.f32.mrb[0].mxu0
      %v2727 = vadd.f32 0.0, %v2726
      %v2728 = vpop.f32.mrb[0].mxu0
      %2729 = vmatprep.mubr.bf16.mxu0 0
      %2730 = vmatmul.mubr.bf16.gmra.mrb[0].mxu0 %v804
      %v2731 = vpop.f32.mrb[0].mxu0
      %v2732 = vadd.f32 0.0, %v2731
      %v2733 = vpop.f32.mrb[0].mxu0
      %v2734 = vpop.f32.mrb[0].mxu0
      %v2735 = vadd.f32 0.0, %v2734
      %v2736 = vpop.f32.mrb[0].mxu0
      %2737 = vmatprep.mubr.bf16.mxu0 0
      %2738 = vmatmul.mubr.bf16.gmra.mrb[0].mxu0 %v807
      %v2739 = vpop.f32.mrb[0].mxu0
      %v2740 = vadd.f32 0.0, %v2739
      %v2741 = vpop.f32.mrb[0].mxu0
      %v2742 = vpop.f32.mrb[0].mxu0
      %v2743 = vadd.f32 0.0, %v2742
      %v2744 = vpop.f32.mrb[0].mxu0
      %2745 = vmatprep.mubr.bf16.mxu0 0
      %2746 = vmatmul.mubr.bf16.gmra.mrb[0].mxu0 %v2655
      %v2747 = vpop.f32.mrb[0].mxu0
      %v2748 = vadd.f32 0.0, %v2747
      %v2749 = vpop.f32.mrb[0].mxu0
      %v2750 = vpop.f32.mrb[0].mxu0
      %v2751 = vadd.f32 0.0, %v2750
      %v2752 = vpop.f32.mrb[0].mxu0
      %2753 = vdwg.mxu0
      %v2754 = vadd.f32 %v2456, %v2692
      %v2755 = vadd.f32 %v2457, %v2695
      %v2756 = vadd.f32 %v2458, %v2700
      %v2757 = vadd.f32 %v2459, %v2703
      %v2758 = vadd.f32 %v2460, %v2708
      %v2759 = vadd.f32 %v2461, %v2711
      %v2760 = vadd.f32 %v2462, %v2716
      %v2761 = vadd.f32 %v2463, %v2719
      %v2762 = vadd.f32 %v2464, %v2724
      %v2763 = vadd.f32 %v2465, %v2727
      %v2764 = vadd.f32 %v2466, %v2732
      %v2765 = vadd.f32 %v2467, %v2735
      %v2766 = vadd.f32 %v2468, %v2740
      %v2767 = vadd.f32 %v2469, %v2743
      %v2768 = vadd.f32 %v2470, %v2748
      %v2769 = vadd.f32 %v2471, %v2751
      %v2771 = vunpack.c.l.b16 %v289
      %v2772 = vpack.c.b16 %v2771, %v1860
      %v2774 = vsel %vm599, %v2772, 0
      %2776 = vmatprep.subr.bf16.mxu0 0
      %2777 = vmatpush1.bf16.msra.mxu0 %v2646
      %2778 = vmatprep.subr.bf16.mxu0 0
      %2779 = vmatpush1.bf16.msra.mxu0 %v2647
      %2780 = vmatprep.subr.bf16.mxu0 0
      %2781 = vmatpush1.bf16.msra.mxu0 %v2648
      %2782 = vmatprep.subr.bf16.mxu0 0
      %2783 = vmatpush1.bf16.msra.mxu0 %v2649
      %2784 = vmatprep.subr.bf16.mxu0 0
      %2785 = vmatpush1.bf16.msra.mxu0 0
      %2786 = vmatprep.subr.bf16.mxu0 0
      %2787 = vmatpush1.bf16.msra.mxu0 0
      %2788 = vmatprep.subr.bf16.mxu0 0
      %2789 = vmatpush1.bf16.msra.mxu0 0
      %2790 = vmatprep.subr.bf16.mxu0 0
      %2791 = vmatpush1.bf16.msra.mxu0 0
      %2792 = vmatprep.subr.bf16.mxu0 0
      %2793 = vmatpush1.bf16.msra.mxu0 0
      %2794 = vmatprep.subr.bf16.mxu0 0
      %2795 = vmatpush1.bf16.msra.mxu0 0
      %2796 = vmatprep.subr.bf16.mxu0 0
      %2797 = vmatpush1.bf16.msra.mxu0 0
      %2798 = vmatprep.subr.bf16.mxu0 0
      %2799 = vmatpush1.bf16.msra.mxu0 0
      %2800 = vmatprep.subr.bf16.mxu0 0
      %2801 = vmatpush1.bf16.msra.mxu0 0
      %2802 = vmatprep.subr.bf16.mxu0 0
      %2803 = vmatpush1.bf16.msra.mxu0 0
      %2804 = vmatprep.subr.bf16.mxu0 0
      %2805 = vmatpush1.bf16.msra.mxu0 0
      %2806 = vmatprep.subr.bf16.mxu0 0
      %2807 = vmatpush1.bf16.msra.mxu0 0
      %2808 = vmatprep.mubr.bf16.mxu0 0
      %2809 = vmatmul.mubr.bf16.gmra.mrb[0].mxu0 %v604
      %v2810 = vpop.f32.mrb[0].mxu0
      %v2811 = vadd.f32 0.0, %v2810
      %v2812 = vpop.f32.mrb[0].mxu0
      %v2813 = vpop.f32.mrb[0].mxu0
      %v2814 = vadd.f32 0.0, %v2813
      %v2815 = vpop.f32.mrb[0].mxu0
      %2816 = vmatprep.mubr.bf16.mxu0 0
      %2817 = vmatmul.mubr.bf16.gmra.mrb[0].mxu0 %v607
      %v2818 = vpop.f32.mrb[0].mxu0
      %v2819 = vadd.f32 0.0, %v2818
      %v2820 = vpop.f32.mrb[0].mxu0
      %v2821 = vpop.f32.mrb[0].mxu0
      %v2822 = vadd.f32 0.0, %v2821
      %v2823 = vpop.f32.mrb[0].mxu0
      %2824 = vmatprep.mubr.bf16.mxu0 0
      %2825 = vmatmul.mubr.bf16.gmra.mrb[0].mxu0 %v610
      %v2826 = vpop.f32.mrb[0].mxu0
      %v2827 = vadd.f32 0.0, %v2826
      %v2828 = vpop.f32.mrb[0].mxu0
      %v2829 = vpop.f32.mrb[0].mxu0
      %v2830 = vadd.f32 0.0, %v2829
      %v2831 = vpop.f32.mrb[0].mxu0
      %2832 = vmatprep.mubr.bf16.mxu0 0
      %2833 = vmatmul.mubr.bf16.gmra.mrb[0].mxu0 %v613
      %v2834 = vpop.f32.mrb[0].mxu0
      %v2835 = vadd.f32 0.0, %v2834
      %v2836 = vpop.f32.mrb[0].mxu0
      %v2837 = vpop.f32.mrb[0].mxu0
      %v2838 = vadd.f32 0.0, %v2837
      %v2839 = vpop.f32.mrb[0].mxu0
      %2840 = vmatprep.mubr.bf16.mxu0 0
      %2841 = vmatmul.mubr.bf16.gmra.mrb[0].mxu0 %v616
      %v2842 = vpop.f32.mrb[0].mxu0
      %v2843 = vadd.f32 0.0, %v2842
      %v2844 = vpop.f32.mrb[0].mxu0
      %v2845 = vpop.f32.mrb[0].mxu0
      %v2846 = vadd.f32 0.0, %v2845
      %v2847 = vpop.f32.mrb[0].mxu0
      %2848 = vmatprep.mubr.bf16.mxu0 0
      %2849 = vmatmul.mubr.bf16.gmra.mrb[0].mxu0 %v619
      %v2850 = vpop.f32.mrb[0].mxu0
      %v2851 = vadd.f32 0.0, %v2850
      %v2852 = vpop.f32.mrb[0].mxu0
      %v2853 = vpop.f32.mrb[0].mxu0
      %v2854 = vadd.f32 0.0, %v2853
      %v2855 = vpop.f32.mrb[0].mxu0
      %2856 = vmatprep.mubr.bf16.mxu0 0
      %2857 = vmatmul.mubr.bf16.gmra.mrb[0].mxu0 %v622
      %v2858 = vpop.f32.mrb[0].mxu0
      %v2859 = vadd.f32 0.0, %v2858
      %v2860 = vpop.f32.mrb[0].mxu0
      %v2861 = vpop.f32.mrb[0].mxu0
      %v2862 = vadd.f32 0.0, %v2861
      %v2863 = vpop.f32.mrb[0].mxu0
      %2864 = vmatprep.mubr.bf16.mxu0 0
      %2865 = vmatmul.mubr.bf16.gmra.mrb[0].mxu0 %v2774
      %v2866 = vpop.f32.mrb[0].mxu0
      %v2867 = vadd.f32 0.0, %v2866
      %v2868 = vpop.f32.mrb[0].mxu0
      %v2869 = vpop.f32.mrb[0].mxu0
      %v2870 = vadd.f32 0.0, %v2869
      %v2871 = vpop.f32.mrb[0].mxu0
      %2872 = vdwg.mxu0
      %v2873 = vadd.f32 %v2602, %v2811
      %v2874 = vadd.f32 %v2603, %v2814
      %v2875 = vadd.f32 %v2604, %v2819
      %v2876 = vadd.f32 %v2605, %v2822
      %v2877 = vadd.f32 %v2606, %v2827
      %v2878 = vadd.f32 %v2607, %v2830
      %v2879 = vadd.f32 %v2608, %v2835
      %v2880 = vadd.f32 %v2609, %v2838
      %v2881 = vadd.f32 %v2610, %v2843
      %v2882 = vadd.f32 %v2611, %v2846
      %v2883 = vadd.f32 %v2612, %v2851
      %v2884 = vadd.f32 %v2613, %v2854
      %v2885 = vadd.f32 %v2614, %v2859
      %v2886 = vadd.f32 %v2615, %v2862
      %v2887 = vadd.f32 %v2616, %v2867
      %v2888 = vadd.f32 %v2617, %v2870
      %s2889 = scalar_lea.vmem %s2, 224
      %v2890 = vld [vmem:[%s2889] sm:$0xf]
      %v2891 = vld [vmem:[%s2889 + $0x4] sm:$0xf]
      %v2892 = vld [vmem:[%s2889 + $0x8] sm:$0xf]
      %v2893 = vld [vmem:[%s2889 + $0xc] sm:$0xf]
      %v2894 = vld [vmem:[%s2889 + $0x10] sm:$0xf]
      %v2895 = vld [vmem:[%s2889 + $0x14] sm:$0xf]
      %v2896 = vld [vmem:[%s2889 + $0x18] sm:$0xf]
      %v2897 = vld [vmem:[%s2889 + $0x1c] sm:$0xf]
      %v2899 = vshrl.u32 %v253, 16
      %v2901 = vrot.slane %v2899, 4
      %v2902 = vshll.u32 %v253, 16
      %v2904 = vrot.slane %v2902, 5
      %v2905 = vor.u32 %v2901, %v2904
      %v2906 = vrot.slane %v2905, 4
      %v2908 = vshll.u32 %v254, 16
      %v2910 = vrot.slane %v2908, 5
      %v2911 = vsel %vm310, %v2906, %v2910
      %v2920 = vunpack.c.l.b16 %v2890
      %v2921 = vunpack.c.l.b16 %v2891
      %v2922 = vunpack.c.l.b16 %v2892
      %v2923 = vunpack.c.l.b16 %v2893
      %v2924 = vunpack.c.l.b16 %v2894
      %v2925 = vunpack.c.l.b16 %v2895
      %v2926 = vunpack.c.l.b16 %v2896
      %v2927 = vunpack.c.l.b16 %v2897
      %v2928 = vpack.c.b16 %v2921, %v2920
      %v2929 = vpack.c.b16 %v2923, %v2922
      %v2930 = vpack.c.b16 %v2925, %v2924
      %v2931 = vpack.c.b16 %v2927, %v2926
      %2936 = vmatprep.subr.bf16.mxu0 0
      %2937 = vmatpush1.bf16.msra.mxu0 %v2928
      %2938 = vmatprep.subr.bf16.mxu0 0
      %2939 = vmatpush1.bf16.msra.mxu0 %v2929
      %2940 = vmatprep.subr.bf16.mxu0 0
      %2941 = vmatpush1.bf16.msra.mxu0 %v2930
      %2942 = vmatprep.subr.bf16.mxu0 0
      %2943 = vmatpush1.bf16.msra.mxu0 %v2931
      %2944 = vmatprep.subr.bf16.mxu0 0
      %2945 = vmatpush1.bf16.msra.mxu0 0
      %2946 = vmatprep.subr.bf16.mxu0 0
      %2947 = vmatpush1.bf16.msra.mxu0 0
      %2948 = vmatprep.subr.bf16.mxu0 0
      %2949 = vmatpush1.bf16.msra.mxu0 0
      %2950 = vmatprep.subr.bf16.mxu0 0
      %2951 = vmatpush1.bf16.msra.mxu0 0
      %2952 = vmatprep.subr.bf16.mxu0 0
      %2953 = vmatpush1.bf16.msra.mxu0 0
      %2954 = vmatprep.subr.bf16.mxu0 0
      %2955 = vmatpush1.bf16.msra.mxu0 0
      %2956 = vmatprep.subr.bf16.mxu0 0
      %2957 = vmatpush1.bf16.msra.mxu0 0
      %2958 = vmatprep.subr.bf16.mxu0 0
      %2959 = vmatpush1.bf16.msra.mxu0 0
      %2960 = vmatprep.subr.bf16.mxu0 0
      %2961 = vmatpush1.bf16.msra.mxu0 0
      %2962 = vmatprep.subr.bf16.mxu0 0
      %2963 = vmatpush1.bf16.msra.mxu0 0
      %2964 = vmatprep.subr.bf16.mxu0 0
      %2965 = vmatpush1.bf16.msra.mxu0 0
      %2966 = vmatprep.subr.bf16.mxu0 0
      %2967 = vmatpush1.bf16.msra.mxu0 0
      %2968 = vmatprep.mubr.bf16.mxu0 0
      %2969 = vmatmul.mubr.bf16.gmra.mrb[0].mxu0 %v604
      %v2970 = vpop.f32.mrb[0].mxu0
      %v2971 = vadd.f32 0.0, %v2970
      %v2972 = vpop.f32.mrb[0].mxu0
      %v2973 = vpop.f32.mrb[0].mxu0
      %v2974 = vadd.f32 0.0, %v2973
      %v2975 = vpop.f32.mrb[0].mxu0
      %2976 = vmatprep.mubr.bf16.mxu0 0
      %2977 = vmatmul.mubr.bf16.gmra.mrb[0].mxu0 %v607
      %v2978 = vpop.f32.mrb[0].mxu0
      %v2979 = vadd.f32 0.0, %v2978
      %v2980 = vpop.f32.mrb[0].mxu0
      %v2981 = vpop.f32.mrb[0].mxu0
      %v2982 = vadd.f32 0.0, %v2981
      %v2983 = vpop.f32.mrb[0].mxu0
      %2984 = vmatprep.mubr.bf16.mxu0 0
      %2985 = vmatmul.mubr.bf16.gmra.mrb[0].mxu0 %v610
      %v2986 = vpop.f32.mrb[0].mxu0
      %v2987 = vadd.f32 0.0, %v2986
      %v2988 = vpop.f32.mrb[0].mxu0
      %v2989 = vpop.f32.mrb[0].mxu0
      %v2990 = vadd.f32 0.0, %v2989
      %v2991 = vpop.f32.mrb[0].mxu0
      %2992 = vmatprep.mubr.bf16.mxu0 0
      %2993 = vmatmul.mubr.bf16.gmra.mrb[0].mxu0 %v613
      %v2994 = vpop.f32.mrb[0].mxu0
      %v2995 = vadd.f32 0.0, %v2994
      %v2996 = vpop.f32.mrb[0].mxu0
      %v2997 = vpop.f32.mrb[0].mxu0
      %v2998 = vadd.f32 0.0, %v2997
      %v2999 = vpop.f32.mrb[0].mxu0
      %3000 = vmatprep.mubr.bf16.mxu0 0
      %3001 = vmatmul.mubr.bf16.gmra.mrb[0].mxu0 %v616
      %v3002 = vpop.f32.mrb[0].mxu0
      %v3003 = vadd.f32 0.0, %v3002
      %v3004 = vpop.f32.mrb[0].mxu0
      %v3005 = vpop.f32.mrb[0].mxu0
      %v3006 = vadd.f32 0.0, %v3005
      %v3007 = vpop.f32.mrb[0].mxu0
      %3008 = vmatprep.mubr.bf16.mxu0 0
      %3009 = vmatmul.mubr.bf16.gmra.mrb[0].mxu0 %v619
      %v3010 = vpop.f32.mrb[0].mxu0
      %v3011 = vadd.f32 0.0, %v3010
      %v3012 = vpop.f32.mrb[0].mxu0
      %v3013 = vpop.f32.mrb[0].mxu0
      %v3014 = vadd.f32 0.0, %v3013
      %v3015 = vpop.f32.mrb[0].mxu0
      %3016 = vmatprep.mubr.bf16.mxu0 0
      %3017 = vmatmul.mubr.bf16.gmra.mrb[0].mxu0 %v622
      %v3018 = vpop.f32.mrb[0].mxu0
      %v3019 = vadd.f32 0.0, %v3018
      %v3020 = vpop.f32.mrb[0].mxu0
      %v3021 = vpop.f32.mrb[0].mxu0
      %v3022 = vadd.f32 0.0, %v3021
      %v3023 = vpop.f32.mrb[0].mxu0
      %3024 = vmatprep.mubr.bf16.mxu0 0
      %3025 = vmatmul.mubr.bf16.gmra.mrb[0].mxu0 %v2774
      %v3026 = vpop.f32.mrb[0].mxu0
      %v3027 = vadd.f32 0.0, %v3026
      %v3028 = vpop.f32.mrb[0].mxu0
      %v3029 = vpop.f32.mrb[0].mxu0
      %v3030 = vadd.f32 0.0, %v3029
      %v3031 = vpop.f32.mrb[0].mxu0
      %3032 = vdwg.mxu0
      %v3033 = vadd.f32 %v2754, %v2971
      %v3034 = vadd.f32 %v2755, %v2974
      %v3035 = vadd.f32 %v2756, %v2979
      %v3036 = vadd.f32 %v2757, %v2982
      %v3037 = vadd.f32 %v2758, %v2987
      %v3038 = vadd.f32 %v2759, %v2990
      %v3039 = vadd.f32 %v2760, %v2995
      %v3040 = vadd.f32 %v2761, %v2998
      %v3041 = vadd.f32 %v2762, %v3003
      %v3042 = vadd.f32 %v2763, %v3006
      %v3043 = vadd.f32 %v2764, %v3011
      %v3044 = vadd.f32 %v2765, %v3014
      %v3045 = vadd.f32 %v2766, %v3019
      %v3046 = vadd.f32 %v2767, %v3022
      %v3047 = vadd.f32 %v2768, %v3027
      %v3048 = vadd.f32 %v2769, %v3030
      %v3049 = vunpack.c.l.b16 %v2911
      %v3050 = vpack.c.b16 %v3049, %v2166
      %v3052 = vsel %vm599, %v3050, 0
      %3054 = vmatprep.subr.bf16.mxu0 0
      %3055 = vmatpush1.bf16.msra.mxu0 %v2928
      %3056 = vmatprep.subr.bf16.mxu0 0
      %3057 = vmatpush1.bf16.msra.mxu0 %v2929
      %3058 = vmatprep.subr.bf16.mxu0 0
      %3059 = vmatpush1.bf16.msra.mxu0 %v2930
      %3060 = vmatprep.subr.bf16.mxu0 0
      %3061 = vmatpush1.bf16.msra.mxu0 %v2931
      %3062 = vmatprep.subr.bf16.mxu0 0
      %3063 = vmatpush1.bf16.msra.mxu0 0
      %3064 = vmatprep.subr.bf16.mxu0 0
      %3065 = vmatpush1.bf16.msra.mxu0 0
      %3066 = vmatprep.subr.bf16.mxu0 0
      %3067 = vmatpush1.bf16.msra.mxu0 0
      %3068 = vmatprep.subr.bf16.mxu0 0
      %3069 = vmatpush1.bf16.msra.mxu0 0
      %3070 = vmatprep.subr.bf16.mxu0 0
      %3071 = vmatpush1.bf16.msra.mxu0 0
      %3072 = vmatprep.subr.bf16.mxu0 0
      %3073 = vmatpush1.bf16.msra.mxu0 0
      %3074 = vmatprep.subr.bf16.mxu0 0
      %3075 = vmatpush1.bf16.msra.mxu0 0
      %3076 = vmatprep.subr.bf16.mxu0 0
      %3077 = vmatpush1.bf16.msra.mxu0 0
      %3078 = vmatprep.subr.bf16.mxu0 0
      %3079 = vmatpush1.bf16.msra.mxu0 0
      %3080 = vmatprep.subr.bf16.mxu0 0
      %3081 = vmatpush1.bf16.msra.mxu0 0
      %3082 = vmatprep.subr.bf16.mxu0 0
      %3083 = vmatpush1.bf16.msra.mxu0 0
      %3084 = vmatprep.subr.bf16.mxu0 0
      %3085 = vmatpush1.bf16.msra.mxu0 0
      %3086 = vmatprep.mubr.bf16.mxu0 0
      %3087 = vmatmul.mubr.bf16.gmra.mrb[0].mxu0 %v934
      %v3088 = vpop.f32.mrb[0].mxu0
      %v3089 = vadd.f32 0.0, %v3088
      %v3090 = vpop.f32.mrb[0].mxu0
      %v3091 = vpop.f32.mrb[0].mxu0
      %v3092 = vadd.f32 0.0, %v3091
      %v3093 = vpop.f32.mrb[0].mxu0
      %3094 = vmatprep.mubr.bf16.mxu0 0
      %3095 = vmatmul.mubr.bf16.gmra.mrb[0].mxu0 %v937
      %v3096 = vpop.f32.mrb[0].mxu0
      %v3097 = vadd.f32 0.0, %v3096
      %v3098 = vpop.f32.mrb[0].mxu0
      %v3099 = vpop.f32.mrb[0].mxu0
      %v3100 = vadd.f32 0.0, %v3099
      %v3101 = vpop.f32.mrb[0].mxu0
      %3102 = vmatprep.mubr.bf16.mxu0 0
      %3103 = vmatmul.mubr.bf16.gmra.mrb[0].mxu0 %v940
      %v3104 = vpop.f32.mrb[0].mxu0
      %v3105 = vadd.f32 0.0, %v3104
      %v3106 = vpop.f32.mrb[0].mxu0
      %v3107 = vpop.f32.mrb[0].mxu0
      %v3108 = vadd.f32 0.0, %v3107
      %v3109 = vpop.f32.mrb[0].mxu0
      %3110 = vmatprep.mubr.bf16.mxu0 0
      %3111 = vmatmul.mubr.bf16.gmra.mrb[0].mxu0 %v943
      %v3112 = vpop.f32.mrb[0].mxu0
      %v3113 = vadd.f32 0.0, %v3112
      %v3114 = vpop.f32.mrb[0].mxu0
      %v3115 = vpop.f32.mrb[0].mxu0
      %v3116 = vadd.f32 0.0, %v3115
      %v3117 = vpop.f32.mrb[0].mxu0
      %3118 = vmatprep.mubr.bf16.mxu0 0
      %3119 = vmatmul.mubr.bf16.gmra.mrb[0].mxu0 %v946
      %v3120 = vpop.f32.mrb[0].mxu0
      %v3121 = vadd.f32 0.0, %v3120
      %v3122 = vpop.f32.mrb[0].mxu0
      %v3123 = vpop.f32.mrb[0].mxu0
      %v3124 = vadd.f32 0.0, %v3123
      %v3125 = vpop.f32.mrb[0].mxu0
      %3126 = vmatprep.mubr.bf16.mxu0 0
      %3127 = vmatmul.mubr.bf16.gmra.mrb[0].mxu0 %v949
      %v3128 = vpop.f32.mrb[0].mxu0
      %v3129 = vadd.f32 0.0, %v3128
      %v3130 = vpop.f32.mrb[0].mxu0
      %v3131 = vpop.f32.mrb[0].mxu0
      %v3132 = vadd.f32 0.0, %v3131
      %v3133 = vpop.f32.mrb[0].mxu0
      %3134 = vmatprep.mubr.bf16.mxu0 0
      %3135 = vmatmul.mubr.bf16.gmra.mrb[0].mxu0 %v952
      %v3136 = vpop.f32.mrb[0].mxu0
      %v3137 = vadd.f32 0.0, %v3136
      %v3138 = vpop.f32.mrb[0].mxu0
      %v3139 = vpop.f32.mrb[0].mxu0
      %v3140 = vadd.f32 0.0, %v3139
      %v3141 = vpop.f32.mrb[0].mxu0
      %3142 = vmatprep.mubr.bf16.mxu0 0
      %3143 = vmatmul.mubr.bf16.gmra.mrb[0].mxu0 %v3052
      %v3144 = vpop.f32.mrb[0].mxu0
      %v3145 = vadd.f32 0.0, %v3144
      %v3146 = vpop.f32.mrb[0].mxu0
      %v3147 = vpop.f32.mrb[0].mxu0
      %v3148 = vadd.f32 0.0, %v3147
      %v3149 = vpop.f32.mrb[0].mxu0
      %3150 = vdwg.mxu0
      %v3151 = vadd.f32 %v2873, %v3089
      %v3152 = vadd.f32 %v2874, %v3092
      %v3153 = vadd.f32 %v2875, %v3097
      %v3154 = vadd.f32 %v2876, %v3100
      %v3155 = vadd.f32 %v2877, %v3105
      %v3156 = vadd.f32 %v2878, %v3108
      %v3157 = vadd.f32 %v2879, %v3113
      %v3158 = vadd.f32 %v2880, %v3116
      %v3159 = vadd.f32 %v2881, %v3121
      %v3160 = vadd.f32 %v2882, %v3124
      %v3161 = vadd.f32 %v2883, %v3129
      %v3162 = vadd.f32 %v2884, %v3132
      %v3163 = vadd.f32 %v2885, %v3137
      %v3164 = vadd.f32 %v2886, %v3140
      %v3165 = vadd.f32 %v2887, %v3145
      %v3166 = vadd.f32 %v2888, %v3148
      %s3167 = scalar_lea.vmem %s2, 256
      %v3168 = vld [vmem:[%s3167] sm:$0xf]
      %v3169 = vld [vmem:[%s3167 + $0x4] sm:$0xf]
      %v3170 = vld [vmem:[%s3167 + $0x8] sm:$0xf]
      %v3171 = vld [vmem:[%s3167 + $0xc] sm:$0xf]
      %v3172 = vld [vmem:[%s3167 + $0x10] sm:$0xf]
      %v3173 = vld [vmem:[%s3167 + $0x14] sm:$0xf]
      %v3174 = vld [vmem:[%s3167 + $0x18] sm:$0xf]
      %v3175 = vld [vmem:[%s3167 + $0x1c] sm:$0xf]
      %v3177 = vshrl.u32 %v289, 16
      %v3179 = vrot.slane %v3177, 4
      %v3180 = vshll.u32 %v289, 16
      %v3182 = vrot.slane %v3180, 5
      %v3183 = vor.u32 %v3179, %v3182
      %v3184 = vrot.slane %v3183, 4
      %v3186 = vshll.u32 %v290, 16
      %v3188 = vrot.slane %v3186, 5
      %v3189 = vsel %vm310, %v3184, %v3188
      %v3198 = vunpack.c.l.b16 %v3168
      %v3199 = vunpack.c.l.b16 %v3169
      %v3200 = vunpack.c.l.b16 %v3170
      %v3201 = vunpack.c.l.b16 %v3171
      %v3202 = vunpack.c.l.b16 %v3172
      %v3203 = vunpack.c.l.b16 %v3173
      %v3204 = vunpack.c.l.b16 %v3174
      %v3205 = vunpack.c.l.b16 %v3175
      %v3206 = vpack.c.b16 %v3199, %v3198
      %v3207 = vpack.c.b16 %v3201, %v3200
      %v3208 = vpack.c.b16 %v3203, %v3202
      %v3209 = vpack.c.b16 %v3205, %v3204
      %3214 = vmatprep.subr.bf16.mxu0 0
      %3215 = vmatpush1.bf16.msra.mxu0 %v3206
      %3216 = vmatprep.subr.bf16.mxu0 0
      %3217 = vmatpush1.bf16.msra.mxu0 %v3207
      %3218 = vmatprep.subr.bf16.mxu0 0
      %3219 = vmatpush1.bf16.msra.mxu0 %v3208
      %3220 = vmatprep.subr.bf16.mxu0 0
      %3221 = vmatpush1.bf16.msra.mxu0 %v3209
      %3222 = vmatprep.subr.bf16.mxu0 0
      %3223 = vmatpush1.bf16.msra.mxu0 0
      %3224 = vmatprep.subr.bf16.mxu0 0
      %3225 = vmatpush1.bf16.msra.mxu0 0
      %3226 = vmatprep.subr.bf16.mxu0 0
      %3227 = vmatpush1.bf16.msra.mxu0 0
      %3228 = vmatprep.subr.bf16.mxu0 0
      %3229 = vmatpush1.bf16.msra.mxu0 0
      %3230 = vmatprep.subr.bf16.mxu0 0
      %3231 = vmatpush1.bf16.msra.mxu0 0
      %3232 = vmatprep.subr.bf16.mxu0 0
      %3233 = vmatpush1.bf16.msra.mxu0 0
      %3234 = vmatprep.subr.bf16.mxu0 0
      %3235 = vmatpush1.bf16.msra.mxu0 0
      %3236 = vmatprep.subr.bf16.mxu0 0
      %3237 = vmatpush1.bf16.msra.mxu0 0
      %3238 = vmatprep.subr.bf16.mxu0 0
      %3239 = vmatpush1.bf16.msra.mxu0 0
      %3240 = vmatprep.subr.bf16.mxu0 0
      %3241 = vmatpush1.bf16.msra.mxu0 0
      %3242 = vmatprep.subr.bf16.mxu0 0
      %3243 = vmatpush1.bf16.msra.mxu0 0
      %3244 = vmatprep.subr.bf16.mxu0 0
      %3245 = vmatpush1.bf16.msra.mxu0 0
      %3246 = vmatprep.mubr.bf16.mxu0 0
      %3247 = vmatmul.mubr.bf16.gmra.mrb[0].mxu0 %v934
      %v3248 = vpop.f32.mrb[0].mxu0
      %v3249 = vadd.f32 0.0, %v3248
      %v3250 = vpop.f32.mrb[0].mxu0
      %v3251 = vpop.f32.mrb[0].mxu0
      %v3252 = vadd.f32 0.0, %v3251
      %v3253 = vpop.f32.mrb[0].mxu0
      %3254 = vmatprep.mubr.bf16.mxu0 0
      %3255 = vmatmul.mubr.bf16.gmra.mrb[0].mxu0 %v937
      %v3256 = vpop.f32.mrb[0].mxu0
      %v3257 = vadd.f32 0.0, %v3256
      %v3258 = vpop.f32.mrb[0].mxu0
      %v3259 = vpop.f32.mrb[0].mxu0
      %v3260 = vadd.f32 0.0, %v3259
      %v3261 = vpop.f32.mrb[0].mxu0
      %3262 = vmatprep.mubr.bf16.mxu0 0
      %3263 = vmatmul.mubr.bf16.gmra.mrb[0].mxu0 %v940
      %v3264 = vpop.f32.mrb[0].mxu0
      %v3265 = vadd.f32 0.0, %v3264
      %v3266 = vpop.f32.mrb[0].mxu0
      %v3267 = vpop.f32.mrb[0].mxu0
      %v3268 = vadd.f32 0.0, %v3267
      %v3269 = vpop.f32.mrb[0].mxu0
      %3270 = vmatprep.mubr.bf16.mxu0 0
      %3271 = vmatmul.mubr.bf16.gmra.mrb[0].mxu0 %v943
      %v3272 = vpop.f32.mrb[0].mxu0
      %v3273 = vadd.f32 0.0, %v3272
      %v3274 = vpop.f32.mrb[0].mxu0
      %v3275 = vpop.f32.mrb[0].mxu0
      %v3276 = vadd.f32 0.0, %v3275
      %v3277 = vpop.f32.mrb[0].mxu0
      %3278 = vmatprep.mubr.bf16.mxu0 0
      %3279 = vmatmul.mubr.bf16.gmra.mrb[0].mxu0 %v946
      %v3280 = vpop.f32.mrb[0].mxu0
      %v3281 = vadd.f32 0.0, %v3280
      %v3282 = vpop.f32.mrb[0].mxu0
      %v3283 = vpop.f32.mrb[0].mxu0
      %v3284 = vadd.f32 0.0, %v3283
      %v3285 = vpop.f32.mrb[0].mxu0
      %3286 = vmatprep.mubr.bf16.mxu0 0
      %3287 = vmatmul.mubr.bf16.gmra.mrb[0].mxu0 %v949
      %v3288 = vpop.f32.mrb[0].mxu0
      %v3289 = vadd.f32 0.0, %v3288
      %v3290 = vpop.f32.mrb[0].mxu0
      %v3291 = vpop.f32.mrb[0].mxu0
      %v3292 = vadd.f32 0.0, %v3291
      %v3293 = vpop.f32.mrb[0].mxu0
      %3294 = vmatprep.mubr.bf16.mxu0 0
      %3295 = vmatmul.mubr.bf16.gmra.mrb[0].mxu0 %v952
      %v3296 = vpop.f32.mrb[0].mxu0
      %v3297 = vadd.f32 0.0, %v3296
      %v3298 = vpop.f32.mrb[0].mxu0
      %v3299 = vpop.f32.mrb[0].mxu0
      %v3300 = vadd.f32 0.0, %v3299
      %v3301 = vpop.f32.mrb[0].mxu0
      %3302 = vmatprep.mubr.bf16.mxu0 0
      %3303 = vmatmul.mubr.bf16.gmra.mrb[0].mxu0 %v3052
      %v3304 = vpop.f32.mrb[0].mxu0
      %v3305 = vadd.f32 0.0, %v3304
      %v3306 = vpop.f32.mrb[0].mxu0
      %v3307 = vpop.f32.mrb[0].mxu0
      %v3308 = vadd.f32 0.0, %v3307
      %v3309 = vpop.f32.mrb[0].mxu0
      %3310 = vdwg.mxu0
      %v3311 = vadd.f32 %v3033, %v3249
      %v3312 = vadd.f32 %v3034, %v3252
      %v3313 = vadd.f32 %v3035, %v3257
      %v3314 = vadd.f32 %v3036, %v3260
      %v3315 = vadd.f32 %v3037, %v3265
      %v3316 = vadd.f32 %v3038, %v3268
      %v3317 = vadd.f32 %v3039, %v3273
      %v3318 = vadd.f32 %v3040, %v3276
      %v3319 = vadd.f32 %v3041, %v3281
      %v3320 = vadd.f32 %v3042, %v3284
      %v3321 = vadd.f32 %v3043, %v3289
      %v3322 = vadd.f32 %v3044, %v3292
      %v3323 = vadd.f32 %v3045, %v3297
      %v3324 = vadd.f32 %v3046, %v3300
      %v3325 = vadd.f32 %v3047, %v3305
      %v3326 = vadd.f32 %v3048, %v3308
      %v3327 = vunpack.c.l.b16 %v3189
      %v3328 = vpack.c.b16 %v3327, %v2472
      %v3330 = vsel %vm599, %v3328, 0
      %3332 = vmatprep.subr.bf16.mxu0 0
      %3333 = vmatpush1.bf16.msra.mxu0 %v3206
      %3334 = vmatprep.subr.bf16.mxu0 0
      %3335 = vmatpush1.bf16.msra.mxu0 %v3207
      %3336 = vmatprep.subr.bf16.mxu0 0
      %3337 = vmatpush1.bf16.msra.mxu0 %v3208
      %3338 = vmatprep.subr.bf16.mxu0 0
      %3339 = vmatpush1.bf16.msra.mxu0 %v3209
      %3340 = vmatprep.subr.bf16.mxu0 0
      %3341 = vmatpush1.bf16.msra.mxu0 0
      %3342 = vmatprep.subr.bf16.mxu0 0
      %3343 = vmatpush1.bf16.msra.mxu0 0
      %3344 = vmatprep.subr.bf16.mxu0 0
      %3345 = vmatpush1.bf16.msra.mxu0 0
      %3346 = vmatprep.subr.bf16.mxu0 0
      %3347 = vmatpush1.bf16.msra.mxu0 0
      %3348 = vmatprep.subr.bf16.mxu0 0
      %3349 = vmatpush1.bf16.msra.mxu0 0
      %3350 = vmatprep.subr.bf16.mxu0 0
      %3351 = vmatpush1.bf16.msra.mxu0 0
      %3352 = vmatprep.subr.bf16.mxu0 0
      %3353 = vmatpush1.bf16.msra.mxu0 0
      %3354 = vmatprep.subr.bf16.mxu0 0
      %3355 = vmatpush1.bf16.msra.mxu0 0
      %3356 = vmatprep.subr.bf16.mxu0 0
      %3357 = vmatpush1.bf16.msra.mxu0 0
      %3358 = vmatprep.subr.bf16.mxu0 0
      %3359 = vmatpush1.bf16.msra.mxu0 0
      %3360 = vmatprep.subr.bf16.mxu0 0
      %3361 = vmatpush1.bf16.msra.mxu0 0
      %3362 = vmatprep.subr.bf16.mxu0 0
      %3363 = vmatpush1.bf16.msra.mxu0 0
      %3364 = vmatprep.mubr.bf16.mxu0 0
      %3365 = vmatmul.mubr.bf16.gmra.mrb[0].mxu0 %v1546
      %v3366 = vpop.f32.mrb[0].mxu0
      %v3367 = vadd.f32 0.0, %v3366
      %v3368 = vpop.f32.mrb[0].mxu0
      %v3369 = vpop.f32.mrb[0].mxu0
      %v3370 = vadd.f32 0.0, %v3369
      %v3371 = vpop.f32.mrb[0].mxu0
      %3372 = vmatprep.mubr.bf16.mxu0 0
      %3373 = vmatmul.mubr.bf16.gmra.mrb[0].mxu0 %v1549
      %v3374 = vpop.f32.mrb[0].mxu0
      %v3375 = vadd.f32 0.0, %v3374
      %v3376 = vpop.f32.mrb[0].mxu0
      %v3377 = vpop.f32.mrb[0].mxu0
      %v3378 = vadd.f32 0.0, %v3377
      %v3379 = vpop.f32.mrb[0].mxu0
      %3380 = vmatprep.mubr.bf16.mxu0 0
      %3381 = vmatmul.mubr.bf16.gmra.mrb[0].mxu0 %v1552
      %v3382 = vpop.f32.mrb[0].mxu0
      %v3383 = vadd.f32 0.0, %v3382
      %v3384 = vpop.f32.mrb[0].mxu0
      %v3385 = vpop.f32.mrb[0].mxu0
      %v3386 = vadd.f32 0.0, %v3385
      %v3387 = vpop.f32.mrb[0].mxu0
      %3388 = vmatprep.mubr.bf16.mxu0 0
      %3389 = vmatmul.mubr.bf16.gmra.mrb[0].mxu0 %v1555
      %v3390 = vpop.f32.mrb[0].mxu0
      %v3391 = vadd.f32 0.0, %v3390
      %v3392 = vpop.f32.mrb[0].mxu0
      %v3393 = vpop.f32.mrb[0].mxu0
      %v3394 = vadd.f32 0.0, %v3393
      %v3395 = vpop.f32.mrb[0].mxu0
      %3396 = vmatprep.mubr.bf16.mxu0 0
      %3397 = vmatmul.mubr.bf16.gmra.mrb[0].mxu0 %v1558
      %v3398 = vpop.f32.mrb[0].mxu0
      %v3399 = vadd.f32 0.0, %v3398
      %v3400 = vpop.f32.mrb[0].mxu0
      %v3401 = vpop.f32.mrb[0].mxu0
      %v3402 = vadd.f32 0.0, %v3401
      %v3403 = vpop.f32.mrb[0].mxu0
      %3404 = vmatprep.mubr.bf16.mxu0 0
      %3405 = vmatmul.mubr.bf16.gmra.mrb[0].mxu0 %v1561
      %v3406 = vpop.f32.mrb[0].mxu0
      %v3407 = vadd.f32 0.0, %v3406
      %v3408 = vpop.f32.mrb[0].mxu0
      %v3409 = vpop.f32.mrb[0].mxu0
      %v3410 = vadd.f32 0.0, %v3409
      %v3411 = vpop.f32.mrb[0].mxu0
      %3412 = vmatprep.mubr.bf16.mxu0 0
      %3413 = vmatmul.mubr.bf16.gmra.mrb[0].mxu0 %v1564
      %v3414 = vpop.f32.mrb[0].mxu0
      %v3415 = vadd.f32 0.0, %v3414
      %v3416 = vpop.f32.mrb[0].mxu0
      %v3417 = vpop.f32.mrb[0].mxu0
      %v3418 = vadd.f32 0.0, %v3417
      %v3419 = vpop.f32.mrb[0].mxu0
      %3420 = vmatprep.mubr.bf16.mxu0 0
      %3421 = vmatmul.mubr.bf16.gmra.mrb[0].mxu0 %v3330
      %v3422 = vpop.f32.mrb[0].mxu0
      %v3423 = vadd.f32 0.0, %v3422
      %v3424 = vpop.f32.mrb[0].mxu0
      %v3425 = vpop.f32.mrb[0].mxu0
      %v3426 = vadd.f32 0.0, %v3425
      %v3427 = vpop.f32.mrb[0].mxu0
      %3428 = vdwg.mxu0
      %v3429 = vadd.f32 %v3151, %v3367
      %v3430 = vadd.f32 %v3152, %v3370
      %v3431 = vadd.f32 %v3153, %v3375
      %v3432 = vadd.f32 %v3154, %v3378
      %v3433 = vadd.f32 %v3155, %v3383
      %v3434 = vadd.f32 %v3156, %v3386
      %v3435 = vadd.f32 %v3157, %v3391
      %v3436 = vadd.f32 %v3158, %v3394
      %v3437 = vadd.f32 %v3159, %v3399
      %v3438 = vadd.f32 %v3160, %v3402
      %v3439 = vadd.f32 %v3161, %v3407
      %v3440 = vadd.f32 %v3162, %v3410
      %v3441 = vadd.f32 %v3163, %v3415
      %v3442 = vadd.f32 %v3164, %v3418
      %v3443 = vadd.f32 %v3165, %v3423
      %v3444 = vadd.f32 %v3166, %v3426
      %v3445 = vmax.f32 %v3311, %v3429
      %v3446 = vmax.f32 %v3312, %v3430
      %v3447 = vmax.f32 %v3313, %v3431
      %v3448 = vmax.f32 %v3314, %v3432
      %v3449 = vmax.f32 %v3315, %v3433
      %v3450 = vmax.f32 %v3316, %v3434
      %v3451 = vmax.f32 %v3317, %v3435
      %v3452 = vmax.f32 %v3318, %v3436
      %v3453 = vmax.f32 %v3319, %v3437
      %v3454 = vmax.f32 %v3320, %v3438
      %v3455 = vmax.f32 %v3321, %v3439
      %v3456 = vmax.f32 %v3322, %v3440
      %v3457 = vmax.f32 %v3323, %v3441
      %v3458 = vmax.f32 %v3324, %v3442
      %v3459 = vmax.f32 %v3325, %v3443
      %v3460 = vmax.f32 %v3326, %v3444
      %v3461 = vld [vmem:[%s3] sm:$0x1]
      %v3463 = vlaneseq
      %v3464 = vshrl.u32 %v3463, 7
      %v3465 = vsub.s32 0, %v3464
      %v3466 = vrot.slane %v3461, %v3465
      %v3468 = vadd.f32 %v3445, %v3466
      %v3469 = vadd.f32 %v3446, %v3466
      %v3470 = vadd.f32 %v3447, %v3466
      %v3471 = vadd.f32 %v3448, %v3466
      %v3472 = vadd.f32 %v3449, %v3466
      %v3473 = vadd.f32 %v3450, %v3466
      %v3474 = vadd.f32 %v3451, %v3466
      %v3475 = vadd.f32 %v3452, %v3466
      %v3476 = vadd.f32 %v3453, %v3466
      %v3477 = vadd.f32 %v3454, %v3466
      %v3478 = vadd.f32 %v3455, %v3466
      %v3479 = vadd.f32 %v3456, %v3466
      %v3480 = vadd.f32 %v3457, %v3466
      %v3481 = vadd.f32 %v3458, %v3466
      %v3482 = vadd.f32 %v3459, %v3466
      %v3483 = vadd.f32 %v3460, %v3466
      %v3484 = vmax.f32 %v3468, %v3469
      %v3485 = vmax.f32 %v3470, %v3471
      %v3486 = vmax.f32 %v3472, %v3473
      %v3487 = vmax.f32 %v3474, %v3475
      %v3488 = vmax.f32 %v3476, %v3477
      %v3489 = vmax.f32 %v3478, %v3479
      %v3490 = vmax.f32 %v3480, %v3481
      %v3491 = vmax.f32 %v3482, %v3483
      %v3492 = vmax.f32 %v3484, 0.0
      %v3493 = vmax.f32 %v3485, 0.0
      %v3494 = vmax.f32 %v3486, 0.0
      %v3495 = vmax.f32 %v3487, 0.0
      %v3496 = vmax.f32 %v3488, 0.0
      %v3497 = vmax.f32 %v3489, 0.0
      %v3498 = vmax.f32 %v3490, 0.0
      %v3499 = vmax.f32 %v3491, 0.0
      %v3500 = vpack.c.bf16 %v3493, %v3492
      %v3501 = vpack.c.bf16 %v3495, %v3494
      %v3502 = vpack.c.bf16 %v3497, %v3496
      %v3503 = vpack.c.bf16 %v3499, %v3498
      %v3508 = vunpack.c.l.b16 %v3500
      %v3509 = vunpack.c.h.b16 %v3500
      %v3510 = vunpack.c.l.b16 %v3501
      %v3511 = vunpack.c.h.b16 %v3501
      %v3512 = vunpack.c.l.b16 %v3502
      %v3513 = vunpack.c.h.b16 %v3502
      %v3514 = vunpack.c.l.b16 %v3503
      %v3515 = vunpack.c.h.b16 %v3503
      %v3516 = vpack.c.b16 %v3508, %v3508
      %v3517 = vpack.c.b16 %v3509, %v3509
      %v3518 = vpack.c.b16 %v3510, %v3510
      %v3519 = vpack.c.b16 %v3511, %v3511
      %v3520 = vpack.c.b16 %v3512, %v3512
      %v3521 = vpack.c.b16 %v3513, %v3513
      %v3522 = vpack.c.b16 %v3514, %v3514
      %v3523 = vpack.c.b16 %v3515, %v3515
      %vm3532 = vcmask 519168
      %3533 = vst.msk [vmem:[%s217] sm:$0xf] %vm3532, %v3516
      %3534 = vst.msk [vmem:[%s217 + $0x4] sm:$0xf] %vm3532, %v3517
      %3535 = vst.msk [vmem:[%s217 + $0x8] sm:$0xf] %vm3532, %v3518
      %3536 = vst.msk [vmem:[%s217 + $0xc] sm:$0xf] %vm3532, %v3519
      %3537 = vst.msk [vmem:[%s217 + $0x10] sm:$0xf] %vm3532, %v3520
      %3538 = vst.msk [vmem:[%s217 + $0x14] sm:$0xf] %vm3532, %v3521
      %3539 = vst.msk [vmem:[%s217 + $0x18] sm:$0xf] %vm3532, %v3522
      %3540 = vst.msk [vmem:[%s217 + $0x1c] sm:$0xf] %vm3532, %v3523
      %p3541 = scmp.lt.s32.totalorder %s15, 1
      %s3542 = scalar_select %p3541, %s15, 1
      %s3543 = smul.addr %s3542, 8
      %s3544 = smul.addr %s3543, 4
      %s3545 = scalar_lea.vmem %s4, %s3544
      // Predicated region
      $region37: #{forward.4} parent=35 // pred_check
        %p3546 = pneg %p127
      $region38: #{forward.4} parent=35 // pred_check_branch
        %3548 = sbr.rel (%p3546) target = $region40
      $region39: #{forward.4} parent=35 // pred_region
        _
      $region40: #{forward.4} parent=35 // pred_fallthru
        _
    $region36: #{forward.4} parent=5 // pred_fallthru
      _
    %p3549 = scmp.le.s32.totalorder 2, %s10
    // Predicated region
    $region41: #{forward.4} parent=5 // pred_check
      %p3550 = pneg %p3549
    $region42: #{forward.4} parent=5 // pred_check_branch
      %3552 = sbr.rel (%p3550) target = $region44
    $region43: #{forward.4} parent=5 // pred_region
      %s3553 = ssub.s32 %s10, 2
      // Predicated region
      $region45: #{forward.4} parent=43 // pred_check
        %p3554 = pneg %p133
      $region46: #{forward.4} parent=43 // pred_check_branch
        %3556 = sbr.rel (%p3554) target = $region48
      $region47: #{forward.4} parent=43 // pred_region
        %p3557 = scmp.lt.s32.totalorder %s16, 1
        %s3558 = scalar_select %p3557, %s16, 1
        %s3559 = smul.addr %s3558, 8
        %s3560 = smul.addr %s3559, 4
        %s3561 = scalar_lea.vmem %s4, %s3560
      $region48: #{forward.4} parent=43 // pred_fallthru
        _
    $region44: #{forward.4} parent=5 // pred_fallthru
      _
  $region6: #{forward.4} parent=0 // loop_footer
    %s14 = sadd.s32 1, %s10
  $region7: #{forward.4} parent=0 // loop_footer_branch
    %9 = sbr.rel target = $region3
  $region8: #{forward.4} parent=0 // loop_exit
    _

// kernel: forward.5
$region0: #{forward.5}
  #allocation0 [shape = 'u32[]', space=smem, size = 0x4, offset = 0x4, fixed_abs, tag = 'smem constant byte address 0x4 - core index']
  #allocation1 [shape = 'u32[144,128]{1,0:T(1,128)}', space=vmem, size = 0x12000, scoped, tag = 'internal scratch']
  %s0 = inlined_call_operand.vmem [shape: bf16[2,4096], index: 0, kind: input, shape index: {}]
  %s1 = inlined_call_operand.vmem [shape: bf16[4096,128], index: 1, kind: input, shape index: {}]
  %s2 = inlined_call_operand.vmem [shape: f32[1,128], index: 2, kind: input, shape index: {}]
  %s3 = inlined_call_operand.vmem [shape: bf16[128,128], index: 3, kind: input, shape index: {}]
  %s4 = inlined_call_operand.vmem [shape: f32[1,128], index: 4, kind: input, shape index: {}]
  %s5 = inlined_call_operand.hbm [shape: f32[2,128], index: 5, kind: output, shape index: {}]
  %s6 = sld [smem:[#allocation0]]
  $region30: #{forward.5} parent=0
    _
  %s8 = ssub.s32 1, %s6
  %s9 = scalar_select 0, %s8, %s6
  $region1: #{forward.5} parent=0
    #allocation2 [shape = 'u8[1024]{0}', space=vmem, size = 0x400, scoped, tag = 'output window, operand 0, single buffered']
    #allocation3 [shape = 's32[1]{0}', space=sflag, size = 0x4, scoped, tag = 'scoped memory for forward.5']
    %10 = vsyncpa [#allocation3], 0
    // Predicated region
    $region2: #{forward.5} parent=1 // pred_check
      _
    $region3: #{forward.5} parent=1 // pred_check_branch
      %12 = sbr.rel (0) target = $region5
    $region4: #{forward.5} parent=1 // pred_region
      _
    $region5: #{forward.5} parent=1 // pred_fallthru
      _
    // Predicated region
    $region6: #{forward.5} parent=1 // pred_check
      _
    $region7: #{forward.5} parent=1 // pred_check_branch
      %14 = sbr.rel (0) target = $region9
    $region8: #{forward.5} parent=1 // pred_region
      _
    $region9: #{forward.5} parent=1 // pred_fallthru
      _
    // Predicated region
    $region10: #{forward.5} parent=1 // pred_check
      _
    $region11: #{forward.5} parent=1 // pred_check_branch
      %16 = sbr.rel (0) target = $region13
    $region12: #{forward.5} parent=1 // pred_region
      _
    $region13: #{forward.5} parent=1 // pred_fallthru
      _
    // Predicated region
    $region14: #{forward.5} parent=1 // pred_check
      _
    $region15: #{forward.5} parent=1 // pred_check_branch
      %18 = sbr.rel (0) target = $region17
    $region16: #{forward.5} parent=1 // pred_region
      _
    $region17: #{forward.5} parent=1 // pred_fallthru
      _
    // Predicated region
    $region18: #{forward.5} parent=1 // pred_check
      _
    $region19: #{forward.5} parent=1 // pred_check_branch
      %20 = sbr.rel (0) target = $region21
    $region20: #{forward.5} parent=1 // pred_region
      _
    $region21: #{forward.5} parent=1 // pred_fallthru
      _
    %v22 = vld [vmem:[%s0] sm:$0xff]
    %v23 = vld [vmem:[%s0 + $0x8] sm:$0xff]
    %v24 = vld [vmem:[%s0 + $0x10] sm:$0xff]
    %v25 = vld [vmem:[%s0 + $0x18] sm:$0xff]
    %v26 = vld [vmem:[%s1] sm:$0xf]
    %v27 = vld [vmem:[%s1 + $0x4] sm:$0xf]
    %v28 = vld [vmem:[%s1 + $0x8] sm:$0xf]
    %v29 = vld [vmem:[%s1 + $0xc] sm:$0xf]
    %v30 = vld [vmem:[%s1 + $0x10] sm:$0xf]
    %v31 = vld [vmem:[%s1 + $0x14] sm:$0xf]
    %v32 = vld [vmem:[%s1 + $0x18] sm:$0xf]
    %v33 = vld [vmem:[%s1 + $0x1c] sm:$0xf]
    %v34 = vld [vmem:[%s1 + $0x20] sm:$0xf]
    %v35 = vld [vmem:[%s1 + $0x24] sm:$0xf]
    %v36 = vld [vmem:[%s1 + $0x28] sm:$0xf]
    %v37 = vld [vmem:[%s1 + $0x2c] sm:$0xf]
    %v38 = vld [vmem:[%s1 + $0x30] sm:$0xf]
    %v39 = vld [vmem:[%s1 + $0x34] sm:$0xf]
    %v40 = vld [vmem:[%s1 + $0x38] sm:$0xf]
    %v41 = vld [vmem:[%s1 + $0x3c] sm:$0xf]
    %v42 = vld [vmem:[%s1 + $0x40] sm:$0xf]
    %v43 = vld [vmem:[%s1 + $0x44] sm:$0xf]
    %v44 = vld [vmem:[%s1 + $0x48] sm:$0xf]
    %v45 = vld [vmem:[%s1 + $0x4c] sm:$0xf]
    %v46 = vld [vmem:[%s1 + $0x50] sm:$0xf]
    %v47 = vld [vmem:[%s1 + $0x54] sm:$0xf]
    %v48 = vld [vmem:[%s1 + $0x58] sm:$0xf]
    %v49 = vld [vmem:[%s1 + $0x5c] sm:$0xf]
    %v50 = vld [vmem:[%s1 + $0x60] sm:$0xf]
    %v51 = vld [vmem:[%s1 + $0x64] sm:$0xf]
    %v52 = vld [vmem:[%s1 + $0x68] sm:$0xf]
    %v53 = vld [vmem:[%s1 + $0x6c] sm:$0xf]
    %v54 = vld [vmem:[%s1 + $0x70] sm:$0xf]
    %v55 = vld [vmem:[%s1 + $0x74] sm:$0xf]
    %v56 = vld [vmem:[%s1 + $0x78] sm:$0xf]
    %v57 = vld [vmem:[%s1 + $0x7c] sm:$0xf]
    %v58 = vld [vmem:[%s1 + $0x80] sm:$0xf]
    %v59 = vld [vmem:[%s1 + $0x84] sm:$0xf]
    %v60 = vld [vmem:[%s1 + $0x88] sm:$0xf]
    %v61 = vld [vmem:[%s1 + $0x8c] sm:$0xf]
    %v62 = vld [vmem:[%s1 + $0x90] sm:$0xf]
    %v63 = vld [vmem:[%s1 + $0x94] sm:$0xf]
    %v64 = vld [vmem:[%s1 + $0x98] sm:$0xf]
    %v65 = vld [vmem:[%s1 + $0x9c] sm:$0xf]
    %v66 = vld [vmem:[%s1 + $0xa0] sm:$0xf]
    %v67 = vld [vmem:[%s1 + $0xa4] sm:$0xf]
    %v68 = vld [vmem:[%s1 + $0xa8] sm:$0xf]
    %v69 = vld [vmem:[%s1 + $0xac] sm:$0xf]
    %v70 = vld [vmem:[%s1 + $0xb0] sm:$0xf]
    %v71 = vld [vmem:[%s1 + $0xb4] sm:$0xf]
    %v72 = vld [vmem:[%s1 + $0xb8] sm:$0xf]
    %v73 = vld [vmem:[%s1 + $0xbc] sm:$0xf]
    %v74 = vld [vmem:[%s1 + $0xc0] sm:$0xf]
    %v75 = vld [vmem:[%s1 + $0xc4] sm:$0xf]
    %v76 = vld [vmem:[%s1 + $0xc8] sm:$0xf]
    %v77 = vld [vmem:[%s1 + $0xcc] sm:$0xf]
    %v78 = vld [vmem:[%s1 + $0xd0] sm:$0xf]
    %v79 = vld [vmem:[%s1 + $0xd4] sm:$0xf]
    %v80 = vld [vmem:[%s1 + $0xd8] sm:$0xf]
    %v81 = vld [vmem:[%s1 + $0xdc] sm:$0xf]
    %v82 = vld [vmem:[%s1 + $0xe0] sm:$0xf]
    %v83 = vld [vmem:[%s1 + $0xe4] sm:$0xf]
    %v84 = vld [vmem:[%s1 + $0xe8] sm:$0xf]
    %v85 = vld [vmem:[%s1 + $0xec] sm:$0xf]
    %v86 = vld [vmem:[%s1 + $0xf0] sm:$0xf]
    %v87 = vld [vmem:[%s1 + $0xf4] sm:$0xf]
    %v88 = vld [vmem:[%s1 + $0xf8] sm:$0xf]
    %v89 = vld [vmem:[%s1 + $0xfc] sm:$0xf]
    %v90 = vld [vmem:[%s1 + $0x100] sm:$0xf]
    %v91 = vld [vmem:[%s1 + $0x104] sm:$0xf]
    %v92 = vld [vmem:[%s1 + $0x108] sm:$0xf]
    %v93 = vld [vmem:[%s1 + $0x10c] sm:$0xf]
    %v94 = vld [vmem:[%s1 + $0x110] sm:$0xf]
    %v95 = vld [vmem:[%s1 + $0x114] sm:$0xf]
    %v96 = vld [vmem:[%s1 + $0x118] sm:$0xf]
    %v97 = vld [vmem:[%s1 + $0x11c] sm:$0xf]
    %v98 = vld [vmem:[%s1 + $0x120] sm:$0xf]
    %v99 = vld [vmem:[%s1 + $0x124] sm:$0xf]
    %v100 = vld [vmem:[%s1 + $0x128] sm:$0xf]
    %v101 = vld [vmem:[%s1 + $0x12c] sm:$0xf]
    %v102 = vld [vmem:[%s1 + $0x130] sm:$0xf]
    %v103 = vld [vmem:[%s1 + $0x134] sm:$0xf]
    %v104 = vld [vmem:[%s1 + $0x138] sm:$0xf]
    %v105 = vld [vmem:[%s1 + $0x13c] sm:$0xf]
    %v106 = vld [vmem:[%s1 + $0x140] sm:$0xf]
    %v107 = vld [vmem:[%s1 + $0x144] sm:$0xf]
    %v108 = vld [vmem:[%s1 + $0x148] sm:$0xf]
    %v109 = vld [vmem:[%s1 + $0x14c] sm:$0xf]
    %v110 = vld [vmem:[%s1 + $0x150] sm:$0xf]
    %v111 = vld [vmem:[%s1 + $0x154] sm:$0xf]
    %v112 = vld [vmem:[%s1 + $0x158] sm:$0xf]
    %v113 = vld [vmem:[%s1 + $0x15c] sm:$0xf]
    %v114 = vld [vmem:[%s1 + $0x160] sm:$0xf]
    %v115 = vld [vmem:[%s1 + $0x164] sm:$0xf]
    %v116 = vld [vmem:[%s1 + $0x168] sm:$0xf]
    %v117 = vld [vmem:[%s1 + $0x16c] sm:$0xf]
    %v118 = vld [vmem:[%s1 + $0x170] sm:$0xf]
    %v119 = vld [vmem:[%s1 + $0x174] sm:$0xf]
    %v120 = vld [vmem:[%s1 + $0x178] sm:$0xf]
    %v121 = vld [vmem:[%s1 + $0x17c] sm:$0xf]
    %v122 = vld [vmem:[%s1 + $0x180] sm:$0xf]
    %v123 = vld [vmem:[%s1 + $0x184] sm:$0xf]
    %v124 = vld [vmem:[%s1 + $0x188] sm:$0xf]
    %v125 = vld [vmem:[%s1 + $0x18c] sm:$0xf]
    %v126 = vld [vmem:[%s1 + $0x190] sm:$0xf]
    %v127 = vld [vmem:[%s1 + $0x194] sm:$0xf]
    %v128 = vld [vmem:[%s1 + $0x198] sm:$0xf]
    %v129 = vld [vmem:[%s1 + $0x19c] sm:$0xf]
    %v130 = vld [vmem:[%s1 + $0x1a0] sm:$0xf]
    %v131 = vld [vmem:[%s1 + $0x1a4] sm:$0xf]
    %v132 = vld [vmem:[%s1 + $0x1a8] sm:$0xf]
    %v133 = vld [vmem:[%s1 + $0x1ac] sm:$0xf]
    %v134 = vld [vmem:[%s1 + $0x1b0] sm:$0xf]
    %v135 = vld [vmem:[%s1 + $0x1b4] sm:$0xf]
    %v136 = vld [vmem:[%s1 + $0x1b8] sm:$0xf]
    %v137 = vld [vmem:[%s1 + $0x1bc] sm:$0xf]
    %v138 = vld [vmem:[%s1 + $0x1c0] sm:$0xf]
    %v139 = vld [vmem:[%s1 + $0x1c4] sm:$0xf]
    %v140 = vld [vmem:[%s1 + $0x1c8] sm:$0xf]
    %v141 = vld [vmem:[%s1 + $0x1cc] sm:$0xf]
    %v142 = vld [vmem:[%s1 + $0x1d0] sm:$0xf]
    %v143 = vld [vmem:[%s1 + $0x1d4] sm:$0xf]
    %v144 = vld [vmem:[%s1 + $0x1d8] sm:$0xf]
    %v145 = vld [vmem:[%s1 + $0x1dc] sm:$0xf]
    %v146 = vld [vmem:[%s1 + $0x1e0] sm:$0xf]
    %v147 = vld [vmem:[%s1 + $0x1e4] sm:$0xf]
    %v148 = vld [vmem:[%s1 + $0x1e8] sm:$0xf]
    %v149 = vld [vmem:[%s1 + $0x1ec] sm:$0xf]
    %v150 = vld [vmem:[%s1 + $0x1f0] sm:$0xf]
    %v151 = vld [vmem:[%s1 + $0x1f4] sm:$0xf]
    %v152 = vld [vmem:[%s1 + $0x1f8] sm:$0xf]
    %v153 = vld [vmem:[%s1 + $0x1fc] sm:$0xf]
    %v154 = vld [vmem:[%s1 + $0x200] sm:$0xf]
    %v155 = vld [vmem:[%s1 + $0x204] sm:$0xf]
    %v156 = vld [vmem:[%s1 + $0x208] sm:$0xf]
    %v157 = vld [vmem:[%s1 + $0x20c] sm:$0xf]
    %v158 = vld [vmem:[%s1 + $0x210] sm:$0xf]
    %v159 = vld [vmem:[%s1 + $0x214] sm:$0xf]
    %v160 = vld [vmem:[%s1 + $0x218] sm:$0xf]
    %v161 = vld [vmem:[%s1 + $0x21c] sm:$0xf]
    %v162 = vld [vmem:[%s1 + $0x220] sm:$0xf]
    %v163 = vld [vmem:[%s1 + $0x224] sm:$0xf]
    %v164 = vld [vmem:[%s1 + $0x228] sm:$0xf]
    %v165 = vld [vmem:[%s1 + $0x22c] sm:$0xf]
    %v166 = vld [vmem:[%s1 + $0x230] sm:$0xf]
    %v167 = vld [vmem:[%s1 + $0x234] sm:$0xf]
    %v168 = vld [vmem:[%s1 + $0x238] sm:$0xf]
    %v169 = vld [vmem:[%s1 + $0x23c] sm:$0xf]
    %v170 = vld [vmem:[%s1 + $0x240] sm:$0xf]
    %v171 = vld [vmem:[%s1 + $0x244] sm:$0xf]
    %v172 = vld [vmem:[%s1 + $0x248] sm:$0xf]
    %v173 = vld [vmem:[%s1 + $0x24c] sm:$0xf]
    %v174 = vld [vmem:[%s1 + $0x250] sm:$0xf]
    %v175 = vld [vmem:[%s1 + $0x254] sm:$0xf]
    %v176 = vld [vmem:[%s1 + $0x258] sm:$0xf]
    %v177 = vld [vmem:[%s1 + $0x25c] sm:$0xf]
    %v178 = vld [vmem:[%s1 + $0x260] sm:$0xf]
    %v179 = vld [vmem:[%s1 + $0x264] sm:$0xf]
    %v180 = vld [vmem:[%s1 + $0x268] sm:$0xf]
    %v181 = vld [vmem:[%s1 + $0x26c] sm:$0xf]
    %v182 = vld [vmem:[%s1 + $0x270] sm:$0xf]
    %v183 = vld [vmem:[%s1 + $0x274] sm:$0xf]
    %v184 = vld [vmem:[%s1 + $0x278] sm:$0xf]
    %v185 = vld [vmem:[%s1 + $0x27c] sm:$0xf]
    %v186 = vld [vmem:[%s1 + $0x280] sm:$0xf]
    %v187 = vld [vmem:[%s1 + $0x284] sm:$0xf]
    %v188 = vld [vmem:[%s1 + $0x288] sm:$0xf]
    %v189 = vld [vmem:[%s1 + $0x28c] sm:$0xf]
    %v190 = vld [vmem:[%s1 + $0x290] sm:$0xf]
    %v191 = vld [vmem:[%s1 + $0x294] sm:$0xf]
    %v192 = vld [vmem:[%s1 + $0x298] sm:$0xf]
    %v193 = vld [vmem:[%s1 + $0x29c] sm:$0xf]
    %v194 = vld [vmem:[%s1 + $0x2a0] sm:$0xf]
    %v195 = vld [vmem:[%s1 + $0x2a4] sm:$0xf]
    %v196 = vld [vmem:[%s1 + $0x2a8] sm:$0xf]
    %v197 = vld [vmem:[%s1 + $0x2ac] sm:$0xf]
    %v198 = vld [vmem:[%s1 + $0x2b0] sm:$0xf]
    %v199 = vld [vmem:[%s1 + $0x2b4] sm:$0xf]
    %v200 = vld [vmem:[%s1 + $0x2b8] sm:$0xf]
    %v201 = vld [vmem:[%s1 + $0x2bc] sm:$0xf]
    %v202 = vld [vmem:[%s1 + $0x2c0] sm:$0xf]
    %v203 = vld [vmem:[%s1 + $0x2c4] sm:$0xf]
    %v204 = vld [vmem:[%s1 + $0x2c8] sm:$0xf]
    %v205 = vld [vmem:[%s1 + $0x2cc] sm:$0xf]
    %v206 = vld [vmem:[%s1 + $0x2d0] sm:$0xf]
    %v207 = vld [vmem:[%s1 + $0x2d4] sm:$0xf]
    %v208 = vld [vmem:[%s1 + $0x2d8] sm:$0xf]
    %v209 = vld [vmem:[%s1 + $0x2dc] sm:$0xf]
    %v210 = vld [vmem:[%s1 + $0x2e0] sm:$0xf]
    %v211 = vld [vmem:[%s1 + $0x2e4] sm:$0xf]
    %v212 = vld [vmem:[%s1 + $0x2e8] sm:$0xf]
    %v213 = vld [vmem:[%s1 + $0x2ec] sm:$0xf]
    %v214 = vld [vmem:[%s1 + $0x2f0] sm:$0xf]
    %v215 = vld [vmem:[%s1 + $0x2f4] sm:$0xf]
    %v216 = vld [vmem:[%s1 + $0x2f8] sm:$0xf]
    %v217 = vld [vmem:[%s1 + $0x2fc] sm:$0xf]
    %v218 = vld [vmem:[%s1 + $0x300] sm:$0xf]
    %v219 = vld [vmem:[%s1 + $0x304] sm:$0xf]
    %v220 = vld [vmem:[%s1 + $0x308] sm:$0xf]
    %v221 = vld [vmem:[%s1 + $0x30c] sm:$0xf]
    %v222 = vld [vmem:[%s1 + $0x310] sm:$0xf]
    %v223 = vld [vmem:[%s1 + $0x314] sm:$0xf]
    %v224 = vld [vmem:[%s1 + $0x318] sm:$0xf]
    %v225 = vld [vmem:[%s1 + $0x31c] sm:$0xf]
    %v226 = vld [vmem:[%s1 + $0x320] sm:$0xf]
    %v227 = vld [vmem:[%s1 + $0x324] sm:$0xf]
    %v228 = vld [vmem:[%s1 + $0x328] sm:$0xf]
    %v229 = vld [vmem:[%s1 + $0x32c] sm:$0xf]
    %v230 = vld [vmem:[%s1 + $0x330] sm:$0xf]
    %v231 = vld [vmem:[%s1 + $0x334] sm:$0xf]
    %v232 = vld [vmem:[%s1 + $0x338] sm:$0xf]
    %v233 = vld [vmem:[%s1 + $0x33c] sm:$0xf]
    %v234 = vld [vmem:[%s1 + $0x340] sm:$0xf]
    %v235 = vld [vmem:[%s1 + $0x344] sm:$0xf]
    %v236 = vld [vmem:[%s1 + $0x348] sm:$0xf]
    %v237 = vld [vmem:[%s1 + $0x34c] sm:$0xf]
    %v238 = vld [vmem:[%s1 + $0x350] sm:$0xf]
    %v239 = vld [vmem:[%s1 + $0x354] sm:$0xf]
    %v240 = vld [vmem:[%s1 + $0x358] sm:$0xf]
    %v241 = vld [vmem:[%s1 + $0x35c] sm:$0xf]
    %v242 = vld [vmem:[%s1 + $0x360] sm:$0xf]
    %v243 = vld [vmem:[%s1 + $0x364] sm:$0xf]
    %v244 = vld [vmem:[%s1 + $0x368] sm:$0xf]
    %v245 = vld [vmem:[%s1 + $0x36c] sm:$0xf]
    %v246 = vld [vmem:[%s1 + $0x370] sm:$0xf]
    %v247 = vld [vmem:[%s1 + $0x374] sm:$0xf]
    %v248 = vld [vmem:[%s1 + $0x378] sm:$0xf]
    %v249 = vld [vmem:[%s1 + $0x37c] sm:$0xf]
    %v250 = vld [vmem:[%s1 + $0x380] sm:$0xf]
    %v251 = vld [vmem:[%s1 + $0x384] sm:$0xf]
    %v252 = vld [vmem:[%s1 + $0x388] sm:$0xf]
    %v253 = vld [vmem:[%s1 + $0x38c] sm:$0xf]
    %v254 = vld [vmem:[%s1 + $0x390] sm:$0xf]
    %v255 = vld [vmem:[%s1 + $0x394] sm:$0xf]
    %v256 = vld [vmem:[%s1 + $0x398] sm:$0xf]
    %v257 = vld [vmem:[%s1 + $0x39c] sm:$0xf]
    %v258 = vld [vmem:[%s1 + $0x3a0] sm:$0xf]
    %v259 = vld [vmem:[%s1 + $0x3a4] sm:$0xf]
    %v260 = vld [vmem:[%s1 + $0x3a8] sm:$0xf]
    %v261 = vld [vmem:[%s1 + $0x3ac] sm:$0xf]
    %v262 = vld [vmem:[%s1 + $0x3b0] sm:$0xf]
    %v263 = vld [vmem:[%s1 + $0x3b4] sm:$0xf]
    %v264 = vld [vmem:[%s1 + $0x3b8] sm:$0xf]
    %v265 = vld [vmem:[%s1 + $0x3bc] sm:$0xf]
    %v266 = vld [vmem:[%s1 + $0x3c0] sm:$0xf]
    %v267 = vld [vmem:[%s1 + $0x3c4] sm:$0xf]
    %v268 = vld [vmem:[%s1 + $0x3c8] sm:$0xf]
    %v269 = vld [vmem:[%s1 + $0x3cc] sm:$0xf]
    %v270 = vld [vmem:[%s1 + $0x3d0] sm:$0xf]
    %v271 = vld [vmem:[%s1 + $0x3d4] sm:$0xf]
    %v272 = vld [vmem:[%s1 + $0x3d8] sm:$0xf]
    %v273 = vld [vmem:[%s1 + $0x3dc] sm:$0xf]
    %v274 = vld [vmem:[%s1 + $0x3e0] sm:$0xf]
    %v275 = vld [vmem:[%s1 + $0x3e4] sm:$0xf]
    %v276 = vld [vmem:[%s1 + $0x3e8] sm:$0xf]
    %v277 = vld [vmem:[%s1 + $0x3ec] sm:$0xf]
    %v278 = vld [vmem:[%s1 + $0x3f0] sm:$0xf]
    %v279 = vld [vmem:[%s1 + $0x3f4] sm:$0xf]
    %v280 = vld [vmem:[%s1 + $0x3f8] sm:$0xf]
    %v281 = vld [vmem:[%s1 + $0x3fc] sm:$0xf]
    %v282 = vld [vmem:[%s1 + $0x400] sm:$0xf]
    %v283 = vld [vmem:[%s1 + $0x404] sm:$0xf]
    %v284 = vld [vmem:[%s1 + $0x408] sm:$0xf]
    %v285 = vld [vmem:[%s1 + $0x40c] sm:$0xf]
    %v286 = vld [vmem:[%s1 + $0x410] sm:$0xf]
    %v287 = vld [vmem:[%s1 + $0x414] sm:$0xf]
    %v288 = vld [vmem:[%s1 + $0x418] sm:$0xf]
    %v289 = vld [vmem:[%s1 + $0x41c] sm:$0xf]
    %v290 = vld [vmem:[%s1 + $0x420] sm:$0xf]
    %v291 = vld [vmem:[%s1 + $0x424] sm:$0xf]
    %v292 = vld [vmem:[%s1 + $0x428] sm:$0xf]
    %v293 = vld [vmem:[%s1 + $0x42c] sm:$0xf]
    %v294 = vld [vmem:[%s1 + $0x430] sm:$0xf]
    %v295 = vld [vmem:[%s1 + $0x434] sm:$0xf]
    %v296 = vld [vmem:[%s1 + $0x438] sm:$0xf]
    %v297 = vld [vmem:[%s1 + $0x43c] sm:$0xf]
    %v298 = vld [vmem:[%s1 + $0x440] sm:$0xf]
    %v299 = vld [vmem:[%s1 + $0x444] sm:$0xf]
    %v300 = vld [vmem:[%s1 + $0x448] sm:$0xf]
    %v301 = vld [vmem:[%s1 + $0x44c] sm:$0xf]
    %v302 = vld [vmem:[%s1 + $0x450] sm:$0xf]
    %v303 = vld [vmem:[%s1 + $0x454] sm:$0xf]
    %v304 = vld [vmem:[%s1 + $0x458] sm:$0xf]
    %v305 = vld [vmem:[%s1 + $0x45c] sm:$0xf]
    %v306 = vld [vmem:[%s1 + $0x460] sm:$0xf]
    %v307 = vld [vmem:[%s1 + $0x464] sm:$0xf]
    %v308 = vld [vmem:[%s1 + $0x468] sm:$0xf]
    %v309 = vld [vmem:[%s1 + $0x46c] sm:$0xf]
    %v310 = vld [vmem:[%s1 + $0x470] sm:$0xf]
    %v311 = vld [vmem:[%s1 + $0x474] sm:$0xf]
    %v312 = vld [vmem:[%s1 + $0x478] sm:$0xf]
    %v313 = vld [vmem:[%s1 + $0x47c] sm:$0xf]
    %v314 = vld [vmem:[%s1 + $0x480] sm:$0xf]
    %v315 = vld [vmem:[%s1 + $0x484] sm:$0xf]
    %v316 = vld [vmem:[%s1 + $0x488] sm:$0xf]
    %v317 = vld [vmem:[%s1 + $0x48c] sm:$0xf]
    %v318 = vld [vmem:[%s1 + $0x490] sm:$0xf]
    %v319 = vld [vmem:[%s1 + $0x494] sm:$0xf]
    %v320 = vld [vmem:[%s1 + $0x498] sm:$0xf]
    %v321 = vld [vmem:[%s1 + $0x49c] sm:$0xf]
    %v322 = vld [vmem:[%s1 + $0x4a0] sm:$0xf]
    %v323 = vld [vmem:[%s1 + $0x4a4] sm:$0xf]
    %v324 = vld [vmem:[%s1 + $0x4a8] sm:$0xf]
    %v325 = vld [vmem:[%s1 + $0x4ac] sm:$0xf]
    %v326 = vld [vmem:[%s1 + $0x4b0] sm:$0xf]
    %v327 = vld [vmem:[%s1 + $0x4b4] sm:$0xf]
    %v328 = vld [vmem:[%s1 + $0x4b8] sm:$0xf]
    %v329 = vld [vmem:[%s1 + $0x4bc] sm:$0xf]
    %v330 = vld [vmem:[%s1 + $0x4c0] sm:$0xf]
    %v331 = vld [vmem:[%s1 + $0x4c4] sm:$0xf]
    %v332 = vld [vmem:[%s1 + $0x4c8] sm:$0xf]
    %v333 = vld [vmem:[%s1 + $0x4cc] sm:$0xf]
    %v334 = vld [vmem:[%s1 + $0x4d0] sm:$0xf]
    %v335 = vld [vmem:[%s1 + $0x4d4] sm:$0xf]
    %v336 = vld [vmem:[%s1 + $0x4d8] sm:$0xf]
    %v337 = vld [vmem:[%s1 + $0x4dc] sm:$0xf]
    %v338 = vld [vmem:[%s1 + $0x4e0] sm:$0xf]
    %v339 = vld [vmem:[%s1 + $0x4e4] sm:$0xf]
    %v340 = vld [vmem:[%s1 + $0x4e8] sm:$0xf]
    %v341 = vld [vmem:[%s1 + $0x4ec] sm:$0xf]
    %v342 = vld [vmem:[%s1 + $0x4f0] sm:$0xf]
    %v343 = vld [vmem:[%s1 + $0x4f4] sm:$0xf]
    %v344 = vld [vmem:[%s1 + $0x4f8] sm:$0xf]
    %v345 = vld [vmem:[%s1 + $0x4fc] sm:$0xf]
    %v346 = vld [vmem:[%s1 + $0x500] sm:$0xf]
    %v347 = vld [vmem:[%s1 + $0x504] sm:$0xf]
    %v348 = vld [vmem:[%s1 + $0x508] sm:$0xf]
    %v349 = vld [vmem:[%s1 + $0x50c] sm:$0xf]
    %v350 = vld [vmem:[%s1 + $0x510] sm:$0xf]
    %v351 = vld [vmem:[%s1 + $0x514] sm:$0xf]
    %v352 = vld [vmem:[%s1 + $0x518] sm:$0xf]
    %v353 = vld [vmem:[%s1 + $0x51c] sm:$0xf]
    %v354 = vld [vmem:[%s1 + $0x520] sm:$0xf]
    %v355 = vld [vmem:[%s1 + $0x524] sm:$0xf]
    %v356 = vld [vmem:[%s1 + $0x528] sm:$0xf]
    %v357 = vld [vmem:[%s1 + $0x52c] sm:$0xf]
    %v358 = vld [vmem:[%s1 + $0x530] sm:$0xf]
    %v359 = vld [vmem:[%s1 + $0x534] sm:$0xf]
    %v360 = vld [vmem:[%s1 + $0x538] sm:$0xf]
    %v361 = vld [vmem:[%s1 + $0x53c] sm:$0xf]
    %v362 = vld [vmem:[%s1 + $0x540] sm:$0xf]
    %v363 = vld [vmem:[%s1 + $0x544] sm:$0xf]
    %v364 = vld [vmem:[%s1 + $0x548] sm:$0xf]
    %v365 = vld [vmem:[%s1 + $0x54c] sm:$0xf]
    %v366 = vld [vmem:[%s1 + $0x550] sm:$0xf]
    %v367 = vld [vmem:[%s1 + $0x554] sm:$0xf]
    %v368 = vld [vmem:[%s1 + $0x558] sm:$0xf]
    %v369 = vld [vmem:[%s1 + $0x55c] sm:$0xf]
    %v370 = vld [vmem:[%s1 + $0x560] sm:$0xf]
    %v371 = vld [vmem:[%s1 + $0x564] sm:$0xf]
    %v372 = vld [vmem:[%s1 + $0x568] sm:$0xf]
    %v373 = vld [vmem:[%s1 + $0x56c] sm:$0xf]
    %v374 = vld [vmem:[%s1 + $0x570] sm:$0xf]
    %v375 = vld [vmem:[%s1 + $0x574] sm:$0xf]
    %v376 = vld [vmem:[%s1 + $0x578] sm:$0xf]
    %v377 = vld [vmem:[%s1 + $0x57c] sm:$0xf]
    %v378 = vld [vmem:[%s1 + $0x580] sm:$0xf]
    %v379 = vld [vmem:[%s1 + $0x584] sm:$0xf]
    %v380 = vld [vmem:[%s1 + $0x588] sm:$0xf]
    %v381 = vld [vmem:[%s1 + $0x58c] sm:$0xf]
    %v382 = vld [vmem:[%s1 + $0x590] sm:$0xf]
    %v383 = vld [vmem:[%s1 + $0x594] sm:$0xf]
    %v384 = vld [vmem:[%s1 + $0x598] sm:$0xf]
    %v385 = vld [vmem:[%s1 + $0x59c] sm:$0xf]
    %v386 = vld [vmem:[%s1 + $0x5a0] sm:$0xf]
    %v387 = vld [vmem:[%s1 + $0x5a4] sm:$0xf]
    %v388 = vld [vmem:[%s1 + $0x5a8] sm:$0xf]
    %v389 = vld [vmem:[%s1 + $0x5ac] sm:$0xf]
    %v390 = vld [vmem:[%s1 + $0x5b0] sm:$0xf]
    %v391 = vld [vmem:[%s1 + $0x5b4] sm:$0xf]
    %v392 = vld [vmem:[%s1 + $0x5b8] sm:$0xf]
    %v393 = vld [vmem:[%s1 + $0x5bc] sm:$0xf]
    %v394 = vld [vmem:[%s1 + $0x5c0] sm:$0xf]
    %v395 = vld [vmem:[%s1 + $0x5c4] sm:$0xf]
    %v396 = vld [vmem:[%s1 + $0x5c8] sm:$0xf]
    %v397 = vld [vmem:[%s1 + $0x5cc] sm:$0xf]
    %v398 = vld [vmem:[%s1 + $0x5d0] sm:$0xf]
    %v399 = vld [vmem:[%s1 + $0x5d4] sm:$0xf]
    %v400 = vld [vmem:[%s1 + $0x5d8] sm:$0xf]
    %v401 = vld [vmem:[%s1 + $0x5dc] sm:$0xf]
    %v402 = vld [vmem:[%s1 + $0x5e0] sm:$0xf]
    %v403 = vld [vmem:[%s1 + $0x5e4] sm:$0xf]
    %v404 = vld [vmem:[%s1 + $0x5e8] sm:$0xf]
    %v405 = vld [vmem:[%s1 + $0x5ec] sm:$0xf]
    %v406 = vld [vmem:[%s1 + $0x5f0] sm:$0xf]
    %v407 = vld [vmem:[%s1 + $0x5f4] sm:$0xf]
    %v408 = vld [vmem:[%s1 + $0x5f8] sm:$0xf]
    %v409 = vld [vmem:[%s1 + $0x5fc] sm:$0xf]
    %v410 = vld [vmem:[%s1 + $0x600] sm:$0xf]
    %v411 = vld [vmem:[%s1 + $0x604] sm:$0xf]
    %v412 = vld [vmem:[%s1 + $0x608] sm:$0xf]
    %v413 = vld [vmem:[%s1 + $0x60c] sm:$0xf]
    %v414 = vld [vmem:[%s1 + $0x610] sm:$0xf]
    %v415 = vld [vmem:[%s1 + $0x614] sm:$0xf]
    %v416 = vld [vmem:[%s1 + $0x618] sm:$0xf]
    %v417 = vld [vmem:[%s1 + $0x61c] sm:$0xf]
    %v418 = vld [vmem:[%s1 + $0x620] sm:$0xf]
    %v419 = vld [vmem:[%s1 + $0x624] sm:$0xf]
    %v420 = vld [vmem:[%s1 + $0x628] sm:$0xf]
    %v421 = vld [vmem:[%s1 + $0x62c] sm:$0xf]
    %v422 = vld [vmem:[%s1 + $0x630] sm:$0xf]
    %v423 = vld [vmem:[%s1 + $0x634] sm:$0xf]
    %v424 = vld [vmem:[%s1 + $0x638] sm:$0xf]
    %v425 = vld [vmem:[%s1 + $0x63c] sm:$0xf]
    %v426 = vld [vmem:[%s1 + $0x640] sm:$0xf]
    %v427 = vld [vmem:[%s1 + $0x644] sm:$0xf]
    %v428 = vld [vmem:[%s1 + $0x648] sm:$0xf]
    %v429 = vld [vmem:[%s1 + $0x64c] sm:$0xf]
    %v430 = vld [vmem:[%s1 + $0x650] sm:$0xf]
    %v431 = vld [vmem:[%s1 + $0x654] sm:$0xf]
    %v432 = vld [vmem:[%s1 + $0x658] sm:$0xf]
    %v433 = vld [vmem:[%s1 + $0x65c] sm:$0xf]
    %v434 = vld [vmem:[%s1 + $0x660] sm:$0xf]
    %v435 = vld [vmem:[%s1 + $0x664] sm:$0xf]
    %v436 = vld [vmem:[%s1 + $0x668] sm:$0xf]
    %v437 = vld [vmem:[%s1 + $0x66c] sm:$0xf]
    %v438 = vld [vmem:[%s1 + $0x670] sm:$0xf]
    %v439 = vld [vmem:[%s1 + $0x674] sm:$0xf]
    %v440 = vld [vmem:[%s1 + $0x678] sm:$0xf]
    %v441 = vld [vmem:[%s1 + $0x67c] sm:$0xf]
    %v442 = vld [vmem:[%s1 + $0x680] sm:$0xf]
    %v443 = vld [vmem:[%s1 + $0x684] sm:$0xf]
    %v444 = vld [vmem:[%s1 + $0x688] sm:$0xf]
    %v445 = vld [vmem:[%s1 + $0x68c] sm:$0xf]
    %v446 = vld [vmem:[%s1 + $0x690] sm:$0xf]
    %v447 = vld [vmem:[%s1 + $0x694] sm:$0xf]
    %v448 = vld [vmem:[%s1 + $0x698] sm:$0xf]
    %v449 = vld [vmem:[%s1 + $0x69c] sm:$0xf]
    %v450 = vld [vmem:[%s1 + $0x6a0] sm:$0xf]
    %v451 = vld [vmem:[%s1 + $0x6a4] sm:$0xf]
    %v452 = vld [vmem:[%s1 + $0x6a8] sm:$0xf]
    %v453 = vld [vmem:[%s1 + $0x6ac] sm:$0xf]
    %v454 = vld [vmem:[%s1 + $0x6b0] sm:$0xf]
    %v455 = vld [vmem:[%s1 + $0x6b4] sm:$0xf]
    %v456 = vld [vmem:[%s1 + $0x6b8] sm:$0xf]
    %v457 = vld [vmem:[%s1 + $0x6bc] sm:$0xf]
    %v458 = vld [vmem:[%s1 + $0x6c0] sm:$0xf]
    %v459 = vld [vmem:[%s1 + $0x6c4] sm:$0xf]
    %v460 = vld [vmem:[%s1 + $0x6c8] sm:$0xf]
    %v461 = vld [vmem:[%s1 + $0x6cc] sm:$0xf]
    %v462 = vld [vmem:[%s1 + $0x6d0] sm:$0xf]
    %v463 = vld [vmem:[%s1 + $0x6d4] sm:$0xf]
    %v464 = vld [vmem:[%s1 + $0x6d8] sm:$0xf]
    %v465 = vld [vmem:[%s1 + $0x6dc] sm:$0xf]
    %v466 = vld [vmem:[%s1 + $0x6e0] sm:$0xf]
    %v467 = vld [vmem:[%s1 + $0x6e4] sm:$0xf]
    %v468 = vld [vmem:[%s1 + $0x6e8] sm:$0xf]
    %v469 = vld [vmem:[%s1 + $0x6ec] sm:$0xf]
    %v470 = vld [vmem:[%s1 + $0x6f0] sm:$0xf]
    %v471 = vld [vmem:[%s1 + $0x6f4] sm:$0xf]
    %v472 = vld [vmem:[%s1 + $0x6f8] sm:$0xf]
    %v473 = vld [vmem:[%s1 + $0x6fc] sm:$0xf]
    %v474 = vld [vmem:[%s1 + $0x700] sm:$0xf]
    %v475 = vld [vmem:[%s1 + $0x704] sm:$0xf]
    %v476 = vld [vmem:[%s1 + $0x708] sm:$0xf]
    %v477 = vld [vmem:[%s1 + $0x70c] sm:$0xf]
    %v478 = vld [vmem:[%s1 + $0x710] sm:$0xf]
    %v479 = vld [vmem:[%s1 + $0x714] sm:$0xf]
    %v480 = vld [vmem:[%s1 + $0x718] sm:$0xf]
    %v481 = vld [vmem:[%s1 + $0x71c] sm:$0xf]
    %v482 = vld [vmem:[%s1 + $0x720] sm:$0xf]
    %v483 = vld [vmem:[%s1 + $0x724] sm:$0xf]
    %v484 = vld [vmem:[%s1 + $0x728] sm:$0xf]
    %v485 = vld [vmem:[%s1 + $0x72c] sm:$0xf]
    %v486 = vld [vmem:[%s1 + $0x730] sm:$0xf]
    %v487 = vld [vmem:[%s1 + $0x734] sm:$0xf]
    %v488 = vld [vmem:[%s1 + $0x738] sm:$0xf]
    %v489 = vld [vmem:[%s1 + $0x73c] sm:$0xf]
    %v490 = vld [vmem:[%s1 + $0x740] sm:$0xf]
    %v491 = vld [vmem:[%s1 + $0x744] sm:$0xf]
    %v492 = vld [vmem:[%s1 + $0x748] sm:$0xf]
    %v493 = vld [vmem:[%s1 + $0x74c] sm:$0xf]
    %v494 = vld [vmem:[%s1 + $0x750] sm:$0xf]
    %v495 = vld [vmem:[%s1 + $0x754] sm:$0xf]
    %v496 = vld [vmem:[%s1 + $0x758] sm:$0xf]
    %v497 = vld [vmem:[%s1 + $0x75c] sm:$0xf]
    %v498 = vld [vmem:[%s1 + $0x760] sm:$0xf]
    %v499 = vld [vmem:[%s1 + $0x764] sm:$0xf]
    %v500 = vld [vmem:[%s1 + $0x768] sm:$0xf]
    %v501 = vld [vmem:[%s1 + $0x76c] sm:$0xf]
    %v502 = vld [vmem:[%s1 + $0x770] sm:$0xf]
    %v503 = vld [vmem:[%s1 + $0x774] sm:$0xf]
    %v504 = vld [vmem:[%s1 + $0x778] sm:$0xf]
    %v505 = vld [vmem:[%s1 + $0x77c] sm:$0xf]
    %v506 = vld [vmem:[%s1 + $0x780] sm:$0xf]
    %v507 = vld [vmem:[%s1 + $0x784] sm:$0xf]
    %v508 = vld [vmem:[%s1 + $0x788] sm:$0xf]
    %v509 = vld [vmem:[%s1 + $0x78c] sm:$0xf]
    %v510 = vld [vmem:[%s1 + $0x790] sm:$0xf]
    %v511 = vld [vmem:[%s1 + $0x794] sm:$0xf]
    %v512 = vld [vmem:[%s1 + $0x798] sm:$0xf]
    %v513 = vld [vmem:[%s1 + $0x79c] sm:$0xf]
    %v514 = vld [vmem:[%s1 + $0x7a0] sm:$0xf]
    %v515 = vld [vmem:[%s1 + $0x7a4] sm:$0xf]
    %v516 = vld [vmem:[%s1 + $0x7a8] sm:$0xf]
    %v517 = vld [vmem:[%s1 + $0x7ac] sm:$0xf]
    %v518 = vld [vmem:[%s1 + $0x7b0] sm:$0xf]
    %v519 = vld [vmem:[%s1 + $0x7b4] sm:$0xf]
    %v520 = vld [vmem:[%s1 + $0x7b8] sm:$0xf]
    %v521 = vld [vmem:[%s1 + $0x7bc] sm:$0xf]
    %v522 = vld [vmem:[%s1 + $0x7c0] sm:$0xf]
    %v523 = vld [vmem:[%s1 + $0x7c4] sm:$0xf]
    %v524 = vld [vmem:[%s1 + $0x7c8] sm:$0xf]
    %v525 = vld [vmem:[%s1 + $0x7cc] sm:$0xf]
    %v526 = vld [vmem:[%s1 + $0x7d0] sm:$0xf]
    %v527 = vld [vmem:[%s1 + $0x7d4] sm:$0xf]
    %v528 = vld [vmem:[%s1 + $0x7d8] sm:$0xf]
    %v529 = vld [vmem:[%s1 + $0x7dc] sm:$0xf]
    %v530 = vld [vmem:[%s1 + $0x7e0] sm:$0xf]
    %v531 = vld [vmem:[%s1 + $0x7e4] sm:$0xf]
    %v532 = vld [vmem:[%s1 + $0x7e8] sm:$0xf]
    %v533 = vld [vmem:[%s1 + $0x7ec] sm:$0xf]
    %v534 = vld [vmem:[%s1 + $0x7f0] sm:$0xf]
    %v535 = vld [vmem:[%s1 + $0x7f4] sm:$0xf]
    %v536 = vld [vmem:[%s1 + $0x7f8] sm:$0xf]
    %v537 = vld [vmem:[%s1 + $0x7fc] sm:$0xf]
    %v538 = vld [vmem:[%s2] sm:$0x1]
    %v540 = vlaneseq
    %v541 = vshrl.u32 %v540, 7
    %v542 = vsub.s32 0, %v541
    %v543 = vrot.slane %v538, %v542
    %v549 = vcombine.high %v22, %v22
    %v551 = vunpack.c.l.s4 1966171168
    %v552 = vunpack.c.0.s8 %v551
    %v553 = vlaneseq
    %v554 = vshrl.u32 %v553, 7
    %v555 = vsub.s32 %v552, %v554
    %v556 = vrot.slane %v22, %v555
    %v558 = vunpack.c.l.s4 1966171168
    %v559 = vunpack.c.0.s8 %v558
    %v560 = vlaneseq
    %v561 = vshrl.u32 %v560, 7
    %v562 = vsub.s32 %v559, %v561
    %v563 = vrot.slane %v549, %v562
    %v564 = vcombine.high %v556, %v556
    %v565 = vcombine.high %v563, %v563
    %v567 = vunpack.c.l.s4 1966171168
    %v568 = vunpack.c.0.s8 %v567
    %v569 = vlaneseq
    %v570 = vshrl.u32 %v569, 7
    %v571 = vsub.s32 %v568, %v570
    %v572 = vrot.slane %v556, %v571
    %v574 = vunpack.c.l.s4 1966171168
    %v575 = vunpack.c.0.s8 %v574
    %v576 = vlaneseq
    %v577 = vshrl.u32 %v576, 7
    %v578 = vsub.s32 %v575, %v577
    %v579 = vrot.slane %v563, %v578
    %v581 = vunpack.c.l.s4 1966171168
    %v582 = vunpack.c.0.s8 %v581
    %v583 = vlaneseq
    %v584 = vshrl.u32 %v583, 7
    %v585 = vsub.s32 %v582, %v584
    %v586 = vrot.slane %v564, %v585
    %v588 = vunpack.c.l.s4 1966171168
    %v589 = vunpack.c.0.s8 %v588
    %v590 = vlaneseq
    %v591 = vshrl.u32 %v590, 7
    %v592 = vsub.s32 %v589, %v591
    %v593 = vrot.slane %v565, %v592
    %v594 = vcombine.high %v572, %v572
    %v595 = vcombine.high %v579, %v579
    %v596 = vcombine.high %v586, %v586
    %v597 = vcombine.high %v593, %v593
    %v598 = vcombine.high %v23, %v23
    %v600 = vunpack.c.l.s4 1966171168
    %v601 = vunpack.c.0.s8 %v600
    %v602 = vlaneseq
    %v603 = vshrl.u32 %v602, 7
    %v604 = vsub.s32 %v601, %v603
    %v605 = vrot.slane %v23, %v604
    %v607 = vunpack.c.l.s4 1966171168
    %v608 = vunpack.c.0.s8 %v607
    %v609 = vlaneseq
    %v610 = vshrl.u32 %v609, 7
    %v611 = vsub.s32 %v608, %v610
    %v612 = vrot.slane %v598, %v611
    %v613 = vcombine.high %v605, %v605
    %v614 = vcombine.high %v612, %v612
    %v616 = vunpack.c.l.s4 1966171168
    %v617 = vunpack.c.0.s8 %v616
    %v618 = vlaneseq
    %v619 = vshrl.u32 %v618, 7
    %v620 = vsub.s32 %v617, %v619
    %v621 = vrot.slane %v605, %v620
    %v623 = vunpack.c.l.s4 1966171168
    %v624 = vunpack.c.0.s8 %v623
    %v625 = vlaneseq
    %v626 = vshrl.u32 %v625, 7
    %v627 = vsub.s32 %v624, %v626
    %v628 = vrot.slane %v612, %v627
    %v630 = vunpack.c.l.s4 1966171168
    %v631 = vunpack.c.0.s8 %v630
    %v632 = vlaneseq
    %v633 = vshrl.u32 %v632, 7
    %v634 = vsub.s32 %v631, %v633
    %v635 = vrot.slane %v613, %v634
    %v637 = vunpack.c.l.s4 1966171168
    %v638 = vunpack.c.0.s8 %v637
    %v639 = vlaneseq
    %v640 = vshrl.u32 %v639, 7
    %v641 = vsub.s32 %v638, %v640
    %v642 = vrot.slane %v614, %v641
    %v643 = vcombine.high %v621, %v621
    %v644 = vcombine.high %v628, %v628
    %v645 = vcombine.high %v635, %v635
    %v646 = vcombine.high %v642, %v642
    %v647 = vcombine.high %v24, %v24
    %v649 = vunpack.c.l.s4 1966171168
    %v650 = vunpack.c.0.s8 %v649
    %v651 = vlaneseq
    %v652 = vshrl.u32 %v651, 7
    %v653 = vsub.s32 %v650, %v652
    %v654 = vrot.slane %v24, %v653
    %v656 = vunpack.c.l.s4 1966171168
    %v657 = vunpack.c.0.s8 %v656
    %v658 = vlaneseq
    %v659 = vshrl.u32 %v658, 7
    %v660 = vsub.s32 %v657, %v659
    %v661 = vrot.slane %v647, %v660
    %v662 = vcombine.high %v654, %v654
    %v663 = vcombine.high %v661, %v661
    %v665 = vunpack.c.l.s4 1966171168
    %v666 = vunpack.c.0.s8 %v665
    %v667 = vlaneseq
    %v668 = vshrl.u32 %v667, 7
    %v669 = vsub.s32 %v666, %v668
    %v670 = vrot.slane %v654, %v669
    %v672 = vunpack.c.l.s4 1966171168
    %v673 = vunpack.c.0.s8 %v672
    %v674 = vlaneseq
    %v675 = vshrl.u32 %v674, 7
    %v676 = vsub.s32 %v673, %v675
    %v677 = vrot.slane %v661, %v676
    %v679 = vunpack.c.l.s4 1966171168
    %v680 = vunpack.c.0.s8 %v679
    %v681 = vlaneseq
    %v682 = vshrl.u32 %v681, 7
    %v683 = vsub.s32 %v680, %v682
    %v684 = vrot.slane %v662, %v683
    %v686 = vunpack.c.l.s4 1966171168
    %v687 = vunpack.c.0.s8 %v686
    %v688 = vlaneseq
    %v689 = vshrl.u32 %v688, 7
    %v690 = vsub.s32 %v687, %v689
    %v691 = vrot.slane %v663, %v690
    %v692 = vcombine.high %v670, %v670
    %v693 = vcombine.high %v677, %v677
    %v694 = vcombine.high %v684, %v684
    %v695 = vcombine.high %v691, %v691
    %v696 = vcombine.high %v25, %v25
    %v698 = vunpack.c.l.s4 1966171168
    %v699 = vunpack.c.0.s8 %v698
    %v700 = vlaneseq
    %v701 = vshrl.u32 %v700, 7
    %v702 = vsub.s32 %v699, %v701
    %v703 = vrot.slane %v25, %v702
    %v705 = vunpack.c.l.s4 1966171168
    %v706 = vunpack.c.0.s8 %v705
    %v707 = vlaneseq
    %v708 = vshrl.u32 %v707, 7
    %v709 = vsub.s32 %v706, %v708
    %v710 = vrot.slane %v696, %v709
    %v711 = vcombine.high %v703, %v703
    %v712 = vcombine.high %v710, %v710
    %v714 = vunpack.c.l.s4 1966171168
    %v715 = vunpack.c.0.s8 %v714
    %v716 = vlaneseq
    %v717 = vshrl.u32 %v716, 7
    %v718 = vsub.s32 %v715, %v717
    %v719 = vrot.slane %v703, %v718
    %v721 = vunpack.c.l.s4 1966171168
    %v722 = vunpack.c.0.s8 %v721
    %v723 = vlaneseq
    %v724 = vshrl.u32 %v723, 7
    %v725 = vsub.s32 %v722, %v724
    %v726 = vrot.slane %v710, %v725
    %v728 = vunpack.c.l.s4 1966171168
    %v729 = vunpack.c.0.s8 %v728
    %v730 = vlaneseq
    %v731 = vshrl.u32 %v730, 7
    %v732 = vsub.s32 %v729, %v731
    %v733 = vrot.slane %v711, %v732
    %v735 = vunpack.c.l.s4 1966171168
    %v736 = vunpack.c.0.s8 %v735
    %v737 = vlaneseq
    %v738 = vshrl.u32 %v737, 7
    %v739 = vsub.s32 %v736, %v738
    %v740 = vrot.slane %v712, %v739
    %v741 = vcombine.high %v719, %v719
    %v742 = vcombine.high %v726, %v726
    %v743 = vcombine.high %v733, %v733
    %v744 = vcombine.high %v740, %v740
    %v1289 = vunpack.c.l.b16 %v26
    %v1290 = vunpack.c.l.b16 %v27
    %v1291 = vunpack.c.l.b16 %v28
    %v1292 = vunpack.c.l.b16 %v29
    %v1293 = vunpack.c.l.b16 %v30
    %v1294 = vunpack.c.l.b16 %v31
    %v1295 = vunpack.c.l.b16 %v32
    %v1296 = vunpack.c.l.b16 %v33
    %v1297 = vunpack.c.l.b16 %v34
    %v1298 = vunpack.c.l.b16 %v35
    %v1299 = vunpack.c.l.b16 %v36
    %v1300 = vunpack.c.l.b16 %v37
    %v1301 = vunpack.c.l.b16 %v38
    %v1302 = vunpack.c.l.b16 %v39
    %v1303 = vunpack.c.l.b16 %v40
    %v1304 = vunpack.c.l.b16 %v41
    %v1305 = vunpack.c.l.b16 %v42
    %v1306 = vunpack.c.l.b16 %v43
    %v1307 = vunpack.c.l.b16 %v44
    %v1308 = vunpack.c.l.b16 %v45
    %v1309 = vunpack.c.l.b16 %v46
    %v1310 = vunpack.c.l.b16 %v47
    %v1311 = vunpack.c.l.b16 %v48
    %v1312 = vunpack.c.l.b16 %v49
    %v1313 = vunpack.c.l.b16 %v50
    %v1314 = vunpack.c.l.b16 %v51
    %v1315 = vunpack.c.l.b16 %v52
    %v1316 = vunpack.c.l.b16 %v53
    %v1317 = vunpack.c.l.b16 %v54
    %v1318 = vunpack.c.l.b16 %v55
    %v1319 = vunpack.c.l.b16 %v56
    %v1320 = vunpack.c.l.b16 %v57
    %v1321 = vunpack.c.l.b16 %v58
    %v1322 = vunpack.c.l.b16 %v59
    %v1323 = vunpack.c.l.b16 %v60
    %v1324 = vunpack.c.l.b16 %v61
    %v1325 = vunpack.c.l.b16 %v62
    %v1326 = vunpack.c.l.b16 %v63
    %v1327 = vunpack.c.l.b16 %v64
    %v1328 = vunpack.c.l.b16 %v65
    %v1329 = vunpack.c.l.b16 %v66
    %v1330 = vunpack.c.l.b16 %v67
    %v1331 = vunpack.c.l.b16 %v68
    %v1332 = vunpack.c.l.b16 %v69
    %v1333 = vunpack.c.l.b16 %v70
    %v1334 = vunpack.c.l.b16 %v71
    %v1335 = vunpack.c.l.b16 %v72
    %v1336 = vunpack.c.l.b16 %v73
    %v1337 = vunpack.c.l.b16 %v74
    %v1338 = vunpack.c.l.b16 %v75
    %v1339 = vunpack.c.l.b16 %v76
    %v1340 = vunpack.c.l.b16 %v77
    %v1341 = vunpack.c.l.b16 %v78
    %v1342 = vunpack.c.l.b16 %v79
    %v1343 = vunpack.c.l.b16 %v80
    %v1344 = vunpack.c.l.b16 %v81
    %v1345 = vunpack.c.l.b16 %v82
    %v1346 = vunpack.c.l.b16 %v83
    %v1347 = vunpack.c.l.b16 %v84
    %v1348 = vunpack.c.l.b16 %v85
    %v1349 = vunpack.c.l.b16 %v86
    %v1350 = vunpack.c.l.b16 %v87
    %v1351 = vunpack.c.l.b16 %v88
    %v1352 = vunpack.c.l.b16 %v89
    %v1353 = vunpack.c.l.b16 %v90
    %v1354 = vunpack.c.l.b16 %v91
    %v1355 = vunpack.c.l.b16 %v92
    %v1356 = vunpack.c.l.b16 %v93
    %v1357 = vunpack.c.l.b16 %v94
    %v1358 = vunpack.c.l.b16 %v95
    %v1359 = vunpack.c.l.b16 %v96
    %v1360 = vunpack.c.l.b16 %v97
    %v1361 = vunpack.c.l.b16 %v98
    %v1362 = vunpack.c.l.b16 %v99
    %v1363 = vunpack.c.l.b16 %v100
    %v1364 = vunpack.c.l.b16 %v101
    %v1365 = vunpack.c.l.b16 %v102
    %v1366 = vunpack.c.l.b16 %v103
    %v1367 = vunpack.c.l.b16 %v104
    %v1368 = vunpack.c.l.b16 %v105
    %v1369 = vunpack.c.l.b16 %v106
    %v1370 = vunpack.c.l.b16 %v107
    %v1371 = vunpack.c.l.b16 %v108
    %v1372 = vunpack.c.l.b16 %v109
    %v1373 = vunpack.c.l.b16 %v110
    %v1374 = vunpack.c.l.b16 %v111
    %v1375 = vunpack.c.l.b16 %v112
    %v1376 = vunpack.c.l.b16 %v113
    %v1377 = vunpack.c.l.b16 %v114
    %v1378 = vunpack.c.l.b16 %v115
    %v1379 = vunpack.c.l.b16 %v116
    %v1380 = vunpack.c.l.b16 %v117
    %v1381 = vunpack.c.l.b16 %v118
    %v1382 = vunpack.c.l.b16 %v119
    %v1383 = vunpack.c.l.b16 %v120
    %v1384 = vunpack.c.l.b16 %v121
    %v1385 = vunpack.c.l.b16 %v122
    %v1386 = vunpack.c.l.b16 %v123
    %v1387 = vunpack.c.l.b16 %v124
    %v1388 = vunpack.c.l.b16 %v125
    %v1389 = vunpack.c.l.b16 %v126
    %v1390 = vunpack.c.l.b16 %v127
    %v1391 = vunpack.c.l.b16 %v128
    %v1392 = vunpack.c.l.b16 %v129
    %v1393 = vunpack.c.l.b16 %v130
    %v1394 = vunpack.c.l.b16 %v131
    %v1395 = vunpack.c.l.b16 %v132
    %v1396 = vunpack.c.l.b16 %v133
    %v1397 = vunpack.c.l.b16 %v134
    %v1398 = vunpack.c.l.b16 %v135
    %v1399 = vunpack.c.l.b16 %v136
    %v1400 = vunpack.c.l.b16 %v137
    %v1401 = vunpack.c.l.b16 %v138
    %v1402 = vunpack.c.l.b16 %v139
    %v1403 = vunpack.c.l.b16 %v140
    %v1404 = vunpack.c.l.b16 %v141
    %v1405 = vunpack.c.l.b16 %v142
    %v1406 = vunpack.c.l.b16 %v143
    %v1407 = vunpack.c.l.b16 %v144
    %v1408 = vunpack.c.l.b16 %v145
    %v1409 = vunpack.c.l.b16 %v146
    %v1410 = vunpack.c.l.b16 %v147
    %v1411 = vunpack.c.l.b16 %v148
    %v1412 = vunpack.c.l.b16 %v149
    %v1413 = vunpack.c.l.b16 %v150
    %v1414 = vunpack.c.l.b16 %v151
    %v1415 = vunpack.c.l.b16 %v152
    %v1416 = vunpack.c.l.b16 %v153
    %v1417 = vunpack.c.l.b16 %v154
    %v1418 = vunpack.c.l.b16 %v155
    %v1419 = vunpack.c.l.b16 %v156
    %v1420 = vunpack.c.l.b16 %v157
    %v1421 = vunpack.c.l.b16 %v158
    %v1422 = vunpack.c.l.b16 %v159
    %v1423 = vunpack.c.l.b16 %v160
    %v1424 = vunpack.c.l.b16 %v161
    %v1425 = vunpack.c.l.b16 %v162
    %v1426 = vunpack.c.l.b16 %v163
    %v1427 = vunpack.c.l.b16 %v164
    %v1428 = vunpack.c.l.b16 %v165
    %v1429 = vunpack.c.l.b16 %v166
    %v1430 = vunpack.c.l.b16 %v167
    %v1431 = vunpack.c.l.b16 %v168
    %v1432 = vunpack.c.l.b16 %v169
    %v1433 = vunpack.c.l.b16 %v170
    %v1434 = vunpack.c.l.b16 %v171
    %v1435 = vunpack.c.l.b16 %v172
    %v1436 = vunpack.c.l.b16 %v173
    %v1437 = vunpack.c.l.b16 %v174
    %v1438 = vunpack.c.l.b16 %v175
    %v1439 = vunpack.c.l.b16 %v176
    %v1440 = vunpack.c.l.b16 %v177
    %v1441 = vunpack.c.l.b16 %v178
    %v1442 = vunpack.c.l.b16 %v179
    %v1443 = vunpack.c.l.b16 %v180
    %v1444 = vunpack.c.l.b16 %v181
    %v1445 = vunpack.c.l.b16 %v182
    %v1446 = vunpack.c.l.b16 %v183
    %v1447 = vunpack.c.l.b16 %v184
    %v1448 = vunpack.c.l.b16 %v185
    %v1449 = vunpack.c.l.b16 %v186
    %v1450 = vunpack.c.l.b16 %v187
    %v1451 = vunpack.c.l.b16 %v188
    %v1452 = vunpack.c.l.b16 %v189
    %v1453 = vunpack.c.l.b16 %v190
    %v1454 = vunpack.c.l.b16 %v191
    %v1455 = vunpack.c.l.b16 %v192
    %v1456 = vunpack.c.l.b16 %v193
    %v1457 = vunpack.c.l.b16 %v194
    %v1458 = vunpack.c.l.b16 %v195
    %v1459 = vunpack.c.l.b16 %v196
    %v1460 = vunpack.c.l.b16 %v197
    %v1461 = vunpack.c.l.b16 %v198
    %v1462 = vunpack.c.l.b16 %v199
    %v1463 = vunpack.c.l.b16 %v200
    %v1464 = vunpack.c.l.b16 %v201
    %v1465 = vunpack.c.l.b16 %v202
    %v1466 = vunpack.c.l.b16 %v203
    %v1467 = vunpack.c.l.b16 %v204
    %v1468 = vunpack.c.l.b16 %v205
    %v1469 = vunpack.c.l.b16 %v206
    %v1470 = vunpack.c.l.b16 %v207
    %v1471 = vunpack.c.l.b16 %v208
    %v1472 = vunpack.c.l.b16 %v209
    %v1473 = vunpack.c.l.b16 %v210
    %v1474 = vunpack.c.l.b16 %v211
    %v1475 = vunpack.c.l.b16 %v212
    %v1476 = vunpack.c.l.b16 %v213
    %v1477 = vunpack.c.l.b16 %v214
    %v1478 = vunpack.c.l.b16 %v215
    %v1479 = vunpack.c.l.b16 %v216
    %v1480 = vunpack.c.l.b16 %v217
    %v1481 = vunpack.c.l.b16 %v218
    %v1482 = vunpack.c.l.b16 %v219
    %v1483 = vunpack.c.l.b16 %v220
    %v1484 = vunpack.c.l.b16 %v221
    %v1485 = vunpack.c.l.b16 %v222
    %v1486 = vunpack.c.l.b16 %v223
    %v1487 = vunpack.c.l.b16 %v224
    %v1488 = vunpack.c.l.b16 %v225
    %v1489 = vunpack.c.l.b16 %v226
    %v1490 = vunpack.c.l.b16 %v227
    %v1491 = vunpack.c.l.b16 %v228
    %v1492 = vunpack.c.l.b16 %v229
    %v1493 = vunpack.c.l.b16 %v230
    %v1494 = vunpack.c.l.b16 %v231
    %v1495 = vunpack.c.l.b16 %v232
    %v1496 = vunpack.c.l.b16 %v233
    %v1497 = vunpack.c.l.b16 %v234
    %v1498 = vunpack.c.l.b16 %v235
    %v1499 = vunpack.c.l.b16 %v236
    %v1500 = vunpack.c.l.b16 %v237
    %v1501 = vunpack.c.l.b16 %v238
    %v1502 = vunpack.c.l.b16 %v239
    %v1503 = vunpack.c.l.b16 %v240
    %v1504 = vunpack.c.l.b16 %v241
    %v1505 = vunpack.c.l.b16 %v242
    %v1506 = vunpack.c.l.b16 %v243
    %v1507 = vunpack.c.l.b16 %v244
    %v1508 = vunpack.c.l.b16 %v245
    %v1509 = vunpack.c.l.b16 %v246
    %v1510 = vunpack.c.l.b16 %v247
    %v1511 = vunpack.c.l.b16 %v248
    %v1512 = vunpack.c.l.b16 %v249
    %v1513 = vunpack.c.l.b16 %v250
    %v1514 = vunpack.c.l.b16 %v251
    %v1515 = vunpack.c.l.b16 %v252
    %v1516 = vunpack.c.l.b16 %v253
    %v1517 = vunpack.c.l.b16 %v254
    %v1518 = vunpack.c.l.b16 %v255
    %v1519 = vunpack.c.l.b16 %v256
    %v1520 = vunpack.c.l.b16 %v257
    %v1521 = vunpack.c.l.b16 %v258
    %v1522 = vunpack.c.l.b16 %v259
    %v1523 = vunpack.c.l.b16 %v260
    %v1524 = vunpack.c.l.b16 %v261
    %v1525 = vunpack.c.l.b16 %v262
    %v1526 = vunpack.c.l.b16 %v263
    %v1527 = vunpack.c.l.b16 %v264
    %v1528 = vunpack.c.l.b16 %v265
    %v1529 = vunpack.c.l.b16 %v266
    %v1530 = vunpack.c.l.b16 %v267
    %v1531 = vunpack.c.l.b16 %v268
    %v1532 = vunpack.c.l.b16 %v269
    %v1533 = vunpack.c.l.b16 %v270
    %v1534 = vunpack.c.l.b16 %v271
    %v1535 = vunpack.c.l.b16 %v272
    %v1536 = vunpack.c.l.b16 %v273
    %v1537 = vunpack.c.l.b16 %v274
    %v1538 = vunpack.c.l.b16 %v275
    %v1539 = vunpack.c.l.b16 %v276
    %v1540 = vunpack.c.l.b16 %v277
    %v1541 = vunpack.c.l.b16 %v278
    %v1542 = vunpack.c.l.b16 %v279
    %v1543 = vunpack.c.l.b16 %v280
    %v1544 = vunpack.c.l.b16 %v281
    %v1545 = vunpack.c.l.b16 %v282
    %v1546 = vunpack.c.l.b16 %v283
    %v1547 = vunpack.c.l.b16 %v284
    %v1548 = vunpack.c.l.b16 %v285
    %v1549 = vunpack.c.l.b16 %v286
    %v1550 = vunpack.c.l.b16 %v287
    %v1551 = vunpack.c.l.b16 %v288
    %v1552 = vunpack.c.l.b16 %v289
    %v1553 = vunpack.c.l.b16 %v290
    %v1554 = vunpack.c.l.b16 %v291
    %v1555 = vunpack.c.l.b16 %v292
    %v1556 = vunpack.c.l.b16 %v293
    %v1557 = vunpack.c.l.b16 %v294
    %v1558 = vunpack.c.l.b16 %v295
    %v1559 = vunpack.c.l.b16 %v296
    %v1560 = vunpack.c.l.b16 %v297
    %v1561 = vunpack.c.l.b16 %v298
    %v1562 = vunpack.c.l.b16 %v299
    %v1563 = vunpack.c.l.b16 %v300
    %v1564 = vunpack.c.l.b16 %v301
    %v1565 = vunpack.c.l.b16 %v302
    %v1566 = vunpack.c.l.b16 %v303
    %v1567 = vunpack.c.l.b16 %v304
    %v1568 = vunpack.c.l.b16 %v305
    %v1569 = vunpack.c.l.b16 %v306
    %v1570 = vunpack.c.l.b16 %v307
    %v1571 = vunpack.c.l.b16 %v308
    %v1572 = vunpack.c.l.b16 %v309
    %v1573 = vunpack.c.l.b16 %v310
    %v1574 = vunpack.c.l.b16 %v311
    %v1575 = vunpack.c.l.b16 %v312
    %v1576 = vunpack.c.l.b16 %v313
    %v1577 = vunpack.c.l.b16 %v314
    %v1578 = vunpack.c.l.b16 %v315
    %v1579 = vunpack.c.l.b16 %v316
    %v1580 = vunpack.c.l.b16 %v317
    %v1581 = vunpack.c.l.b16 %v318
    %v1582 = vunpack.c.l.b16 %v319
    %v1583 = vunpack.c.l.b16 %v320
    %v1584 = vunpack.c.l.b16 %v321
    %v1585 = vunpack.c.l.b16 %v322
    %v1586 = vunpack.c.l.b16 %v323
    %v1587 = vunpack.c.l.b16 %v324
    %v1588 = vunpack.c.l.b16 %v325
    %v1589 = vunpack.c.l.b16 %v326
    %v1590 = vunpack.c.l.b16 %v327
    %v1591 = vunpack.c.l.b16 %v328
    %v1592 = vunpack.c.l.b16 %v329
    %v1593 = vunpack.c.l.b16 %v330
    %v1594 = vunpack.c.l.b16 %v331
    %v1595 = vunpack.c.l.b16 %v332
    %v1596 = vunpack.c.l.b16 %v333
    %v1597 = vunpack.c.l.b16 %v334
    %v1598 = vunpack.c.l.b16 %v335
    %v1599 = vunpack.c.l.b16 %v336
    %v1600 = vunpack.c.l.b16 %v337
    %v1601 = vunpack.c.l.b16 %v338
    %v1602 = vunpack.c.l.b16 %v339
    %v1603 = vunpack.c.l.b16 %v340
    %v1604 = vunpack.c.l.b16 %v341
    %v1605 = vunpack.c.l.b16 %v342
    %v1606 = vunpack.c.l.b16 %v343
    %v1607 = vunpack.c.l.b16 %v344
    %v1608 = vunpack.c.l.b16 %v345
    %v1609 = vunpack.c.l.b16 %v346
    %v1610 = vunpack.c.l.b16 %v347
    %v1611 = vunpack.c.l.b16 %v348
    %v1612 = vunpack.c.l.b16 %v349
    %v1613 = vunpack.c.l.b16 %v350
    %v1614 = vunpack.c.l.b16 %v351
    %v1615 = vunpack.c.l.b16 %v352
    %v1616 = vunpack.c.l.b16 %v353
    %v1617 = vunpack.c.l.b16 %v354
    %v1618 = vunpack.c.l.b16 %v355
    %v1619 = vunpack.c.l.b16 %v356
    %v1620 = vunpack.c.l.b16 %v357
    %v1621 = vunpack.c.l.b16 %v358
    %v1622 = vunpack.c.l.b16 %v359
    %v1623 = vunpack.c.l.b16 %v360
    %v1624 = vunpack.c.l.b16 %v361
    %v1625 = vunpack.c.l.b16 %v362
    %v1626 = vunpack.c.l.b16 %v363
    %v1627 = vunpack.c.l.b16 %v364
    %v1628 = vunpack.c.l.b16 %v365
    %v1629 = vunpack.c.l.b16 %v366
    %v1630 = vunpack.c.l.b16 %v367
    %v1631 = vunpack.c.l.b16 %v368
    %v1632 = vunpack.c.l.b16 %v369
    %v1633 = vunpack.c.l.b16 %v370
    %v1634 = vunpack.c.l.b16 %v371
    %v1635 = vunpack.c.l.b16 %v372
    %v1636 = vunpack.c.l.b16 %v373
    %v1637 = vunpack.c.l.b16 %v374
    %v1638 = vunpack.c.l.b16 %v375
    %v1639 = vunpack.c.l.b16 %v376
    %v1640 = vunpack.c.l.b16 %v377
    %v1641 = vunpack.c.l.b16 %v378
    %v1642 = vunpack.c.l.b16 %v379
    %v1643 = vunpack.c.l.b16 %v380
    %v1644 = vunpack.c.l.b16 %v381
    %v1645 = vunpack.c.l.b16 %v382
    %v1646 = vunpack.c.l.b16 %v383
    %v1647 = vunpack.c.l.b16 %v384
    %v1648 = vunpack.c.l.b16 %v385
    %v1649 = vunpack.c.l.b16 %v386
    %v1650 = vunpack.c.l.b16 %v387
    %v1651 = vunpack.c.l.b16 %v388
    %v1652 = vunpack.c.l.b16 %v389
    %v1653 = vunpack.c.l.b16 %v390
    %v1654 = vunpack.c.l.b16 %v391
    %v1655 = vunpack.c.l.b16 %v392
    %v1656 = vunpack.c.l.b16 %v393
    %v1657 = vunpack.c.l.b16 %v394
    %v1658 = vunpack.c.l.b16 %v395
    %v1659 = vunpack.c.l.b16 %v396
    %v1660 = vunpack.c.l.b16 %v397
    %v1661 = vunpack.c.l.b16 %v398
    %v1662 = vunpack.c.l.b16 %v399
    %v1663 = vunpack.c.l.b16 %v400
    %v1664 = vunpack.c.l.b16 %v401
    %v1665 = vunpack.c.l.b16 %v402
    %v1666 = vunpack.c.l.b16 %v403
    %v1667 = vunpack.c.l.b16 %v404
    %v1668 = vunpack.c.l.b16 %v405
    %v1669 = vunpack.c.l.b16 %v406
    %v1670 = vunpack.c.l.b16 %v407
    %v1671 = vunpack.c.l.b16 %v408
    %v1672 = vunpack.c.l.b16 %v409
    %v1673 = vunpack.c.l.b16 %v410
    %v1674 = vunpack.c.l.b16 %v411
    %v1675 = vunpack.c.l.b16 %v412
    %v1676 = vunpack.c.l.b16 %v413
    %v1677 = vunpack.c.l.b16 %v414
    %v1678 = vunpack.c.l.b16 %v415
    %v1679 = vunpack.c.l.b16 %v416
    %v1680 = vunpack.c.l.b16 %v417
    %v1681 = vunpack.c.l.b16 %v418
    %v1682 = vunpack.c.l.b16 %v419
    %v1683 = vunpack.c.l.b16 %v420
    %v1684 = vunpack.c.l.b16 %v421
    %v1685 = vunpack.c.l.b16 %v422
    %v1686 = vunpack.c.l.b16 %v423
    %v1687 = vunpack.c.l.b16 %v424
    %v1688 = vunpack.c.l.b16 %v425
    %v1689 = vunpack.c.l.b16 %v426
    %v1690 = vunpack.c.l.b16 %v427
    %v1691 = vunpack.c.l.b16 %v428
    %v1692 = vunpack.c.l.b16 %v429
    %v1693 = vunpack.c.l.b16 %v430
    %v1694 = vunpack.c.l.b16 %v431
    %v1695 = vunpack.c.l.b16 %v432
    %v1696 = vunpack.c.l.b16 %v433
    %v1697 = vunpack.c.l.b16 %v434
    %v1698 = vunpack.c.l.b16 %v435
    %v1699 = vunpack.c.l.b16 %v436
    %v1700 = vunpack.c.l.b16 %v437
    %v1701 = vunpack.c.l.b16 %v438
    %v1702 = vunpack.c.l.b16 %v439
    %v1703 = vunpack.c.l.b16 %v440
    %v1704 = vunpack.c.l.b16 %v441
    %v1705 = vunpack.c.l.b16 %v442
    %v1706 = vunpack.c.l.b16 %v443
    %v1707 = vunpack.c.l.b16 %v444
    %v1708 = vunpack.c.l.b16 %v445
    %v1709 = vunpack.c.l.b16 %v446
    %v1710 = vunpack.c.l.b16 %v447
    %v1711 = vunpack.c.l.b16 %v448
    %v1712 = vunpack.c.l.b16 %v449
    %v1713 = vunpack.c.l.b16 %v450
    %v1714 = vunpack.c.l.b16 %v451
    %v1715 = vunpack.c.l.b16 %v452
    %v1716 = vunpack.c.l.b16 %v453
    %v1717 = vunpack.c.l.b16 %v454
    %v1718 = vunpack.c.l.b16 %v455
    %v1719 = vunpack.c.l.b16 %v456
    %v1720 = vunpack.c.l.b16 %v457
    %v1721 = vunpack.c.l.b16 %v458
    %v1722 = vunpack.c.l.b16 %v459
    %v1723 = vunpack.c.l.b16 %v460
    %v1724 = vunpack.c.l.b16 %v461
    %v1725 = vunpack.c.l.b16 %v462
    %v1726 = vunpack.c.l.b16 %v463
    %v1727 = vunpack.c.l.b16 %v464
    %v1728 = vunpack.c.l.b16 %v465
    %v1729 = vunpack.c.l.b16 %v466
    %v1730 = vunpack.c.l.b16 %v467
    %v1731 = vunpack.c.l.b16 %v468
    %v1732 = vunpack.c.l.b16 %v469
    %v1733 = vunpack.c.l.b16 %v470
    %v1734 = vunpack.c.l.b16 %v471
    %v1735 = vunpack.c.l.b16 %v472
    %v1736 = vunpack.c.l.b16 %v473
    %v1737 = vunpack.c.l.b16 %v474
    %v1738 = vunpack.c.l.b16 %v475
    %v1739 = vunpack.c.l.b16 %v476
    %v1740 = vunpack.c.l.b16 %v477
    %v1741 = vunpack.c.l.b16 %v478
    %v1742 = vunpack.c.l.b16 %v479
    %v1743 = vunpack.c.l.b16 %v480
    %v1744 = vunpack.c.l.b16 %v481
    %v1745 = vunpack.c.l.b16 %v482
    %v1746 = vunpack.c.l.b16 %v483
    %v1747 = vunpack.c.l.b16 %v484
    %v1748 = vunpack.c.l.b16 %v485
    %v1749 = vunpack.c.l.b16 %v486
    %v1750 = vunpack.c.l.b16 %v487
    %v1751 = vunpack.c.l.b16 %v488
    %v1752 = vunpack.c.l.b16 %v489
    %v1753 = vunpack.c.l.b16 %v490
    %v1754 = vunpack.c.l.b16 %v491
    %v1755 = vunpack.c.l.b16 %v492
    %v1756 = vunpack.c.l.b16 %v493
    %v1757 = vunpack.c.l.b16 %v494
    %v1758 = vunpack.c.l.b16 %v495
    %v1759 = vunpack.c.l.b16 %v496
    %v1760 = vunpack.c.l.b16 %v497
    %v1761 = vunpack.c.l.b16 %v498
    %v1762 = vunpack.c.l.b16 %v499
    %v1763 = vunpack.c.l.b16 %v500
    %v1764 = vunpack.c.l.b16 %v501
    %v1765 = vunpack.c.l.b16 %v502
    %v1766 = vunpack.c.l.b16 %v503
    %v1767 = vunpack.c.l.b16 %v504
    %v1768 = vunpack.c.l.b16 %v505
    %v1769 = vunpack.c.l.b16 %v506
    %v1770 = vunpack.c.l.b16 %v507
    %v1771 = vunpack.c.l.b16 %v508
    %v1772 = vunpack.c.l.b16 %v509
    %v1773 = vunpack.c.l.b16 %v510
    %v1774 = vunpack.c.l.b16 %v511
    %v1775 = vunpack.c.l.b16 %v512
    %v1776 = vunpack.c.l.b16 %v513
    %v1777 = vunpack.c.l.b16 %v514
    %v1778 = vunpack.c.l.b16 %v515
    %v1779 = vunpack.c.l.b16 %v516
    %v1780 = vunpack.c.l.b16 %v517
    %v1781 = vunpack.c.l.b16 %v518
    %v1782 = vunpack.c.l.b16 %v519
    %v1783 = vunpack.c.l.b16 %v520
    %v1784 = vunpack.c.l.b16 %v521
    %v1785 = vunpack.c.l.b16 %v522
    %v1786 = vunpack.c.l.b16 %v523
    %v1787 = vunpack.c.l.b16 %v524
    %v1788 = vunpack.c.l.b16 %v525
    %v1789 = vunpack.c.l.b16 %v526
    %v1790 = vunpack.c.l.b16 %v527
    %v1791 = vunpack.c.l.b16 %v528
    %v1792 = vunpack.c.l.b16 %v529
    %v1793 = vunpack.c.l.b16 %v530
    %v1794 = vunpack.c.l.b16 %v531
    %v1795 = vunpack.c.l.b16 %v532
    %v1796 = vunpack.c.l.b16 %v533
    %v1797 = vunpack.c.l.b16 %v534
    %v1798 = vunpack.c.l.b16 %v535
    %v1799 = vunpack.c.l.b16 %v536
    %v1800 = vunpack.c.l.b16 %v537
    %v1801 = vpack.c.b16 %v1290, %v1289
    %v1802 = vpack.c.b16 %v1292, %v1291
    %v1803 = vpack.c.b16 %v1294, %v1293
    %v1804 = vpack.c.b16 %v1296, %v1295
    %v1805 = vpack.c.b16 %v1298, %v1297
    %v1806 = vpack.c.b16 %v1300, %v1299
    %v1807 = vpack.c.b16 %v1302, %v1301
    %v1808 = vpack.c.b16 %v1304, %v1303
    %v1809 = vpack.c.b16 %v1306, %v1305
    %v1810 = vpack.c.b16 %v1308, %v1307
    %v1811 = vpack.c.b16 %v1310, %v1309
    %v1812 = vpack.c.b16 %v1312, %v1311
    %v1813 = vpack.c.b16 %v1314, %v1313
    %v1814 = vpack.c.b16 %v1316, %v1315
    %v1815 = vpack.c.b16 %v1318, %v1317
    %v1816 = vpack.c.b16 %v1320, %v1319
    %v1817 = vpack.c.b16 %v1322, %v1321
    %v1818 = vpack.c.b16 %v1324, %v1323
    %v1819 = vpack.c.b16 %v1326, %v1325
    %v1820 = vpack.c.b16 %v1328, %v1327
    %v1821 = vpack.c.b16 %v1330, %v1329
    %v1822 = vpack.c.b16 %v1332, %v1331
    %v1823 = vpack.c.b16 %v1334, %v1333
    %v1824 = vpack.c.b16 %v1336, %v1335
    %v1825 = vpack.c.b16 %v1338, %v1337
    %v1826 = vpack.c.b16 %v1340, %v1339
    %v1827 = vpack.c.b16 %v1342, %v1341
    %v1828 = vpack.c.b16 %v1344, %v1343
    %v1829 = vpack.c.b16 %v1346, %v1345
    %v1830 = vpack.c.b16 %v1348, %v1347
    %v1831 = vpack.c.b16 %v1350, %v1349
    %v1832 = vpack.c.b16 %v1352, %v1351
    %v1833 = vpack.c.b16 %v1354, %v1353
    %v1834 = vpack.c.b16 %v1356, %v1355
    %v1835 = vpack.c.b16 %v1358, %v1357
    %v1836 = vpack.c.b16 %v1360, %v1359
    %v1837 = vpack.c.b16 %v1362, %v1361
    %v1838 = vpack.c.b16 %v1364, %v1363
    %v1839 = vpack.c.b16 %v1366, %v1365
    %v1840 = vpack.c.b16 %v1368, %v1367
    %v1841 = vpack.c.b16 %v1370, %v1369
    %v1842 = vpack.c.b16 %v1372, %v1371
    %v1843 = vpack.c.b16 %v1374, %v1373
    %v1844 = vpack.c.b16 %v1376, %v1375
    %v1845 = vpack.c.b16 %v1378, %v1377
    %v1846 = vpack.c.b16 %v1380, %v1379
    %v1847 = vpack.c.b16 %v1382, %v1381
    %v1848 = vpack.c.b16 %v1384, %v1383
    %v1849 = vpack.c.b16 %v1386, %v1385
    %v1850 = vpack.c.b16 %v1388, %v1387
    %v1851 = vpack.c.b16 %v1390, %v1389
    %v1852 = vpack.c.b16 %v1392, %v1391
    %v1853 = vpack.c.b16 %v1394, %v1393
    %v1854 = vpack.c.b16 %v1396, %v1395
    %v1855 = vpack.c.b16 %v1398, %v1397
    %v1856 = vpack.c.b16 %v1400, %v1399
    %v1857 = vpack.c.b16 %v1402, %v1401
    %v1858 = vpack.c.b16 %v1404, %v1403
    %v1859 = vpack.c.b16 %v1406, %v1405
    %v1860 = vpack.c.b16 %v1408, %v1407
    %v1861 = vpack.c.b16 %v1410, %v1409
    %v1862 = vpack.c.b16 %v1412, %v1411
    %v1863 = vpack.c.b16 %v1414, %v1413
    %v1864 = vpack.c.b16 %v1416, %v1415
    %v1865 = vpack.c.b16 %v1418, %v1417
    %v1866 = vpack.c.b16 %v1420, %v1419
    %v1867 = vpack.c.b16 %v1422, %v1421
    %v1868 = vpack.c.b16 %v1424, %v1423
    %v1869 = vpack.c.b16 %v1426, %v1425
    %v1870 = vpack.c.b16 %v1428, %v1427
    %v1871 = vpack.c.b16 %v1430, %v1429
    %v1872 = vpack.c.b16 %v1432, %v1431
    %v1873 = vpack.c.b16 %v1434, %v1433
    %v1874 = vpack.c.b16 %v1436, %v1435
    %v1875 = vpack.c.b16 %v1438, %v1437
    %v1876 = vpack.c.b16 %v1440, %v1439
    %v1877 = vpack.c.b16 %v1442, %v1441
    %v1878 = vpack.c.b16 %v1444, %v1443
    %v1879 = vpack.c.b16 %v1446, %v1445
    %v1880 = vpack.c.b16 %v1448, %v1447
    %v1881 = vpack.c.b16 %v1450, %v1449
    %v1882 = vpack.c.b16 %v1452, %v1451
    %v1883 = vpack.c.b16 %v1454, %v1453
    %v1884 = vpack.c.b16 %v1456, %v1455
    %v1885 = vpack.c.b16 %v1458, %v1457
    %v1886 = vpack.c.b16 %v1460, %v1459
    %v1887 = vpack.c.b16 %v1462, %v1461
    %v1888 = vpack.c.b16 %v1464, %v1463
    %v1889 = vpack.c.b16 %v1466, %v1465
    %v1890 = vpack.c.b16 %v1468, %v1467
    %v1891 = vpack.c.b16 %v1470, %v1469
    %v1892 = vpack.c.b16 %v1472, %v1471
    %v1893 = vpack.c.b16 %v1474, %v1473
    %v1894 = vpack.c.b16 %v1476, %v1475
    %v1895 = vpack.c.b16 %v1478, %v1477
    %v1896 = vpack.c.b16 %v1480, %v1479
    %v1897 = vpack.c.b16 %v1482, %v1481
    %v1898 = vpack.c.b16 %v1484, %v1483
    %v1899 = vpack.c.b16 %v1486, %v1485
    %v1900 = vpack.c.b16 %v1488, %v1487
    %v1901 = vpack.c.b16 %v1490, %v1489
    %v1902 = vpack.c.b16 %v1492, %v1491
    %v1903 = vpack.c.b16 %v1494, %v1493
    %v1904 = vpack.c.b16 %v1496, %v1495
    %v1905 = vpack.c.b16 %v1498, %v1497
    %v1906 = vpack.c.b16 %v1500, %v1499
    %v1907 = vpack.c.b16 %v1502, %v1501
    %v1908 = vpack.c.b16 %v1504, %v1503
    %v1909 = vpack.c.b16 %v1506, %v1505
    %v1910 = vpack.c.b16 %v1508, %v1507
    %v1911 = vpack.c.b16 %v1510, %v1509
    %v1912 = vpack.c.b16 %v1512, %v1511
    %v1913 = vpack.c.b16 %v1514, %v1513
    %v1914 = vpack.c.b16 %v1516, %v1515
    %v1915 = vpack.c.b16 %v1518, %v1517
    %v1916 = vpack.c.b16 %v1520, %v1519
    %v1917 = vpack.c.b16 %v1522, %v1521
    %v1918 = vpack.c.b16 %v1524, %v1523
    %v1919 = vpack.c.b16 %v1526, %v1525
    %v1920 = vpack.c.b16 %v1528, %v1527
    %v1921 = vpack.c.b16 %v1530, %v1529
    %v1922 = vpack.c.b16 %v1532, %v1531
    %v1923 = vpack.c.b16 %v1534, %v1533
    %v1924 = vpack.c.b16 %v1536, %v1535
    %v1925 = vpack.c.b16 %v1538, %v1537
    %v1926 = vpack.c.b16 %v1540, %v1539
    %v1927 = vpack.c.b16 %v1542, %v1541
    %v1928 = vpack.c.b16 %v1544, %v1543
    %v1929 = vpack.c.b16 %v1546, %v1545
    %v1930 = vpack.c.b16 %v1548, %v1547
    %v1931 = vpack.c.b16 %v1550, %v1549
    %v1932 = vpack.c.b16 %v1552, %v1551
    %v1933 = vpack.c.b16 %v1554, %v1553
    %v1934 = vpack.c.b16 %v1556, %v1555
    %v1935 = vpack.c.b16 %v1558, %v1557
    %v1936 = vpack.c.b16 %v1560, %v1559
    %v1937 = vpack.c.b16 %v1562, %v1561
    %v1938 = vpack.c.b16 %v1564, %v1563
    %v1939 = vpack.c.b16 %v1566, %v1565
    %v1940 = vpack.c.b16 %v1568, %v1567
    %v1941 = vpack.c.b16 %v1570, %v1569
    %v1942 = vpack.c.b16 %v1572, %v1571
    %v1943 = vpack.c.b16 %v1574, %v1573
    %v1944 = vpack.c.b16 %v1576, %v1575
    %v1945 = vpack.c.b16 %v1578, %v1577
    %v1946 = vpack.c.b16 %v1580, %v1579
    %v1947 = vpack.c.b16 %v1582, %v1581
    %v1948 = vpack.c.b16 %v1584, %v1583
    %v1949 = vpack.c.b16 %v1586, %v1585
    %v1950 = vpack.c.b16 %v1588, %v1587
    %v1951 = vpack.c.b16 %v1590, %v1589
    %v1952 = vpack.c.b16 %v1592, %v1591
    %v1953 = vpack.c.b16 %v1594, %v1593
    %v1954 = vpack.c.b16 %v1596, %v1595
    %v1955 = vpack.c.b16 %v1598, %v1597
    %v1956 = vpack.c.b16 %v1600, %v1599
    %v1957 = vpack.c.b16 %v1602, %v1601
    %v1958 = vpack.c.b16 %v1604, %v1603
    %v1959 = vpack.c.b16 %v1606, %v1605
    %v1960 = vpack.c.b16 %v1608, %v1607
    %v1961 = vpack.c.b16 %v1610, %v1609
    %v1962 = vpack.c.b16 %v1612, %v1611
    %v1963 = vpack.c.b16 %v1614, %v1613
    %v1964 = vpack.c.b16 %v1616, %v1615
    %v1965 = vpack.c.b16 %v1618, %v1617
    %v1966 = vpack.c.b16 %v1620, %v1619
    %v1967 = vpack.c.b16 %v1622, %v1621
    %v1968 = vpack.c.b16 %v1624, %v1623
    %v1969 = vpack.c.b16 %v1626, %v1625
    %v1970 = vpack.c.b16 %v1628, %v1627
    %v1971 = vpack.c.b16 %v1630, %v1629
    %v1972 = vpack.c.b16 %v1632, %v1631
    %v1973 = vpack.c.b16 %v1634, %v1633
    %v1974 = vpack.c.b16 %v1636, %v1635
    %v1975 = vpack.c.b16 %v1638, %v1637
    %v1976 = vpack.c.b16 %v1640, %v1639
    %v1977 = vpack.c.b16 %v1642, %v1641
    %v1978 = vpack.c.b16 %v1644, %v1643
    %v1979 = vpack.c.b16 %v1646, %v1645
    %v1980 = vpack.c.b16 %v1648, %v1647
    %v1981 = vpack.c.b16 %v1650, %v1649
    %v1982 = vpack.c.b16 %v1652, %v1651
    %v1983 = vpack.c.b16 %v1654, %v1653
    %v1984 = vpack.c.b16 %v1656, %v1655
    %v1985 = vpack.c.b16 %v1658, %v1657
    %v1986 = vpack.c.b16 %v1660, %v1659
    %v1987 = vpack.c.b16 %v1662, %v1661
    %v1988 = vpack.c.b16 %v1664, %v1663
    %v1989 = vpack.c.b16 %v1666, %v1665
    %v1990 = vpack.c.b16 %v1668, %v1667
    %v1991 = vpack.c.b16 %v1670, %v1669
    %v1992 = vpack.c.b16 %v1672, %v1671
    %v1993 = vpack.c.b16 %v1674, %v1673
    %v1994 = vpack.c.b16 %v1676, %v1675
    %v1995 = vpack.c.b16 %v1678, %v1677
    %v1996 = vpack.c.b16 %v1680, %v1679
    %v1997 = vpack.c.b16 %v1682, %v1681
    %v1998 = vpack.c.b16 %v1684, %v1683
    %v1999 = vpack.c.b16 %v1686, %v1685
    %v2000 = vpack.c.b16 %v1688, %v1687
    %v2001 = vpack.c.b16 %v1690, %v1689
    %v2002 = vpack.c.b16 %v1692, %v1691
    %v2003 = vpack.c.b16 %v1694, %v1693
    %v2004 = vpack.c.b16 %v1696, %v1695
    %v2005 = vpack.c.b16 %v1698, %v1697
    %v2006 = vpack.c.b16 %v1700, %v1699
    %v2007 = vpack.c.b16 %v1702, %v1701
    %v2008 = vpack.c.b16 %v1704, %v1703
    %v2009 = vpack.c.b16 %v1706, %v1705
    %v2010 = vpack.c.b16 %v1708, %v1707
    %v2011 = vpack.c.b16 %v1710, %v1709
    %v2012 = vpack.c.b16 %v1712, %v1711
    %v2013 = vpack.c.b16 %v1714, %v1713
    %v2014 = vpack.c.b16 %v1716, %v1715
    %v2015 = vpack.c.b16 %v1718, %v1717
    %v2016 = vpack.c.b16 %v1720, %v1719
    %v2017 = vpack.c.b16 %v1722, %v1721
    %v2018 = vpack.c.b16 %v1724, %v1723
    %v2019 = vpack.c.b16 %v1726, %v1725
    %v2020 = vpack.c.b16 %v1728, %v1727
    %v2021 = vpack.c.b16 %v1730, %v1729
    %v2022 = vpack.c.b16 %v1732, %v1731
    %v2023 = vpack.c.b16 %v1734, %v1733
    %v2024 = vpack.c.b16 %v1736, %v1735
    %v2025 = vpack.c.b16 %v1738, %v1737
    %v2026 = vpack.c.b16 %v1740, %v1739
    %v2027 = vpack.c.b16 %v1742, %v1741
    %v2028 = vpack.c.b16 %v1744, %v1743
    %v2029 = vpack.c.b16 %v1746, %v1745
    %v2030 = vpack.c.b16 %v1748, %v1747
    %v2031 = vpack.c.b16 %v1750, %v1749
    %v2032 = vpack.c.b16 %v1752, %v1751
    %v2033 = vpack.c.b16 %v1754, %v1753
    %v2034 = vpack.c.b16 %v1756, %v1755
    %v2035 = vpack.c.b16 %v1758, %v1757
    %v2036 = vpack.c.b16 %v1760, %v1759
    %v2037 = vpack.c.b16 %v1762, %v1761
    %v2038 = vpack.c.b16 %v1764, %v1763
    %v2039 = vpack.c.b16 %v1766, %v1765
    %v2040 = vpack.c.b16 %v1768, %v1767
    %v2041 = vpack.c.b16 %v1770, %v1769
    %v2042 = vpack.c.b16 %v1772, %v1771
    %v2043 = vpack.c.b16 %v1774, %v1773
    %v2044 = vpack.c.b16 %v1776, %v1775
    %v2045 = vpack.c.b16 %v1778, %v1777
    %v2046 = vpack.c.b16 %v1780, %v1779
    %v2047 = vpack.c.b16 %v1782, %v1781
    %v2048 = vpack.c.b16 %v1784, %v1783
    %v2049 = vpack.c.b16 %v1786, %v1785
    %v2050 = vpack.c.b16 %v1788, %v1787
    %v2051 = vpack.c.b16 %v1790, %v1789
    %v2052 = vpack.c.b16 %v1792, %v1791
    %v2053 = vpack.c.b16 %v1794, %v1793
    %v2054 = vpack.c.b16 %v1796, %v1795
    %v2055 = vpack.c.b16 %v1798, %v1797
    %v2056 = vpack.c.b16 %v1800, %v1799
    %2313 = vmatprep.subr.bf16.mxu0 0
    %2314 = vmatpush1.bf16.msra.mxu0 %v1801
    %2315 = vmatprep.subr.bf16.mxu0 0
    %2316 = vmatpush1.bf16.msra.mxu0 %v1802
    %2317 = vmatprep.subr.bf16.mxu0 0
    %2318 = vmatpush1.bf16.msra.mxu0 %v1803
    %2319 = vmatprep.subr.bf16.mxu0 0
    %2320 = vmatpush1.bf16.msra.mxu0 %v1804
    %2321 = vmatprep.subr.bf16.mxu0 0
    %2322 = vmatpush1.bf16.msra.mxu0 %v1805
    %2323 = vmatprep.subr.bf16.mxu0 0
    %2324 = vmatpush1.bf16.msra.mxu0 %v1806
    %2325 = vmatprep.subr.bf16.mxu0 0
    %2326 = vmatpush1.bf16.msra.mxu0 %v1807
    %2327 = vmatprep.subr.bf16.mxu0 0
    %2328 = vmatpush1.bf16.msra.mxu0 %v1808
    %2329 = vmatprep.subr.bf16.mxu0 0
    %2330 = vmatpush1.bf16.msra.mxu0 %v1809
    %2331 = vmatprep.subr.bf16.mxu0 0
    %2332 = vmatpush1.bf16.msra.mxu0 %v1810
    %2333 = vmatprep.subr.bf16.mxu0 0
    %2334 = vmatpush1.bf16.msra.mxu0 %v1811
    %2335 = vmatprep.subr.bf16.mxu0 0
    %2336 = vmatpush1.bf16.msra.mxu0 %v1812
    %2337 = vmatprep.subr.bf16.mxu0 0
    %2338 = vmatpush1.bf16.msra.mxu0 %v1813
    %2339 = vmatprep.subr.bf16.mxu0 0
    %2340 = vmatpush1.bf16.msra.mxu0 %v1814
    %2341 = vmatprep.subr.bf16.mxu0 0
    %2342 = vmatpush1.bf16.msra.mxu0 %v1815
    %2343 = vmatprep.subr.bf16.mxu0 0
    %2344 = vmatpush1.bf16.msra.mxu0 %v1816
    %2345 = vmatprep.mubr.bf16.mxu0 %v586
    %2346 = vmatmul.mubr.bf16.gmra.mrb[0].mxu0 %v572
    %v2347 = vpop.f32.mrb[0].mxu0
    %v2348 = vadd.f32 %v543, %v2347
    %v2349 = vpop.f32.mrb[0].mxu0
    %v2350 = vpop.f32.mrb[0].mxu0
    %v2351 = vpop.f32.mrb[0].mxu0
    %2352 = vdwg.mxu0
    %2353 = vmatprep.subr.bf16.mxu0 0
    %2354 = vmatpush1.bf16.msra.mxu0 %v1817
    %2355 = vmatprep.subr.bf16.mxu0 0
    %2356 = vmatpush1.bf16.msra.mxu0 %v1818
    %2357 = vmatprep.subr.bf16.mxu0 0
    %2358 = vmatpush1.bf16.msra.mxu0 %v1819
    %2359 = vmatprep.subr.bf16.mxu0 0
    %2360 = vmatpush1.bf16.msra.mxu0 %v1820
    %2361 = vmatprep.subr.bf16.mxu0 0
    %2362 = vmatpush1.bf16.msra.mxu0 %v1821
    %2363 = vmatprep.subr.bf16.mxu0 0
    %2364 = vmatpush1.bf16.msra.mxu0 %v1822
    %2365 = vmatprep.subr.bf16.mxu0 0
    %2366 = vmatpush1.bf16.msra.mxu0 %v1823
    %2367 = vmatprep.subr.bf16.mxu0 0
    %2368 = vmatpush1.bf16.msra.mxu0 %v1824
    %2369 = vmatprep.subr.bf16.mxu0 0
    %2370 = vmatpush1.bf16.msra.mxu0 %v1825
    %2371 = vmatprep.subr.bf16.mxu0 0
    %2372 = vmatpush1.bf16.msra.mxu0 %v1826
    %2373 = vmatprep.subr.bf16.mxu0 0
    %2374 = vmatpush1.bf16.msra.mxu0 %v1827
    %2375 = vmatprep.subr.bf16.mxu0 0
    %2376 = vmatpush1.bf16.msra.mxu0 %v1828
    %2377 = vmatprep.subr.bf16.mxu0 0
    %2378 = vmatpush1.bf16.msra.mxu0 %v1829
    %2379 = vmatprep.subr.bf16.mxu0 0
    %2380 = vmatpush1.bf16.msra.mxu0 %v1830
    %2381 = vmatprep.subr.bf16.mxu0 0
    %2382 = vmatpush1.bf16.msra.mxu0 %v1831
    %2383 = vmatprep.subr.bf16.mxu0 0
    %2384 = vmatpush1.bf16.msra.mxu0 %v1832
    %2385 = vmatprep.mubr.bf16.mxu0 %v596
    %2386 = vmatmul.mubr.bf16.gmra.mrb[0].mxu0 %v594
    %v2387 = vpop.f32.mrb[0].mxu0
    %v2388 = vadd.f32 %v2348, %v2387
    %v2389 = vpop.f32.mrb[0].mxu0
    %v2390 = vpop.f32.mrb[0].mxu0
    %v2391 = vpop.f32.mrb[0].mxu0
    %2392 = vdwg.mxu0
    %2393 = vmatprep.subr.bf16.mxu0 0
    %2394 = vmatpush1.bf16.msra.mxu0 %v1833
    %2395 = vmatprep.subr.bf16.mxu0 0
    %2396 = vmatpush1.bf16.msra.mxu0 %v1834
    %2397 = vmatprep.subr.bf16.mxu0 0
    %2398 = vmatpush1.bf16.msra.mxu0 %v1835
    %2399 = vmatprep.subr.bf16.mxu0 0
    %2400 = vmatpush1.bf16.msra.mxu0 %v1836
    %2401 = vmatprep.subr.bf16.mxu0 0
    %2402 = vmatpush1.bf16.msra.mxu0 %v1837
    %2403 = vmatprep.subr.bf16.mxu0 0
    %2404 = vmatpush1.bf16.msra.mxu0 %v1838
    %2405 = vmatprep.subr.bf16.mxu0 0
    %2406 = vmatpush1.bf16.msra.mxu0 %v1839
    %2407 = vmatprep.subr.bf16.mxu0 0
    %2408 = vmatpush1.bf16.msra.mxu0 %v1840
    %2409 = vmatprep.subr.bf16.mxu0 0
    %2410 = vmatpush1.bf16.msra.mxu0 %v1841
    %2411 = vmatprep.subr.bf16.mxu0 0
    %2412 = vmatpush1.bf16.msra.mxu0 %v1842
    %2413 = vmatprep.subr.bf16.mxu0 0
    %2414 = vmatpush1.bf16.msra.mxu0 %v1843
    %2415 = vmatprep.subr.bf16.mxu0 0
    %2416 = vmatpush1.bf16.msra.mxu0 %v1844
    %2417 = vmatprep.subr.bf16.mxu0 0
    %2418 = vmatpush1.bf16.msra.mxu0 %v1845
    %2419 = vmatprep.subr.bf16.mxu0 0
    %2420 = vmatpush1.bf16.msra.mxu0 %v1846
    %2421 = vmatprep.subr.bf16.mxu0 0
    %2422 = vmatpush1.bf16.msra.mxu0 %v1847
    %2423 = vmatprep.subr.bf16.mxu0 0
    %2424 = vmatpush1.bf16.msra.mxu0 %v1848
    %2425 = vmatprep.mubr.bf16.mxu0 %v593
    %2426 = vmatmul.mubr.bf16.gmra.mrb[0].mxu0 %v579
    %v2427 = vpop.f32.mrb[0].mxu0
    %v2428 = vadd.f32 %v2388, %v2427
    %v2429 = vpop.f32.mrb[0].mxu0
    %v2430 = vpop.f32.mrb[0].mxu0
    %v2431 = vpop.f32.mrb[0].mxu0
    %2432 = vdwg.mxu0
    %2433 = vmatprep.subr.bf16.mxu0 0
    %2434 = vmatpush1.bf16.msra.mxu0 %v1849
    %2435 = vmatprep.subr.bf16.mxu0 0
    %2436 = vmatpush1.bf16.msra.mxu0 %v1850
    %2437 = vmatprep.subr.bf16.mxu0 0
    %2438 = vmatpush1.bf16.msra.mxu0 %v1851
    %2439 = vmatprep.subr.bf16.mxu0 0
    %2440 = vmatpush1.bf16.msra.mxu0 %v1852
    %2441 = vmatprep.subr.bf16.mxu0 0
    %2442 = vmatpush1.bf16.msra.mxu0 %v1853
    %2443 = vmatprep.subr.bf16.mxu0 0
    %2444 = vmatpush1.bf16.msra.mxu0 %v1854
    %2445 = vmatprep.subr.bf16.mxu0 0
    %2446 = vmatpush1.bf16.msra.mxu0 %v1855
    %2447 = vmatprep.subr.bf16.mxu0 0
    %2448 = vmatpush1.bf16.msra.mxu0 %v1856
    %2449 = vmatprep.subr.bf16.mxu0 0
    %2450 = vmatpush1.bf16.msra.mxu0 %v1857
    %2451 = vmatprep.subr.bf16.mxu0 0
    %2452 = vmatpush1.bf16.msra.mxu0 %v1858
    %2453 = vmatprep.subr.bf16.mxu0 0
    %2454 = vmatpush1.bf16.msra.mxu0 %v1859
    %2455 = vmatprep.subr.bf16.mxu0 0
    %2456 = vmatpush1.bf16.msra.mxu0 %v1860
    %2457 = vmatprep.subr.bf16.mxu0 0
    %2458 = vmatpush1.bf16.msra.mxu0 %v1861
    %2459 = vmatprep.subr.bf16.mxu0 0
    %2460 = vmatpush1.bf16.msra.mxu0 %v1862
    %2461 = vmatprep.subr.bf16.mxu0 0
    %2462 = vmatpush1.bf16.msra.mxu0 %v1863
    %2463 = vmatprep.subr.bf16.mxu0 0
    %2464 = vmatpush1.bf16.msra.mxu0 %v1864
    %2465 = vmatprep.mubr.bf16.mxu0 %v597
    %2466 = vmatmul.mubr.bf16.gmra.mrb[0].mxu0 %v595
    %v2467 = vpop.f32.mrb[0].mxu0
    %v2468 = vadd.f32 %v2428, %v2467
    %v2469 = vpop.f32.mrb[0].mxu0
    %v2470 = vpop.f32.mrb[0].mxu0
    %v2471 = vpop.f32.mrb[0].mxu0
    %2472 = vdwg.mxu0
    %2473 = vmatprep.subr.bf16.mxu0 0
    %2474 = vmatpush1.bf16.msra.mxu0 %v1865
    %2475 = vmatprep.subr.bf16.mxu0 0
    %2476 = vmatpush1.bf16.msra.mxu0 %v1866
    %2477 = vmatprep.subr.bf16.mxu0 0
    %2478 = vmatpush1.bf16.msra.mxu0 %v1867
    %2479 = vmatprep.subr.bf16.mxu0 0
    %2480 = vmatpush1.bf16.msra.mxu0 %v1868
    %2481 = vmatprep.subr.bf16.mxu0 0
    %2482 = vmatpush1.bf16.msra.mxu0 %v1869
    %2483 = vmatprep.subr.bf16.mxu0 0
    %2484 = vmatpush1.bf16.msra.mxu0 %v1870
    %2485 = vmatprep.subr.bf16.mxu0 0
    %2486 = vmatpush1.bf16.msra.mxu0 %v1871
    %2487 = vmatprep.subr.bf16.mxu0 0
    %2488 = vmatpush1.bf16.msra.mxu0 %v1872
    %2489 = vmatprep.subr.bf16.mxu0 0
    %2490 = vmatpush1.bf16.msra.mxu0 %v1873
    %2491 = vmatprep.subr.bf16.mxu0 0
    %2492 = vmatpush1.bf16.msra.mxu0 %v1874
    %2493 = vmatprep.subr.bf16.mxu0 0
    %2494 = vmatpush1.bf16.msra.mxu0 %v1875
    %2495 = vmatprep.subr.bf16.mxu0 0
    %2496 = vmatpush1.bf16.msra.mxu0 %v1876
    %2497 = vmatprep.subr.bf16.mxu0 0
    %2498 = vmatpush1.bf16.msra.mxu0 %v1877
    %2499 = vmatprep.subr.bf16.mxu0 0
    %2500 = vmatpush1.bf16.msra.mxu0 %v1878
    %2501 = vmatprep.subr.bf16.mxu0 0
    %2502 = vmatpush1.bf16.msra.mxu0 %v1879
    %2503 = vmatprep.subr.bf16.mxu0 0
    %2504 = vmatpush1.bf16.msra.mxu0 %v1880
    %2505 = vmatprep.mubr.bf16.mxu0 %v635
    %2506 = vmatmul.mubr.bf16.gmra.mrb[0].mxu0 %v621
    %v2507 = vpop.f32.mrb[0].mxu0
    %v2508 = vadd.f32 %v2468, %v2507
    %v2509 = vpop.f32.mrb[0].mxu0
    %v2510 = vpop.f32.mrb[0].mxu0
    %v2511 = vpop.f32.mrb[0].mxu0
    %2512 = vdwg.mxu0
    %2513 = vmatprep.subr.bf16.mxu0 0
    %2514 = vmatpush1.bf16.msra.mxu0 %v1881
    %2515 = vmatprep.subr.bf16.mxu0 0
    %2516 = vmatpush1.bf16.msra.mxu0 %v1882
    %2517 = vmatprep.subr.bf16.mxu0 0
    %2518 = vmatpush1.bf16.msra.mxu0 %v1883
    %2519 = vmatprep.subr.bf16.mxu0 0
    %2520 = vmatpush1.bf16.msra.mxu0 %v1884
    %2521 = vmatprep.subr.bf16.mxu0 0
    %2522 = vmatpush1.bf16.msra.mxu0 %v1885
    %2523 = vmatprep.subr.bf16.mxu0 0
    %2524 = vmatpush1.bf16.msra.mxu0 %v1886
    %2525 = vmatprep.subr.bf16.mxu0 0
    %2526 = vmatpush1.bf16.msra.mxu0 %v1887
    %2527 = vmatprep.subr.bf16.mxu0 0
    %2528 = vmatpush1.bf16.msra.mxu0 %v1888
    %2529 = vmatprep.subr.bf16.mxu0 0
    %2530 = vmatpush1.bf16.msra.mxu0 %v1889
    %2531 = vmatprep.subr.bf16.mxu0 0
    %2532 = vmatpush1.bf16.msra.mxu0 %v1890
    %2533 = vmatprep.subr.bf16.mxu0 0
    %2534 = vmatpush1.bf16.msra.mxu0 %v1891
    %2535 = vmatprep.subr.bf16.mxu0 0
    %2536 = vmatpush1.bf16.msra.mxu0 %v1892
    %2537 = vmatprep.subr.bf16.mxu0 0
    %2538 = vmatpush1.bf16.msra.mxu0 %v1893
    %2539 = vmatprep.subr.bf16.mxu0 0
    %2540 = vmatpush1.bf16.msra.mxu0 %v1894
    %2541 = vmatprep.subr.bf16.mxu0 0
    %2542 = vmatpush1.bf16.msra.mxu0 %v1895
    %2543 = vmatprep.subr.bf16.mxu0 0
    %2544 = vmatpush1.bf16.msra.mxu0 %v1896
    %2545 = vmatprep.mubr.bf16.mxu0 %v645
    %2546 = vmatmul.mubr.bf16.gmra.mrb[0].mxu0 %v643
    %v2547 = vpop.f32.mrb[0].mxu0
    %v2548 = vadd.f32 %v2508, %v2547
    %v2549 = vpop.f32.mrb[0].mxu0
    %v2550 = vpop.f32.mrb[0].mxu0
    %v2551 = vpop.f32.mrb[0].mxu0
    %2552 = vdwg.mxu0
    %2553 = vmatprep.subr.bf16.mxu0 0
    %2554 = vmatpush1.bf16.msra.mxu0 %v1897
    %2555 = vmatprep.subr.bf16.mxu0 0
    %2556 = vmatpush1.bf16.msra.mxu0 %v1898
    %2557 = vmatprep.subr.bf16.mxu0 0
    %2558 = vmatpush1.bf16.msra.mxu0 %v1899
    %2559 = vmatprep.subr.bf16.mxu0 0
    %2560 = vmatpush1.bf16.msra.mxu0 %v1900
    %2561 = vmatprep.subr.bf16.mxu0 0
    %2562 = vmatpush1.bf16.msra.mxu0 %v1901
    %2563 = vmatprep.subr.bf16.mxu0 0
    %2564 = vmatpush1.bf16.msra.mxu0 %v1902
    %2565 = vmatprep.subr.bf16.mxu0 0
    %2566 = vmatpush1.bf16.msra.mxu0 %v1903
    %2567 = vmatprep.subr.bf16.mxu0 0
    %2568 = vmatpush1.bf16.msra.mxu0 %v1904
    %2569 = vmatprep.subr.bf16.mxu0 0
    %2570 = vmatpush1.bf16.msra.mxu0 %v1905
    %2571 = vmatprep.subr.bf16.mxu0 0
    %2572 = vmatpush1.bf16.msra.mxu0 %v1906
    %2573 = vmatprep.subr.bf16.mxu0 0
    %2574 = vmatpush1.bf16.msra.mxu0 %v1907
    %2575 = vmatprep.subr.bf16.mxu0 0
    %2576 = vmatpush1.bf16.msra.mxu0 %v1908
    %2577 = vmatprep.subr.bf16.mxu0 0
    %2578 = vmatpush1.bf16.msra.mxu0 %v1909
    %2579 = vmatprep.subr.bf16.mxu0 0
    %2580 = vmatpush1.bf16.msra.mxu0 %v1910
    %2581 = vmatprep.subr.bf16.mxu0 0
    %2582 = vmatpush1.bf16.msra.mxu0 %v1911
    %2583 = vmatprep.subr.bf16.mxu0 0
    %2584 = vmatpush1.bf16.msra.mxu0 %v1912
    %2585 = vmatprep.mubr.bf16.mxu0 %v642
    %2586 = vmatmul.mubr.bf16.gmra.mrb[0].mxu0 %v628
    %v2587 = vpop.f32.mrb[0].mxu0
    %v2588 = vadd.f32 %v2548, %v2587
    %v2589 = vpop.f32.mrb[0].mxu0
    %v2590 = vpop.f32.mrb[0].mxu0
    %v2591 = vpop.f32.mrb[0].mxu0
    %2592 = vdwg.mxu0
    %2593 = vmatprep.subr.bf16.mxu0 0
    %2594 = vmatpush1.bf16.msra.mxu0 %v1913
    %2595 = vmatprep.subr.bf16.mxu0 0
    %2596 = vmatpush1.bf16.msra.mxu0 %v1914
    %2597 = vmatprep.subr.bf16.mxu0 0
    %2598 = vmatpush1.bf16.msra.mxu0 %v1915
    %2599 = vmatprep.subr.bf16.mxu0 0
    %2600 = vmatpush1.bf16.msra.mxu0 %v1916
    %2601 = vmatprep.subr.bf16.mxu0 0
    %2602 = vmatpush1.bf16.msra.mxu0 %v1917
    %2603 = vmatprep.subr.bf16.mxu0 0
    %2604 = vmatpush1.bf16.msra.mxu0 %v1918
    %2605 = vmatprep.subr.bf16.mxu0 0
    %2606 = vmatpush1.bf16.msra.mxu0 %v1919
    %2607 = vmatprep.subr.bf16.mxu0 0
    %2608 = vmatpush1.bf16.msra.mxu0 %v1920
    %2609 = vmatprep.subr.bf16.mxu0 0
    %2610 = vmatpush1.bf16.msra.mxu0 %v1921
    %2611 = vmatprep.subr.bf16.mxu0 0
    %2612 = vmatpush1.bf16.msra.mxu0 %v1922
    %2613 = vmatprep.subr.bf16.mxu0 0
    %2614 = vmatpush1.bf16.msra.mxu0 %v1923
    %2615 = vmatprep.subr.bf16.mxu0 0
    %2616 = vmatpush1.bf16.msra.mxu0 %v1924
    %2617 = vmatprep.subr.bf16.mxu0 0
    %2618 = vmatpush1.bf16.msra.mxu0 %v1925
    %2619 = vmatprep.subr.bf16.mxu0 0
    %2620 = vmatpush1.bf16.msra.mxu0 %v1926
    %2621 = vmatprep.subr.bf16.mxu0 0
    %2622 = vmatpush1.bf16.msra.mxu0 %v1927
    %2623 = vmatprep.subr.bf16.mxu0 0
    %2624 = vmatpush1.bf16.msra.mxu0 %v1928
    %2625 = vmatprep.mubr.bf16.mxu0 %v646
    %2626 = vmatmul.mubr.bf16.gmra.mrb[0].mxu0 %v644
    %v2627 = vpop.f32.mrb[0].mxu0
    %v2628 = vadd.f32 %v2588, %v2627
    %v2629 = vpop.f32.mrb[0].mxu0
    %v2630 = vpop.f32.mrb[0].mxu0
    %v2631 = vpop.f32.mrb[0].mxu0
    %2632 = vdwg.mxu0
    %2633 = vmatprep.subr.bf16.mxu0 0
    %2634 = vmatpush1.bf16.msra.mxu0 %v1929
    %2635 = vmatprep.subr.bf16.mxu0 0
    %2636 = vmatpush1.bf16.msra.mxu0 %v1930
    %2637 = vmatprep.subr.bf16.mxu0 0
    %2638 = vmatpush1.bf16.msra.mxu0 %v1931
    %2639 = vmatprep.subr.bf16.mxu0 0
    %2640 = vmatpush1.bf16.msra.mxu0 %v1932
    %2641 = vmatprep.subr.bf16.mxu0 0
    %2642 = vmatpush1.bf16.msra.mxu0 %v1933
    %2643 = vmatprep.subr.bf16.mxu0 0
    %2644 = vmatpush1.bf16.msra.mxu0 %v1934
    %2645 = vmatprep.subr.bf16.mxu0 0
    %2646 = vmatpush1.bf16.msra.mxu0 %v1935
    %2647 = vmatprep.subr.bf16.mxu0 0
    %2648 = vmatpush1.bf16.msra.mxu0 %v1936
    %2649 = vmatprep.subr.bf16.mxu0 0
    %2650 = vmatpush1.bf16.msra.mxu0 %v1937
    %2651 = vmatprep.subr.bf16.mxu0 0
    %2652 = vmatpush1.bf16.msra.mxu0 %v1938
    %2653 = vmatprep.subr.bf16.mxu0 0
    %2654 = vmatpush1.bf16.msra.mxu0 %v1939
    %2655 = vmatprep.subr.bf16.mxu0 0
    %2656 = vmatpush1.bf16.msra.mxu0 %v1940
    %2657 = vmatprep.subr.bf16.mxu0 0
    %2658 = vmatpush1.bf16.msra.mxu0 %v1941
    %2659 = vmatprep.subr.bf16.mxu0 0
    %2660 = vmatpush1.bf16.msra.mxu0 %v1942
    %2661 = vmatprep.subr.bf16.mxu0 0
    %2662 = vmatpush1.bf16.msra.mxu0 %v1943
    %2663 = vmatprep.subr.bf16.mxu0 0
    %2664 = vmatpush1.bf16.msra.mxu0 %v1944
    %2665 = vmatprep.mubr.bf16.mxu0 %v684
    %2666 = vmatmul.mubr.bf16.gmra.mrb[0].mxu0 %v670
    %v2667 = vpop.f32.mrb[0].mxu0
    %v2668 = vadd.f32 %v2628, %v2667
    %v2669 = vpop.f32.mrb[0].mxu0
    %v2670 = vpop.f32.mrb[0].mxu0
    %v2671 = vpop.f32.mrb[0].mxu0
    %2672 = vdwg.mxu0
    %2673 = vmatprep.subr.bf16.mxu0 0
    %2674 = vmatpush1.bf16.msra.mxu0 %v1945
    %2675 = vmatprep.subr.bf16.mxu0 0
    %2676 = vmatpush1.bf16.msra.mxu0 %v1946
    %2677 = vmatprep.subr.bf16.mxu0 0
    %2678 = vmatpush1.bf16.msra.mxu0 %v1947
    %2679 = vmatprep.subr.bf16.mxu0 0
    %2680 = vmatpush1.bf16.msra.mxu0 %v1948
    %2681 = vmatprep.subr.bf16.mxu0 0
    %2682 = vmatpush1.bf16.msra.mxu0 %v1949
    %2683 = vmatprep.subr.bf16.mxu0 0
    %2684 = vmatpush1.bf16.msra.mxu0 %v1950
    %2685 = vmatprep.subr.bf16.mxu0 0
    %2686 = vmatpush1.bf16.msra.mxu0 %v1951
    %2687 = vmatprep.subr.bf16.mxu0 0
    %2688 = vmatpush1.bf16.msra.mxu0 %v1952
    %2689 = vmatprep.subr.bf16.mxu0 0
    %2690 = vmatpush1.bf16.msra.mxu0 %v1953
    %2691 = vmatprep.subr.bf16.mxu0 0
    %2692 = vmatpush1.bf16.msra.mxu0 %v1954
    %2693 = vmatprep.subr.bf16.mxu0 0
    %2694 = vmatpush1.bf16.msra.mxu0 %v1955
    %2695 = vmatprep.subr.bf16.mxu0 0
    %2696 = vmatpush1.bf16.msra.mxu0 %v1956
    %2697 = vmatprep.subr.bf16.mxu0 0
    %2698 = vmatpush1.bf16.msra.mxu0 %v1957
    %2699 = vmatprep.subr.bf16.mxu0 0
    %2700 = vmatpush1.bf16.msra.mxu0 %v1958
    %2701 = vmatprep.subr.bf16.mxu0 0
    %2702 = vmatpush1.bf16.msra.mxu0 %v1959
    %2703 = vmatprep.subr.bf16.mxu0 0
    %2704 = vmatpush1.bf16.msra.mxu0 %v1960
    %2705 = vmatprep.mubr.bf16.mxu0 %v694
    %2706 = vmatmul.mubr.bf16.gmra.mrb[0].mxu0 %v692
    %v2707 = vpop.f32.mrb[0].mxu0
    %v2708 = vadd.f32 %v2668, %v2707
    %v2709 = vpop.f32.mrb[0].mxu0
    %v2710 = vpop.f32.mrb[0].mxu0
    %v2711 = vpop.f32.mrb[0].mxu0
    %2712 = vdwg.mxu0
    %2713 = vmatprep.subr.bf16.mxu0 0
    %2714 = vmatpush1.bf16.msra.mxu0 %v1961
    %2715 = vmatprep.subr.bf16.mxu0 0
    %2716 = vmatpush1.bf16.msra.mxu0 %v1962
    %2717 = vmatprep.subr.bf16.mxu0 0
    %2718 = vmatpush1.bf16.msra.mxu0 %v1963
    %2719 = vmatprep.subr.bf16.mxu0 0
    %2720 = vmatpush1.bf16.msra.mxu0 %v1964
    %2721 = vmatprep.subr.bf16.mxu0 0
    %2722 = vmatpush1.bf16.msra.mxu0 %v1965
    %2723 = vmatprep.subr.bf16.mxu0 0
    %2724 = vmatpush1.bf16.msra.mxu0 %v1966
    %2725 = vmatprep.subr.bf16.mxu0 0
    %2726 = vmatpush1.bf16.msra.mxu0 %v1967
    %2727 = vmatprep.subr.bf16.mxu0 0
    %2728 = vmatpush1.bf16.msra.mxu0 %v1968
    %2729 = vmatprep.subr.bf16.mxu0 0
    %2730 = vmatpush1.bf16.msra.mxu0 %v1969
    %2731 = vmatprep.subr.bf16.mxu0 0
    %2732 = vmatpush1.bf16.msra.mxu0 %v1970
    %2733 = vmatprep.subr.bf16.mxu0 0
    %2734 = vmatpush1.bf16.msra.mxu0 %v1971
    %2735 = vmatprep.subr.bf16.mxu0 0
    %2736 = vmatpush1.bf16.msra.mxu0 %v1972
    %2737 = vmatprep.subr.bf16.mxu0 0
    %2738 = vmatpush1.bf16.msra.mxu0 %v1973
    %2739 = vmatprep.subr.bf16.mxu0 0
    %2740 = vmatpush1.bf16.msra.mxu0 %v1974
    %2741 = vmatprep.subr.bf16.mxu0 0
    %2742 = vmatpush1.bf16.msra.mxu0 %v1975
    %2743 = vmatprep.subr.bf16.mxu0 0
    %2744 = vmatpush1.bf16.msra.mxu0 %v1976
    %2745 = vmatprep.mubr.bf16.mxu0 %v691
    %2746 = vmatmul.mubr.bf16.gmra.mrb[0].mxu0 %v677
    %v2747 = vpop.f32.mrb[0].mxu0
    %v2748 = vadd.f32 %v2708, %v2747
    %v2749 = vpop.f32.mrb[0].mxu0
    %v2750 = vpop.f32.mrb[0].mxu0
    %v2751 = vpop.f32.mrb[0].mxu0
    %2752 = vdwg.mxu0
    %2753 = vmatprep.subr.bf16.mxu0 0
    %2754 = vmatpush1.bf16.msra.mxu0 %v1977
    %2755 = vmatprep.subr.bf16.mxu0 0
    %2756 = vmatpush1.bf16.msra.mxu0 %v1978
    %2757 = vmatprep.subr.bf16.mxu0 0
    %2758 = vmatpush1.bf16.msra.mxu0 %v1979
    %2759 = vmatprep.subr.bf16.mxu0 0
    %2760 = vmatpush1.bf16.msra.mxu0 %v1980
    %2761 = vmatprep.subr.bf16.mxu0 0
    %2762 = vmatpush1.bf16.msra.mxu0 %v1981
    %2763 = vmatprep.subr.bf16.mxu0 0
    %2764 = vmatpush1.bf16.msra.mxu0 %v1982
    %2765 = vmatprep.subr.bf16.mxu0 0
    %2766 = vmatpush1.bf16.msra.mxu0 %v1983
    %2767 = vmatprep.subr.bf16.mxu0 0
    %2768 = vmatpush1.bf16.msra.mxu0 %v1984
    %2769 = vmatprep.subr.bf16.mxu0 0
    %2770 = vmatpush1.bf16.msra.mxu0 %v1985
    %2771 = vmatprep.subr.bf16.mxu0 0
    %2772 = vmatpush1.bf16.msra.mxu0 %v1986
    %2773 = vmatprep.subr.bf16.mxu0 0
    %2774 = vmatpush1.bf16.msra.mxu0 %v1987
    %2775 = vmatprep.subr.bf16.mxu0 0
    %2776 = vmatpush1.bf16.msra.mxu0 %v1988
    %2777 = vmatprep.subr.bf16.mxu0 0
    %2778 = vmatpush1.bf16.msra.mxu0 %v1989
    %2779 = vmatprep.subr.bf16.mxu0 0
    %2780 = vmatpush1.bf16.msra.mxu0 %v1990
    %2781 = vmatprep.subr.bf16.mxu0 0
    %2782 = vmatpush1.bf16.msra.mxu0 %v1991
    %2783 = vmatprep.subr.bf16.mxu0 0
    %2784 = vmatpush1.bf16.msra.mxu0 %v1992
    %2785 = vmatprep.mubr.bf16.mxu0 %v695
    %2786 = vmatmul.mubr.bf16.gmra.mrb[0].mxu0 %v693
    %v2787 = vpop.f32.mrb[0].mxu0
    %v2788 = vadd.f32 %v2748, %v2787
    %v2789 = vpop.f32.mrb[0].mxu0
    %v2790 = vpop.f32.mrb[0].mxu0
    %v2791 = vpop.f32.mrb[0].mxu0
    %2792 = vdwg.mxu0
    %2793 = vmatprep.subr.bf16.mxu0 0
    %2794 = vmatpush1.bf16.msra.mxu0 %v1993
    %2795 = vmatprep.subr.bf16.mxu0 0
    %2796 = vmatpush1.bf16.msra.mxu0 %v1994
    %2797 = vmatprep.subr.bf16.mxu0 0
    %2798 = vmatpush1.bf16.msra.mxu0 %v1995
    %2799 = vmatprep.subr.bf16.mxu0 0
    %2800 = vmatpush1.bf16.msra.mxu0 %v1996
    %2801 = vmatprep.subr.bf16.mxu0 0
    %2802 = vmatpush1.bf16.msra.mxu0 %v1997
    %2803 = vmatprep.subr.bf16.mxu0 0
    %2804 = vmatpush1.bf16.msra.mxu0 %v1998
    %2805 = vmatprep.subr.bf16.mxu0 0
    %2806 = vmatpush1.bf16.msra.mxu0 %v1999
    %2807 = vmatprep.subr.bf16.mxu0 0
    %2808 = vmatpush1.bf16.msra.mxu0 %v2000
    %2809 = vmatprep.subr.bf16.mxu0 0
    %2810 = vmatpush1.bf16.msra.mxu0 %v2001
    %2811 = vmatprep.subr.bf16.mxu0 0
    %2812 = vmatpush1.bf16.msra.mxu0 %v2002
    %2813 = vmatprep.subr.bf16.mxu0 0
    %2814 = vmatpush1.bf16.msra.mxu0 %v2003
    %2815 = vmatprep.subr.bf16.mxu0 0
    %2816 = vmatpush1.bf16.msra.mxu0 %v2004
    %2817 = vmatprep.subr.bf16.mxu0 0
    %2818 = vmatpush1.bf16.msra.mxu0 %v2005
    %2819 = vmatprep.subr.bf16.mxu0 0
    %2820 = vmatpush1.bf16.msra.mxu0 %v2006
    %2821 = vmatprep.subr.bf16.mxu0 0
    %2822 = vmatpush1.bf16.msra.mxu0 %v2007
    %2823 = vmatprep.subr.bf16.mxu0 0
    %2824 = vmatpush1.bf16.msra.mxu0 %v2008
    %2825 = vmatprep.mubr.bf16.mxu0 %v733
    %2826 = vmatmul.mubr.bf16.gmra.mrb[0].mxu0 %v719
    %v2827 = vpop.f32.mrb[0].mxu0
    %v2828 = vadd.f32 %v2788, %v2827
    %v2829 = vpop.f32.mrb[0].mxu0
    %v2830 = vpop.f32.mrb[0].mxu0
    %v2831 = vpop.f32.mrb[0].mxu0
    %2832 = vdwg.mxu0
    %2833 = vmatprep.subr.bf16.mxu0 0
    %2834 = vmatpush1.bf16.msra.mxu0 %v2009
    %2835 = vmatprep.subr.bf16.mxu0 0
    %2836 = vmatpush1.bf16.msra.mxu0 %v2010
    %2837 = vmatprep.subr.bf16.mxu0 0
    %2838 = vmatpush1.bf16.msra.mxu0 %v2011
    %2839 = vmatprep.subr.bf16.mxu0 0
    %2840 = vmatpush1.bf16.msra.mxu0 %v2012
    %2841 = vmatprep.subr.bf16.mxu0 0
    %2842 = vmatpush1.bf16.msra.mxu0 %v2013
    %2843 = vmatprep.subr.bf16.mxu0 0
    %2844 = vmatpush1.bf16.msra.mxu0 %v2014
    %2845 = vmatprep.subr.bf16.mxu0 0
    %2846 = vmatpush1.bf16.msra.mxu0 %v2015
    %2847 = vmatprep.subr.bf16.mxu0 0
    %2848 = vmatpush1.bf16.msra.mxu0 %v2016
    %2849 = vmatprep.subr.bf16.mxu0 0
    %2850 = vmatpush1.bf16.msra.mxu0 %v2017
    %2851 = vmatprep.subr.bf16.mxu0 0
    %2852 = vmatpush1.bf16.msra.mxu0 %v2018
    %2853 = vmatprep.subr.bf16.mxu0 0
    %2854 = vmatpush1.bf16.msra.mxu0 %v2019
    %2855 = vmatprep.subr.bf16.mxu0 0
    %2856 = vmatpush1.bf16.msra.mxu0 %v2020
    %2857 = vmatprep.subr.bf16.mxu0 0
    %2858 = vmatpush1.bf16.msra.mxu0 %v2021
    %2859 = vmatprep.subr.bf16.mxu0 0
    %2860 = vmatpush1.bf16.msra.mxu0 %v2022
    %2861 = vmatprep.subr.bf16.mxu0 0
    %2862 = vmatpush1.bf16.msra.mxu0 %v2023
    %2863 = vmatprep.subr.bf16.mxu0 0
    %2864 = vmatpush1.bf16.msra.mxu0 %v2024
    %2865 = vmatprep.mubr.bf16.mxu0 %v743
    %2866 = vmatmul.mubr.bf16.gmra.mrb[0].mxu0 %v741
    %v2867 = vpop.f32.mrb[0].mxu0
    %v2868 = vadd.f32 %v2828, %v2867
    %v2869 = vpop.f32.mrb[0].mxu0
    %v2870 = vpop.f32.mrb[0].mxu0
    %v2871 = vpop.f32.mrb[0].mxu0
    %2872 = vdwg.mxu0
    %2873 = vmatprep.subr.bf16.mxu0 0
    %2874 = vmatpush1.bf16.msra.mxu0 %v2025
    %2875 = vmatprep.subr.bf16.mxu0 0
    %2876 = vmatpush1.bf16.msra.mxu0 %v2026
    %2877 = vmatprep.subr.bf16.mxu0 0
    %2878 = vmatpush1.bf16.msra.mxu0 %v2027
    %2879 = vmatprep.subr.bf16.mxu0 0
    %2880 = vmatpush1.bf16.msra.mxu0 %v2028
    %2881 = vmatprep.subr.bf16.mxu0 0
    %2882 = vmatpush1.bf16.msra.mxu0 %v2029
    %2883 = vmatprep.subr.bf16.mxu0 0
    %2884 = vmatpush1.bf16.msra.mxu0 %v2030
    %2885 = vmatprep.subr.bf16.mxu0 0
    %2886 = vmatpush1.bf16.msra.mxu0 %v2031
    %2887 = vmatprep.subr.bf16.mxu0 0
    %2888 = vmatpush1.bf16.msra.mxu0 %v2032
    %2889 = vmatprep.subr.bf16.mxu0 0
    %2890 = vmatpush1.bf16.msra.mxu0 %v2033
    %2891 = vmatprep.subr.bf16.mxu0 0
    %2892 = vmatpush1.bf16.msra.mxu0 %v2034
    %2893 = vmatprep.subr.bf16.mxu0 0
    %2894 = vmatpush1.bf16.msra.mxu0 %v2035
    %2895 = vmatprep.subr.bf16.mxu0 0
    %2896 = vmatpush1.bf16.msra.mxu0 %v2036
    %2897 = vmatprep.subr.bf16.mxu0 0
    %2898 = vmatpush1.bf16.msra.mxu0 %v2037
    %2899 = vmatprep.subr.bf16.mxu0 0
    %2900 = vmatpush1.bf16.msra.mxu0 %v2038
    %2901 = vmatprep.subr.bf16.mxu0 0
    %2902 = vmatpush1.bf16.msra.mxu0 %v2039
    %2903 = vmatprep.subr.bf16.mxu0 0
    %2904 = vmatpush1.bf16.msra.mxu0 %v2040
    %2905 = vmatprep.mubr.bf16.mxu0 %v740
    %2906 = vmatmul.mubr.bf16.gmra.mrb[0].mxu0 %v726
    %v2907 = vpop.f32.mrb[0].mxu0
    %v2908 = vadd.f32 %v2868, %v2907
    %v2909 = vpop.f32.mrb[0].mxu0
    %v2910 = vpop.f32.mrb[0].mxu0
    %v2911 = vpop.f32.mrb[0].mxu0
    %2912 = vdwg.mxu0
    %2913 = vmatprep.subr.bf16.mxu0 0
    %2914 = vmatpush1.bf16.msra.mxu0 %v2041
    %2915 = vmatprep.subr.bf16.mxu0 0
    %2916 = vmatpush1.bf16.msra.mxu0 %v2042
    %2917 = vmatprep.subr.bf16.mxu0 0
    %2918 = vmatpush1.bf16.msra.mxu0 %v2043
    %2919 = vmatprep.subr.bf16.mxu0 0
    %2920 = vmatpush1.bf16.msra.mxu0 %v2044
    %2921 = vmatprep.subr.bf16.mxu0 0
    %2922 = vmatpush1.bf16.msra.mxu0 %v2045
    %2923 = vmatprep.subr.bf16.mxu0 0
    %2924 = vmatpush1.bf16.msra.mxu0 %v2046
    %2925 = vmatprep.subr.bf16.mxu0 0
    %2926 = vmatpush1.bf16.msra.mxu0 %v2047
    %2927 = vmatprep.subr.bf16.mxu0 0
    %2928 = vmatpush1.bf16.msra.mxu0 %v2048
    %2929 = vmatprep.subr.bf16.mxu0 0
    %2930 = vmatpush1.bf16.msra.mxu0 %v2049
    %2931 = vmatprep.subr.bf16.mxu0 0
    %2932 = vmatpush1.bf16.msra.mxu0 %v2050
    %2933 = vmatprep.subr.bf16.mxu0 0
    %2934 = vmatpush1.bf16.msra.mxu0 %v2051
    %2935 = vmatprep.subr.bf16.mxu0 0
    %2936 = vmatpush1.bf16.msra.mxu0 %v2052
    %2937 = vmatprep.subr.bf16.mxu0 0
    %2938 = vmatpush1.bf16.msra.mxu0 %v2053
    %2939 = vmatprep.subr.bf16.mxu0 0
    %2940 = vmatpush1.bf16.msra.mxu0 %v2054
    %2941 = vmatprep.subr.bf16.mxu0 0
    %2942 = vmatpush1.bf16.msra.mxu0 %v2055
    %2943 = vmatprep.subr.bf16.mxu0 0
    %2944 = vmatpush1.bf16.msra.mxu0 %v2056
    %2945 = vmatprep.mubr.bf16.mxu0 %v744
    %2946 = vmatmul.mubr.bf16.gmra.mrb[0].mxu0 %v742
    %v2947 = vpop.f32.mrb[0].mxu0
    %v2948 = vadd.f32 %v2908, %v2947
    %v2949 = vpop.f32.mrb[0].mxu0
    %v2950 = vpop.f32.mrb[0].mxu0
    %v2951 = vpop.f32.mrb[0].mxu0
    %2952 = vdwg.mxu0
    %v2953 = vmax.f32 %v2948, 0.0
    %v2954 = vpack.c.bf16 %v2953, %v2953
    %v2955 = vld [vmem:[%s3] sm:$0xf]
    %v2956 = vld [vmem:[%s3 + $0x4] sm:$0xf]
    %v2957 = vld [vmem:[%s3 + $0x8] sm:$0xf]
    %v2958 = vld [vmem:[%s3 + $0xc] sm:$0xf]
    %v2959 = vld [vmem:[%s3 + $0x10] sm:$0xf]
    %v2960 = vld [vmem:[%s3 + $0x14] sm:$0xf]
    %v2961 = vld [vmem:[%s3 + $0x18] sm:$0xf]
    %v2962 = vld [vmem:[%s3 + $0x1c] sm:$0xf]
    %v2963 = vld [vmem:[%s3 + $0x20] sm:$0xf]
    %v2964 = vld [vmem:[%s3 + $0x24] sm:$0xf]
    %v2965 = vld [vmem:[%s3 + $0x28] sm:$0xf]
    %v2966 = vld [vmem:[%s3 + $0x2c] sm:$0xf]
    %v2967 = vld [vmem:[%s3 + $0x30] sm:$0xf]
    %v2968 = vld [vmem:[%s3 + $0x34] sm:$0xf]
    %v2969 = vld [vmem:[%s3 + $0x38] sm:$0xf]
    %v2970 = vld [vmem:[%s3 + $0x3c] sm:$0xf]
    %v2971 = vld [vmem:[%s4] sm:$0x1]
    %v2973 = vlaneseq
    %v2974 = vshrl.u32 %v2973, 7
    %v2975 = vsub.s32 0, %v2974
    %v2976 = vrot.slane %v2971, %v2975
    %v2994 = vunpack.c.l.b16 %v2955
    %v2995 = vunpack.c.l.b16 %v2956
    %v2996 = vunpack.c.l.b16 %v2957
    %v2997 = vunpack.c.l.b16 %v2958
    %v2998 = vunpack.c.l.b16 %v2959
    %v2999 = vunpack.c.l.b16 %v2960
    %v3000 = vunpack.c.l.b16 %v2961
    %v3001 = vunpack.c.l.b16 %v2962
    %v3002 = vunpack.c.l.b16 %v2963
    %v3003 = vunpack.c.l.b16 %v2964
    %v3004 = vunpack.c.l.b16 %v2965
    %v3005 = vunpack.c.l.b16 %v2966
    %v3006 = vunpack.c.l.b16 %v2967
    %v3007 = vunpack.c.l.b16 %v2968
    %v3008 = vunpack.c.l.b16 %v2969
    %v3009 = vunpack.c.l.b16 %v2970
    %v3010 = vpack.c.b16 %v2995, %v2994
    %v3011 = vpack.c.b16 %v2997, %v2996
    %v3012 = vpack.c.b16 %v2999, %v2998
    %v3013 = vpack.c.b16 %v3001, %v3000
    %v3014 = vpack.c.b16 %v3003, %v3002
    %v3015 = vpack.c.b16 %v3005, %v3004
    %v3016 = vpack.c.b16 %v3007, %v3006
    %v3017 = vpack.c.b16 %v3009, %v3008
    %3026 = vmatprep.subr.bf16.mxu0 0
    %3027 = vmatpush1.bf16.msra.mxu0 %v3010
    %3028 = vmatprep.subr.bf16.mxu0 0
    %3029 = vmatpush1.bf16.msra.mxu0 %v3011
    %3030 = vmatprep.subr.bf16.mxu0 0
    %3031 = vmatpush1.bf16.msra.mxu0 %v3012
    %3032 = vmatprep.subr.bf16.mxu0 0
    %3033 = vmatpush1.bf16.msra.mxu0 %v3013
    %3034 = vmatprep.subr.bf16.mxu0 0
    %3035 = vmatpush1.bf16.msra.mxu0 %v3014
    %3036 = vmatprep.subr.bf16.mxu0 0
    %3037 = vmatpush1.bf16.msra.mxu0 %v3015
    %3038 = vmatprep.subr.bf16.mxu0 0
    %3039 = vmatpush1.bf16.msra.mxu0 %v3016
    %3040 = vmatprep.subr.bf16.mxu0 0
    %3041 = vmatpush1.bf16.msra.mxu0 %v3017
    %3042 = vmatprep.subr.bf16.mxu0 0
    %3043 = vmatpush1.bf16.msra.mxu0 0
    %3044 = vmatprep.subr.bf16.mxu0 0
    %3045 = vmatpush1.bf16.msra.mxu0 0
    %3046 = vmatprep.subr.bf16.mxu0 0
    %3047 = vmatpush1.bf16.msra.mxu0 0
    %3048 = vmatprep.subr.bf16.mxu0 0
    %3049 = vmatpush1.bf16.msra.mxu0 0
    %3050 = vmatprep.subr.bf16.mxu0 0
    %3051 = vmatpush1.bf16.msra.mxu0 0
    %3052 = vmatprep.subr.bf16.mxu0 0
    %3053 = vmatpush1.bf16.msra.mxu0 0
    %3054 = vmatprep.subr.bf16.mxu0 0
    %3055 = vmatpush1.bf16.msra.mxu0 0
    %3056 = vmatprep.subr.bf16.mxu0 0
    %3057 = vmatpush1.bf16.msra.mxu0 0
    %3058 = vmatprep.mubr.bf16.mxu0 0
    %3059 = vmatmul.mubr.bf16.gmra.mrb[0].mxu0 %v2954
    %v3060 = vpop.f32.mrb[0].mxu0
    %v3061 = vadd.f32 %v2976, %v3060
    %v3062 = vpop.f32.mrb[0].mxu0
    %v3063 = vpop.f32.mrb[0].mxu0
    %v3064 = vpop.f32.mrb[0].mxu0
    %3065 = vdwg.mxu0
    %vm3066 = vcmask 1041408
    %v3067 = vsel %vm3066, %v3061, -inf
    %3068 = vmax.xlane.f32.xlu0 %v3067
    %v3069 = vpop.xlane.xlu0 %3068
    %v3070 = vsub.f32 %v3061, %v3069
    %v3071 = vmul.f32 %v3070, 1.442695
    %v3072 = vpow.pop %v3071
    %v3073 = vsel %vm3066, %v3072, 0.0
    %3074 = vadd.xlane.f32.xlu0 %v3073
    %v3075 = vpop.xlane.xlu0 %3074
    %v3076 = vlog2.pop %v3075
    %v3077 = vmul.f32 %v3076, 0.6931472
    %v3078 = vadd.f32 %v3069, %v3077
    %v3079 = vsub.f32 %v3061, %v3078
    %3080 = vst [vmem:[#allocation2] sm:$0x3] %v3079
    // Predicated region
    $region22: #{forward.5} parent=1 // pred_check
      _
    $region23: #{forward.5} parent=1 // pred_check_branch
      %3082 = sbr.rel (0) target = $region25
    $region24: #{forward.5} parent=1 // pred_region
      %s3084 = ssub.s32 32, 32
      %3085 = vsyncadd [#allocation3], %s3084
      %s3087 = sshll.u32 [#allocation2], 4
      %s3088 = int_to_ptr.vmem [resolvable:$true] %s3087
      %3090 = dma.vmem_to_hbm [thread:$0]  %s3088, 32, %s5, [#allocation3]
    $region25: #{forward.5} parent=1 // pred_fallthru
      _
    // Predicated region
    $region26: #{forward.5} parent=1 // pred_check
      _
    $region27: #{forward.5} parent=1 // pred_check_branch
      %3092 = sbr.rel (0) target = $region29
    $region28: #{forward.5} parent=1 // pred_region
      %3093 = dma.done [#allocation3], 32
    $region29: #{forward.5} parent=1 // pred_fallthru
      _
    %3094 = vsyncpa [#allocation3], 1

</llo_original>
